<compile_context>
chip_gen: v6e
topology: v6e:2x2x1
jax: 0.10.0
libtpu: 0.0.40
codegen_flags: <defaults>
</compile_context>

<pallas_src>
import functools

import jax
import jax.numpy as jnp
from jax import lax
from jax.experimental import pallas as pl
from jax.experimental.pallas import tpu as pltpu

LANE = 128   # padded channel width = TPU lane width
TAPS = 9     # 3x3 convolution taps


# ------------------------------ fused kernel -------------------------------


def _encoder_kernel(xp_ref, mask_ref, w1_ref, s1_ref, w2_ref, s2_ref,
                    w3_ref, s3_ref, o_ref, y_scr, h_scr, patch_scr, *, H, W):
    """Fully fused encoder forward for one image.

    Activations live on the flattened, spatially padded grid (F = Hp*Wp rows,
    LANE channels), stored with an OFF-row zero halo so each 3x3 tap is the
    contiguous row window starting at offset OFF + (di-1)*Wp + (dj-1).

    xp_ref:        (1, F, Kstem)   bf16  stem im2col patches (wrapper-built)
    mask_ref:      (F, 1)          f32   1.0 on interior rows, 0.0 on border
    w1_ref:        (Kstem, LANE)   bf16  stem weight, BN scale folded
    w2/w3_ref:     (9*LANE, LANE)  bf16  K-concatenated tap weights, BN folded
    s1/s2/s3_ref:  (1, LANE)       f32   folded BN shifts
    o_ref:         (1, 1, LANE)    f32   pooled features for this image
    y_scr, h_scr:  (F + 2*OFF, LANE) f32 halo-padded flat activations
    patch_scr:     (F, 9*LANE)     bf16  shared im2col scratch (conv2 / conv3)
    """
    Hp, Wp = H + 2, W + 2
    F = Hp * Wp
    OFF = Wp + 1

    mask = mask_ref[...]                              # (F, 1)
    halo = jnp.zeros((OFF, LANE), jnp.float32)

    def store_act(act_scr, act):
        act_scr[0:OFF, :] = halo
        act_scr[OFF + F:OFF + F + OFF, :] = halo
        act_scr[OFF:OFF + F, :] = act

    def build_patches(act_scr):
        # 9 contiguous row windows of the flat activation (static offsets),
        # written into lane-aligned 128-wide column blocks of the scratch.
        for t in range(TAPS):
            di, dj = t // 3, t % 3
            start = OFF + (di - 1) * Wp + (dj - 1)
            patch_scr[:, t * LANE:(t + 1) * LANE] = (
                act_scr[start:start + F, :].astype(jnp.bfloat16))

    # ---- conv1 + BN + ReLU (stem, single K=9*Cin matmul) -------------------
    y = jnp.dot(xp_ref[0], w1_ref[...], preferred_element_type=jnp.float32)
    y = jnp.maximum(y + s1_ref[...], 0.0) * mask
    store_act(y_scr, y)

    # ---- conv2 + BN + ReLU (single K=9*128 matmul) --------------------------
    build_patches(y_scr)
    h = jnp.dot(patch_scr[...], w2_ref[...], preferred_element_type=jnp.float32)
    h = jnp.maximum(h + s2_ref[...], 0.0) * mask
    store_act(h_scr, h)

    # ---- conv3 + BN + residual + ReLU + global average pool -----------------
    build_patches(h_scr)
    out = jnp.dot(patch_scr[...], w3_ref[...], preferred_element_type=jnp.float32)
    resid = y_scr[OFF:OFF + F, :]
    out = jnp.maximum(out + s3_ref[...] + resid, 0.0) * mask
    pooled = jnp.sum(out, axis=0, keepdims=True) * (1.0 / (H * W))
    o_ref[...] = pooled.reshape(o_ref.shape)


# ------------------------------ glue helpers -------------------------------


def _fold_bn(w_oihw, bn, eps=1e-5):
    gamma, beta, mean, var = bn
    scale = gamma / jnp.sqrt(var + eps)                     # (cout,)
    shift = beta - mean * scale                             # (cout,)
    w_hwio = jnp.transpose(w_oihw, (2, 3, 1, 0)) * scale    # (3,3,cin,cout)
    return w_hwio, shift


def _stem_weight(w_oihw, bn, *, k_pad, cout_pad):
    """(cout,cin,3,3) -> (k_pad, cout_pad) bf16 with K index (di*3+dj)*cin+c."""
    w_hwio, shift = _fold_bn(w_oihw, bn)
    kh, kw, cin, cout = w_hwio.shape
    w = w_hwio.reshape(kh * kw * cin, cout)
    w = jnp.pad(w, ((0, k_pad - kh * kw * cin), (0, cout_pad - cout)))
    shift = jnp.pad(shift, (0, cout_pad - cout)).reshape(1, cout_pad)
    return w.astype(jnp.bfloat16), shift.astype(jnp.float32)


def _block_weight(w_oihw, bn, *, cin_pad, cout_pad):
    """(cout,cin,3,3) -> (9*cin_pad, cout_pad) bf16, K index (di*3+dj)*cin_pad+c."""
    w_hwio, shift = _fold_bn(w_oihw, bn)
    kh, kw, cin, cout = w_hwio.shape
    w = jnp.pad(w_hwio, ((0, 0), (0, 0), (0, cin_pad - cin), (0, cout_pad - cout)))
    w = w.reshape(kh * kw * cin_pad, cout_pad)
    shift = jnp.pad(shift, (0, cout_pad - cout)).reshape(1, cout_pad)
    return w.astype(jnp.bfloat16), shift.astype(jnp.float32)


def _stem_patches(x_nhwc, *, k_pad):
    """im2col of the stem on the padded output grid: (B, Hp*Wp, k_pad) bf16."""
    B, H, W, cin = x_nhwc.shape
    Hp, Wp = H + 2, W + 2
    xpad2 = jnp.pad(x_nhwc, ((0, 0), (2, 2), (2, 2), (0, 0)))
    taps = [xpad2[:, di:di + Hp, dj:dj + Wp, :]
            for di in range(3) for dj in range(3)]
    p = jnp.concatenate(taps, axis=-1)                       # (B,Hp,Wp,9*cin)
    p = jnp.pad(p, ((0, 0), (0, 0), (0, 0), (0, k_pad - TAPS * cin)))
    return p.reshape(B, Hp * Wp, k_pad).astype(jnp.bfloat16)


def _interior_mask(H, W):
    Hp, Wp = H + 2, W + 2
    ii = jnp.arange(Hp)
    jj = jnp.arange(Wp)
    m2d = (((ii >= 1) & (ii <= H))[:, None]
           & ((jj >= 1) & (jj <= W))[None, :])               # (Hp, Wp) bool
    return m2d.reshape(Hp * Wp, 1).astype(jnp.float32)


# ------------------------------ encoder model ------------------------------


def init_params(key, cin=3, c=64):
    ks = jax.random.split(key, 8)

    def conv_w(k, cout, cin_):
        fan_in = cin_ * 9
        return (jax.random.normal(k, (cout, cin_, 3, 3), jnp.float32)
                * (2.0 / fan_in) ** 0.5)

    def bn(k, cfeat):
        kg, kb = jax.random.split(k)
        gamma = 1.0 + 0.1 * jax.random.normal(kg, (cfeat,), jnp.float32)
        beta = 0.1 * jax.random.normal(kb, (cfeat,), jnp.float32)
        mean = jnp.zeros((cfeat,), jnp.float32)
        var = jnp.ones((cfeat,), jnp.float32)
        return (gamma, beta, mean, var)

    return {
        "conv1_w": conv_w(ks[0], c, cin), "bn1": bn(ks[1], c),
        "conv2_w": conv_w(ks[2], c, c),   "bn2": bn(ks[3], c),
        "conv3_w": conv_w(ks[4], c, c),   "bn3": bn(ks[5], c),
    }


def encoder_forward(x_nchw, params):
    B, cin, H, W = x_nchw.shape
    c = params["conv1_w"].shape[0]
    assert c <= LANE
    Hp, Wp = H + 2, W + 2
    F = Hp * Wp
    OFF = Wp + 1
    k_pad = -(-(TAPS * cin) // 8) * 8                        # 27 -> 32 for cin=3

    # Wrapper-side layout plumbing only (tiny tensors): NCHW->NHWC, stem im2col.
    x = jnp.transpose(x_nchw, (0, 2, 3, 1)).astype(jnp.float32)
    xp = _stem_patches(x, k_pad=k_pad)                       # (B, F, k_pad) bf16
    mask = _interior_mask(H, W)                              # (F, 1) f32

    w1, s1 = _stem_weight(params["conv1_w"], params["bn1"],
                          k_pad=k_pad, cout_pad=LANE)
    w2, s2 = _block_weight(params["conv2_w"], params["bn2"],
                           cin_pad=LANE, cout_pad=LANE)
    w3, s3 = _block_weight(params["conv3_w"], params["bn3"],
                           cin_pad=LANE, cout_pad=LANE)

    flops = 2 * B * F * LANE * (k_pad + 2 * TAPS * LANE)
    bytes_accessed = int(xp.size * 2 + mask.size * 4
                         + (w1.size + w2.size + w3.size) * 2
                         + 3 * LANE * 4 + B * LANE * 4)

    feat = pl.pallas_call(
        functools.partial(_encoder_kernel, H=H, W=W),
        out_shape=jax.ShapeDtypeStruct((B, 1, LANE), jnp.float32),
        grid=(B,),
        in_specs=[
            pl.BlockSpec((1, F, k_pad), lambda b: (b, 0, 0)),   # stem patches
            pl.BlockSpec((F, 1), lambda b: (0, 0)),             # interior mask
            pl.BlockSpec((k_pad, LANE), lambda b: (0, 0)),      # w1
            pl.BlockSpec((1, LANE), lambda b: (0, 0)),          # s1
            pl.BlockSpec((TAPS * LANE, LANE), lambda b: (0, 0)),  # w2
            pl.BlockSpec((1, LANE), lambda b: (0, 0)),          # s2
            pl.BlockSpec((TAPS * LANE, LANE), lambda b: (0, 0)),  # w3
            pl.BlockSpec((1, LANE), lambda b: (0, 0)),          # s3
        ],
        out_specs=pl.BlockSpec((1, 1, LANE), lambda b: (b, 0, 0)),
        scratch_shapes=[
            pltpu.VMEM((F + 2 * OFF, LANE), jnp.float32),        # y (stem out)
            pltpu.VMEM((F + 2 * OFF, LANE), jnp.float32),        # h (conv2 out)
            pltpu.VMEM((F, TAPS * LANE), jnp.bfloat16),          # im2col scratch
        ],
        compiler_params=pltpu.CompilerParams(
            dimension_semantics=("parallel",)),
        cost_estimate=pl.CostEstimate(flops=flops, transcendentals=0,
                                      bytes_accessed=bytes_accessed),
    )(xp, mask, w1, s1, w2, s2, w3, s3)

    return feat.reshape(B, LANE)[:, :c]                      # drop lane padding


# -------------------------- plain-JAX reference ----------------------------


def _ref_conv(x_nhwc, w_oihw):
    w_hwio = jnp.transpose(w_oihw, (2, 3, 1, 0))
    return lax.conv_general_dilated(
        x_nhwc, w_hwio, (1, 1), ((1, 1), (1, 1)),
        dimension_numbers=("NHWC", "HWIO", "NHWC"))


def _ref_bn(x, bn, eps=1e-5):
    gamma, beta, mean, var = bn
    return gamma * (x - mean) / jnp.sqrt(var + eps) + beta


def reference_forward(x_nchw, params):
    x = jnp.transpose(x_nchw, (0, 2, 3, 1)).astype(jnp.float32)
    y = jax.nn.relu(_ref_bn(_ref_conv(x, params["conv1_w"]), params["bn1"]))
    h = jax.nn.relu(_ref_bn(_ref_conv(y, params["conv2_w"]), params["bn2"]))
    h = jax.nn.relu(_ref_bn(_ref_conv(h, params["conv3_w"]), params["bn3"]) + y)
    return jnp.mean(h, axis=(1, 2))


# ---------------------------------- main -----------------------------------

if __name__ == "__main__":
    key = jax.random.PRNGKey(0)
    kx, kp = jax.random.split(key)

    B, CIN, H, W = 2, 3, 16, 16          # small CIFAR-like input, NCHW
    x = jax.random.normal(kx, (B, CIN, H, W), jnp.float32)
    params = init_params(kp, cin=CIN, c=64)

    out = jax.jit(encoder_forward)(x, params)
    out = jax.block_until_ready(out)

    ref = reference_forward(x, params)
    assert out.shape == (B, 64), out.shape
    # bf16 MXU operands -> looser tolerance than the pure-f32 reference.
    max_err = float(jnp.max(jnp.abs(out - ref)))
    assert jnp.allclose(out, ref, atol=5e-2, rtol=5e-2), max_err

    print("KERNEL_OK")
</pallas_src>

<mosaic_0001>
module attributes {stable_mosaic.version = 11 : i64} {
  func.func @_encoder_kernel(%arg0: i32, %arg1: memref<1x324x32xbf16, #tpu.memory_space<vmem>>, %arg2: memref<324x1xf32, #tpu.memory_space<vmem>>, %arg3: memref<32x128xbf16, #tpu.memory_space<vmem>>, %arg4: memref<1x128xf32, #tpu.memory_space<vmem>>, %arg5: memref<1152x128xbf16, #tpu.memory_space<vmem>>, %arg6: memref<1x128xf32, #tpu.memory_space<vmem>>, %arg7: memref<1152x128xbf16, #tpu.memory_space<vmem>>, %arg8: memref<1x128xf32, #tpu.memory_space<vmem>>, %arg9: memref<1x1x128xf32, #tpu.memory_space<vmem>>, %arg10: memref<362x128xf32, #tpu.memory_space<vmem>>, %arg11: memref<362x128xf32, #tpu.memory_space<vmem>>, %arg12: memref<324x1152xbf16, #tpu.memory_space<vmem>>) attributes {dimension_semantics = [#tpu.dimension_semantics<parallel>], iteration_bounds = array<i64: 2>, scalar_prefetch = 0 : i64, scratch_operands = 3 : i64, tpu.core_type = #tpu.core_type<tc>, window_params = [{transform_indices = @transform_0, window_bounds = array<i64: 1, 324, 32>}, {pipeline_mode = #tpu.pipeline_mode<synchronous>, transform_indices = @transform_1, window_bounds = array<i64: 324, 1>}, {pipeline_mode = #tpu.pipeline_mode<synchronous>, transform_indices = @transform_2, window_bounds = array<i64: 32, 128>}, {pipeline_mode = #tpu.pipeline_mode<synchronous>, transform_indices = @transform_3, window_bounds = array<i64: 1, 128>}, {pipeline_mode = #tpu.pipeline_mode<synchronous>, transform_indices = @transform_4, window_bounds = array<i64: 1152, 128>}, {pipeline_mode = #tpu.pipeline_mode<synchronous>, transform_indices = @transform_5, window_bounds = array<i64: 1, 128>}, {pipeline_mode = #tpu.pipeline_mode<synchronous>, transform_indices = @transform_6, window_bounds = array<i64: 1152, 128>}, {pipeline_mode = #tpu.pipeline_mode<synchronous>, transform_indices = @transform_7, window_bounds = array<i64: 1, 128>}, {transform_indices = @transform_8, window_bounds = array<i64: 1, 1, 128>}]} {
    %c0 = arith.constant 0 : index
    %c0_0 = arith.constant 0 : index
    %0 = vector.load %arg2[%c0, %c0_0] : memref<324x1xf32, #tpu.memory_space<vmem>>, vector<324x1xf32>
    %cst = arith.constant 0.000000e+00 : f32
    %1 = vector.broadcast %cst : f32 to vector<19x128xf32>
    %c0_1 = arith.constant 0 : index
    %c0_2 = arith.constant 0 : index
    %c0_3 = arith.constant 0 : index
    %2 = vector.load %arg1[%c0_1, %c0_2, %c0_3] : memref<1x324x32xbf16, #tpu.memory_space<vmem>>, vector<1x324x32xbf16>
    %3 = vector.shape_cast %2 : vector<1x324x32xbf16> to vector<324x32xbf16>
    %c0_4 = arith.constant 0 : index
    %c0_5 = arith.constant 0 : index
    %4 = vector.load %arg3[%c0_4, %c0_5] : memref<32x128xbf16, #tpu.memory_space<vmem>>, vector<32x128xbf16>
    %cst_6 = arith.constant dense<0.000000e+00> : vector<324x128xf32>
    %5 = tpu.matmul %3, %4, %cst_6 {dimension_numbers = #tpu.dot_dimension_numbers<[1], [0], [0], [1], [0, 0, 1, 1], [], []>} : vector<324x32xbf16>, vector<32x128xbf16>, vector<324x128xf32> -> vector<324x128xf32>
    %c0_7 = arith.constant 0 : index
    %c0_8 = arith.constant 0 : index
    %6 = vector.load %arg4[%c0_7, %c0_8] : memref<1x128xf32, #tpu.memory_space<vmem>>, vector<1x128xf32>
    %7 = vector.broadcast %6 : vector<1x128xf32> to vector<324x128xf32>
    %8 = arith.addf %5, %7 : vector<324x128xf32>
    %cst_9 = arith.constant 0.000000e+00 : f32
    %9 = vector.broadcast %cst_9 : f32 to vector<324x128xf32>
    %10 = arith.maximumf %8, %9 : vector<324x128xf32>
    %11 = vector.broadcast %0 : vector<324x1xf32> to vector<324x128xf32>
    %12 = arith.mulf %10, %11 : vector<324x128xf32>
    %c0_10 = arith.constant 0 : index
    %c0_11 = arith.constant 0 : index
    %13 = vector.load %arg10[%c0_10, %c0_11] : memref<362x128xf32, #tpu.memory_space<vmem>>, vector<19x128xf32>
    tpu.vector_store %arg10[%c0_10, %c0_11], %1 {strides = array<i32>} : memref<362x128xf32, #tpu.memory_space<vmem>>, vector<19x128xf32>,
    %c343 = arith.constant 343 : index
    %c0_12 = arith.constant 0 : index
    %14 = vector.load %arg10[%c343, %c0_12] : memref<362x128xf32, #tpu.memory_space<vmem>>, vector<19x128xf32>
    tpu.vector_store %arg10[%c343, %c0_12], %1 {strides = array<i32>} : memref<362x128xf32, #tpu.memory_space<vmem>>, vector<19x128xf32>,
    %c19 = arith.constant 19 : index
    %c0_13 = arith.constant 0 : index
    %15 = vector.load %arg10[%c19, %c0_13] : memref<362x128xf32, #tpu.memory_space<vmem>>, vector<324x128xf32>
    tpu.vector_store %arg10[%c19, %c0_13], %12 {strides = array<i32>} : memref<362x128xf32, #tpu.memory_space<vmem>>, vector<324x128xf32>,
    %c0_14 = arith.constant 0 : index
    %c0_15 = arith.constant 0 : index
    %16 = vector.load %arg10[%c0_14, %c0_15] : memref<362x128xf32, #tpu.memory_space<vmem>>, vector<324x128xf32>
    %17 = arith.truncf %16 : vector<324x128xf32> to vector<324x128xbf16>
    %c0_16 = arith.constant 0 : index
    %c0_17 = arith.constant 0 : index
    %18 = vector.load %arg12[%c0_16, %c0_17] : memref<324x1152xbf16, #tpu.memory_space<vmem>>, vector<324x128xbf16>
    tpu.vector_store %arg12[%c0_16, %c0_17], %17 {strides = array<i32>} : memref<324x1152xbf16, #tpu.memory_space<vmem>>, vector<324x128xbf16>,
    %c1 = arith.constant 1 : index
    %c0_18 = arith.constant 0 : index
    %19 = vector.load %arg10[%c1, %c0_18] : memref<362x128xf32, #tpu.memory_space<vmem>>, vector<324x128xf32>
    %20 = arith.truncf %19 : vector<324x128xf32> to vector<324x128xbf16>
    %c0_19 = arith.constant 0 : index
    %c128 = arith.constant 128 : index
    %21 = vector.load %arg12[%c0_19, %c128] : memref<324x1152xbf16, #tpu.memory_space<vmem>>, vector<324x128xbf16>
    tpu.vector_store %arg12[%c0_19, %c128], %20 {strides = array<i32>} : memref<324x1152xbf16, #tpu.memory_space<vmem>>, vector<324x128xbf16>,
    %c2 = arith.constant 2 : index
    %c0_20 = arith.constant 0 : index
    %22 = vector.load %arg10[%c2, %c0_20] : memref<362x128xf32, #tpu.memory_space<vmem>>, vector<324x128xf32>
    %23 = arith.truncf %22 : vector<324x128xf32> to vector<324x128xbf16>
    %c0_21 = arith.constant 0 : index
    %c256 = arith.constant 256 : index
    %24 = vector.load %arg12[%c0_21, %c256] : memref<324x1152xbf16, #tpu.memory_space<vmem>>, vector<324x128xbf16>
    tpu.vector_store %arg12[%c0_21, %c256], %23 {strides = array<i32>} : memref<324x1152xbf16, #tpu.memory_space<vmem>>, vector<324x128xbf16>,
    %c18 = arith.constant 18 : index
    %c0_22 = arith.constant 0 : index
    %25 = vector.load %arg10[%c18, %c0_22] : memref<362x128xf32, #tpu.memory_space<vmem>>, vector<324x128xf32>
    %26 = arith.truncf %25 : vector<324x128xf32> to vector<324x128xbf16>
    %c0_23 = arith.constant 0 : index
    %c384 = arith.constant 384 : index
    %27 = vector.load %arg12[%c0_23, %c384] : memref<324x1152xbf16, #tpu.memory_space<vmem>>, vector<324x128xbf16>
    tpu.vector_store %arg12[%c0_23, %c384], %26 {strides = array<i32>} : memref<324x1152xbf16, #tpu.memory_space<vmem>>, vector<324x128xbf16>,
    %c19_24 = arith.constant 19 : index
    %c0_25 = arith.constant 0 : index
    %28 = vector.load %arg10[%c19_24, %c0_25] : memref<362x128xf32, #tpu.memory_space<vmem>>, vector<324x128xf32>
    %29 = arith.truncf %28 : vector<324x128xf32> to vector<324x128xbf16>
    %c0_26 = arith.constant 0 : index
    %c512 = arith.constant 512 : index
    %30 = vector.load %arg12[%c0_26, %c512] : memref<324x1152xbf16, #tpu.memory_space<vmem>>, vector<324x128xbf16>
    tpu.vector_store %arg12[%c0_26, %c512], %29 {strides = array<i32>} : memref<324x1152xbf16, #tpu.memory_space<vmem>>, vector<324x128xbf16>,
    %c20 = arith.constant 20 : index
    %c0_27 = arith.constant 0 : index
    %31 = vector.load %arg10[%c20, %c0_27] : memref<362x128xf32, #tpu.memory_space<vmem>>, vector<324x128xf32>
    %32 = arith.truncf %31 : vector<324x128xf32> to vector<324x128xbf16>
    %c0_28 = arith.constant 0 : index
    %c640 = arith.constant 640 : index
    %33 = vector.load %arg12[%c0_28, %c640] : memref<324x1152xbf16, #tpu.memory_space<vmem>>, vector<324x128xbf16>
    tpu.vector_store %arg12[%c0_28, %c640], %32 {strides = array<i32>} : memref<324x1152xbf16, #tpu.memory_space<vmem>>, vector<324x128xbf16>,
    %c36 = arith.constant 36 : index
    %c0_29 = arith.constant 0 : index
    %34 = vector.load %arg10[%c36, %c0_29] : memref<362x128xf32, #tpu.memory_space<vmem>>, vector<324x128xf32>
    %35 = arith.truncf %34 : vector<324x128xf32> to vector<324x128xbf16>
    %c0_30 = arith.constant 0 : index
    %c768 = arith.constant 768 : index
    %36 = vector.load %arg12[%c0_30, %c768] : memref<324x1152xbf16, #tpu.memory_space<vmem>>, vector<324x128xbf16>
    tpu.vector_store %arg12[%c0_30, %c768], %35 {strides = array<i32>} : memref<324x1152xbf16, #tpu.memory_space<vmem>>, vector<324x128xbf16>,
    %c37 = arith.constant 37 : index
    %c0_31 = arith.constant 0 : index
    %37 = vector.load %arg10[%c37, %c0_31] : memref<362x128xf32, #tpu.memory_space<vmem>>, vector<324x128xf32>
    %38 = arith.truncf %37 : vector<324x128xf32> to vector<324x128xbf16>
    %c0_32 = arith.constant 0 : index
    %c896 = arith.constant 896 : index
    %39 = vector.load %arg12[%c0_32, %c896] : memref<324x1152xbf16, #tpu.memory_space<vmem>>, vector<324x128xbf16>
    tpu.vector_store %arg12[%c0_32, %c896], %38 {strides = array<i32>} : memref<324x1152xbf16, #tpu.memory_space<vmem>>, vector<324x128xbf16>,
    %c38 = arith.constant 38 : index
    %c0_33 = arith.constant 0 : index
    %40 = vector.load %arg10[%c38, %c0_33] : memref<362x128xf32, #tpu.memory_space<vmem>>, vector<324x128xf32>
    %41 = arith.truncf %40 : vector<324x128xf32> to vector<324x128xbf16>
    %c0_34 = arith.constant 0 : index
    %c1024 = arith.constant 1024 : index
    %42 = vector.load %arg12[%c0_34, %c1024] : memref<324x1152xbf16, #tpu.memory_space<vmem>>, vector<324x128xbf16>
    tpu.vector_store %arg12[%c0_34, %c1024], %41 {strides = array<i32>} : memref<324x1152xbf16, #tpu.memory_space<vmem>>, vector<324x128xbf16>,
    %c0_35 = arith.constant 0 : index
    %c0_36 = arith.constant 0 : index
    %43 = vector.load %arg12[%c0_35, %c0_36] : memref<324x1152xbf16, #tpu.memory_space<vmem>>, vector<324x1152xbf16>
    %c0_37 = arith.constant 0 : index
    %c0_38 = arith.constant 0 : index
    %44 = vector.load %arg5[%c0_37, %c0_38] : memref<1152x128xbf16, #tpu.memory_space<vmem>>, vector<1152x128xbf16>
    %cst_39 = arith.constant dense<0.000000e+00> : vector<324x128xf32>
    %45 = tpu.matmul %43, %44, %cst_39 {dimension_numbers = #tpu.dot_dimension_numbers<[1], [0], [0], [1], [0, 0, 1, 1], [], []>} : vector<324x1152xbf16>, vector<1152x128xbf16>, vector<324x128xf32> -> vector<324x128xf32>
    %c0_40 = arith.constant 0 : index
    %c0_41 = arith.constant 0 : index
    %46 = vector.load %arg6[%c0_40, %c0_41] : memref<1x128xf32, #tpu.memory_space<vmem>>, vector<1x128xf32>
    %47 = vector.broadcast %46 : vector<1x128xf32> to vector<324x128xf32>
    %48 = arith.addf %45, %47 : vector<324x128xf32>
    %cst_42 = arith.constant 0.000000e+00 : f32
    %49 = vector.broadcast %cst_42 : f32 to vector<324x128xf32>
    %50 = arith.maximumf %48, %49 : vector<324x128xf32>
    %51 = vector.broadcast %0 : vector<324x1xf32> to vector<324x128xf32>
    %52 = arith.mulf %50, %51 : vector<324x128xf32>
    %c0_43 = arith.constant 0 : index
    %c0_44 = arith.constant 0 : index
    %53 = vector.load %arg11[%c0_43, %c0_44] : memref<362x128xf32, #tpu.memory_space<vmem>>, vector<19x128xf32>
    tpu.vector_store %arg11[%c0_43, %c0_44], %1 {strides = array<i32>} : memref<362x128xf32, #tpu.memory_space<vmem>>, vector<19x128xf32>,
    %c343_45 = arith.constant 343 : index
    %c0_46 = arith.constant 0 : index
    %54 = vector.load %arg11[%c343_45, %c0_46] : memref<362x128xf32, #tpu.memory_space<vmem>>, vector<19x128xf32>
    tpu.vector_store %arg11[%c343_45, %c0_46], %1 {strides = array<i32>} : memref<362x128xf32, #tpu.memory_space<vmem>>, vector<19x128xf32>,
    %c19_47 = arith.constant 19 : index
    %c0_48 = arith.constant 0 : index
    %55 = vector.load %arg11[%c19_47, %c0_48] : memref<362x128xf32, #tpu.memory_space<vmem>>, vector<324x128xf32>
    tpu.vector_store %arg11[%c19_47, %c0_48], %52 {strides = array<i32>} : memref<362x128xf32, #tpu.memory_space<vmem>>, vector<324x128xf32>,
    %c0_49 = arith.constant 0 : index
    %c0_50 = arith.constant 0 : index
    %56 = vector.load %arg11[%c0_49, %c0_50] : memref<362x128xf32, #tpu.memory_space<vmem>>, vector<324x128xf32>
    %57 = arith.truncf %56 : vector<324x128xf32> to vector<324x128xbf16>
    %c0_51 = arith.constant 0 : index
    %c0_52 = arith.constant 0 : index
    %58 = vector.load %arg12[%c0_51, %c0_52] : memref<324x1152xbf16, #tpu.memory_space<vmem>>, vector<324x128xbf16>
    tpu.vector_store %arg12[%c0_51, %c0_52], %57 {strides = array<i32>} : memref<324x1152xbf16, #tpu.memory_space<vmem>>, vector<324x128xbf16>,
    %c1_53 = arith.constant 1 : index
    %c0_54 = arith.constant 0 : index
    %59 = vector.load %arg11[%c1_53, %c0_54] : memref<362x128xf32, #tpu.memory_space<vmem>>, vector<324x128xf32>
    %60 = arith.truncf %59 : vector<324x128xf32> to vector<324x128xbf16>
    %c0_55 = arith.constant 0 : index
    %c128_56 = arith.constant 128 : index
    %61 = vector.load %arg12[%c0_55, %c128_56] : memref<324x1152xbf16, #tpu.memory_space<vmem>>, vector<324x128xbf16>
    tpu.vector_store %arg12[%c0_55, %c128_56], %60 {strides = array<i32>} : memref<324x1152xbf16, #tpu.memory_space<vmem>>, vector<324x128xbf16>,
    %c2_57 = arith.constant 2 : index
    %c0_58 = arith.constant 0 : index
    %62 = vector.load %arg11[%c2_57, %c0_58] : memref<362x128xf32, #tpu.memory_space<vmem>>, vector<324x128xf32>
    %63 = arith.truncf %62 : vector<324x128xf32> to vector<324x128xbf16>
    %c0_59 = arith.constant 0 : index
    %c256_60 = arith.constant 256 : index
    %64 = vector.load %arg12[%c0_59, %c256_60] : memref<324x1152xbf16, #tpu.memory_space<vmem>>, vector<324x128xbf16>
    tpu.vector_store %arg12[%c0_59, %c256_60], %63 {strides = array<i32>} : memref<324x1152xbf16, #tpu.memory_space<vmem>>, vector<324x128xbf16>,
    %c18_61 = arith.constant 18 : index
    %c0_62 = arith.constant 0 : index
    %65 = vector.load %arg11[%c18_61, %c0_62] : memref<362x128xf32, #tpu.memory_space<vmem>>, vector<324x128xf32>
    %66 = arith.truncf %65 : vector<324x128xf32> to vector<324x128xbf16>
    %c0_63 = arith.constant 0 : index
    %c384_64 = arith.constant 384 : index
    %67 = vector.load %arg12[%c0_63, %c384_64] : memref<324x1152xbf16, #tpu.memory_space<vmem>>, vector<324x128xbf16>
    tpu.vector_store %arg12[%c0_63, %c384_64], %66 {strides = array<i32>} : memref<324x1152xbf16, #tpu.memory_space<vmem>>, vector<324x128xbf16>,
    %c19_65 = arith.constant 19 : index
    %c0_66 = arith.constant 0 : index
    %68 = vector.load %arg11[%c19_65, %c0_66] : memref<362x128xf32, #tpu.memory_space<vmem>>, vector<324x128xf32>
    %69 = arith.truncf %68 : vector<324x128xf32> to vector<324x128xbf16>
    %c0_67 = arith.constant 0 : index
    %c512_68 = arith.constant 512 : index
    %70 = vector.load %arg12[%c0_67, %c512_68] : memref<324x1152xbf16, #tpu.memory_space<vmem>>, vector<324x128xbf16>
    tpu.vector_store %arg12[%c0_67, %c512_68], %69 {strides = array<i32>} : memref<324x1152xbf16, #tpu.memory_space<vmem>>, vector<324x128xbf16>,
    %c20_69 = arith.constant 20 : index
    %c0_70 = arith.constant 0 : index
    %71 = vector.load %arg11[%c20_69, %c0_70] : memref<362x128xf32, #tpu.memory_space<vmem>>, vector<324x128xf32>
    %72 = arith.truncf %71 : vector<324x128xf32> to vector<324x128xbf16>
    %c0_71 = arith.constant 0 : index
    %c640_72 = arith.constant 640 : index
    %73 = vector.load %arg12[%c0_71, %c640_72] : memref<324x1152xbf16, #tpu.memory_space<vmem>>, vector<324x128xbf16>
    tpu.vector_store %arg12[%c0_71, %c640_72], %72 {strides = array<i32>} : memref<324x1152xbf16, #tpu.memory_space<vmem>>, vector<324x128xbf16>,
    %c36_73 = arith.constant 36 : index
    %c0_74 = arith.constant 0 : index
    %74 = vector.load %arg11[%c36_73, %c0_74] : memref<362x128xf32, #tpu.memory_space<vmem>>, vector<324x128xf32>
    %75 = arith.truncf %74 : vector<324x128xf32> to vector<324x128xbf16>
    %c0_75 = arith.constant 0 : index
    %c768_76 = arith.constant 768 : index
    %76 = vector.load %arg12[%c0_75, %c768_76] : memref<324x1152xbf16, #tpu.memory_space<vmem>>, vector<324x128xbf16>
    tpu.vector_store %arg12[%c0_75, %c768_76], %75 {strides = array<i32>} : memref<324x1152xbf16, #tpu.memory_space<vmem>>, vector<324x128xbf16>,
    %c37_77 = arith.constant 37 : index
    %c0_78 = arith.constant 0 : index
    %77 = vector.load %arg11[%c37_77, %c0_78] : memref<362x128xf32, #tpu.memory_space<vmem>>, vector<324x128xf32>
    %78 = arith.truncf %77 : vector<324x128xf32> to vector<324x128xbf16>
    %c0_79 = arith.constant 0 : index
    %c896_80 = arith.constant 896 : index
    %79 = vector.load %arg12[%c0_79, %c896_80] : memref<324x1152xbf16, #tpu.memory_space<vmem>>, vector<324x128xbf16>
    tpu.vector_store %arg12[%c0_79, %c896_80], %78 {strides = array<i32>} : memref<324x1152xbf16, #tpu.memory_space<vmem>>, vector<324x128xbf16>,
    %c38_81 = arith.constant 38 : index
    %c0_82 = arith.constant 0 : index
    %80 = vector.load %arg11[%c38_81, %c0_82] : memref<362x128xf32, #tpu.memory_space<vmem>>, vector<324x128xf32>
    %81 = arith.truncf %80 : vector<324x128xf32> to vector<324x128xbf16>
    %c0_83 = arith.constant 0 : index
    %c1024_84 = arith.constant 1024 : index
    %82 = vector.load %arg12[%c0_83, %c1024_84] : memref<324x1152xbf16, #tpu.memory_space<vmem>>, vector<324x128xbf16>
    tpu.vector_store %arg12[%c0_83, %c1024_84], %81 {strides = array<i32>} : memref<324x1152xbf16, #tpu.memory_space<vmem>>, vector<324x128xbf16>,
    %c0_85 = arith.constant 0 : index
    %c0_86 = arith.constant 0 : index
    %83 = vector.load %arg12[%c0_85, %c0_86] : memref<324x1152xbf16, #tpu.memory_space<vmem>>, vector<324x1152xbf16>
    %c0_87 = arith.constant 0 : index
    %c0_88 = arith.constant 0 : index
    %84 = vector.load %arg7[%c0_87, %c0_88] : memref<1152x128xbf16, #tpu.memory_space<vmem>>, vector<1152x128xbf16>
    %cst_89 = arith.constant dense<0.000000e+00> : vector<324x128xf32>
    %85 = tpu.matmul %83, %84, %cst_89 {dimension_numbers = #tpu.dot_dimension_numbers<[1], [0], [0], [1], [0, 0, 1, 1], [], []>} : vector<324x1152xbf16>, vector<1152x128xbf16>, vector<324x128xf32> -> vector<324x128xf32>
    %c19_90 = arith.constant 19 : index
    %c0_91 = arith.constant 0 : index
    %86 = vector.load %arg10[%c19_90, %c0_91] : memref<362x128xf32, #tpu.memory_space<vmem>>, vector<324x128xf32>
    %c0_92 = arith.constant 0 : index
    %c0_93 = arith.constant 0 : index
    %87 = vector.load %arg8[%c0_92, %c0_93] : memref<1x128xf32, #tpu.memory_space<vmem>>, vector<1x128xf32>
    %88 = vector.broadcast %87 : vector<1x128xf32> to vector<324x128xf32>
    %89 = arith.addf %85, %88 : vector<324x128xf32>
    %90 = arith.addf %89, %86 : vector<324x128xf32>
    %cst_94 = arith.constant 0.000000e+00 : f32
    %91 = vector.broadcast %cst_94 : f32 to vector<324x128xf32>
    %92 = arith.maximumf %90, %91 : vector<324x128xf32>
    %93 = vector.broadcast %0 : vector<324x1xf32> to vector<324x128xf32>
    %94 = arith.mulf %92, %93 : vector<324x128xf32>
    %cst_95 = arith.constant dense<0.000000e+00> : vector<128xf32>
    %95 = vector.multi_reduction <add>, %94, %cst_95 [0] : vector<324x128xf32> to vector<128xf32>
    %96 = vector.shape_cast %95 : vector<128xf32> to vector<1x128xf32>
    %cst_96 = arith.constant 3.906250e-03 : f32
    %97 = vector.broadcast %cst_96 : f32 to vector<1x128xf32>
    %98 = arith.mulf %96, %97 : vector<1x128xf32>
    %99 = vector.shape_cast %98 : vector<1x128xf32> to vector<1x1x128xf32>
    %c0_97 = arith.constant 0 : index
    %c0_98 = arith.constant 0 : index
    %c0_99 = arith.constant 0 : index
    %100 = vector.load %arg9[%c0_97, %c0_98, %c0_99] : memref<1x1x128xf32, #tpu.memory_space<vmem>>, vector<1x1x128xf32>
    tpu.vector_store %arg9[%c0_97, %c0_98, %c0_99], %99 {strides = array<i32>} : memref<1x1x128xf32, #tpu.memory_space<vmem>>, vector<1x1x128xf32>,
    return
  }
  func.func @transform_0(%arg0: i32) -> (i32, i32, i32) {
    %c0_i32 = arith.constant 0 : i32
    %c0_i32_0 = arith.constant 0 : i32
    %c0_i32_1 = arith.constant 0 : i32
    return %arg0, %c0_i32, %c0_i32_0 : i32, i32, i32
  }
  func.func @transform_1(%arg0: i32) -> (i32, i32) {
    %c0_i32 = arith.constant 0 : i32
    %c0_i32_0 = arith.constant 0 : i32
    %c0_i32_1 = arith.constant 0 : i32
    return %c0_i32, %c0_i32_0 : i32, i32
  }
  func.func @transform_2(%arg0: i32) -> (i32, i32) {
    %c0_i32 = arith.constant 0 : i32
    %c0_i32_0 = arith.constant 0 : i32
    %c0_i32_1 = arith.constant 0 : i32
    return %c0_i32, %c0_i32_0 : i32, i32
  }
  func.func @transform_3(%arg0: i32) -> (i32, i32) {
    %c0_i32 = arith.constant 0 : i32
    %c0_i32_0 = arith.constant 0 : i32
    %c0_i32_1 = arith.constant 0 : i32
    return %c0_i32, %c0_i32_0 : i32, i32
  }
  func.func @transform_4(%arg0: i32) -> (i32, i32) {
    %c0_i32 = arith.constant 0 : i32
    %c0_i32_0 = arith.constant 0 : i32
    %c0_i32_1 = arith.constant 0 : i32
    return %c0_i32, %c0_i32_0 : i32, i32
  }
  func.func @transform_5(%arg0: i32) -> (i32, i32) {
    %c0_i32 = arith.constant 0 : i32
    %c0_i32_0 = arith.constant 0 : i32
    %c0_i32_1 = arith.constant 0 : i32
    return %c0_i32, %c0_i32_0 : i32, i32
  }
  func.func @transform_6(%arg0: i32) -> (i32, i32) {
    %c0_i32 = arith.constant 0 : i32
    %c0_i32_0 = arith.constant 0 : i32
    %c0_i32_1 = arith.constant 0 : i32
    return %c0_i32, %c0_i32_0 : i32, i32
  }
  func.func @transform_7(%arg0: i32) -> (i32, i32) {
    %c0_i32 = arith.constant 0 : i32
    %c0_i32_0 = arith.constant 0 : i32
    %c0_i32_1 = arith.constant 0 : i32
    return %c0_i32, %c0_i32_0 : i32, i32
  }
  func.func @transform_8(%arg0: i32) -> (i32, i32, i32) {
    %c0_i32 = arith.constant 0 : i32
    %c0_i32_0 = arith.constant 0 : i32
    %c0_i32_1 = arith.constant 0 : i32
    return %arg0, %c0_i32, %c0_i32_0 : i32, i32, i32
  }
}

</mosaic_0001>

<llo_original>
// kernel: encoder_forward.1
$region0: #{encoder_forward.1}
  #allocation0 [shape = 'u32[]', space=smem, size = 0x4, offset = 0x4, fixed_abs, tag = 'smem constant byte address 0x4 - core index']
  #allocation1 [shape = 'u32[144,128]{1,0:T(1,128)}', space=vmem, size = 0x12000, scoped, tag = 'internal scratch']
  #allocation2 [shape = 'f32[362,128]{1,0:T(8,128)}', space=vmem, size = 0x2e000, scoped, tag = 'scratch operand']
  #allocation3 [shape = 'f32[362,128]{1,0:T(8,128)}', space=vmem, size = 0x2e000, scoped, tag = 'scratch operand']
  #allocation4 [shape = 'bf16[324,1152]{1,0:T(8,128)(2,1)}', space=vmem, size = 0xb8800, scoped, tag = 'scratch operand']
  %s0 = inlined_call_operand.vmem [shape: bf16[2,324,32], index: 0, kind: input, shape index: {}]
  %s1 = inlined_call_operand.vmem [shape: f32[324,1], index: 1, kind: input, shape index: {}]
  %s2 = inlined_call_operand.vmem [shape: bf16[32,128], index: 2, kind: input, shape index: {}]
  %s3 = inlined_call_operand.vmem [shape: f32[1,128], index: 3, kind: input, shape index: {}]
  %s4 = inlined_call_operand.vmem [shape: bf16[1152,128], index: 4, kind: input, shape index: {}]
  %s5 = inlined_call_operand.vmem [shape: f32[1,128], index: 5, kind: input, shape index: {}]
  %s6 = inlined_call_operand.vmem [shape: bf16[1152,128], index: 6, kind: input, shape index: {}]
  %s7 = inlined_call_operand.vmem [shape: f32[1,128], index: 7, kind: input, shape index: {}]
  %s8 = inlined_call_operand.hbm [shape: f32[2,1,128], index: 8, kind: output, shape index: {}]
  %s9 = sld [smem:[#allocation0]]
  $region65: #{encoder_forward.1} parent=0
    _
  %s11 = ssub.s32 1, %s9
  %s12 = scalar_select 0, %s11, %s9
  $region1: #{encoder_forward.1} parent=0
    #allocation5 [shape = 'u8[1024]{0}', space=vmem, size = 0x400, scoped, tag = 'output window, operand 0']
    #allocation6 [shape = 's32[2]{0}', space=sflag, size = 0x8, scoped, tag = 'scoped memory for encoder_forward.1']
    %13 = vsyncpa [#allocation6], 0
    %s14 = scalar_lea.sflag [#allocation6], 1
    %15 = vsyncpa %s14, 0
    loop: start=0, step=1, limit=4
    $region2: #{encoder_forward.1} parent=1 // loop_pre_header
      _
    $region3: #{encoder_forward.1} parent=1 // loop_header
      %s17 = sphi 0, %s21
      %p18 = scmp.ge.s32.totalorder %s17, 4
      %s27 = sphi 0, %s29
      %s30 = sphi 0, %s27
      %s31 = sphi 0, %s30
      %s47 = sphi 0, %s31
      %s51 = sphi 0, %s51
      %s53 = sphi 0, %s51
      %s54 = sphi 0, %s53
      %s68 = sphi 0, %s54
      %s72 = sphi 0, %s72
      %s74 = sphi 0, %s72
      %s75 = sphi 0, %s74
      %s89 = sphi 0, %s75
      %s93 = sphi 0, %s93
      %s95 = sphi 0, %s93
      %s96 = sphi 0, %s95
      %s110 = sphi 0, %s96
      %s114 = sphi 0, %s114
      %s116 = sphi 0, %s114
      %s117 = sphi 0, %s116
      %s131 = sphi 0, %s117
      %s135 = sphi 0, %s135
      %s137 = sphi 0, %s135
      %s138 = sphi 0, %s137
      %s152 = sphi 0, %s138
      %s156 = sphi 0, %s156
      %s158 = sphi 0, %s156
      %s159 = sphi 0, %s158
      %s173 = sphi 0, %s159
      %s177 = sphi 0, %s177
      %s179 = sphi 0, %s177
      %s180 = sphi 0, %s179
      %s194 = sphi 0, %s180
      %s200 = sphi 0, %s202
      %s203 = sphi 0, %s200
      %s204 = sphi 0, %s203
      %s220 = sphi 0, %s204
    $region4: #{encoder_forward.1} parent=1 // loop_header_branch
      %20 = sbr.rel (%p18) target = $region8
    $region5: #{encoder_forward.1} parent=1 // loop_body
      %s22 = ssub.s32 %s17, 1
      %s23 = ssub.s32 %s17, 2
      %s24 = sadd.s32 %s17, 1
      %s25 = ssub.s32 %s17, %s24
      %p26 = scmp.eq.s32.totalorder %s25, 0
      %s28 = sadd.s32 %s27, 1
      %s29 = scalar_select %p26, %s27, %s28
      %p32 = pneg %p26
      %p33 = scmp.eq.s32.totalorder %s17, 1
      %p34 = por %p32, %p33
      %p35 = scmp.ne.s32.totalorder %s27, %s30
      %p36 = scmp.eq.s32.totalorder %s17, 0
      %p37 = por %p35, %p36
      %p38 = scmp.ne.s32.totalorder %s27, %s30
      %p39 = scmp.eq.s32.totalorder %s22, 1
      %p40 = por %p38, %p39
      %p41 = scmp.ne.s32.totalorder %s30, %s31
      %p42 = scmp.eq.s32.totalorder %s22, 0
      %p43 = por %p41, %p42
      %p44 = scmp.ne.s32.totalorder %s30, %s31
      %p45 = scmp.eq.s32.totalorder %s23, 1
      %p46 = por %p44, %p45
      %p48 = scmp.ne.s32.totalorder %s31, %s47
      %p49 = scmp.eq.s32.totalorder %s23, 0
      %p50 = por %p48, %p49
      %s52 = sadd.s32 %s51, 1
      %p55 = scmp.eq.s32.totalorder %s17, 1
      %p56 = scmp.ne.s32.totalorder %s51, %s53
      %p57 = scmp.eq.s32.totalorder %s17, 0
      %p58 = por %p56, %p57
      %p59 = scmp.ne.s32.totalorder %s51, %s53
      %p60 = scmp.eq.s32.totalorder %s22, 1
      %p61 = por %p59, %p60
      %p62 = scmp.ne.s32.totalorder %s53, %s54
      %p63 = scmp.eq.s32.totalorder %s22, 0
      %p64 = por %p62, %p63
      %p65 = scmp.ne.s32.totalorder %s53, %s54
      %p66 = scmp.eq.s32.totalorder %s23, 1
      %p67 = por %p65, %p66
      %p69 = scmp.ne.s32.totalorder %s54, %s68
      %p70 = scmp.eq.s32.totalorder %s23, 0
      %p71 = por %p69, %p70
      %s73 = sadd.s32 %s72, 1
      %p76 = scmp.eq.s32.totalorder %s17, 1
      %p77 = scmp.ne.s32.totalorder %s72, %s74
      %p78 = scmp.eq.s32.totalorder %s17, 0
      %p79 = por %p77, %p78
      %p80 = scmp.ne.s32.totalorder %s72, %s74
      %p81 = scmp.eq.s32.totalorder %s22, 1
      %p82 = por %p80, %p81
      %p83 = scmp.ne.s32.totalorder %s74, %s75
      %p84 = scmp.eq.s32.totalorder %s22, 0
      %p85 = por %p83, %p84
      %p86 = scmp.ne.s32.totalorder %s74, %s75
      %p87 = scmp.eq.s32.totalorder %s23, 1
      %p88 = por %p86, %p87
      %p90 = scmp.ne.s32.totalorder %s75, %s89
      %p91 = scmp.eq.s32.totalorder %s23, 0
      %p92 = por %p90, %p91
      %s94 = sadd.s32 %s93, 1
      %p97 = scmp.eq.s32.totalorder %s17, 1
      %p98 = scmp.ne.s32.totalorder %s93, %s95
      %p99 = scmp.eq.s32.totalorder %s17, 0
      %p100 = por %p98, %p99
      %p101 = scmp.ne.s32.totalorder %s93, %s95
      %p102 = scmp.eq.s32.totalorder %s22, 1
      %p103 = por %p101, %p102
      %p104 = scmp.ne.s32.totalorder %s95, %s96
      %p105 = scmp.eq.s32.totalorder %s22, 0
      %p106 = por %p104, %p105
      %p107 = scmp.ne.s32.totalorder %s95, %s96
      %p108 = scmp.eq.s32.totalorder %s23, 1
      %p109 = por %p107, %p108
      %p111 = scmp.ne.s32.totalorder %s96, %s110
      %p112 = scmp.eq.s32.totalorder %s23, 0
      %p113 = por %p111, %p112
      %s115 = sadd.s32 %s114, 1
      %p118 = scmp.eq.s32.totalorder %s17, 1
      %p119 = scmp.ne.s32.totalorder %s114, %s116
      %p120 = scmp.eq.s32.totalorder %s17, 0
      %p121 = por %p119, %p120
      %p122 = scmp.ne.s32.totalorder %s114, %s116
      %p123 = scmp.eq.s32.totalorder %s22, 1
      %p124 = por %p122, %p123
      %p125 = scmp.ne.s32.totalorder %s116, %s117
      %p126 = scmp.eq.s32.totalorder %s22, 0
      %p127 = por %p125, %p126
      %p128 = scmp.ne.s32.totalorder %s116, %s117
      %p129 = scmp.eq.s32.totalorder %s23, 1
      %p130 = por %p128, %p129
      %p132 = scmp.ne.s32.totalorder %s117, %s131
      %p133 = scmp.eq.s32.totalorder %s23, 0
      %p134 = por %p132, %p133
      %s136 = sadd.s32 %s135, 1
      %p139 = scmp.eq.s32.totalorder %s17, 1
      %p140 = scmp.ne.s32.totalorder %s135, %s137
      %p141 = scmp.eq.s32.totalorder %s17, 0
      %p142 = por %p140, %p141
      %p143 = scmp.ne.s32.totalorder %s135, %s137
      %p144 = scmp.eq.s32.totalorder %s22, 1
      %p145 = por %p143, %p144
      %p146 = scmp.ne.s32.totalorder %s137, %s138
      %p147 = scmp.eq.s32.totalorder %s22, 0
      %p148 = por %p146, %p147
      %p149 = scmp.ne.s32.totalorder %s137, %s138
      %p150 = scmp.eq.s32.totalorder %s23, 1
      %p151 = por %p149, %p150
      %p153 = scmp.ne.s32.totalorder %s138, %s152
      %p154 = scmp.eq.s32.totalorder %s23, 0
      %p155 = por %p153, %p154
      %s157 = sadd.s32 %s156, 1
      %p160 = scmp.eq.s32.totalorder %s17, 1
      %p161 = scmp.ne.s32.totalorder %s156, %s158
      %p162 = scmp.eq.s32.totalorder %s17, 0
      %p163 = por %p161, %p162
      %p164 = scmp.ne.s32.totalorder %s156, %s158
      %p165 = scmp.eq.s32.totalorder %s22, 1
      %p166 = por %p164, %p165
      %p167 = scmp.ne.s32.totalorder %s158, %s159
      %p168 = scmp.eq.s32.totalorder %s22, 0
      %p169 = por %p167, %p168
      %p170 = scmp.ne.s32.totalorder %s158, %s159
      %p171 = scmp.eq.s32.totalorder %s23, 1
      %p172 = por %p170, %p171
      %p174 = scmp.ne.s32.totalorder %s159, %s173
      %p175 = scmp.eq.s32.totalorder %s23, 0
      %p176 = por %p174, %p175
      %s178 = sadd.s32 %s177, 1
      %p181 = scmp.eq.s32.totalorder %s17, 1
      %p182 = scmp.ne.s32.totalorder %s177, %s179
      %p183 = scmp.eq.s32.totalorder %s17, 0
      %p184 = por %p182, %p183
      %p185 = scmp.ne.s32.totalorder %s177, %s179
      %p186 = scmp.eq.s32.totalorder %s22, 1
      %p187 = por %p185, %p186
      %p188 = scmp.ne.s32.totalorder %s179, %s180
      %p189 = scmp.eq.s32.totalorder %s22, 0
      %p190 = por %p188, %p189
      %p191 = scmp.ne.s32.totalorder %s179, %s180
      %p192 = scmp.eq.s32.totalorder %s23, 1
      %p193 = por %p191, %p192
      %p195 = scmp.ne.s32.totalorder %s180, %s194
      %p196 = scmp.eq.s32.totalorder %s23, 0
      %p197 = por %p195, %p196
      %s198 = ssub.s32 %s17, %s24
      %p199 = scmp.eq.s32.totalorder %s198, 0
      %s201 = sadd.s32 %s200, 1
      %s202 = scalar_select %p199, %s200, %s201
      %p205 = pneg %p199
      %p206 = scmp.eq.s32.totalorder %s17, 1
      %p207 = por %p205, %p206
      %p208 = scmp.ne.s32.totalorder %s200, %s203
      %p209 = scmp.eq.s32.totalorder %s17, 0
      %p210 = por %p208, %p209
      %p211 = scmp.ne.s32.totalorder %s200, %s203
      %p212 = scmp.eq.s32.totalorder %s22, 1
      %p213 = por %p211, %p212
      %p214 = scmp.ne.s32.totalorder %s203, %s204
      %p215 = scmp.eq.s32.totalorder %s22, 0
      %p216 = por %p214, %p215
      %p217 = scmp.ne.s32.totalorder %s203, %s204
      %p218 = scmp.eq.s32.totalorder %s23, 1
      %p219 = por %p217, %p218
      %p221 = scmp.ne.s32.totalorder %s204, %s220
      %p222 = scmp.eq.s32.totalorder %s23, 0
      %p223 = por %p221, %p222
      %p224 = scmp.le.s32.totalorder 1, %s17
      %p225 = scmp.lt.s32.totalorder %s17, 3
      %p226 = pnand %p224, %p225
      %p227 = pneg %p226
      // Predicated region
      $region9: #{encoder_forward.1} parent=5 // pred_check
        _
      $region10: #{encoder_forward.1} parent=5 // pred_check_branch
        %229 = sbr.rel (%p226) target = $region12
      $region11: #{encoder_forward.1} parent=5 // pred_region
        %s230 = ssub.s32 %s17, 1
        // Predicated region
        $region13: #{encoder_forward.1} parent=11 // pred_check
          %p231 = pneg %p64
        $region14: #{encoder_forward.1} parent=11 // pred_check_branch
          %233 = sbr.rel (%p231) target = $region16
        $region15: #{encoder_forward.1} parent=11 // pred_region
          _
        $region16: #{encoder_forward.1} parent=11 // pred_fallthru
          _
        // Predicated region
        $region17: #{encoder_forward.1} parent=11 // pred_check
          %p234 = pneg %p85
        $region18: #{encoder_forward.1} parent=11 // pred_check_branch
          %236 = sbr.rel (%p234) target = $region20
        $region19: #{encoder_forward.1} parent=11 // pred_region
          _
        $region20: #{encoder_forward.1} parent=11 // pred_fallthru
          _
        // Predicated region
        $region21: #{encoder_forward.1} parent=11 // pred_check
          %p237 = pneg %p106
        $region22: #{encoder_forward.1} parent=11 // pred_check_branch
          %239 = sbr.rel (%p237) target = $region24
        $region23: #{encoder_forward.1} parent=11 // pred_region
          _
        $region24: #{encoder_forward.1} parent=11 // pred_fallthru
          _
        // Predicated region
        $region25: #{encoder_forward.1} parent=11 // pred_check
          %p240 = pneg %p127
        $region26: #{encoder_forward.1} parent=11 // pred_check_branch
          %242 = sbr.rel (%p240) target = $region28
        $region27: #{encoder_forward.1} parent=11 // pred_region
          _
        $region28: #{encoder_forward.1} parent=11 // pred_fallthru
          _
        // Predicated region
        $region29: #{encoder_forward.1} parent=11 // pred_check
          %p243 = pneg %p148
        $region30: #{encoder_forward.1} parent=11 // pred_check_branch
          %245 = sbr.rel (%p243) target = $region32
        $region31: #{encoder_forward.1} parent=11 // pred_region
          _
        $region32: #{encoder_forward.1} parent=11 // pred_fallthru
          _
        // Predicated region
        $region33: #{encoder_forward.1} parent=11 // pred_check
          %p246 = pneg %p169
        $region34: #{encoder_forward.1} parent=11 // pred_check_branch
          %248 = sbr.rel (%p246) target = $region36
        $region35: #{encoder_forward.1} parent=11 // pred_region
          _
        $region36: #{encoder_forward.1} parent=11 // pred_fallthru
          _
        // Predicated region
        $region37: #{encoder_forward.1} parent=11 // pred_check
          %p249 = pneg %p190
        $region38: #{encoder_forward.1} parent=11 // pred_check_branch
          %251 = sbr.rel (%p249) target = $region40
        $region39: #{encoder_forward.1} parent=11 // pred_region
          _
        $region40: #{encoder_forward.1} parent=11 // pred_fallthru
          _
      $region12: #{encoder_forward.1} parent=5 // pred_fallthru
        _
      %p252 = scmp.lt.s32.totalorder %s17, 2
      // Predicated region
      $region41: #{encoder_forward.1} parent=5 // pred_check
        %p253 = pneg %p252
      $region42: #{encoder_forward.1} parent=5 // pred_check_branch
        %255 = sbr.rel (%p253) target = $region44
      $region43: #{encoder_forward.1} parent=5 // pred_region
        // Predicated region
        $region45: #{encoder_forward.1} parent=43 // pred_check
          %p256 = pneg %p37
        $region46: #{encoder_forward.1} parent=43 // pred_check_branch
          %258 = sbr.rel (%p256) target = $region48
        $region47: #{encoder_forward.1} parent=43 // pred_region
          %p259 = scmp.lt.s32.totalorder %s17, 1
          %s260 = scalar_select %p259, %s17, 1
          %s261 = smul.addr %s260, 41
          %s262 = smul.addr %s261, 4
          %s263 = scalar_lea.vmem %s0, %s262
        $region48: #{encoder_forward.1} parent=43 // pred_fallthru
          _
      $region44: #{encoder_forward.1} parent=5 // pred_fallthru
        _
      %p264 = scmp.le.s32.totalorder 1, %s17
      %p265 = scmp.lt.s32.totalorder %s17, 3
      %p266 = pnand %p264, %p265
      %p267 = pneg %p266
      // Predicated region
      $region49: #{encoder_forward.1} parent=5 // pred_check
        _
      $region50: #{encoder_forward.1} parent=5 // pred_check_branch
        %269 = sbr.rel (%p266) target = $region52
      $region51: #{encoder_forward.1} parent=5 // pred_region
        %s270 = ssub.s32 %s17, 1
        %p271 = scmp.lt.s32.totalorder %s22, 1
        %s272 = scalar_select %p271, %s22, 1
        %s273 = smul.addr %s272, 41
        %s274 = smul.addr %s273, 4
        %s275 = scalar_lea.vmem %s0, %s274
        %p276 = pneg %p43
        %p277 = pneg %p40
        %p278 = pneg %p64
        %p279 = pneg %p61
        %p280 = pneg %p85
        %p281 = pneg %p82
        %p282 = pneg %p106
        %p283 = pneg %p103
        %p284 = pneg %p127
        %p285 = pneg %p124
        %p286 = pneg %p148
        %p287 = pneg %p145
        %p288 = pneg %p169
        %p289 = pneg %p166
        %p290 = pneg %p190
        %p291 = pneg %p187
        %p292 = pneg %p216
        %p293 = pneg %p213
        %s294 = sand.u32 %s203, 1
        %s295 = scalar_lea.sflag [#allocation6], %s294
        %s296 = sand.u32 %s203, 1
        %s297 = scalar_lea.vmem [#allocation5], %s296
        %p298 = scmp.lt.s32.totalorder %s22, 1
        %s299 = scalar_select %p298, %s22, 1
        %s300 = smul.addr %s299, 41
        %s301 = smul.addr %s300, 4
        %s302 = scalar_lea.vmem %s0, %s301
        %v304 = vld [vmem:[%s1] sm:$0xff]
        %v305 = vld [vmem:[%s1 + $0x8] sm:$0xff]
        %v306 = vld [vmem:[%s1 + $0x10] sm:$0xff]
        %v307 = vld [vmem:[%s1 + $0x18] sm:$0xff]
        %v308 = vld [vmem:[%s1 + $0x20] sm:$0xff]
        %v309 = vld [vmem:[%s1 + $0x28] sm:$0xff]
        %v310 = vld [vmem:[%s1 + $0x30] sm:$0xff]
        %v311 = vld [vmem:[%s1 + $0x38] sm:$0xff]
        %v312 = vld [vmem:[%s1 + $0x40] sm:$0xff]
        %v313 = vld [vmem:[%s1 + $0x48] sm:$0xff]
        %v314 = vld [vmem:[%s1 + $0x50] sm:$0xff]
        %v315 = vld [vmem:[%s1 + $0x58] sm:$0xff]
        %v316 = vld [vmem:[%s1 + $0x60] sm:$0xff]
        %v317 = vld [vmem:[%s1 + $0x68] sm:$0xff]
        %v318 = vld [vmem:[%s1 + $0x70] sm:$0xff]
        %v319 = vld [vmem:[%s1 + $0x78] sm:$0xff]
        %v320 = vld [vmem:[%s1 + $0x80] sm:$0xff]
        %v321 = vld [vmem:[%s1 + $0x88] sm:$0xff]
        %v322 = vld [vmem:[%s1 + $0x90] sm:$0xff]
        %v323 = vld [vmem:[%s1 + $0x98] sm:$0xff]
        %v324 = vld [vmem:[%s1 + $0xa0] sm:$0xff]
        %v325 = vld [vmem:[%s1 + $0xa8] sm:$0xff]
        %v326 = vld [vmem:[%s1 + $0xb0] sm:$0xff]
        %v327 = vld [vmem:[%s1 + $0xb8] sm:$0xff]
        %v328 = vld [vmem:[%s1 + $0xc0] sm:$0xff]
        %v329 = vld [vmem:[%s1 + $0xc8] sm:$0xff]
        %v330 = vld [vmem:[%s1 + $0xd0] sm:$0xff]
        %v331 = vld [vmem:[%s1 + $0xd8] sm:$0xff]
        %v332 = vld [vmem:[%s1 + $0xe0] sm:$0xff]
        %v333 = vld [vmem:[%s1 + $0xe8] sm:$0xff]
        %v334 = vld [vmem:[%s1 + $0xf0] sm:$0xff]
        %v335 = vld [vmem:[%s1 + $0xf8] sm:$0xff]
        %v336 = vld [vmem:[%s1 + $0x100] sm:$0xff]
        %v337 = vld [vmem:[%s1 + $0x108] sm:$0xff]
        %v338 = vld [vmem:[%s1 + $0x110] sm:$0xff]
        %v339 = vld [vmem:[%s1 + $0x118] sm:$0xff]
        %v340 = vld [vmem:[%s1 + $0x120] sm:$0xff]
        %v341 = vld [vmem:[%s1 + $0x128] sm:$0xff]
        %v342 = vld [vmem:[%s1 + $0x130] sm:$0xff]
        %v343 = vld [vmem:[%s1 + $0x138] sm:$0xff]
        %v344 = vld [vmem:[%s1 + $0x140] sm:$0xf]
        %v345 = vld [vmem:[%s302] sm:$0xf]
        %v346 = vld [vmem:[%s302 + $0x4] sm:$0xf]
        %v347 = vld [vmem:[%s302 + $0x8] sm:$0xf]
        %v348 = vld [vmem:[%s302 + $0xc] sm:$0xf]
        %v349 = vld [vmem:[%s302 + $0x10] sm:$0xf]
        %v350 = vld [vmem:[%s302 + $0x14] sm:$0xf]
        %v351 = vld [vmem:[%s302 + $0x18] sm:$0xf]
        %v352 = vld [vmem:[%s302 + $0x1c] sm:$0xf]
        %v353 = vld [vmem:[%s302 + $0x20] sm:$0xf]
        %v354 = vld [vmem:[%s302 + $0x24] sm:$0xf]
        %v355 = vld [vmem:[%s302 + $0x28] sm:$0xf]
        %v356 = vld [vmem:[%s302 + $0x2c] sm:$0xf]
        %v357 = vld [vmem:[%s302 + $0x30] sm:$0xf]
        %v358 = vld [vmem:[%s302 + $0x34] sm:$0xf]
        %v359 = vld [vmem:[%s302 + $0x38] sm:$0xf]
        %v360 = vld [vmem:[%s302 + $0x3c] sm:$0xf]
        %v361 = vld [vmem:[%s302 + $0x40] sm:$0xf]
        %v362 = vld [vmem:[%s302 + $0x44] sm:$0xf]
        %v363 = vld [vmem:[%s302 + $0x48] sm:$0xf]
        %v364 = vld [vmem:[%s302 + $0x4c] sm:$0xf]
        %v365 = vld [vmem:[%s302 + $0x50] sm:$0xf]
        %v366 = vld [vmem:[%s302 + $0x54] sm:$0xf]
        %v367 = vld [vmem:[%s302 + $0x58] sm:$0xf]
        %v368 = vld [vmem:[%s302 + $0x5c] sm:$0xf]
        %v369 = vld [vmem:[%s302 + $0x60] sm:$0xf]
        %v370 = vld [vmem:[%s302 + $0x64] sm:$0xf]
        %v371 = vld [vmem:[%s302 + $0x68] sm:$0xf]
        %v372 = vld [vmem:[%s302 + $0x6c] sm:$0xf]
        %v373 = vld [vmem:[%s302 + $0x70] sm:$0xf]
        %v374 = vld [vmem:[%s302 + $0x74] sm:$0xf]
        %v375 = vld [vmem:[%s302 + $0x78] sm:$0xf]
        %v376 = vld [vmem:[%s302 + $0x7c] sm:$0xf]
        %v377 = vld [vmem:[%s302 + $0x80] sm:$0xf]
        %v378 = vld [vmem:[%s302 + $0x84] sm:$0xf]
        %v379 = vld [vmem:[%s302 + $0x88] sm:$0xf]
        %v380 = vld [vmem:[%s302 + $0x8c] sm:$0xf]
        %v381 = vld [vmem:[%s302 + $0x90] sm:$0xf]
        %v382 = vld [vmem:[%s302 + $0x94] sm:$0xf]
        %v383 = vld [vmem:[%s302 + $0x98] sm:$0xf]
        %v384 = vld [vmem:[%s302 + $0x9c] sm:$0xf]
        %v385 = vld [vmem:[%s302 + $0xa0] sm:$0x3]
        %v386 = vld [vmem:[%s2] sm:$0xf]
        %v387 = vld [vmem:[%s2 + $0x4] sm:$0xf]
        %v388 = vld [vmem:[%s2 + $0x8] sm:$0xf]
        %v389 = vld [vmem:[%s2 + $0xc] sm:$0xf]
        %v390 = vld [vmem:[%s3] sm:$0x1]
        %v392 = vlaneseq
        %v393 = vshrl.u32 %v392, 7
        %v394 = vsub.s32 0, %v393
        %v395 = vrot.slane %v390, %v394
        %v438 = vunpack.c.l.b16 %v345
        %v439 = vunpack.c.l.b16 %v346
        %v440 = vunpack.c.l.b16 %v347
        %v441 = vunpack.c.l.b16 %v348
        %v442 = vunpack.c.l.b16 %v349
        %v443 = vunpack.c.l.b16 %v350
        %v444 = vunpack.c.l.b16 %v351
        %v445 = vunpack.c.l.b16 %v352
        %v446 = vunpack.c.l.b16 %v353
        %v447 = vunpack.c.l.b16 %v354
        %v448 = vunpack.c.l.b16 %v355
        %v449 = vunpack.c.l.b16 %v356
        %v450 = vunpack.c.l.b16 %v357
        %v451 = vunpack.c.l.b16 %v358
        %v452 = vunpack.c.l.b16 %v359
        %v453 = vunpack.c.l.b16 %v360
        %v454 = vunpack.c.l.b16 %v361
        %v455 = vunpack.c.l.b16 %v362
        %v456 = vunpack.c.l.b16 %v363
        %v457 = vunpack.c.l.b16 %v364
        %v458 = vunpack.c.l.b16 %v365
        %v459 = vunpack.c.l.b16 %v366
        %v460 = vunpack.c.l.b16 %v367
        %v461 = vunpack.c.l.b16 %v368
        %v462 = vunpack.c.l.b16 %v369
        %v463 = vunpack.c.l.b16 %v370
        %v464 = vunpack.c.l.b16 %v371
        %v465 = vunpack.c.l.b16 %v372
        %v466 = vunpack.c.l.b16 %v373
        %v467 = vunpack.c.l.b16 %v374
        %v468 = vunpack.c.l.b16 %v375
        %v469 = vunpack.c.l.b16 %v376
        %v470 = vunpack.c.l.b16 %v377
        %v471 = vunpack.c.l.b16 %v378
        %v472 = vunpack.c.l.b16 %v379
        %v473 = vunpack.c.l.b16 %v380
        %v474 = vunpack.c.l.b16 %v381
        %v475 = vunpack.c.l.b16 %v382
        %v476 = vunpack.c.l.b16 %v383
        %v477 = vunpack.c.l.b16 %v384
        %v478 = vunpack.c.l.b16 %v385
        %v479 = vpack.c.b16 %v439, %v438
        %v480 = vpack.c.b16 %v441, %v440
        %v481 = vpack.c.b16 %v443, %v442
        %v482 = vpack.c.b16 %v445, %v444
        %v483 = vpack.c.b16 %v447, %v446
        %v484 = vpack.c.b16 %v449, %v448
        %v485 = vpack.c.b16 %v451, %v450
        %v486 = vpack.c.b16 %v453, %v452
        %v487 = vpack.c.b16 %v455, %v454
        %v488 = vpack.c.b16 %v457, %v456
        %v489 = vpack.c.b16 %v459, %v458
        %v490 = vpack.c.b16 %v461, %v460
        %v491 = vpack.c.b16 %v463, %v462
        %v492 = vpack.c.b16 %v465, %v464
        %v493 = vpack.c.b16 %v467, %v466
        %v494 = vpack.c.b16 %v469, %v468
        %v495 = vpack.c.b16 %v471, %v470
        %v496 = vpack.c.b16 %v473, %v472
        %v497 = vpack.c.b16 %v475, %v474
        %v498 = vpack.c.b16 %v477, %v476
        %v499 = vpack.c.b16 %v478, %v478
        %v504 = vunpack.c.l.b16 %v386
        %v505 = vunpack.c.l.b16 %v387
        %v506 = vunpack.c.l.b16 %v388
        %v507 = vunpack.c.l.b16 %v389
        %v508 = vpack.c.b16 %v505, %v504
        %v509 = vpack.c.b16 %v507, %v506
        %vm512 = vcmask 261120
        %v514 = vsel %vm512, %v479, 0
        %v517 = vsel %vm512, %v480, 0
        %v520 = vsel %vm512, %v481, 0
        %v523 = vsel %vm512, %v482, 0
        %v526 = vsel %vm512, %v483, 0
        %v529 = vsel %vm512, %v484, 0
        %v532 = vsel %vm512, %v485, 0
        %v535 = vsel %vm512, %v486, 0
        %v538 = vsel %vm512, %v487, 0
        %v541 = vsel %vm512, %v488, 0
        %v544 = vsel %vm512, %v489, 0
        %v547 = vsel %vm512, %v490, 0
        %v550 = vsel %vm512, %v491, 0
        %v553 = vsel %vm512, %v492, 0
        %v556 = vsel %vm512, %v493, 0
        %v559 = vsel %vm512, %v494, 0
        %v562 = vsel %vm512, %v495, 0
        %v565 = vsel %vm512, %v496, 0
        %v568 = vsel %vm512, %v497, 0
        %v571 = vsel %vm512, %v498, 0
        %v574 = vsel %vm512, %v499, 0
        %576 = vmatprep.subr.bf16.mxu0 0
        %577 = vmatpush1.bf16.msra.mxu0 0
        %578 = vmatprep.subr.bf16.mxu0 0
        %579 = vmatpush1.bf16.msra.mxu0 0
        %580 = vmatprep.subr.bf16.mxu0 0
        %581 = vmatpush1.bf16.msra.mxu0 0
        %582 = vmatprep.subr.bf16.mxu0 0
        %583 = vmatpush1.bf16.msra.mxu0 0
        %584 = vmatprep.subr.bf16.mxu0 0
        %585 = vmatpush1.bf16.msra.mxu0 0
        %586 = vmatprep.subr.bf16.mxu0 0
        %587 = vmatpush1.bf16.msra.mxu0 0
        %588 = vmatprep.subr.bf16.mxu0 0
        %589 = vmatpush1.bf16.msra.mxu0 %v509
        %590 = vmatprep.subr.bf16.mxu0 0
        %591 = vmatpush1.bf16.msra.mxu0 %v508
        %592 = vmatprep.subr.bf16.mxu0 0
        %593 = vmatpush2.bf16.msra.mxu0 0
        %594 = vmatprep.subr.bf16.mxu0 0
        %595 = vmatpush2.bf16.msra.mxu0 0
        %596 = vmatprep.subr.bf16.mxu0 0
        %597 = vmatpush2.bf16.msra.mxu0 0
        %598 = vmatprep.subr.bf16.mxu0 0
        %599 = vmatpush2.bf16.msra.mxu0 0
        %600 = vmatprep.subr.bf16.mxu0 0
        %601 = vmatpush2.bf16.msra.mxu0 0
        %602 = vmatprep.subr.bf16.mxu0 0
        %603 = vmatpush2.bf16.msra.mxu0 0
        %604 = vmatprep.subr.bf16.mxu0 0
        %605 = vmatpush2.bf16.msra.mxu0 0
        %606 = vmatprep.subr.bf16.mxu0 0
        %607 = vmatpush2.bf16.msra.mxu0 0
        %608 = vmatprep.mubr.bf16.mxu0 0
        %609 = vmatmul.mubr.bf16.gmra.mxu0 %v514
        %v610 = vpop.f32.mrf.mxu0
        %v611 = vadd.f32 %v395, %v610
        %v612 = vpop.f32.mrf.mxu0
        %v613 = vpop.f32.mrf.mxu0
        %v614 = vadd.f32 %v395, %v613
        %v615 = vpop.f32.mrf.mxu0
        %616 = vmatprep.mubr.bf16.mxu0 0
        %617 = vmatmul.mubr.bf16.gmra.mxu0 %v517
        %v618 = vpop.f32.mrf.mxu0
        %v619 = vadd.f32 %v395, %v618
        %v620 = vpop.f32.mrf.mxu0
        %v621 = vpop.f32.mrf.mxu0
        %v622 = vadd.f32 %v395, %v621
        %v623 = vpop.f32.mrf.mxu0
        %624 = vmatprep.mubr.bf16.mxu0 0
        %625 = vmatmul.mubr.bf16.gmra.mxu0 %v520
        %v626 = vpop.f32.mrf.mxu0
        %v627 = vadd.f32 %v395, %v626
        %v628 = vpop.f32.mrf.mxu0
        %v629 = vpop.f32.mrf.mxu0
        %v630 = vadd.f32 %v395, %v629
        %v631 = vpop.f32.mrf.mxu0
        %632 = vmatprep.mubr.bf16.mxu0 0
        %633 = vmatmul.mubr.bf16.gmra.mxu0 %v523
        %v634 = vpop.f32.mrf.mxu0
        %v635 = vadd.f32 %v395, %v634
        %v636 = vpop.f32.mrf.mxu0
        %v637 = vpop.f32.mrf.mxu0
        %v638 = vadd.f32 %v395, %v637
        %v639 = vpop.f32.mrf.mxu0
        %640 = vmatprep.mubr.bf16.mxu0 0
        %641 = vmatmul.mubr.bf16.gmra.mxu0 %v526
        %v642 = vpop.f32.mrf.mxu0
        %v643 = vadd.f32 %v395, %v642
        %v644 = vpop.f32.mrf.mxu0
        %v645 = vpop.f32.mrf.mxu0
        %v646 = vadd.f32 %v395, %v645
        %v647 = vpop.f32.mrf.mxu0
        %648 = vmatprep.mubr.bf16.mxu0 0
        %649 = vmatmul.mubr.bf16.gmra.mxu0 %v529
        %v650 = vpop.f32.mrf.mxu0
        %v651 = vadd.f32 %v395, %v650
        %v652 = vpop.f32.mrf.mxu0
        %v653 = vpop.f32.mrf.mxu0
        %v654 = vadd.f32 %v395, %v653
        %v655 = vpop.f32.mrf.mxu0
        %656 = vmatprep.mubr.bf16.mxu0 0
        %657 = vmatmul.mubr.bf16.gmra.mxu0 %v532
        %v658 = vpop.f32.mrf.mxu0
        %v659 = vadd.f32 %v395, %v658
        %v660 = vpop.f32.mrf.mxu0
        %v661 = vpop.f32.mrf.mxu0
        %v662 = vadd.f32 %v395, %v661
        %v663 = vpop.f32.mrf.mxu0
        %664 = vmatprep.mubr.bf16.mxu0 0
        %665 = vmatmul.mubr.bf16.gmra.mxu0 %v535
        %v666 = vpop.f32.mrf.mxu0
        %v667 = vadd.f32 %v395, %v666
        %v668 = vpop.f32.mrf.mxu0
        %v669 = vpop.f32.mrf.mxu0
        %v670 = vadd.f32 %v395, %v669
        %v671 = vpop.f32.mrf.mxu0
        %672 = vmatprep.mubr.bf16.mxu0 0
        %673 = vmatmul.mubr.bf16.gmra.mxu0 %v538
        %v674 = vpop.f32.mrf.mxu0
        %v675 = vadd.f32 %v395, %v674
        %v676 = vpop.f32.mrf.mxu0
        %v677 = vpop.f32.mrf.mxu0
        %v678 = vadd.f32 %v395, %v677
        %v679 = vpop.f32.mrf.mxu0
        %680 = vmatprep.mubr.bf16.mxu0 0
        %681 = vmatmul.mubr.bf16.gmra.mxu0 %v541
        %v682 = vpop.f32.mrf.mxu0
        %v683 = vadd.f32 %v395, %v682
        %v684 = vpop.f32.mrf.mxu0
        %v685 = vpop.f32.mrf.mxu0
        %v686 = vadd.f32 %v395, %v685
        %v687 = vpop.f32.mrf.mxu0
        %688 = vmatprep.mubr.bf16.mxu0 0
        %689 = vmatmul.mubr.bf16.gmra.mxu0 %v544
        %v690 = vpop.f32.mrf.mxu0
        %v691 = vadd.f32 %v395, %v690
        %v692 = vpop.f32.mrf.mxu0
        %v693 = vpop.f32.mrf.mxu0
        %v694 = vadd.f32 %v395, %v693
        %v695 = vpop.f32.mrf.mxu0
        %696 = vmatprep.mubr.bf16.mxu0 0
        %697 = vmatmul.mubr.bf16.gmra.mxu0 %v547
        %v698 = vpop.f32.mrf.mxu0
        %v699 = vadd.f32 %v395, %v698
        %v700 = vpop.f32.mrf.mxu0
        %v701 = vpop.f32.mrf.mxu0
        %v702 = vadd.f32 %v395, %v701
        %v703 = vpop.f32.mrf.mxu0
        %704 = vmatprep.mubr.bf16.mxu0 0
        %705 = vmatmul.mubr.bf16.gmra.mxu0 %v550
        %v706 = vpop.f32.mrf.mxu0
        %v707 = vadd.f32 %v395, %v706
        %v708 = vpop.f32.mrf.mxu0
        %v709 = vpop.f32.mrf.mxu0
        %v710 = vadd.f32 %v395, %v709
        %v711 = vpop.f32.mrf.mxu0
        %712 = vmatprep.mubr.bf16.mxu0 0
        %713 = vmatmul.mubr.bf16.gmra.mxu0 %v553
        %v714 = vpop.f32.mrf.mxu0
        %v715 = vadd.f32 %v395, %v714
        %v716 = vpop.f32.mrf.mxu0
        %v717 = vpop.f32.mrf.mxu0
        %v718 = vadd.f32 %v395, %v717
        %v719 = vpop.f32.mrf.mxu0
        %720 = vmatprep.mubr.bf16.mxu0 0
        %721 = vmatmul.mubr.bf16.gmra.mxu0 %v556
        %v722 = vpop.f32.mrf.mxu0
        %v723 = vadd.f32 %v395, %v722
        %v724 = vpop.f32.mrf.mxu0
        %v725 = vpop.f32.mrf.mxu0
        %v726 = vadd.f32 %v395, %v725
        %v727 = vpop.f32.mrf.mxu0
        %728 = vmatprep.mubr.bf16.mxu0 0
        %729 = vmatmul.mubr.bf16.gmra.mxu0 %v559
        %v730 = vpop.f32.mrf.mxu0
        %v731 = vadd.f32 %v395, %v730
        %v732 = vpop.f32.mrf.mxu0
        %v733 = vpop.f32.mrf.mxu0
        %v734 = vadd.f32 %v395, %v733
        %v735 = vpop.f32.mrf.mxu0
        %736 = vmatprep.mubr.bf16.mxu0 0
        %737 = vmatmul.mubr.bf16.gmra.mxu0 %v562
        %v738 = vpop.f32.mrf.mxu0
        %v739 = vadd.f32 %v395, %v738
        %v740 = vpop.f32.mrf.mxu0
        %v741 = vpop.f32.mrf.mxu0
        %v742 = vadd.f32 %v395, %v741
        %v743 = vpop.f32.mrf.mxu0
        %744 = vmatprep.mubr.bf16.mxu0 0
        %745 = vmatmul.mubr.bf16.gmra.mxu0 %v565
        %v746 = vpop.f32.mrf.mxu0
        %v747 = vadd.f32 %v395, %v746
        %v748 = vpop.f32.mrf.mxu0
        %v749 = vpop.f32.mrf.mxu0
        %v750 = vadd.f32 %v395, %v749
        %v751 = vpop.f32.mrf.mxu0
        %752 = vmatprep.mubr.bf16.mxu0 0
        %753 = vmatmul.mubr.bf16.gmra.mxu0 %v568
        %v754 = vpop.f32.mrf.mxu0
        %v755 = vadd.f32 %v395, %v754
        %v756 = vpop.f32.mrf.mxu0
        %v757 = vpop.f32.mrf.mxu0
        %v758 = vadd.f32 %v395, %v757
        %v759 = vpop.f32.mrf.mxu0
        %760 = vmatprep.mubr.bf16.mxu0 0
        %761 = vmatmul.mubr.bf16.gmra.mxu0 %v571
        %v762 = vpop.f32.mrf.mxu0
        %v763 = vadd.f32 %v395, %v762
        %v764 = vpop.f32.mrf.mxu0
        %v765 = vpop.f32.mrf.mxu0
        %v766 = vadd.f32 %v395, %v765
        %v767 = vpop.f32.mrf.mxu0
        %768 = vmatprep.mubr.bf16.mxu0 0
        %769 = vmatmul.mubr.bf16.gmra.mxu0 %v574
        %v770 = vpop.f32.mrf.mxu0
        %v771 = vadd.f32 %v395, %v770
        %v772 = vpop.f32.mrf.mxu0
        %v773 = vpop.f32.mrf.mxu0
        %v774 = vpop.f32.mrf.mxu0
        %775 = vdwg.mxu0
        %v776 = vmax.f32 %v611, 0.0
        %v777 = vmax.f32 %v614, 0.0
        %v778 = vmax.f32 %v619, 0.0
        %v779 = vmax.f32 %v622, 0.0
        %v780 = vmax.f32 %v627, 0.0
        %v781 = vmax.f32 %v630, 0.0
        %v782 = vmax.f32 %v635, 0.0
        %v783 = vmax.f32 %v638, 0.0
        %v784 = vmax.f32 %v643, 0.0
        %v785 = vmax.f32 %v646, 0.0
        %v786 = vmax.f32 %v651, 0.0
        %v787 = vmax.f32 %v654, 0.0
        %v788 = vmax.f32 %v659, 0.0
        %v789 = vmax.f32 %v662, 0.0
        %v790 = vmax.f32 %v667, 0.0
        %v791 = vmax.f32 %v670, 0.0
        %v792 = vmax.f32 %v675, 0.0
        %v793 = vmax.f32 %v678, 0.0
        %v794 = vmax.f32 %v683, 0.0
        %v795 = vmax.f32 %v686, 0.0
        %v796 = vmax.f32 %v691, 0.0
        %v797 = vmax.f32 %v694, 0.0
        %v798 = vmax.f32 %v699, 0.0
        %v799 = vmax.f32 %v702, 0.0
        %v800 = vmax.f32 %v707, 0.0
        %v801 = vmax.f32 %v710, 0.0
        %v802 = vmax.f32 %v715, 0.0
        %v803 = vmax.f32 %v718, 0.0
        %v804 = vmax.f32 %v723, 0.0
        %v805 = vmax.f32 %v726, 0.0
        %v806 = vmax.f32 %v731, 0.0
        %v807 = vmax.f32 %v734, 0.0
        %v808 = vmax.f32 %v739, 0.0
        %v809 = vmax.f32 %v742, 0.0
        %v810 = vmax.f32 %v747, 0.0
        %v811 = vmax.f32 %v750, 0.0
        %v812 = vmax.f32 %v755, 0.0
        %v813 = vmax.f32 %v758, 0.0
        %v814 = vmax.f32 %v763, 0.0
        %v815 = vmax.f32 %v766, 0.0
        %v816 = vmax.f32 %v771, 0.0
        %818 = vset.pattern.permute.xlu0 0
        %819 = vperm.xlu0 %818, %v304
        %v820 = vpop.permute.xlu0 %819
        %823 = vset.pattern.permute.xlu0 0
        %824 = vperm.xlu0 %823, %v305
        %v825 = vpop.permute.xlu0 %824
        %828 = vset.pattern.permute.xlu0 0
        %829 = vperm.xlu0 %828, %v306
        %v830 = vpop.permute.xlu0 %829
        %833 = vset.pattern.permute.xlu0 0
        %834 = vperm.xlu0 %833, %v307
        %v835 = vpop.permute.xlu0 %834
        %838 = vset.pattern.permute.xlu0 0
        %839 = vperm.xlu0 %838, %v308
        %v840 = vpop.permute.xlu0 %839
        %843 = vset.pattern.permute.xlu0 0
        %844 = vperm.xlu0 %843, %v309
        %v845 = vpop.permute.xlu0 %844
        %848 = vset.pattern.permute.xlu0 0
        %849 = vperm.xlu0 %848, %v310
        %v850 = vpop.permute.xlu0 %849
        %853 = vset.pattern.permute.xlu0 0
        %854 = vperm.xlu0 %853, %v311
        %v855 = vpop.permute.xlu0 %854
        %858 = vset.pattern.permute.xlu0 0
        %859 = vperm.xlu0 %858, %v312
        %v860 = vpop.permute.xlu0 %859
        %863 = vset.pattern.permute.xlu0 0
        %864 = vperm.xlu0 %863, %v313
        %v865 = vpop.permute.xlu0 %864
        %868 = vset.pattern.permute.xlu0 0
        %869 = vperm.xlu0 %868, %v314
        %v870 = vpop.permute.xlu0 %869
        %873 = vset.pattern.permute.xlu0 0
        %874 = vperm.xlu0 %873, %v315
        %v875 = vpop.permute.xlu0 %874
        %878 = vset.pattern.permute.xlu0 0
        %879 = vperm.xlu0 %878, %v316
        %v880 = vpop.permute.xlu0 %879
        %883 = vset.pattern.permute.xlu0 0
        %884 = vperm.xlu0 %883, %v317
        %v885 = vpop.permute.xlu0 %884
        %888 = vset.pattern.permute.xlu0 0
        %889 = vperm.xlu0 %888, %v318
        %v890 = vpop.permute.xlu0 %889
        %893 = vset.pattern.permute.xlu0 0
        %894 = vperm.xlu0 %893, %v319
        %v895 = vpop.permute.xlu0 %894
        %898 = vset.pattern.permute.xlu0 0
        %899 = vperm.xlu0 %898, %v320
        %v900 = vpop.permute.xlu0 %899
        %903 = vset.pattern.permute.xlu0 0
        %904 = vperm.xlu0 %903, %v321
        %v905 = vpop.permute.xlu0 %904
        %908 = vset.pattern.permute.xlu0 0
        %909 = vperm.xlu0 %908, %v322
        %v910 = vpop.permute.xlu0 %909
        %913 = vset.pattern.permute.xlu0 0
        %914 = vperm.xlu0 %913, %v323
        %v915 = vpop.permute.xlu0 %914
        %918 = vset.pattern.permute.xlu0 0
        %919 = vperm.xlu0 %918, %v324
        %v920 = vpop.permute.xlu0 %919
        %923 = vset.pattern.permute.xlu0 0
        %924 = vperm.xlu0 %923, %v325
        %v925 = vpop.permute.xlu0 %924
        %928 = vset.pattern.permute.xlu0 0
        %929 = vperm.xlu0 %928, %v326
        %v930 = vpop.permute.xlu0 %929
        %933 = vset.pattern.permute.xlu0 0
        %934 = vperm.xlu0 %933, %v327
        %v935 = vpop.permute.xlu0 %934
        %938 = vset.pattern.permute.xlu0 0
        %939 = vperm.xlu0 %938, %v328
        %v940 = vpop.permute.xlu0 %939
        %943 = vset.pattern.permute.xlu0 0
        %944 = vperm.xlu0 %943, %v329
        %v945 = vpop.permute.xlu0 %944
        %948 = vset.pattern.permute.xlu0 0
        %949 = vperm.xlu0 %948, %v330
        %v950 = vpop.permute.xlu0 %949
        %953 = vset.pattern.permute.xlu0 0
        %954 = vperm.xlu0 %953, %v331
        %v955 = vpop.permute.xlu0 %954
        %958 = vset.pattern.permute.xlu0 0
        %959 = vperm.xlu0 %958, %v332
        %v960 = vpop.permute.xlu0 %959
        %963 = vset.pattern.permute.xlu0 0
        %964 = vperm.xlu0 %963, %v333
        %v965 = vpop.permute.xlu0 %964
        %968 = vset.pattern.permute.xlu0 0
        %969 = vperm.xlu0 %968, %v334
        %v970 = vpop.permute.xlu0 %969
        %973 = vset.pattern.permute.xlu0 0
        %974 = vperm.xlu0 %973, %v335
        %v975 = vpop.permute.xlu0 %974
        %978 = vset.pattern.permute.xlu0 0
        %979 = vperm.xlu0 %978, %v336
        %v980 = vpop.permute.xlu0 %979
        %983 = vset.pattern.permute.xlu0 0
        %984 = vperm.xlu0 %983, %v337
        %v985 = vpop.permute.xlu0 %984
        %988 = vset.pattern.permute.xlu0 0
        %989 = vperm.xlu0 %988, %v338
        %v990 = vpop.permute.xlu0 %989
        %993 = vset.pattern.permute.xlu0 0
        %994 = vperm.xlu0 %993, %v339
        %v995 = vpop.permute.xlu0 %994
        %998 = vset.pattern.permute.xlu0 0
        %999 = vperm.xlu0 %998, %v340
        %v1000 = vpop.permute.xlu0 %999
        %1003 = vset.pattern.permute.xlu0 0
        %1004 = vperm.xlu0 %1003, %v341
        %v1005 = vpop.permute.xlu0 %1004
        %1008 = vset.pattern.permute.xlu0 0
        %1009 = vperm.xlu0 %1008, %v342
        %v1010 = vpop.permute.xlu0 %1009
        %1013 = vset.pattern.permute.xlu0 0
        %1014 = vperm.xlu0 %1013, %v343
        %v1015 = vpop.permute.xlu0 %1014
        %1018 = vset.pattern.permute.xlu0 0
        %1019 = vperm.xlu0 %1018, %v344
        %v1020 = vpop.permute.xlu0 %1019
        %v1022 = vmul.f32 %v776, %v820
        %v1023 = vmul.f32 %v777, %v825
        %v1024 = vmul.f32 %v778, %v830
        %v1025 = vmul.f32 %v779, %v835
        %v1026 = vmul.f32 %v780, %v840
        %v1027 = vmul.f32 %v781, %v845
        %v1028 = vmul.f32 %v782, %v850
        %v1029 = vmul.f32 %v783, %v855
        %v1030 = vmul.f32 %v784, %v860
        %v1031 = vmul.f32 %v785, %v865
        %v1032 = vmul.f32 %v786, %v870
        %v1033 = vmul.f32 %v787, %v875
        %v1034 = vmul.f32 %v788, %v880
        %v1035 = vmul.f32 %v789, %v885
        %v1036 = vmul.f32 %v790, %v890
        %v1037 = vmul.f32 %v791, %v895
        %v1038 = vmul.f32 %v792, %v900
        %v1039 = vmul.f32 %v793, %v905
        %v1040 = vmul.f32 %v794, %v910
        %v1041 = vmul.f32 %v795, %v915
        %v1042 = vmul.f32 %v796, %v920
        %v1043 = vmul.f32 %v797, %v925
        %v1044 = vmul.f32 %v798, %v930
        %v1045 = vmul.f32 %v799, %v935
        %v1046 = vmul.f32 %v800, %v940
        %v1047 = vmul.f32 %v801, %v945
        %v1048 = vmul.f32 %v802, %v950
        %v1049 = vmul.f32 %v803, %v955
        %v1050 = vmul.f32 %v804, %v960
        %v1051 = vmul.f32 %v805, %v965
        %v1052 = vmul.f32 %v806, %v970
        %v1053 = vmul.f32 %v807, %v975
        %v1054 = vmul.f32 %v808, %v980
        %v1055 = vmul.f32 %v809, %v985
        %v1056 = vmul.f32 %v810, %v990
        %v1057 = vmul.f32 %v811, %v995
        %v1058 = vmul.f32 %v812, %v1000
        %v1059 = vmul.f32 %v813, %v1005
        %v1060 = vmul.f32 %v814, %v1010
        %v1061 = vmul.f32 %v815, %v1015
        %v1062 = vmul.f32 %v816, %v1020
        %1063 = vst [vmem:[#allocation2] sm:$0xff] 0.0
        %1064 = vst [vmem:[#allocation2 + $0x8] sm:$0xff] 0.0
        %1065 = vst [vmem:[#allocation2 + $0x10] sm:$0x7] 0.0
        %1066 = vst [vmem:[#allocation2 + $0x157] sm:$0xff] 0.0
        %1067 = vst [vmem:[#allocation2 + $0x15f] sm:$0xff] 0.0
        %1068 = vst [vmem:[#allocation2 + $0x167] sm:$0x7] 0.0
        %1069 = vst [vmem:[#allocation2 + $0x13] sm:$0xff] %v1022
        %1070 = vst [vmem:[#allocation2 + $0x1b] sm:$0xff] %v1023
        %1071 = vst [vmem:[#allocation2 + $0x23] sm:$0xff] %v1024
        %1072 = vst [vmem:[#allocation2 + $0x2b] sm:$0xff] %v1025
        %1073 = vst [vmem:[#allocation2 + $0x33] sm:$0xff] %v1026
        %1074 = vst [vmem:[#allocation2 + $0x3b] sm:$0xff] %v1027
        %1075 = vst [vmem:[#allocation2 + $0x43] sm:$0xff] %v1028
        %1076 = vst [vmem:[#allocation2 + $0x4b] sm:$0xff] %v1029
        %1077 = vst [vmem:[#allocation2 + $0x53] sm:$0xff] %v1030
        %1078 = vst [vmem:[#allocation2 + $0x5b] sm:$0xff] %v1031
        %1079 = vst [vmem:[#allocation2 + $0x63] sm:$0xff] %v1032
        %1080 = vst [vmem:[#allocation2 + $0x6b] sm:$0xff] %v1033
        %1081 = vst [vmem:[#allocation2 + $0x73] sm:$0xff] %v1034
        %1082 = vst [vmem:[#allocation2 + $0x7b] sm:$0xff] %v1035
        %1083 = vst [vmem:[#allocation2 + $0x83] sm:$0xff] %v1036
        %1084 = vst [vmem:[#allocation2 + $0x8b] sm:$0xff] %v1037
        %1085 = vst [vmem:[#allocation2 + $0x93] sm:$0xff] %v1038
        %1086 = vst [vmem:[#allocation2 + $0x9b] sm:$0xff] %v1039
        %1087 = vst [vmem:[#allocation2 + $0xa3] sm:$0xff] %v1040
        %1088 = vst [vmem:[#allocation2 + $0xab] sm:$0xff] %v1041
        %1089 = vst [vmem:[#allocation2 + $0xb3] sm:$0xff] %v1042
        %1090 = vst [vmem:[#allocation2 + $0xbb] sm:$0xff] %v1043
        %1091 = vst [vmem:[#allocation2 + $0xc3] sm:$0xff] %v1044
        %1092 = vst [vmem:[#allocation2 + $0xcb] sm:$0xff] %v1045
        %1093 = vst [vmem:[#allocation2 + $0xd3] sm:$0xff] %v1046
        %1094 = vst [vmem:[#allocation2 + $0xdb] sm:$0xff] %v1047
        %1095 = vst [vmem:[#allocation2 + $0xe3] sm:$0xff] %v1048
        %1096 = vst [vmem:[#allocation2 + $0xeb] sm:$0xff] %v1049
        %1097 = vst [vmem:[#allocation2 + $0xf3] sm:$0xff] %v1050
        %1098 = vst [vmem:[#allocation2 + $0xfb] sm:$0xff] %v1051
        %1099 = vst [vmem:[#allocation2 + $0x103] sm:$0xff] %v1052
        %1100 = vst [vmem:[#allocation2 + $0x10b] sm:$0xff] %v1053
        %1101 = vst [vmem:[#allocation2 + $0x113] sm:$0xff] %v1054
        %1102 = vst [vmem:[#allocation2 + $0x11b] sm:$0xff] %v1055
        %1103 = vst [vmem:[#allocation2 + $0x123] sm:$0xff] %v1056
        %1104 = vst [vmem:[#allocation2 + $0x12b] sm:$0xff] %v1057
        %1105 = vst [vmem:[#allocation2 + $0x133] sm:$0xff] %v1058
        %1106 = vst [vmem:[#allocation2 + $0x13b] sm:$0xff] %v1059
        %1107 = vst [vmem:[#allocation2 + $0x143] sm:$0xff] %v1060
        %1108 = vst [vmem:[#allocation2 + $0x14b] sm:$0xff] %v1061
        %1109 = vst [vmem:[#allocation2 + $0x153] sm:$0xf] %v1062
        %v1110 = vld [vmem:[#allocation2] sm:$0xff]
        %v1111 = vld [vmem:[#allocation2 + $0x8] sm:$0xff]
        %v1112 = vld [vmem:[#allocation2 + $0x10] sm:$0xff]
        %v1113 = vld [vmem:[#allocation2 + $0x18] sm:$0xff]
        %v1114 = vld [vmem:[#allocation2 + $0x20] sm:$0xff]
        %v1115 = vld [vmem:[#allocation2 + $0x28] sm:$0xff]
        %v1116 = vld [vmem:[#allocation2 + $0x30] sm:$0xff]
        %v1117 = vld [vmem:[#allocation2 + $0x38] sm:$0xff]
        %v1118 = vld [vmem:[#allocation2 + $0x40] sm:$0xff]
        %v1119 = vld [vmem:[#allocation2 + $0x48] sm:$0xff]
        %v1120 = vld [vmem:[#allocation2 + $0x50] sm:$0xff]
        %v1121 = vld [vmem:[#allocation2 + $0x58] sm:$0xff]
        %v1122 = vld [vmem:[#allocation2 + $0x60] sm:$0xff]
        %v1123 = vld [vmem:[#allocation2 + $0x68] sm:$0xff]
        %v1124 = vld [vmem:[#allocation2 + $0x70] sm:$0xff]
        %v1125 = vld [vmem:[#allocation2 + $0x78] sm:$0xff]
        %v1126 = vld [vmem:[#allocation2 + $0x80] sm:$0xff]
        %v1127 = vld [vmem:[#allocation2 + $0x88] sm:$0xff]
        %v1128 = vld [vmem:[#allocation2 + $0x90] sm:$0xff]
        %v1129 = vld [vmem:[#allocation2 + $0x98] sm:$0xff]
        %v1130 = vld [vmem:[#allocation2 + $0xa0] sm:$0xff]
        %v1131 = vld [vmem:[#allocation2 + $0xa8] sm:$0xff]
        %v1132 = vld [vmem:[#allocation2 + $0xb0] sm:$0xff]
        %v1133 = vld [vmem:[#allocation2 + $0xb8] sm:$0xff]
        %v1134 = vld [vmem:[#allocation2 + $0xc0] sm:$0xff]
        %v1135 = vld [vmem:[#allocation2 + $0xc8] sm:$0xff]
        %v1136 = vld [vmem:[#allocation2 + $0xd0] sm:$0xff]
        %v1137 = vld [vmem:[#allocation2 + $0xd8] sm:$0xff]
        %v1138 = vld [vmem:[#allocation2 + $0xe0] sm:$0xff]
        %v1139 = vld [vmem:[#allocation2 + $0xe8] sm:$0xff]
        %v1140 = vld [vmem:[#allocation2 + $0xf0] sm:$0xff]
        %v1141 = vld [vmem:[#allocation2 + $0xf8] sm:$0xff]
        %v1142 = vld [vmem:[#allocation2 + $0x100] sm:$0xff]
        %v1143 = vld [vmem:[#allocation2 + $0x108] sm:$0xff]
        %v1144 = vld [vmem:[#allocation2 + $0x110] sm:$0xff]
        %v1145 = vld [vmem:[#allocation2 + $0x118] sm:$0xff]
        %v1146 = vld [vmem:[#allocation2 + $0x120] sm:$0xff]
        %v1147 = vld [vmem:[#allocation2 + $0x128] sm:$0xff]
        %v1148 = vld [vmem:[#allocation2 + $0x130] sm:$0xff]
        %v1149 = vld [vmem:[#allocation2 + $0x138] sm:$0xff]
        %v1150 = vld [vmem:[#allocation2 + $0x140] sm:$0xf]
        %v1151 = vpack.c.bf16 %v1111, %v1110
        %v1152 = vpack.c.bf16 %v1113, %v1112
        %v1153 = vpack.c.bf16 %v1115, %v1114
        %v1154 = vpack.c.bf16 %v1117, %v1116
        %v1155 = vpack.c.bf16 %v1119, %v1118
        %v1156 = vpack.c.bf16 %v1121, %v1120
        %v1157 = vpack.c.bf16 %v1123, %v1122
        %v1158 = vpack.c.bf16 %v1125, %v1124
        %v1159 = vpack.c.bf16 %v1127, %v1126
        %v1160 = vpack.c.bf16 %v1129, %v1128
        %v1161 = vpack.c.bf16 %v1131, %v1130
        %v1162 = vpack.c.bf16 %v1133, %v1132
        %v1163 = vpack.c.bf16 %v1135, %v1134
        %v1164 = vpack.c.bf16 %v1137, %v1136
        %v1165 = vpack.c.bf16 %v1139, %v1138
        %v1166 = vpack.c.bf16 %v1141, %v1140
        %v1167 = vpack.c.bf16 %v1143, %v1142
        %v1168 = vpack.c.bf16 %v1145, %v1144
        %v1169 = vpack.c.bf16 %v1147, %v1146
        %v1170 = vpack.c.bf16 %v1149, %v1148
        %v1171 = vpack.c.bf16 %v1150, %v1150
        %v1193 = vunpack.c.l.b16 %v1151
        %v1194 = vunpack.c.h.b16 %v1151
        %v1195 = vunpack.c.l.b16 %v1152
        %v1196 = vunpack.c.h.b16 %v1152
        %v1197 = vunpack.c.l.b16 %v1153
        %v1198 = vunpack.c.h.b16 %v1153
        %v1199 = vunpack.c.l.b16 %v1154
        %v1200 = vunpack.c.h.b16 %v1154
        %v1201 = vunpack.c.l.b16 %v1155
        %v1202 = vunpack.c.h.b16 %v1155
        %v1203 = vunpack.c.l.b16 %v1156
        %v1204 = vunpack.c.h.b16 %v1156
        %v1205 = vunpack.c.l.b16 %v1157
        %v1206 = vunpack.c.h.b16 %v1157
        %v1207 = vunpack.c.l.b16 %v1158
        %v1208 = vunpack.c.h.b16 %v1158
        %v1209 = vunpack.c.l.b16 %v1159
        %v1210 = vunpack.c.h.b16 %v1159
        %v1211 = vunpack.c.l.b16 %v1160
        %v1212 = vunpack.c.h.b16 %v1160
        %v1213 = vunpack.c.l.b16 %v1161
        %v1214 = vunpack.c.h.b16 %v1161
        %v1215 = vunpack.c.l.b16 %v1162
        %v1216 = vunpack.c.h.b16 %v1162
        %v1217 = vunpack.c.l.b16 %v1163
        %v1218 = vunpack.c.h.b16 %v1163
        %v1219 = vunpack.c.l.b16 %v1164
        %v1220 = vunpack.c.h.b16 %v1164
        %v1221 = vunpack.c.l.b16 %v1165
        %v1222 = vunpack.c.h.b16 %v1165
        %v1223 = vunpack.c.l.b16 %v1166
        %v1224 = vunpack.c.h.b16 %v1166
        %v1225 = vunpack.c.l.b16 %v1167
        %v1226 = vunpack.c.h.b16 %v1167
        %v1227 = vunpack.c.l.b16 %v1168
        %v1228 = vunpack.c.h.b16 %v1168
        %v1229 = vunpack.c.l.b16 %v1169
        %v1230 = vunpack.c.h.b16 %v1169
        %v1231 = vunpack.c.l.b16 %v1170
        %v1232 = vunpack.c.h.b16 %v1170
        %v1233 = vunpack.c.l.b16 %v1171
        %v1234 = vpack.c.b16 %v1193, %v1193
        %v1235 = vpack.c.b16 %v1194, %v1194
        %v1236 = vpack.c.b16 %v1195, %v1195
        %v1237 = vpack.c.b16 %v1196, %v1196
        %v1238 = vpack.c.b16 %v1197, %v1197
        %v1239 = vpack.c.b16 %v1198, %v1198
        %v1240 = vpack.c.b16 %v1199, %v1199
        %v1241 = vpack.c.b16 %v1200, %v1200
        %v1242 = vpack.c.b16 %v1201, %v1201
        %v1243 = vpack.c.b16 %v1202, %v1202
        %v1244 = vpack.c.b16 %v1203, %v1203
        %v1245 = vpack.c.b16 %v1204, %v1204
        %v1246 = vpack.c.b16 %v1205, %v1205
        %v1247 = vpack.c.b16 %v1206, %v1206
        %v1248 = vpack.c.b16 %v1207, %v1207
        %v1249 = vpack.c.b16 %v1208, %v1208
        %v1250 = vpack.c.b16 %v1209, %v1209
        %v1251 = vpack.c.b16 %v1210, %v1210
        %v1252 = vpack.c.b16 %v1211, %v1211
        %v1253 = vpack.c.b16 %v1212, %v1212
        %v1254 = vpack.c.b16 %v1213, %v1213
        %v1255 = vpack.c.b16 %v1214, %v1214
        %v1256 = vpack.c.b16 %v1215, %v1215
        %v1257 = vpack.c.b16 %v1216, %v1216
        %v1258 = vpack.c.b16 %v1217, %v1217
        %v1259 = vpack.c.b16 %v1218, %v1218
        %v1260 = vpack.c.b16 %v1219, %v1219
        %v1261 = vpack.c.b16 %v1220, %v1220
        %v1262 = vpack.c.b16 %v1221, %v1221
        %v1263 = vpack.c.b16 %v1222, %v1222
        %v1264 = vpack.c.b16 %v1223, %v1223
        %v1265 = vpack.c.b16 %v1224, %v1224
        %v1266 = vpack.c.b16 %v1225, %v1225
        %v1267 = vpack.c.b16 %v1226, %v1226
        %v1268 = vpack.c.b16 %v1227, %v1227
        %v1269 = vpack.c.b16 %v1228, %v1228
        %v1270 = vpack.c.b16 %v1229, %v1229
        %v1271 = vpack.c.b16 %v1230, %v1230
        %v1272 = vpack.c.b16 %v1231, %v1231
        %v1273 = vpack.c.b16 %v1232, %v1232
        %v1274 = vpack.c.b16 %v1233, %v1233
        %1316 = vst [vmem:[#allocation4] sm:$0xf] %v1234
        %1317 = vst [vmem:[#allocation4 + $0x24] sm:$0xf] %v1235
        %1318 = vst [vmem:[#allocation4 + $0x48] sm:$0xf] %v1236
        %1319 = vst [vmem:[#allocation4 + $0x6c] sm:$0xf] %v1237
        %1320 = vst [vmem:[#allocation4 + $0x90] sm:$0xf] %v1238
        %1321 = vst [vmem:[#allocation4 + $0xb4] sm:$0xf] %v1239
        %1322 = vst [vmem:[#allocation4 + $0xd8] sm:$0xf] %v1240
        %1323 = vst [vmem:[#allocation4 + $0xfc] sm:$0xf] %v1241
        %1324 = vst [vmem:[#allocation4 + $0x120] sm:$0xf] %v1242
        %1325 = vst [vmem:[#allocation4 + $0x144] sm:$0xf] %v1243
        %1326 = vst [vmem:[#allocation4 + $0x168] sm:$0xf] %v1244
        %1327 = vst [vmem:[#allocation4 + $0x18c] sm:$0xf] %v1245
        %1328 = vst [vmem:[#allocation4 + $0x1b0] sm:$0xf] %v1246
        %1329 = vst [vmem:[#allocation4 + $0x1d4] sm:$0xf] %v1247
        %1330 = vst [vmem:[#allocation4 + $0x1f8] sm:$0xf] %v1248
        %1331 = vst [vmem:[#allocation4 + $0x21c] sm:$0xf] %v1249
        %1332 = vst [vmem:[#allocation4 + $0x240] sm:$0xf] %v1250
        %1333 = vst [vmem:[#allocation4 + $0x264] sm:$0xf] %v1251
        %1334 = vst [vmem:[#allocation4 + $0x288] sm:$0xf] %v1252
        %1335 = vst [vmem:[#allocation4 + $0x2ac] sm:$0xf] %v1253
        %1336 = vst [vmem:[#allocation4 + $0x2d0] sm:$0xf] %v1254
        %1337 = vst [vmem:[#allocation4 + $0x2f4] sm:$0xf] %v1255
        %1338 = vst [vmem:[#allocation4 + $0x318] sm:$0xf] %v1256
        %1339 = vst [vmem:[#allocation4 + $0x33c] sm:$0xf] %v1257
        %1340 = vst [vmem:[#allocation4 + $0x360] sm:$0xf] %v1258
        %1341 = vst [vmem:[#allocation4 + $0x384] sm:$0xf] %v1259
        %1342 = vst [vmem:[#allocation4 + $0x3a8] sm:$0xf] %v1260
        %1343 = vst [vmem:[#allocation4 + $0x3cc] sm:$0xf] %v1261
        %1344 = vst [vmem:[#allocation4 + $0x3f0] sm:$0xf] %v1262
        %1345 = vst [vmem:[#allocation4 + $0x414] sm:$0xf] %v1263
        %1346 = vst [vmem:[#allocation4 + $0x438] sm:$0xf] %v1264
        %1347 = vst [vmem:[#allocation4 + $0x45c] sm:$0xf] %v1265
        %1348 = vst [vmem:[#allocation4 + $0x480] sm:$0xf] %v1266
        %1349 = vst [vmem:[#allocation4 + $0x4a4] sm:$0xf] %v1267
        %1350 = vst [vmem:[#allocation4 + $0x4c8] sm:$0xf] %v1268
        %1351 = vst [vmem:[#allocation4 + $0x4ec] sm:$0xf] %v1269
        %1352 = vst [vmem:[#allocation4 + $0x510] sm:$0xf] %v1270
        %1353 = vst [vmem:[#allocation4 + $0x534] sm:$0xf] %v1271
        %1354 = vst [vmem:[#allocation4 + $0x558] sm:$0xf] %v1272
        %1355 = vst [vmem:[#allocation4 + $0x57c] sm:$0xf] %v1273
        %1356 = vst [vmem:[#allocation4 + $0x5a0] sm:$0x3] %v1274
        %v1357 = vld [vmem:[#allocation2 + $0x1] sm:$0xff]
        %v1358 = vld [vmem:[#allocation2 + $0x9] sm:$0xff]
        %v1359 = vld [vmem:[#allocation2 + $0x11] sm:$0xff]
        %v1360 = vld [vmem:[#allocation2 + $0x19] sm:$0xff]
        %v1361 = vld [vmem:[#allocation2 + $0x21] sm:$0xff]
        %v1362 = vld [vmem:[#allocation2 + $0x29] sm:$0xff]
        %v1363 = vld [vmem:[#allocation2 + $0x31] sm:$0xff]
        %v1364 = vld [vmem:[#allocation2 + $0x39] sm:$0xff]
        %v1365 = vld [vmem:[#allocation2 + $0x41] sm:$0xff]
        %v1366 = vld [vmem:[#allocation2 + $0x49] sm:$0xff]
        %v1367 = vld [vmem:[#allocation2 + $0x51] sm:$0xff]
        %v1368 = vld [vmem:[#allocation2 + $0x59] sm:$0xff]
        %v1369 = vld [vmem:[#allocation2 + $0x61] sm:$0xff]
        %v1370 = vld [vmem:[#allocation2 + $0x69] sm:$0xff]
        %v1371 = vld [vmem:[#allocation2 + $0x71] sm:$0xff]
        %v1372 = vld [vmem:[#allocation2 + $0x79] sm:$0xff]
        %v1373 = vld [vmem:[#allocation2 + $0x81] sm:$0xff]
        %v1374 = vld [vmem:[#allocation2 + $0x89] sm:$0xff]
        %v1375 = vld [vmem:[#allocation2 + $0x91] sm:$0xff]
        %v1376 = vld [vmem:[#allocation2 + $0x99] sm:$0xff]
        %v1377 = vld [vmem:[#allocation2 + $0xa1] sm:$0xff]
        %v1378 = vld [vmem:[#allocation2 + $0xa9] sm:$0xff]
        %v1379 = vld [vmem:[#allocation2 + $0xb1] sm:$0xff]
        %v1380 = vld [vmem:[#allocation2 + $0xb9] sm:$0xff]
        %v1381 = vld [vmem:[#allocation2 + $0xc1] sm:$0xff]
        %v1382 = vld [vmem:[#allocation2 + $0xc9] sm:$0xff]
        %v1383 = vld [vmem:[#allocation2 + $0xd1] sm:$0xff]
        %v1384 = vld [vmem:[#allocation2 + $0xd9] sm:$0xff]
        %v1385 = vld [vmem:[#allocation2 + $0xe1] sm:$0xff]
        %v1386 = vld [vmem:[#allocation2 + $0xe9] sm:$0xff]
        %v1387 = vld [vmem:[#allocation2 + $0xf1] sm:$0xff]
        %v1388 = vld [vmem:[#allocation2 + $0xf9] sm:$0xff]
        %v1389 = vld [vmem:[#allocation2 + $0x101] sm:$0xff]
        %v1390 = vld [vmem:[#allocation2 + $0x109] sm:$0xff]
        %v1391 = vld [vmem:[#allocation2 + $0x111] sm:$0xff]
        %v1392 = vld [vmem:[#allocation2 + $0x119] sm:$0xff]
        %v1393 = vld [vmem:[#allocation2 + $0x121] sm:$0xff]
        %v1394 = vld [vmem:[#allocation2 + $0x129] sm:$0xff]
        %v1395 = vld [vmem:[#allocation2 + $0x131] sm:$0xff]
        %v1396 = vld [vmem:[#allocation2 + $0x139] sm:$0xff]
        %v1397 = vld [vmem:[#allocation2 + $0x141] sm:$0xf]
        %v1398 = vpack.c.bf16 %v1358, %v1357
        %v1399 = vpack.c.bf16 %v1360, %v1359
        %v1400 = vpack.c.bf16 %v1362, %v1361
        %v1401 = vpack.c.bf16 %v1364, %v1363
        %v1402 = vpack.c.bf16 %v1366, %v1365
        %v1403 = vpack.c.bf16 %v1368, %v1367
        %v1404 = vpack.c.bf16 %v1370, %v1369
        %v1405 = vpack.c.bf16 %v1372, %v1371
        %v1406 = vpack.c.bf16 %v1374, %v1373
        %v1407 = vpack.c.bf16 %v1376, %v1375
        %v1408 = vpack.c.bf16 %v1378, %v1377
        %v1409 = vpack.c.bf16 %v1380, %v1379
        %v1410 = vpack.c.bf16 %v1382, %v1381
        %v1411 = vpack.c.bf16 %v1384, %v1383
        %v1412 = vpack.c.bf16 %v1386, %v1385
        %v1413 = vpack.c.bf16 %v1388, %v1387
        %v1414 = vpack.c.bf16 %v1390, %v1389
        %v1415 = vpack.c.bf16 %v1392, %v1391
        %v1416 = vpack.c.bf16 %v1394, %v1393
        %v1417 = vpack.c.bf16 %v1396, %v1395
        %v1418 = vpack.c.bf16 %v1397, %v1397
        %v1440 = vunpack.c.l.b16 %v1398
        %v1441 = vunpack.c.h.b16 %v1398
        %v1442 = vunpack.c.l.b16 %v1399
        %v1443 = vunpack.c.h.b16 %v1399
        %v1444 = vunpack.c.l.b16 %v1400
        %v1445 = vunpack.c.h.b16 %v1400
        %v1446 = vunpack.c.l.b16 %v1401
        %v1447 = vunpack.c.h.b16 %v1401
        %v1448 = vunpack.c.l.b16 %v1402
        %v1449 = vunpack.c.h.b16 %v1402
        %v1450 = vunpack.c.l.b16 %v1403
        %v1451 = vunpack.c.h.b16 %v1403
        %v1452 = vunpack.c.l.b16 %v1404
        %v1453 = vunpack.c.h.b16 %v1404
        %v1454 = vunpack.c.l.b16 %v1405
        %v1455 = vunpack.c.h.b16 %v1405
        %v1456 = vunpack.c.l.b16 %v1406
        %v1457 = vunpack.c.h.b16 %v1406
        %v1458 = vunpack.c.l.b16 %v1407
        %v1459 = vunpack.c.h.b16 %v1407
        %v1460 = vunpack.c.l.b16 %v1408
        %v1461 = vunpack.c.h.b16 %v1408
        %v1462 = vunpack.c.l.b16 %v1409
        %v1463 = vunpack.c.h.b16 %v1409
        %v1464 = vunpack.c.l.b16 %v1410
        %v1465 = vunpack.c.h.b16 %v1410
        %v1466 = vunpack.c.l.b16 %v1411
        %v1467 = vunpack.c.h.b16 %v1411
        %v1468 = vunpack.c.l.b16 %v1412
        %v1469 = vunpack.c.h.b16 %v1412
        %v1470 = vunpack.c.l.b16 %v1413
        %v1471 = vunpack.c.h.b16 %v1413
        %v1472 = vunpack.c.l.b16 %v1414
        %v1473 = vunpack.c.h.b16 %v1414
        %v1474 = vunpack.c.l.b16 %v1415
        %v1475 = vunpack.c.h.b16 %v1415
        %v1476 = vunpack.c.l.b16 %v1416
        %v1477 = vunpack.c.h.b16 %v1416
        %v1478 = vunpack.c.l.b16 %v1417
        %v1479 = vunpack.c.h.b16 %v1417
        %v1480 = vunpack.c.l.b16 %v1418
        %v1481 = vpack.c.b16 %v1440, %v1440
        %v1482 = vpack.c.b16 %v1441, %v1441
        %v1483 = vpack.c.b16 %v1442, %v1442
        %v1484 = vpack.c.b16 %v1443, %v1443
        %v1485 = vpack.c.b16 %v1444, %v1444
        %v1486 = vpack.c.b16 %v1445, %v1445
        %v1487 = vpack.c.b16 %v1446, %v1446
        %v1488 = vpack.c.b16 %v1447, %v1447
        %v1489 = vpack.c.b16 %v1448, %v1448
        %v1490 = vpack.c.b16 %v1449, %v1449
        %v1491 = vpack.c.b16 %v1450, %v1450
        %v1492 = vpack.c.b16 %v1451, %v1451
        %v1493 = vpack.c.b16 %v1452, %v1452
        %v1494 = vpack.c.b16 %v1453, %v1453
        %v1495 = vpack.c.b16 %v1454, %v1454
        %v1496 = vpack.c.b16 %v1455, %v1455
        %v1497 = vpack.c.b16 %v1456, %v1456
        %v1498 = vpack.c.b16 %v1457, %v1457
        %v1499 = vpack.c.b16 %v1458, %v1458
        %v1500 = vpack.c.b16 %v1459, %v1459
        %v1501 = vpack.c.b16 %v1460, %v1460
        %v1502 = vpack.c.b16 %v1461, %v1461
        %v1503 = vpack.c.b16 %v1462, %v1462
        %v1504 = vpack.c.b16 %v1463, %v1463
        %v1505 = vpack.c.b16 %v1464, %v1464
        %v1506 = vpack.c.b16 %v1465, %v1465
        %v1507 = vpack.c.b16 %v1466, %v1466
        %v1508 = vpack.c.b16 %v1467, %v1467
        %v1509 = vpack.c.b16 %v1468, %v1468
        %v1510 = vpack.c.b16 %v1469, %v1469
        %v1511 = vpack.c.b16 %v1470, %v1470
        %v1512 = vpack.c.b16 %v1471, %v1471
        %v1513 = vpack.c.b16 %v1472, %v1472
        %v1514 = vpack.c.b16 %v1473, %v1473
        %v1515 = vpack.c.b16 %v1474, %v1474
        %v1516 = vpack.c.b16 %v1475, %v1475
        %v1517 = vpack.c.b16 %v1476, %v1476
        %v1518 = vpack.c.b16 %v1477, %v1477
        %v1519 = vpack.c.b16 %v1478, %v1478
        %v1520 = vpack.c.b16 %v1479, %v1479
        %v1521 = vpack.c.b16 %v1480, %v1480
        %1563 = vst [vmem:[#allocation4 + $0x4] sm:$0xf] %v1481
        %1564 = vst [vmem:[#allocation4 + $0x28] sm:$0xf] %v1482
        %1565 = vst [vmem:[#allocation4 + $0x4c] sm:$0xf] %v1483
        %1566 = vst [vmem:[#allocation4 + $0x70] sm:$0xf] %v1484
        %1567 = vst [vmem:[#allocation4 + $0x94] sm:$0xf] %v1485
        %1568 = vst [vmem:[#allocation4 + $0xb8] sm:$0xf] %v1486
        %1569 = vst [vmem:[#allocation4 + $0xdc] sm:$0xf] %v1487
        %1570 = vst [vmem:[#allocation4 + $0x100] sm:$0xf] %v1488
        %1571 = vst [vmem:[#allocation4 + $0x124] sm:$0xf] %v1489
        %1572 = vst [vmem:[#allocation4 + $0x148] sm:$0xf] %v1490
        %1573 = vst [vmem:[#allocation4 + $0x16c] sm:$0xf] %v1491
        %1574 = vst [vmem:[#allocation4 + $0x190] sm:$0xf] %v1492
        %1575 = vst [vmem:[#allocation4 + $0x1b4] sm:$0xf] %v1493
        %1576 = vst [vmem:[#allocation4 + $0x1d8] sm:$0xf] %v1494
        %1577 = vst [vmem:[#allocation4 + $0x1fc] sm:$0xf] %v1495
        %1578 = vst [vmem:[#allocation4 + $0x220] sm:$0xf] %v1496
        %1579 = vst [vmem:[#allocation4 + $0x244] sm:$0xf] %v1497
        %1580 = vst [vmem:[#allocation4 + $0x268] sm:$0xf] %v1498
        %1581 = vst [vmem:[#allocation4 + $0x28c] sm:$0xf] %v1499
        %1582 = vst [vmem:[#allocation4 + $0x2b0] sm:$0xf] %v1500
        %1583 = vst [vmem:[#allocation4 + $0x2d4] sm:$0xf] %v1501
        %1584 = vst [vmem:[#allocation4 + $0x2f8] sm:$0xf] %v1502
        %1585 = vst [vmem:[#allocation4 + $0x31c] sm:$0xf] %v1503
        %1586 = vst [vmem:[#allocation4 + $0x340] sm:$0xf] %v1504
        %1587 = vst [vmem:[#allocation4 + $0x364] sm:$0xf] %v1505
        %1588 = vst [vmem:[#allocation4 + $0x388] sm:$0xf] %v1506
        %1589 = vst [vmem:[#allocation4 + $0x3ac] sm:$0xf] %v1507
        %1590 = vst [vmem:[#allocation4 + $0x3d0] sm:$0xf] %v1508
        %1591 = vst [vmem:[#allocation4 + $0x3f4] sm:$0xf] %v1509
        %1592 = vst [vmem:[#allocation4 + $0x418] sm:$0xf] %v1510
        %1593 = vst [vmem:[#allocation4 + $0x43c] sm:$0xf] %v1511
        %1594 = vst [vmem:[#allocation4 + $0x460] sm:$0xf] %v1512
        %1595 = vst [vmem:[#allocation4 + $0x484] sm:$0xf] %v1513
        %1596 = vst [vmem:[#allocation4 + $0x4a8] sm:$0xf] %v1514
        %1597 = vst [vmem:[#allocation4 + $0x4cc] sm:$0xf] %v1515
        %1598 = vst [vmem:[#allocation4 + $0x4f0] sm:$0xf] %v1516
        %1599 = vst [vmem:[#allocation4 + $0x514] sm:$0xf] %v1517
        %1600 = vst [vmem:[#allocation4 + $0x538] sm:$0xf] %v1518
        %1601 = vst [vmem:[#allocation4 + $0x55c] sm:$0xf] %v1519
        %1602 = vst [vmem:[#allocation4 + $0x580] sm:$0xf] %v1520
        %1603 = vst [vmem:[#allocation4 + $0x5a4] sm:$0x3] %v1521
        %v1604 = vld [vmem:[#allocation2 + $0x2] sm:$0xff]
        %v1605 = vld [vmem:[#allocation2 + $0xa] sm:$0xff]
        %v1606 = vld [vmem:[#allocation2 + $0x12] sm:$0xff]
        %v1607 = vld [vmem:[#allocation2 + $0x1a] sm:$0xff]
        %v1608 = vld [vmem:[#allocation2 + $0x22] sm:$0xff]
        %v1609 = vld [vmem:[#allocation2 + $0x2a] sm:$0xff]
        %v1610 = vld [vmem:[#allocation2 + $0x32] sm:$0xff]
        %v1611 = vld [vmem:[#allocation2 + $0x3a] sm:$0xff]
        %v1612 = vld [vmem:[#allocation2 + $0x42] sm:$0xff]
        %v1613 = vld [vmem:[#allocation2 + $0x4a] sm:$0xff]
        %v1614 = vld [vmem:[#allocation2 + $0x52] sm:$0xff]
        %v1615 = vld [vmem:[#allocation2 + $0x5a] sm:$0xff]
        %v1616 = vld [vmem:[#allocation2 + $0x62] sm:$0xff]
        %v1617 = vld [vmem:[#allocation2 + $0x6a] sm:$0xff]
        %v1618 = vld [vmem:[#allocation2 + $0x72] sm:$0xff]
        %v1619 = vld [vmem:[#allocation2 + $0x7a] sm:$0xff]
        %v1620 = vld [vmem:[#allocation2 + $0x82] sm:$0xff]
        %v1621 = vld [vmem:[#allocation2 + $0x8a] sm:$0xff]
        %v1622 = vld [vmem:[#allocation2 + $0x92] sm:$0xff]
        %v1623 = vld [vmem:[#allocation2 + $0x9a] sm:$0xff]
        %v1624 = vld [vmem:[#allocation2 + $0xa2] sm:$0xff]
        %v1625 = vld [vmem:[#allocation2 + $0xaa] sm:$0xff]
        %v1626 = vld [vmem:[#allocation2 + $0xb2] sm:$0xff]
        %v1627 = vld [vmem:[#allocation2 + $0xba] sm:$0xff]
        %v1628 = vld [vmem:[#allocation2 + $0xc2] sm:$0xff]
        %v1629 = vld [vmem:[#allocation2 + $0xca] sm:$0xff]
        %v1630 = vld [vmem:[#allocation2 + $0xd2] sm:$0xff]
        %v1631 = vld [vmem:[#allocation2 + $0xda] sm:$0xff]
        %v1632 = vld [vmem:[#allocation2 + $0xe2] sm:$0xff]
        %v1633 = vld [vmem:[#allocation2 + $0xea] sm:$0xff]
        %v1634 = vld [vmem:[#allocation2 + $0xf2] sm:$0xff]
        %v1635 = vld [vmem:[#allocation2 + $0xfa] sm:$0xff]
        %v1636 = vld [vmem:[#allocation2 + $0x102] sm:$0xff]
        %v1637 = vld [vmem:[#allocation2 + $0x10a] sm:$0xff]
        %v1638 = vld [vmem:[#allocation2 + $0x112] sm:$0xff]
        %v1639 = vld [vmem:[#allocation2 + $0x11a] sm:$0xff]
        %v1640 = vld [vmem:[#allocation2 + $0x122] sm:$0xff]
        %v1641 = vld [vmem:[#allocation2 + $0x12a] sm:$0xff]
        %v1642 = vld [vmem:[#allocation2 + $0x132] sm:$0xff]
        %v1643 = vld [vmem:[#allocation2 + $0x13a] sm:$0xff]
        %v1644 = vld [vmem:[#allocation2 + $0x142] sm:$0xf]
        %v1645 = vpack.c.bf16 %v1605, %v1604
        %v1646 = vpack.c.bf16 %v1607, %v1606
        %v1647 = vpack.c.bf16 %v1609, %v1608
        %v1648 = vpack.c.bf16 %v1611, %v1610
        %v1649 = vpack.c.bf16 %v1613, %v1612
        %v1650 = vpack.c.bf16 %v1615, %v1614
        %v1651 = vpack.c.bf16 %v1617, %v1616
        %v1652 = vpack.c.bf16 %v1619, %v1618
        %v1653 = vpack.c.bf16 %v1621, %v1620
        %v1654 = vpack.c.bf16 %v1623, %v1622
        %v1655 = vpack.c.bf16 %v1625, %v1624
        %v1656 = vpack.c.bf16 %v1627, %v1626
        %v1657 = vpack.c.bf16 %v1629, %v1628
        %v1658 = vpack.c.bf16 %v1631, %v1630
        %v1659 = vpack.c.bf16 %v1633, %v1632
        %v1660 = vpack.c.bf16 %v1635, %v1634
        %v1661 = vpack.c.bf16 %v1637, %v1636
        %v1662 = vpack.c.bf16 %v1639, %v1638
        %v1663 = vpack.c.bf16 %v1641, %v1640
        %v1664 = vpack.c.bf16 %v1643, %v1642
        %v1665 = vpack.c.bf16 %v1644, %v1644
        %v1687 = vunpack.c.l.b16 %v1645
        %v1688 = vunpack.c.h.b16 %v1645
        %v1689 = vunpack.c.l.b16 %v1646
        %v1690 = vunpack.c.h.b16 %v1646
        %v1691 = vunpack.c.l.b16 %v1647
        %v1692 = vunpack.c.h.b16 %v1647
        %v1693 = vunpack.c.l.b16 %v1648
        %v1694 = vunpack.c.h.b16 %v1648
        %v1695 = vunpack.c.l.b16 %v1649
        %v1696 = vunpack.c.h.b16 %v1649
        %v1697 = vunpack.c.l.b16 %v1650
        %v1698 = vunpack.c.h.b16 %v1650
        %v1699 = vunpack.c.l.b16 %v1651
        %v1700 = vunpack.c.h.b16 %v1651
        %v1701 = vunpack.c.l.b16 %v1652
        %v1702 = vunpack.c.h.b16 %v1652
        %v1703 = vunpack.c.l.b16 %v1653
        %v1704 = vunpack.c.h.b16 %v1653
        %v1705 = vunpack.c.l.b16 %v1654
        %v1706 = vunpack.c.h.b16 %v1654
        %v1707 = vunpack.c.l.b16 %v1655
        %v1708 = vunpack.c.h.b16 %v1655
        %v1709 = vunpack.c.l.b16 %v1656
        %v1710 = vunpack.c.h.b16 %v1656
        %v1711 = vunpack.c.l.b16 %v1657
        %v1712 = vunpack.c.h.b16 %v1657
        %v1713 = vunpack.c.l.b16 %v1658
        %v1714 = vunpack.c.h.b16 %v1658
        %v1715 = vunpack.c.l.b16 %v1659
        %v1716 = vunpack.c.h.b16 %v1659
        %v1717 = vunpack.c.l.b16 %v1660
        %v1718 = vunpack.c.h.b16 %v1660
        %v1719 = vunpack.c.l.b16 %v1661
        %v1720 = vunpack.c.h.b16 %v1661
        %v1721 = vunpack.c.l.b16 %v1662
        %v1722 = vunpack.c.h.b16 %v1662
        %v1723 = vunpack.c.l.b16 %v1663
        %v1724 = vunpack.c.h.b16 %v1663
        %v1725 = vunpack.c.l.b16 %v1664
        %v1726 = vunpack.c.h.b16 %v1664
        %v1727 = vunpack.c.l.b16 %v1665
        %v1728 = vpack.c.b16 %v1687, %v1687
        %v1729 = vpack.c.b16 %v1688, %v1688
        %v1730 = vpack.c.b16 %v1689, %v1689
        %v1731 = vpack.c.b16 %v1690, %v1690
        %v1732 = vpack.c.b16 %v1691, %v1691
        %v1733 = vpack.c.b16 %v1692, %v1692
        %v1734 = vpack.c.b16 %v1693, %v1693
        %v1735 = vpack.c.b16 %v1694, %v1694
        %v1736 = vpack.c.b16 %v1695, %v1695
        %v1737 = vpack.c.b16 %v1696, %v1696
        %v1738 = vpack.c.b16 %v1697, %v1697
        %v1739 = vpack.c.b16 %v1698, %v1698
        %v1740 = vpack.c.b16 %v1699, %v1699
        %v1741 = vpack.c.b16 %v1700, %v1700
        %v1742 = vpack.c.b16 %v1701, %v1701
        %v1743 = vpack.c.b16 %v1702, %v1702
        %v1744 = vpack.c.b16 %v1703, %v1703
        %v1745 = vpack.c.b16 %v1704, %v1704
        %v1746 = vpack.c.b16 %v1705, %v1705
        %v1747 = vpack.c.b16 %v1706, %v1706
        %v1748 = vpack.c.b16 %v1707, %v1707
        %v1749 = vpack.c.b16 %v1708, %v1708
        %v1750 = vpack.c.b16 %v1709, %v1709
        %v1751 = vpack.c.b16 %v1710, %v1710
        %v1752 = vpack.c.b16 %v1711, %v1711
        %v1753 = vpack.c.b16 %v1712, %v1712
        %v1754 = vpack.c.b16 %v1713, %v1713
        %v1755 = vpack.c.b16 %v1714, %v1714
        %v1756 = vpack.c.b16 %v1715, %v1715
        %v1757 = vpack.c.b16 %v1716, %v1716
        %v1758 = vpack.c.b16 %v1717, %v1717
        %v1759 = vpack.c.b16 %v1718, %v1718
        %v1760 = vpack.c.b16 %v1719, %v1719
        %v1761 = vpack.c.b16 %v1720, %v1720
        %v1762 = vpack.c.b16 %v1721, %v1721
        %v1763 = vpack.c.b16 %v1722, %v1722
        %v1764 = vpack.c.b16 %v1723, %v1723
        %v1765 = vpack.c.b16 %v1724, %v1724
        %v1766 = vpack.c.b16 %v1725, %v1725
        %v1767 = vpack.c.b16 %v1726, %v1726
        %v1768 = vpack.c.b16 %v1727, %v1727
        %1810 = vst [vmem:[#allocation4 + $0x8] sm:$0xf] %v1728
        %1811 = vst [vmem:[#allocation4 + $0x2c] sm:$0xf] %v1729
        %1812 = vst [vmem:[#allocation4 + $0x50] sm:$0xf] %v1730
        %1813 = vst [vmem:[#allocation4 + $0x74] sm:$0xf] %v1731
        %1814 = vst [vmem:[#allocation4 + $0x98] sm:$0xf] %v1732
        %1815 = vst [vmem:[#allocation4 + $0xbc] sm:$0xf] %v1733
        %1816 = vst [vmem:[#allocation4 + $0xe0] sm:$0xf] %v1734
        %1817 = vst [vmem:[#allocation4 + $0x104] sm:$0xf] %v1735
        %1818 = vst [vmem:[#allocation4 + $0x128] sm:$0xf] %v1736
        %1819 = vst [vmem:[#allocation4 + $0x14c] sm:$0xf] %v1737
        %1820 = vst [vmem:[#allocation4 + $0x170] sm:$0xf] %v1738
        %1821 = vst [vmem:[#allocation4 + $0x194] sm:$0xf] %v1739
        %1822 = vst [vmem:[#allocation4 + $0x1b8] sm:$0xf] %v1740
        %1823 = vst [vmem:[#allocation4 + $0x1dc] sm:$0xf] %v1741
        %1824 = vst [vmem:[#allocation4 + $0x200] sm:$0xf] %v1742
        %1825 = vst [vmem:[#allocation4 + $0x224] sm:$0xf] %v1743
        %1826 = vst [vmem:[#allocation4 + $0x248] sm:$0xf] %v1744
        %1827 = vst [vmem:[#allocation4 + $0x26c] sm:$0xf] %v1745
        %1828 = vst [vmem:[#allocation4 + $0x290] sm:$0xf] %v1746
        %1829 = vst [vmem:[#allocation4 + $0x2b4] sm:$0xf] %v1747
        %1830 = vst [vmem:[#allocation4 + $0x2d8] sm:$0xf] %v1748
        %1831 = vst [vmem:[#allocation4 + $0x2fc] sm:$0xf] %v1749
        %1832 = vst [vmem:[#allocation4 + $0x320] sm:$0xf] %v1750
        %1833 = vst [vmem:[#allocation4 + $0x344] sm:$0xf] %v1751
        %1834 = vst [vmem:[#allocation4 + $0x368] sm:$0xf] %v1752
        %1835 = vst [vmem:[#allocation4 + $0x38c] sm:$0xf] %v1753
        %1836 = vst [vmem:[#allocation4 + $0x3b0] sm:$0xf] %v1754
        %1837 = vst [vmem:[#allocation4 + $0x3d4] sm:$0xf] %v1755
        %1838 = vst [vmem:[#allocation4 + $0x3f8] sm:$0xf] %v1756
        %1839 = vst [vmem:[#allocation4 + $0x41c] sm:$0xf] %v1757
        %1840 = vst [vmem:[#allocation4 + $0x440] sm:$0xf] %v1758
        %1841 = vst [vmem:[#allocation4 + $0x464] sm:$0xf] %v1759
        %1842 = vst [vmem:[#allocation4 + $0x488] sm:$0xf] %v1760
        %1843 = vst [vmem:[#allocation4 + $0x4ac] sm:$0xf] %v1761
        %1844 = vst [vmem:[#allocation4 + $0x4d0] sm:$0xf] %v1762
        %1845 = vst [vmem:[#allocation4 + $0x4f4] sm:$0xf] %v1763
        %1846 = vst [vmem:[#allocation4 + $0x518] sm:$0xf] %v1764
        %1847 = vst [vmem:[#allocation4 + $0x53c] sm:$0xf] %v1765
        %1848 = vst [vmem:[#allocation4 + $0x560] sm:$0xf] %v1766
        %1849 = vst [vmem:[#allocation4 + $0x584] sm:$0xf] %v1767
        %1850 = vst [vmem:[#allocation4 + $0x5a8] sm:$0x3] %v1768
        %v1851 = vld [vmem:[#allocation2 + $0x12] sm:$0xff]
        %v1852 = vld [vmem:[#allocation2 + $0x1a] sm:$0xff]
        %v1853 = vld [vmem:[#allocation2 + $0x22] sm:$0xff]
        %v1854 = vld [vmem:[#allocation2 + $0x2a] sm:$0xff]
        %v1855 = vld [vmem:[#allocation2 + $0x32] sm:$0xff]
        %v1856 = vld [vmem:[#allocation2 + $0x3a] sm:$0xff]
        %v1857 = vld [vmem:[#allocation2 + $0x42] sm:$0xff]
        %v1858 = vld [vmem:[#allocation2 + $0x4a] sm:$0xff]
        %v1859 = vld [vmem:[#allocation2 + $0x52] sm:$0xff]
        %v1860 = vld [vmem:[#allocation2 + $0x5a] sm:$0xff]
        %v1861 = vld [vmem:[#allocation2 + $0x62] sm:$0xff]
        %v1862 = vld [vmem:[#allocation2 + $0x6a] sm:$0xff]
        %v1863 = vld [vmem:[#allocation2 + $0x72] sm:$0xff]
        %v1864 = vld [vmem:[#allocation2 + $0x7a] sm:$0xff]
        %v1865 = vld [vmem:[#allocation2 + $0x82] sm:$0xff]
        %v1866 = vld [vmem:[#allocation2 + $0x8a] sm:$0xff]
        %v1867 = vld [vmem:[#allocation2 + $0x92] sm:$0xff]
        %v1868 = vld [vmem:[#allocation2 + $0x9a] sm:$0xff]
        %v1869 = vld [vmem:[#allocation2 + $0xa2] sm:$0xff]
        %v1870 = vld [vmem:[#allocation2 + $0xaa] sm:$0xff]
        %v1871 = vld [vmem:[#allocation2 + $0xb2] sm:$0xff]
        %v1872 = vld [vmem:[#allocation2 + $0xba] sm:$0xff]
        %v1873 = vld [vmem:[#allocation2 + $0xc2] sm:$0xff]
        %v1874 = vld [vmem:[#allocation2 + $0xca] sm:$0xff]
        %v1875 = vld [vmem:[#allocation2 + $0xd2] sm:$0xff]
        %v1876 = vld [vmem:[#allocation2 + $0xda] sm:$0xff]
        %v1877 = vld [vmem:[#allocation2 + $0xe2] sm:$0xff]
        %v1878 = vld [vmem:[#allocation2 + $0xea] sm:$0xff]
        %v1879 = vld [vmem:[#allocation2 + $0xf2] sm:$0xff]
        %v1880 = vld [vmem:[#allocation2 + $0xfa] sm:$0xff]
        %v1881 = vld [vmem:[#allocation2 + $0x102] sm:$0xff]
        %v1882 = vld [vmem:[#allocation2 + $0x10a] sm:$0xff]
        %v1883 = vld [vmem:[#allocation2 + $0x112] sm:$0xff]
        %v1884 = vld [vmem:[#allocation2 + $0x11a] sm:$0xff]
        %v1885 = vld [vmem:[#allocation2 + $0x122] sm:$0xff]
        %v1886 = vld [vmem:[#allocation2 + $0x12a] sm:$0xff]
        %v1887 = vld [vmem:[#allocation2 + $0x132] sm:$0xff]
        %v1888 = vld [vmem:[#allocation2 + $0x13a] sm:$0xff]
        %v1889 = vld [vmem:[#allocation2 + $0x142] sm:$0xff]
        %v1890 = vld [vmem:[#allocation2 + $0x14a] sm:$0xff]
        %v1891 = vld [vmem:[#allocation2 + $0x152] sm:$0xf]
        %v1892 = vpack.c.bf16 %v1852, %v1851
        %v1893 = vpack.c.bf16 %v1854, %v1853
        %v1894 = vpack.c.bf16 %v1856, %v1855
        %v1895 = vpack.c.bf16 %v1858, %v1857
        %v1896 = vpack.c.bf16 %v1860, %v1859
        %v1897 = vpack.c.bf16 %v1862, %v1861
        %v1898 = vpack.c.bf16 %v1864, %v1863
        %v1899 = vpack.c.bf16 %v1866, %v1865
        %v1900 = vpack.c.bf16 %v1868, %v1867
        %v1901 = vpack.c.bf16 %v1870, %v1869
        %v1902 = vpack.c.bf16 %v1872, %v1871
        %v1903 = vpack.c.bf16 %v1874, %v1873
        %v1904 = vpack.c.bf16 %v1876, %v1875
        %v1905 = vpack.c.bf16 %v1878, %v1877
        %v1906 = vpack.c.bf16 %v1880, %v1879
        %v1907 = vpack.c.bf16 %v1882, %v1881
        %v1908 = vpack.c.bf16 %v1884, %v1883
        %v1909 = vpack.c.bf16 %v1886, %v1885
        %v1910 = vpack.c.bf16 %v1888, %v1887
        %v1911 = vpack.c.bf16 %v1890, %v1889
        %v1912 = vpack.c.bf16 %v1891, %v1891
        %v1934 = vunpack.c.l.b16 %v1892
        %v1935 = vunpack.c.h.b16 %v1892
        %v1936 = vunpack.c.l.b16 %v1893
        %v1937 = vunpack.c.h.b16 %v1893
        %v1938 = vunpack.c.l.b16 %v1894
        %v1939 = vunpack.c.h.b16 %v1894
        %v1940 = vunpack.c.l.b16 %v1895
        %v1941 = vunpack.c.h.b16 %v1895
        %v1942 = vunpack.c.l.b16 %v1896
        %v1943 = vunpack.c.h.b16 %v1896
        %v1944 = vunpack.c.l.b16 %v1897
        %v1945 = vunpack.c.h.b16 %v1897
        %v1946 = vunpack.c.l.b16 %v1898
        %v1947 = vunpack.c.h.b16 %v1898
        %v1948 = vunpack.c.l.b16 %v1899
        %v1949 = vunpack.c.h.b16 %v1899
        %v1950 = vunpack.c.l.b16 %v1900
        %v1951 = vunpack.c.h.b16 %v1900
        %v1952 = vunpack.c.l.b16 %v1901
        %v1953 = vunpack.c.h.b16 %v1901
        %v1954 = vunpack.c.l.b16 %v1902
        %v1955 = vunpack.c.h.b16 %v1902
        %v1956 = vunpack.c.l.b16 %v1903
        %v1957 = vunpack.c.h.b16 %v1903
        %v1958 = vunpack.c.l.b16 %v1904
        %v1959 = vunpack.c.h.b16 %v1904
        %v1960 = vunpack.c.l.b16 %v1905
        %v1961 = vunpack.c.h.b16 %v1905
        %v1962 = vunpack.c.l.b16 %v1906
        %v1963 = vunpack.c.h.b16 %v1906
        %v1964 = vunpack.c.l.b16 %v1907
        %v1965 = vunpack.c.h.b16 %v1907
        %v1966 = vunpack.c.l.b16 %v1908
        %v1967 = vunpack.c.h.b16 %v1908
        %v1968 = vunpack.c.l.b16 %v1909
        %v1969 = vunpack.c.h.b16 %v1909
        %v1970 = vunpack.c.l.b16 %v1910
        %v1971 = vunpack.c.h.b16 %v1910
        %v1972 = vunpack.c.l.b16 %v1911
        %v1973 = vunpack.c.h.b16 %v1911
        %v1974 = vunpack.c.l.b16 %v1912
        %v1975 = vpack.c.b16 %v1934, %v1934
        %v1976 = vpack.c.b16 %v1935, %v1935
        %v1977 = vpack.c.b16 %v1936, %v1936
        %v1978 = vpack.c.b16 %v1937, %v1937
        %v1979 = vpack.c.b16 %v1938, %v1938
        %v1980 = vpack.c.b16 %v1939, %v1939
        %v1981 = vpack.c.b16 %v1940, %v1940
        %v1982 = vpack.c.b16 %v1941, %v1941
        %v1983 = vpack.c.b16 %v1942, %v1942
        %v1984 = vpack.c.b16 %v1943, %v1943
        %v1985 = vpack.c.b16 %v1944, %v1944
        %v1986 = vpack.c.b16 %v1945, %v1945
        %v1987 = vpack.c.b16 %v1946, %v1946
        %v1988 = vpack.c.b16 %v1947, %v1947
        %v1989 = vpack.c.b16 %v1948, %v1948
        %v1990 = vpack.c.b16 %v1949, %v1949
        %v1991 = vpack.c.b16 %v1950, %v1950
        %v1992 = vpack.c.b16 %v1951, %v1951
        %v1993 = vpack.c.b16 %v1952, %v1952
        %v1994 = vpack.c.b16 %v1953, %v1953
        %v1995 = vpack.c.b16 %v1954, %v1954
        %v1996 = vpack.c.b16 %v1955, %v1955
        %v1997 = vpack.c.b16 %v1956, %v1956
        %v1998 = vpack.c.b16 %v1957, %v1957
        %v1999 = vpack.c.b16 %v1958, %v1958
        %v2000 = vpack.c.b16 %v1959, %v1959
        %v2001 = vpack.c.b16 %v1960, %v1960
        %v2002 = vpack.c.b16 %v1961, %v1961
        %v2003 = vpack.c.b16 %v1962, %v1962
        %v2004 = vpack.c.b16 %v1963, %v1963
        %v2005 = vpack.c.b16 %v1964, %v1964
        %v2006 = vpack.c.b16 %v1965, %v1965
        %v2007 = vpack.c.b16 %v1966, %v1966
        %v2008 = vpack.c.b16 %v1967, %v1967
        %v2009 = vpack.c.b16 %v1968, %v1968
        %v2010 = vpack.c.b16 %v1969, %v1969
        %v2011 = vpack.c.b16 %v1970, %v1970
        %v2012 = vpack.c.b16 %v1971, %v1971
        %v2013 = vpack.c.b16 %v1972, %v1972
        %v2014 = vpack.c.b16 %v1973, %v1973
        %v2015 = vpack.c.b16 %v1974, %v1974
        %2057 = vst [vmem:[#allocation4 + $0xc] sm:$0xf] %v1975
        %2058 = vst [vmem:[#allocation4 + $0x30] sm:$0xf] %v1976
        %2059 = vst [vmem:[#allocation4 + $0x54] sm:$0xf] %v1977
        %2060 = vst [vmem:[#allocation4 + $0x78] sm:$0xf] %v1978
        %2061 = vst [vmem:[#allocation4 + $0x9c] sm:$0xf] %v1979
        %2062 = vst [vmem:[#allocation4 + $0xc0] sm:$0xf] %v1980
        %2063 = vst [vmem:[#allocation4 + $0xe4] sm:$0xf] %v1981
        %2064 = vst [vmem:[#allocation4 + $0x108] sm:$0xf] %v1982
        %2065 = vst [vmem:[#allocation4 + $0x12c] sm:$0xf] %v1983
        %2066 = vst [vmem:[#allocation4 + $0x150] sm:$0xf] %v1984
        %2067 = vst [vmem:[#allocation4 + $0x174] sm:$0xf] %v1985
        %2068 = vst [vmem:[#allocation4 + $0x198] sm:$0xf] %v1986
        %2069 = vst [vmem:[#allocation4 + $0x1bc] sm:$0xf] %v1987
        %2070 = vst [vmem:[#allocation4 + $0x1e0] sm:$0xf] %v1988
        %2071 = vst [vmem:[#allocation4 + $0x204] sm:$0xf] %v1989
        %2072 = vst [vmem:[#allocation4 + $0x228] sm:$0xf] %v1990
        %2073 = vst [vmem:[#allocation4 + $0x24c] sm:$0xf] %v1991
        %2074 = vst [vmem:[#allocation4 + $0x270] sm:$0xf] %v1992
        %2075 = vst [vmem:[#allocation4 + $0x294] sm:$0xf] %v1993
        %2076 = vst [vmem:[#allocation4 + $0x2b8] sm:$0xf] %v1994
        %2077 = vst [vmem:[#allocation4 + $0x2dc] sm:$0xf] %v1995
        %2078 = vst [vmem:[#allocation4 + $0x300] sm:$0xf] %v1996
        %2079 = vst [vmem:[#allocation4 + $0x324] sm:$0xf] %v1997
        %2080 = vst [vmem:[#allocation4 + $0x348] sm:$0xf] %v1998
        %2081 = vst [vmem:[#allocation4 + $0x36c] sm:$0xf] %v1999
        %2082 = vst [vmem:[#allocation4 + $0x390] sm:$0xf] %v2000
        %2083 = vst [vmem:[#allocation4 + $0x3b4] sm:$0xf] %v2001
        %2084 = vst [vmem:[#allocation4 + $0x3d8] sm:$0xf] %v2002
        %2085 = vst [vmem:[#allocation4 + $0x3fc] sm:$0xf] %v2003
        %2086 = vst [vmem:[#allocation4 + $0x420] sm:$0xf] %v2004
        %2087 = vst [vmem:[#allocation4 + $0x444] sm:$0xf] %v2005
        %2088 = vst [vmem:[#allocation4 + $0x468] sm:$0xf] %v2006
        %2089 = vst [vmem:[#allocation4 + $0x48c] sm:$0xf] %v2007
        %2090 = vst [vmem:[#allocation4 + $0x4b0] sm:$0xf] %v2008
        %2091 = vst [vmem:[#allocation4 + $0x4d4] sm:$0xf] %v2009
        %2092 = vst [vmem:[#allocation4 + $0x4f8] sm:$0xf] %v2010
        %2093 = vst [vmem:[#allocation4 + $0x51c] sm:$0xf] %v2011
        %2094 = vst [vmem:[#allocation4 + $0x540] sm:$0xf] %v2012
        %2095 = vst [vmem:[#allocation4 + $0x564] sm:$0xf] %v2013
        %2096 = vst [vmem:[#allocation4 + $0x588] sm:$0xf] %v2014
        %2097 = vst [vmem:[#allocation4 + $0x5ac] sm:$0x3] %v2015
        %v2098 = vld [vmem:[#allocation2 + $0x13] sm:$0xff]
        %v2099 = vld [vmem:[#allocation2 + $0x1b] sm:$0xff]
        %v2100 = vld [vmem:[#allocation2 + $0x23] sm:$0xff]
        %v2101 = vld [vmem:[#allocation2 + $0x2b] sm:$0xff]
        %v2102 = vld [vmem:[#allocation2 + $0x33] sm:$0xff]
        %v2103 = vld [vmem:[#allocation2 + $0x3b] sm:$0xff]
        %v2104 = vld [vmem:[#allocation2 + $0x43] sm:$0xff]
        %v2105 = vld [vmem:[#allocation2 + $0x4b] sm:$0xff]
        %v2106 = vld [vmem:[#allocation2 + $0x53] sm:$0xff]
        %v2107 = vld [vmem:[#allocation2 + $0x5b] sm:$0xff]
        %v2108 = vld [vmem:[#allocation2 + $0x63] sm:$0xff]
        %v2109 = vld [vmem:[#allocation2 + $0x6b] sm:$0xff]
        %v2110 = vld [vmem:[#allocation2 + $0x73] sm:$0xff]
        %v2111 = vld [vmem:[#allocation2 + $0x7b] sm:$0xff]
        %v2112 = vld [vmem:[#allocation2 + $0x83] sm:$0xff]
        %v2113 = vld [vmem:[#allocation2 + $0x8b] sm:$0xff]
        %v2114 = vld [vmem:[#allocation2 + $0x93] sm:$0xff]
        %v2115 = vld [vmem:[#allocation2 + $0x9b] sm:$0xff]
        %v2116 = vld [vmem:[#allocation2 + $0xa3] sm:$0xff]
        %v2117 = vld [vmem:[#allocation2 + $0xab] sm:$0xff]
        %v2118 = vld [vmem:[#allocation2 + $0xb3] sm:$0xff]
        %v2119 = vld [vmem:[#allocation2 + $0xbb] sm:$0xff]
        %v2120 = vld [vmem:[#allocation2 + $0xc3] sm:$0xff]
        %v2121 = vld [vmem:[#allocation2 + $0xcb] sm:$0xff]
        %v2122 = vld [vmem:[#allocation2 + $0xd3] sm:$0xff]
        %v2123 = vld [vmem:[#allocation2 + $0xdb] sm:$0xff]
        %v2124 = vld [vmem:[#allocation2 + $0xe3] sm:$0xff]
        %v2125 = vld [vmem:[#allocation2 + $0xeb] sm:$0xff]
        %v2126 = vld [vmem:[#allocation2 + $0xf3] sm:$0xff]
        %v2127 = vld [vmem:[#allocation2 + $0xfb] sm:$0xff]
        %v2128 = vld [vmem:[#allocation2 + $0x103] sm:$0xff]
        %v2129 = vld [vmem:[#allocation2 + $0x10b] sm:$0xff]
        %v2130 = vld [vmem:[#allocation2 + $0x113] sm:$0xff]
        %v2131 = vld [vmem:[#allocation2 + $0x11b] sm:$0xff]
        %v2132 = vld [vmem:[#allocation2 + $0x123] sm:$0xff]
        %v2133 = vld [vmem:[#allocation2 + $0x12b] sm:$0xff]
        %v2134 = vld [vmem:[#allocation2 + $0x133] sm:$0xff]
        %v2135 = vld [vmem:[#allocation2 + $0x13b] sm:$0xff]
        %v2136 = vld [vmem:[#allocation2 + $0x143] sm:$0xff]
        %v2137 = vld [vmem:[#allocation2 + $0x14b] sm:$0xff]
        %v2138 = vld [vmem:[#allocation2 + $0x153] sm:$0xf]
        %v2139 = vpack.c.bf16 %v2099, %v2098
        %v2140 = vpack.c.bf16 %v2101, %v2100
        %v2141 = vpack.c.bf16 %v2103, %v2102
        %v2142 = vpack.c.bf16 %v2105, %v2104
        %v2143 = vpack.c.bf16 %v2107, %v2106
        %v2144 = vpack.c.bf16 %v2109, %v2108
        %v2145 = vpack.c.bf16 %v2111, %v2110
        %v2146 = vpack.c.bf16 %v2113, %v2112
        %v2147 = vpack.c.bf16 %v2115, %v2114
        %v2148 = vpack.c.bf16 %v2117, %v2116
        %v2149 = vpack.c.bf16 %v2119, %v2118
        %v2150 = vpack.c.bf16 %v2121, %v2120
        %v2151 = vpack.c.bf16 %v2123, %v2122
        %v2152 = vpack.c.bf16 %v2125, %v2124
        %v2153 = vpack.c.bf16 %v2127, %v2126
        %v2154 = vpack.c.bf16 %v2129, %v2128
        %v2155 = vpack.c.bf16 %v2131, %v2130
        %v2156 = vpack.c.bf16 %v2133, %v2132
        %v2157 = vpack.c.bf16 %v2135, %v2134
        %v2158 = vpack.c.bf16 %v2137, %v2136
        %v2159 = vpack.c.bf16 %v2138, %v2138
        %v2181 = vunpack.c.l.b16 %v2139
        %v2182 = vunpack.c.h.b16 %v2139
        %v2183 = vunpack.c.l.b16 %v2140
        %v2184 = vunpack.c.h.b16 %v2140
        %v2185 = vunpack.c.l.b16 %v2141
        %v2186 = vunpack.c.h.b16 %v2141
        %v2187 = vunpack.c.l.b16 %v2142
        %v2188 = vunpack.c.h.b16 %v2142
        %v2189 = vunpack.c.l.b16 %v2143
        %v2190 = vunpack.c.h.b16 %v2143
        %v2191 = vunpack.c.l.b16 %v2144
        %v2192 = vunpack.c.h.b16 %v2144
        %v2193 = vunpack.c.l.b16 %v2145
        %v2194 = vunpack.c.h.b16 %v2145
        %v2195 = vunpack.c.l.b16 %v2146
        %v2196 = vunpack.c.h.b16 %v2146
        %v2197 = vunpack.c.l.b16 %v2147
        %v2198 = vunpack.c.h.b16 %v2147
        %v2199 = vunpack.c.l.b16 %v2148
        %v2200 = vunpack.c.h.b16 %v2148
        %v2201 = vunpack.c.l.b16 %v2149
        %v2202 = vunpack.c.h.b16 %v2149
        %v2203 = vunpack.c.l.b16 %v2150
        %v2204 = vunpack.c.h.b16 %v2150
        %v2205 = vunpack.c.l.b16 %v2151
        %v2206 = vunpack.c.h.b16 %v2151
        %v2207 = vunpack.c.l.b16 %v2152
        %v2208 = vunpack.c.h.b16 %v2152
        %v2209 = vunpack.c.l.b16 %v2153
        %v2210 = vunpack.c.h.b16 %v2153
        %v2211 = vunpack.c.l.b16 %v2154
        %v2212 = vunpack.c.h.b16 %v2154
        %v2213 = vunpack.c.l.b16 %v2155
        %v2214 = vunpack.c.h.b16 %v2155
        %v2215 = vunpack.c.l.b16 %v2156
        %v2216 = vunpack.c.h.b16 %v2156
        %v2217 = vunpack.c.l.b16 %v2157
        %v2218 = vunpack.c.h.b16 %v2157
        %v2219 = vunpack.c.l.b16 %v2158
        %v2220 = vunpack.c.h.b16 %v2158
        %v2221 = vunpack.c.l.b16 %v2159
        %v2222 = vpack.c.b16 %v2181, %v2181
        %v2223 = vpack.c.b16 %v2182, %v2182
        %v2224 = vpack.c.b16 %v2183, %v2183
        %v2225 = vpack.c.b16 %v2184, %v2184
        %v2226 = vpack.c.b16 %v2185, %v2185
        %v2227 = vpack.c.b16 %v2186, %v2186
        %v2228 = vpack.c.b16 %v2187, %v2187
        %v2229 = vpack.c.b16 %v2188, %v2188
        %v2230 = vpack.c.b16 %v2189, %v2189
        %v2231 = vpack.c.b16 %v2190, %v2190
        %v2232 = vpack.c.b16 %v2191, %v2191
        %v2233 = vpack.c.b16 %v2192, %v2192
        %v2234 = vpack.c.b16 %v2193, %v2193
        %v2235 = vpack.c.b16 %v2194, %v2194
        %v2236 = vpack.c.b16 %v2195, %v2195
        %v2237 = vpack.c.b16 %v2196, %v2196
        %v2238 = vpack.c.b16 %v2197, %v2197
        %v2239 = vpack.c.b16 %v2198, %v2198
        %v2240 = vpack.c.b16 %v2199, %v2199
        %v2241 = vpack.c.b16 %v2200, %v2200
        %v2242 = vpack.c.b16 %v2201, %v2201
        %v2243 = vpack.c.b16 %v2202, %v2202
        %v2244 = vpack.c.b16 %v2203, %v2203
        %v2245 = vpack.c.b16 %v2204, %v2204
        %v2246 = vpack.c.b16 %v2205, %v2205
        %v2247 = vpack.c.b16 %v2206, %v2206
        %v2248 = vpack.c.b16 %v2207, %v2207
        %v2249 = vpack.c.b16 %v2208, %v2208
        %v2250 = vpack.c.b16 %v2209, %v2209
        %v2251 = vpack.c.b16 %v2210, %v2210
        %v2252 = vpack.c.b16 %v2211, %v2211
        %v2253 = vpack.c.b16 %v2212, %v2212
        %v2254 = vpack.c.b16 %v2213, %v2213
        %v2255 = vpack.c.b16 %v2214, %v2214
        %v2256 = vpack.c.b16 %v2215, %v2215
        %v2257 = vpack.c.b16 %v2216, %v2216
        %v2258 = vpack.c.b16 %v2217, %v2217
        %v2259 = vpack.c.b16 %v2218, %v2218
        %v2260 = vpack.c.b16 %v2219, %v2219
        %v2261 = vpack.c.b16 %v2220, %v2220
        %v2262 = vpack.c.b16 %v2221, %v2221
        %2304 = vst [vmem:[#allocation4 + $0x10] sm:$0xf] %v2222
        %2305 = vst [vmem:[#allocation4 + $0x34] sm:$0xf] %v2223
        %2306 = vst [vmem:[#allocation4 + $0x58] sm:$0xf] %v2224
        %2307 = vst [vmem:[#allocation4 + $0x7c] sm:$0xf] %v2225
        %2308 = vst [vmem:[#allocation4 + $0xa0] sm:$0xf] %v2226
        %2309 = vst [vmem:[#allocation4 + $0xc4] sm:$0xf] %v2227
        %2310 = vst [vmem:[#allocation4 + $0xe8] sm:$0xf] %v2228
        %2311 = vst [vmem:[#allocation4 + $0x10c] sm:$0xf] %v2229
        %2312 = vst [vmem:[#allocation4 + $0x130] sm:$0xf] %v2230
        %2313 = vst [vmem:[#allocation4 + $0x154] sm:$0xf] %v2231
        %2314 = vst [vmem:[#allocation4 + $0x178] sm:$0xf] %v2232
        %2315 = vst [vmem:[#allocation4 + $0x19c] sm:$0xf] %v2233
        %2316 = vst [vmem:[#allocation4 + $0x1c0] sm:$0xf] %v2234
        %2317 = vst [vmem:[#allocation4 + $0x1e4] sm:$0xf] %v2235
        %2318 = vst [vmem:[#allocation4 + $0x208] sm:$0xf] %v2236
        %2319 = vst [vmem:[#allocation4 + $0x22c] sm:$0xf] %v2237
        %2320 = vst [vmem:[#allocation4 + $0x250] sm:$0xf] %v2238
        %2321 = vst [vmem:[#allocation4 + $0x274] sm:$0xf] %v2239
        %2322 = vst [vmem:[#allocation4 + $0x298] sm:$0xf] %v2240
        %2323 = vst [vmem:[#allocation4 + $0x2bc] sm:$0xf] %v2241
        %2324 = vst [vmem:[#allocation4 + $0x2e0] sm:$0xf] %v2242
        %2325 = vst [vmem:[#allocation4 + $0x304] sm:$0xf] %v2243
        %2326 = vst [vmem:[#allocation4 + $0x328] sm:$0xf] %v2244
        %2327 = vst [vmem:[#allocation4 + $0x34c] sm:$0xf] %v2245
        %2328 = vst [vmem:[#allocation4 + $0x370] sm:$0xf] %v2246
        %2329 = vst [vmem:[#allocation4 + $0x394] sm:$0xf] %v2247
        %2330 = vst [vmem:[#allocation4 + $0x3b8] sm:$0xf] %v2248
        %2331 = vst [vmem:[#allocation4 + $0x3dc] sm:$0xf] %v2249
        %2332 = vst [vmem:[#allocation4 + $0x400] sm:$0xf] %v2250
        %2333 = vst [vmem:[#allocation4 + $0x424] sm:$0xf] %v2251
        %2334 = vst [vmem:[#allocation4 + $0x448] sm:$0xf] %v2252
        %2335 = vst [vmem:[#allocation4 + $0x46c] sm:$0xf] %v2253
        %2336 = vst [vmem:[#allocation4 + $0x490] sm:$0xf] %v2254
        %2337 = vst [vmem:[#allocation4 + $0x4b4] sm:$0xf] %v2255
        %2338 = vst [vmem:[#allocation4 + $0x4d8] sm:$0xf] %v2256
        %2339 = vst [vmem:[#allocation4 + $0x4fc] sm:$0xf] %v2257
        %2340 = vst [vmem:[#allocation4 + $0x520] sm:$0xf] %v2258
        %2341 = vst [vmem:[#allocation4 + $0x544] sm:$0xf] %v2259
        %2342 = vst [vmem:[#allocation4 + $0x568] sm:$0xf] %v2260
        %2343 = vst [vmem:[#allocation4 + $0x58c] sm:$0xf] %v2261
        %2344 = vst [vmem:[#allocation4 + $0x5b0] sm:$0x3] %v2262
        %v2345 = vld [vmem:[#allocation2 + $0x14] sm:$0xff]
        %v2346 = vld [vmem:[#allocation2 + $0x1c] sm:$0xff]
        %v2347 = vld [vmem:[#allocation2 + $0x24] sm:$0xff]
        %v2348 = vld [vmem:[#allocation2 + $0x2c] sm:$0xff]
        %v2349 = vld [vmem:[#allocation2 + $0x34] sm:$0xff]
        %v2350 = vld [vmem:[#allocation2 + $0x3c] sm:$0xff]
        %v2351 = vld [vmem:[#allocation2 + $0x44] sm:$0xff]
        %v2352 = vld [vmem:[#allocation2 + $0x4c] sm:$0xff]
        %v2353 = vld [vmem:[#allocation2 + $0x54] sm:$0xff]
        %v2354 = vld [vmem:[#allocation2 + $0x5c] sm:$0xff]
        %v2355 = vld [vmem:[#allocation2 + $0x64] sm:$0xff]
        %v2356 = vld [vmem:[#allocation2 + $0x6c] sm:$0xff]
        %v2357 = vld [vmem:[#allocation2 + $0x74] sm:$0xff]
        %v2358 = vld [vmem:[#allocation2 + $0x7c] sm:$0xff]
        %v2359 = vld [vmem:[#allocation2 + $0x84] sm:$0xff]
        %v2360 = vld [vmem:[#allocation2 + $0x8c] sm:$0xff]
        %v2361 = vld [vmem:[#allocation2 + $0x94] sm:$0xff]
        %v2362 = vld [vmem:[#allocation2 + $0x9c] sm:$0xff]
        %v2363 = vld [vmem:[#allocation2 + $0xa4] sm:$0xff]
        %v2364 = vld [vmem:[#allocation2 + $0xac] sm:$0xff]
        %v2365 = vld [vmem:[#allocation2 + $0xb4] sm:$0xff]
        %v2366 = vld [vmem:[#allocation2 + $0xbc] sm:$0xff]
        %v2367 = vld [vmem:[#allocation2 + $0xc4] sm:$0xff]
        %v2368 = vld [vmem:[#allocation2 + $0xcc] sm:$0xff]
        %v2369 = vld [vmem:[#allocation2 + $0xd4] sm:$0xff]
        %v2370 = vld [vmem:[#allocation2 + $0xdc] sm:$0xff]
        %v2371 = vld [vmem:[#allocation2 + $0xe4] sm:$0xff]
        %v2372 = vld [vmem:[#allocation2 + $0xec] sm:$0xff]
        %v2373 = vld [vmem:[#allocation2 + $0xf4] sm:$0xff]
        %v2374 = vld [vmem:[#allocation2 + $0xfc] sm:$0xff]
        %v2375 = vld [vmem:[#allocation2 + $0x104] sm:$0xff]
        %v2376 = vld [vmem:[#allocation2 + $0x10c] sm:$0xff]
        %v2377 = vld [vmem:[#allocation2 + $0x114] sm:$0xff]
        %v2378 = vld [vmem:[#allocation2 + $0x11c] sm:$0xff]
        %v2379 = vld [vmem:[#allocation2 + $0x124] sm:$0xff]
        %v2380 = vld [vmem:[#allocation2 + $0x12c] sm:$0xff]
        %v2381 = vld [vmem:[#allocation2 + $0x134] sm:$0xff]
        %v2382 = vld [vmem:[#allocation2 + $0x13c] sm:$0xff]
        %v2383 = vld [vmem:[#allocation2 + $0x144] sm:$0xff]
        %v2384 = vld [vmem:[#allocation2 + $0x14c] sm:$0xff]
        %v2385 = vld [vmem:[#allocation2 + $0x154] sm:$0xf]
        %v2386 = vpack.c.bf16 %v2346, %v2345
        %v2387 = vpack.c.bf16 %v2348, %v2347
        %v2388 = vpack.c.bf16 %v2350, %v2349
        %v2389 = vpack.c.bf16 %v2352, %v2351
        %v2390 = vpack.c.bf16 %v2354, %v2353
        %v2391 = vpack.c.bf16 %v2356, %v2355
        %v2392 = vpack.c.bf16 %v2358, %v2357
        %v2393 = vpack.c.bf16 %v2360, %v2359
        %v2394 = vpack.c.bf16 %v2362, %v2361
        %v2395 = vpack.c.bf16 %v2364, %v2363
        %v2396 = vpack.c.bf16 %v2366, %v2365
        %v2397 = vpack.c.bf16 %v2368, %v2367
        %v2398 = vpack.c.bf16 %v2370, %v2369
        %v2399 = vpack.c.bf16 %v2372, %v2371
        %v2400 = vpack.c.bf16 %v2374, %v2373
        %v2401 = vpack.c.bf16 %v2376, %v2375
        %v2402 = vpack.c.bf16 %v2378, %v2377
        %v2403 = vpack.c.bf16 %v2380, %v2379
        %v2404 = vpack.c.bf16 %v2382, %v2381
        %v2405 = vpack.c.bf16 %v2384, %v2383
        %v2406 = vpack.c.bf16 %v2385, %v2385
        %v2428 = vunpack.c.l.b16 %v2386
        %v2429 = vunpack.c.h.b16 %v2386
        %v2430 = vunpack.c.l.b16 %v2387
        %v2431 = vunpack.c.h.b16 %v2387
        %v2432 = vunpack.c.l.b16 %v2388
        %v2433 = vunpack.c.h.b16 %v2388
        %v2434 = vunpack.c.l.b16 %v2389
        %v2435 = vunpack.c.h.b16 %v2389
        %v2436 = vunpack.c.l.b16 %v2390
        %v2437 = vunpack.c.h.b16 %v2390
        %v2438 = vunpack.c.l.b16 %v2391
        %v2439 = vunpack.c.h.b16 %v2391
        %v2440 = vunpack.c.l.b16 %v2392
        %v2441 = vunpack.c.h.b16 %v2392
        %v2442 = vunpack.c.l.b16 %v2393
        %v2443 = vunpack.c.h.b16 %v2393
        %v2444 = vunpack.c.l.b16 %v2394
        %v2445 = vunpack.c.h.b16 %v2394
        %v2446 = vunpack.c.l.b16 %v2395
        %v2447 = vunpack.c.h.b16 %v2395
        %v2448 = vunpack.c.l.b16 %v2396
        %v2449 = vunpack.c.h.b16 %v2396
        %v2450 = vunpack.c.l.b16 %v2397
        %v2451 = vunpack.c.h.b16 %v2397
        %v2452 = vunpack.c.l.b16 %v2398
        %v2453 = vunpack.c.h.b16 %v2398
        %v2454 = vunpack.c.l.b16 %v2399
        %v2455 = vunpack.c.h.b16 %v2399
        %v2456 = vunpack.c.l.b16 %v2400
        %v2457 = vunpack.c.h.b16 %v2400
        %v2458 = vunpack.c.l.b16 %v2401
        %v2459 = vunpack.c.h.b16 %v2401
        %v2460 = vunpack.c.l.b16 %v2402
        %v2461 = vunpack.c.h.b16 %v2402
        %v2462 = vunpack.c.l.b16 %v2403
        %v2463 = vunpack.c.h.b16 %v2403
        %v2464 = vunpack.c.l.b16 %v2404
        %v2465 = vunpack.c.h.b16 %v2404
        %v2466 = vunpack.c.l.b16 %v2405
        %v2467 = vunpack.c.h.b16 %v2405
        %v2468 = vunpack.c.l.b16 %v2406
        %v2469 = vpack.c.b16 %v2428, %v2428
        %v2470 = vpack.c.b16 %v2429, %v2429
        %v2471 = vpack.c.b16 %v2430, %v2430
        %v2472 = vpack.c.b16 %v2431, %v2431
        %v2473 = vpack.c.b16 %v2432, %v2432
        %v2474 = vpack.c.b16 %v2433, %v2433
        %v2475 = vpack.c.b16 %v2434, %v2434
        %v2476 = vpack.c.b16 %v2435, %v2435
        %v2477 = vpack.c.b16 %v2436, %v2436
        %v2478 = vpack.c.b16 %v2437, %v2437
        %v2479 = vpack.c.b16 %v2438, %v2438
        %v2480 = vpack.c.b16 %v2439, %v2439
        %v2481 = vpack.c.b16 %v2440, %v2440
        %v2482 = vpack.c.b16 %v2441, %v2441
        %v2483 = vpack.c.b16 %v2442, %v2442
        %v2484 = vpack.c.b16 %v2443, %v2443
        %v2485 = vpack.c.b16 %v2444, %v2444
        %v2486 = vpack.c.b16 %v2445, %v2445
        %v2487 = vpack.c.b16 %v2446, %v2446
        %v2488 = vpack.c.b16 %v2447, %v2447
        %v2489 = vpack.c.b16 %v2448, %v2448
        %v2490 = vpack.c.b16 %v2449, %v2449
        %v2491 = vpack.c.b16 %v2450, %v2450
        %v2492 = vpack.c.b16 %v2451, %v2451
        %v2493 = vpack.c.b16 %v2452, %v2452
        %v2494 = vpack.c.b16 %v2453, %v2453
        %v2495 = vpack.c.b16 %v2454, %v2454
        %v2496 = vpack.c.b16 %v2455, %v2455
        %v2497 = vpack.c.b16 %v2456, %v2456
        %v2498 = vpack.c.b16 %v2457, %v2457
        %v2499 = vpack.c.b16 %v2458, %v2458
        %v2500 = vpack.c.b16 %v2459, %v2459
        %v2501 = vpack.c.b16 %v2460, %v2460
        %v2502 = vpack.c.b16 %v2461, %v2461
        %v2503 = vpack.c.b16 %v2462, %v2462
        %v2504 = vpack.c.b16 %v2463, %v2463
        %v2505 = vpack.c.b16 %v2464, %v2464
        %v2506 = vpack.c.b16 %v2465, %v2465
        %v2507 = vpack.c.b16 %v2466, %v2466
        %v2508 = vpack.c.b16 %v2467, %v2467
        %v2509 = vpack.c.b16 %v2468, %v2468
        %2551 = vst [vmem:[#allocation4 + $0x14] sm:$0xf] %v2469
        %2552 = vst [vmem:[#allocation4 + $0x38] sm:$0xf] %v2470
        %2553 = vst [vmem:[#allocation4 + $0x5c] sm:$0xf] %v2471
        %2554 = vst [vmem:[#allocation4 + $0x80] sm:$0xf] %v2472
        %2555 = vst [vmem:[#allocation4 + $0xa4] sm:$0xf] %v2473
        %2556 = vst [vmem:[#allocation4 + $0xc8] sm:$0xf] %v2474
        %2557 = vst [vmem:[#allocation4 + $0xec] sm:$0xf] %v2475
        %2558 = vst [vmem:[#allocation4 + $0x110] sm:$0xf] %v2476
        %2559 = vst [vmem:[#allocation4 + $0x134] sm:$0xf] %v2477
        %2560 = vst [vmem:[#allocation4 + $0x158] sm:$0xf] %v2478
        %2561 = vst [vmem:[#allocation4 + $0x17c] sm:$0xf] %v2479
        %2562 = vst [vmem:[#allocation4 + $0x1a0] sm:$0xf] %v2480
        %2563 = vst [vmem:[#allocation4 + $0x1c4] sm:$0xf] %v2481
        %2564 = vst [vmem:[#allocation4 + $0x1e8] sm:$0xf] %v2482
        %2565 = vst [vmem:[#allocation4 + $0x20c] sm:$0xf] %v2483
        %2566 = vst [vmem:[#allocation4 + $0x230] sm:$0xf] %v2484
        %2567 = vst [vmem:[#allocation4 + $0x254] sm:$0xf] %v2485
        %2568 = vst [vmem:[#allocation4 + $0x278] sm:$0xf] %v2486
        %2569 = vst [vmem:[#allocation4 + $0x29c] sm:$0xf] %v2487
        %2570 = vst [vmem:[#allocation4 + $0x2c0] sm:$0xf] %v2488
        %2571 = vst [vmem:[#allocation4 + $0x2e4] sm:$0xf] %v2489
        %2572 = vst [vmem:[#allocation4 + $0x308] sm:$0xf] %v2490
        %2573 = vst [vmem:[#allocation4 + $0x32c] sm:$0xf] %v2491
        %2574 = vst [vmem:[#allocation4 + $0x350] sm:$0xf] %v2492
        %2575 = vst [vmem:[#allocation4 + $0x374] sm:$0xf] %v2493
        %2576 = vst [vmem:[#allocation4 + $0x398] sm:$0xf] %v2494
        %2577 = vst [vmem:[#allocation4 + $0x3bc] sm:$0xf] %v2495
        %2578 = vst [vmem:[#allocation4 + $0x3e0] sm:$0xf] %v2496
        %2579 = vst [vmem:[#allocation4 + $0x404] sm:$0xf] %v2497
        %2580 = vst [vmem:[#allocation4 + $0x428] sm:$0xf] %v2498
        %2581 = vst [vmem:[#allocation4 + $0x44c] sm:$0xf] %v2499
        %2582 = vst [vmem:[#allocation4 + $0x470] sm:$0xf] %v2500
        %2583 = vst [vmem:[#allocation4 + $0x494] sm:$0xf] %v2501
        %2584 = vst [vmem:[#allocation4 + $0x4b8] sm:$0xf] %v2502
        %2585 = vst [vmem:[#allocation4 + $0x4dc] sm:$0xf] %v2503
        %2586 = vst [vmem:[#allocation4 + $0x500] sm:$0xf] %v2504
        %2587 = vst [vmem:[#allocation4 + $0x524] sm:$0xf] %v2505
        %2588 = vst [vmem:[#allocation4 + $0x548] sm:$0xf] %v2506
        %2589 = vst [vmem:[#allocation4 + $0x56c] sm:$0xf] %v2507
        %2590 = vst [vmem:[#allocation4 + $0x590] sm:$0xf] %v2508
        %2591 = vst [vmem:[#allocation4 + $0x5b4] sm:$0x3] %v2509
        %v2592 = vld [vmem:[#allocation2 + $0x24] sm:$0xff]
        %v2593 = vld [vmem:[#allocation2 + $0x2c] sm:$0xff]
        %v2594 = vld [vmem:[#allocation2 + $0x34] sm:$0xff]
        %v2595 = vld [vmem:[#allocation2 + $0x3c] sm:$0xff]
        %v2596 = vld [vmem:[#allocation2 + $0x44] sm:$0xff]
        %v2597 = vld [vmem:[#allocation2 + $0x4c] sm:$0xff]
        %v2598 = vld [vmem:[#allocation2 + $0x54] sm:$0xff]
        %v2599 = vld [vmem:[#allocation2 + $0x5c] sm:$0xff]
        %v2600 = vld [vmem:[#allocation2 + $0x64] sm:$0xff]
        %v2601 = vld [vmem:[#allocation2 + $0x6c] sm:$0xff]
        %v2602 = vld [vmem:[#allocation2 + $0x74] sm:$0xff]
        %v2603 = vld [vmem:[#allocation2 + $0x7c] sm:$0xff]
        %v2604 = vld [vmem:[#allocation2 + $0x84] sm:$0xff]
        %v2605 = vld [vmem:[#allocation2 + $0x8c] sm:$0xff]
        %v2606 = vld [vmem:[#allocation2 + $0x94] sm:$0xff]
        %v2607 = vld [vmem:[#allocation2 + $0x9c] sm:$0xff]
        %v2608 = vld [vmem:[#allocation2 + $0xa4] sm:$0xff]
        %v2609 = vld [vmem:[#allocation2 + $0xac] sm:$0xff]
        %v2610 = vld [vmem:[#allocation2 + $0xb4] sm:$0xff]
        %v2611 = vld [vmem:[#allocation2 + $0xbc] sm:$0xff]
        %v2612 = vld [vmem:[#allocation2 + $0xc4] sm:$0xff]
        %v2613 = vld [vmem:[#allocation2 + $0xcc] sm:$0xff]
        %v2614 = vld [vmem:[#allocation2 + $0xd4] sm:$0xff]
        %v2615 = vld [vmem:[#allocation2 + $0xdc] sm:$0xff]
        %v2616 = vld [vmem:[#allocation2 + $0xe4] sm:$0xff]
        %v2617 = vld [vmem:[#allocation2 + $0xec] sm:$0xff]
        %v2618 = vld [vmem:[#allocation2 + $0xf4] sm:$0xff]
        %v2619 = vld [vmem:[#allocation2 + $0xfc] sm:$0xff]
        %v2620 = vld [vmem:[#allocation2 + $0x104] sm:$0xff]
        %v2621 = vld [vmem:[#allocation2 + $0x10c] sm:$0xff]
        %v2622 = vld [vmem:[#allocation2 + $0x114] sm:$0xff]
        %v2623 = vld [vmem:[#allocation2 + $0x11c] sm:$0xff]
        %v2624 = vld [vmem:[#allocation2 + $0x124] sm:$0xff]
        %v2625 = vld [vmem:[#allocation2 + $0x12c] sm:$0xff]
        %v2626 = vld [vmem:[#allocation2 + $0x134] sm:$0xff]
        %v2627 = vld [vmem:[#allocation2 + $0x13c] sm:$0xff]
        %v2628 = vld [vmem:[#allocation2 + $0x144] sm:$0xff]
        %v2629 = vld [vmem:[#allocation2 + $0x14c] sm:$0xff]
        %v2630 = vld [vmem:[#allocation2 + $0x154] sm:$0xff]
        %v2631 = vld [vmem:[#allocation2 + $0x15c] sm:$0xff]
        %v2632 = vld [vmem:[#allocation2 + $0x164] sm:$0xf]
        %v2633 = vpack.c.bf16 %v2593, %v2592
        %v2634 = vpack.c.bf16 %v2595, %v2594
        %v2635 = vpack.c.bf16 %v2597, %v2596
        %v2636 = vpack.c.bf16 %v2599, %v2598
        %v2637 = vpack.c.bf16 %v2601, %v2600
        %v2638 = vpack.c.bf16 %v2603, %v2602
        %v2639 = vpack.c.bf16 %v2605, %v2604
        %v2640 = vpack.c.bf16 %v2607, %v2606
        %v2641 = vpack.c.bf16 %v2609, %v2608
        %v2642 = vpack.c.bf16 %v2611, %v2610
        %v2643 = vpack.c.bf16 %v2613, %v2612
        %v2644 = vpack.c.bf16 %v2615, %v2614
        %v2645 = vpack.c.bf16 %v2617, %v2616
        %v2646 = vpack.c.bf16 %v2619, %v2618
        %v2647 = vpack.c.bf16 %v2621, %v2620
        %v2648 = vpack.c.bf16 %v2623, %v2622
        %v2649 = vpack.c.bf16 %v2625, %v2624
        %v2650 = vpack.c.bf16 %v2627, %v2626
        %v2651 = vpack.c.bf16 %v2629, %v2628
        %v2652 = vpack.c.bf16 %v2631, %v2630
        %v2653 = vpack.c.bf16 %v2632, %v2632
        %v2675 = vunpack.c.l.b16 %v2633
        %v2676 = vunpack.c.h.b16 %v2633
        %v2677 = vunpack.c.l.b16 %v2634
        %v2678 = vunpack.c.h.b16 %v2634
        %v2679 = vunpack.c.l.b16 %v2635
        %v2680 = vunpack.c.h.b16 %v2635
        %v2681 = vunpack.c.l.b16 %v2636
        %v2682 = vunpack.c.h.b16 %v2636
        %v2683 = vunpack.c.l.b16 %v2637
        %v2684 = vunpack.c.h.b16 %v2637
        %v2685 = vunpack.c.l.b16 %v2638
        %v2686 = vunpack.c.h.b16 %v2638
        %v2687 = vunpack.c.l.b16 %v2639
        %v2688 = vunpack.c.h.b16 %v2639
        %v2689 = vunpack.c.l.b16 %v2640
        %v2690 = vunpack.c.h.b16 %v2640
        %v2691 = vunpack.c.l.b16 %v2641
        %v2692 = vunpack.c.h.b16 %v2641
        %v2693 = vunpack.c.l.b16 %v2642
        %v2694 = vunpack.c.h.b16 %v2642
        %v2695 = vunpack.c.l.b16 %v2643
        %v2696 = vunpack.c.h.b16 %v2643
        %v2697 = vunpack.c.l.b16 %v2644
        %v2698 = vunpack.c.h.b16 %v2644
        %v2699 = vunpack.c.l.b16 %v2645
        %v2700 = vunpack.c.h.b16 %v2645
        %v2701 = vunpack.c.l.b16 %v2646
        %v2702 = vunpack.c.h.b16 %v2646
        %v2703 = vunpack.c.l.b16 %v2647
        %v2704 = vunpack.c.h.b16 %v2647
        %v2705 = vunpack.c.l.b16 %v2648
        %v2706 = vunpack.c.h.b16 %v2648
        %v2707 = vunpack.c.l.b16 %v2649
        %v2708 = vunpack.c.h.b16 %v2649
        %v2709 = vunpack.c.l.b16 %v2650
        %v2710 = vunpack.c.h.b16 %v2650
        %v2711 = vunpack.c.l.b16 %v2651
        %v2712 = vunpack.c.h.b16 %v2651
        %v2713 = vunpack.c.l.b16 %v2652
        %v2714 = vunpack.c.h.b16 %v2652
        %v2715 = vunpack.c.l.b16 %v2653
        %v2716 = vpack.c.b16 %v2675, %v2675
        %v2717 = vpack.c.b16 %v2676, %v2676
        %v2718 = vpack.c.b16 %v2677, %v2677
        %v2719 = vpack.c.b16 %v2678, %v2678
        %v2720 = vpack.c.b16 %v2679, %v2679
        %v2721 = vpack.c.b16 %v2680, %v2680
        %v2722 = vpack.c.b16 %v2681, %v2681
        %v2723 = vpack.c.b16 %v2682, %v2682
        %v2724 = vpack.c.b16 %v2683, %v2683
        %v2725 = vpack.c.b16 %v2684, %v2684
        %v2726 = vpack.c.b16 %v2685, %v2685
        %v2727 = vpack.c.b16 %v2686, %v2686
        %v2728 = vpack.c.b16 %v2687, %v2687
        %v2729 = vpack.c.b16 %v2688, %v2688
        %v2730 = vpack.c.b16 %v2689, %v2689
        %v2731 = vpack.c.b16 %v2690, %v2690
        %v2732 = vpack.c.b16 %v2691, %v2691
        %v2733 = vpack.c.b16 %v2692, %v2692
        %v2734 = vpack.c.b16 %v2693, %v2693
        %v2735 = vpack.c.b16 %v2694, %v2694
        %v2736 = vpack.c.b16 %v2695, %v2695
        %v2737 = vpack.c.b16 %v2696, %v2696
        %v2738 = vpack.c.b16 %v2697, %v2697
        %v2739 = vpack.c.b16 %v2698, %v2698
        %v2740 = vpack.c.b16 %v2699, %v2699
        %v2741 = vpack.c.b16 %v2700, %v2700
        %v2742 = vpack.c.b16 %v2701, %v2701
        %v2743 = vpack.c.b16 %v2702, %v2702
        %v2744 = vpack.c.b16 %v2703, %v2703
        %v2745 = vpack.c.b16 %v2704, %v2704
        %v2746 = vpack.c.b16 %v2705, %v2705
        %v2747 = vpack.c.b16 %v2706, %v2706
        %v2748 = vpack.c.b16 %v2707, %v2707
        %v2749 = vpack.c.b16 %v2708, %v2708
        %v2750 = vpack.c.b16 %v2709, %v2709
        %v2751 = vpack.c.b16 %v2710, %v2710
        %v2752 = vpack.c.b16 %v2711, %v2711
        %v2753 = vpack.c.b16 %v2712, %v2712
        %v2754 = vpack.c.b16 %v2713, %v2713
        %v2755 = vpack.c.b16 %v2714, %v2714
        %v2756 = vpack.c.b16 %v2715, %v2715
        %2798 = vst [vmem:[#allocation4 + $0x18] sm:$0xf] %v2716
        %2799 = vst [vmem:[#allocation4 + $0x3c] sm:$0xf] %v2717
        %2800 = vst [vmem:[#allocation4 + $0x60] sm:$0xf] %v2718
        %2801 = vst [vmem:[#allocation4 + $0x84] sm:$0xf] %v2719
        %2802 = vst [vmem:[#allocation4 + $0xa8] sm:$0xf] %v2720
        %2803 = vst [vmem:[#allocation4 + $0xcc] sm:$0xf] %v2721
        %2804 = vst [vmem:[#allocation4 + $0xf0] sm:$0xf] %v2722
        %2805 = vst [vmem:[#allocation4 + $0x114] sm:$0xf] %v2723
        %2806 = vst [vmem:[#allocation4 + $0x138] sm:$0xf] %v2724
        %2807 = vst [vmem:[#allocation4 + $0x15c] sm:$0xf] %v2725
        %2808 = vst [vmem:[#allocation4 + $0x180] sm:$0xf] %v2726
        %2809 = vst [vmem:[#allocation4 + $0x1a4] sm:$0xf] %v2727
        %2810 = vst [vmem:[#allocation4 + $0x1c8] sm:$0xf] %v2728
        %2811 = vst [vmem:[#allocation4 + $0x1ec] sm:$0xf] %v2729
        %2812 = vst [vmem:[#allocation4 + $0x210] sm:$0xf] %v2730
        %2813 = vst [vmem:[#allocation4 + $0x234] sm:$0xf] %v2731
        %2814 = vst [vmem:[#allocation4 + $0x258] sm:$0xf] %v2732
        %2815 = vst [vmem:[#allocation4 + $0x27c] sm:$0xf] %v2733
        %2816 = vst [vmem:[#allocation4 + $0x2a0] sm:$0xf] %v2734
        %2817 = vst [vmem:[#allocation4 + $0x2c4] sm:$0xf] %v2735
        %2818 = vst [vmem:[#allocation4 + $0x2e8] sm:$0xf] %v2736
        %2819 = vst [vmem:[#allocation4 + $0x30c] sm:$0xf] %v2737
        %2820 = vst [vmem:[#allocation4 + $0x330] sm:$0xf] %v2738
        %2821 = vst [vmem:[#allocation4 + $0x354] sm:$0xf] %v2739
        %2822 = vst [vmem:[#allocation4 + $0x378] sm:$0xf] %v2740
        %2823 = vst [vmem:[#allocation4 + $0x39c] sm:$0xf] %v2741
        %2824 = vst [vmem:[#allocation4 + $0x3c0] sm:$0xf] %v2742
        %2825 = vst [vmem:[#allocation4 + $0x3e4] sm:$0xf] %v2743
        %2826 = vst [vmem:[#allocation4 + $0x408] sm:$0xf] %v2744
        %2827 = vst [vmem:[#allocation4 + $0x42c] sm:$0xf] %v2745
        %2828 = vst [vmem:[#allocation4 + $0x450] sm:$0xf] %v2746
        %2829 = vst [vmem:[#allocation4 + $0x474] sm:$0xf] %v2747
        %2830 = vst [vmem:[#allocation4 + $0x498] sm:$0xf] %v2748
        %2831 = vst [vmem:[#allocation4 + $0x4bc] sm:$0xf] %v2749
        %2832 = vst [vmem:[#allocation4 + $0x4e0] sm:$0xf] %v2750
        %2833 = vst [vmem:[#allocation4 + $0x504] sm:$0xf] %v2751
        %2834 = vst [vmem:[#allocation4 + $0x528] sm:$0xf] %v2752
        %2835 = vst [vmem:[#allocation4 + $0x54c] sm:$0xf] %v2753
        %2836 = vst [vmem:[#allocation4 + $0x570] sm:$0xf] %v2754
        %2837 = vst [vmem:[#allocation4 + $0x594] sm:$0xf] %v2755
        %2838 = vst [vmem:[#allocation4 + $0x5b8] sm:$0x3] %v2756
        %v2839 = vld [vmem:[#allocation2 + $0x25] sm:$0xff]
        %v2840 = vld [vmem:[#allocation2 + $0x2d] sm:$0xff]
        %v2841 = vld [vmem:[#allocation2 + $0x35] sm:$0xff]
        %v2842 = vld [vmem:[#allocation2 + $0x3d] sm:$0xff]
        %v2843 = vld [vmem:[#allocation2 + $0x45] sm:$0xff]
        %v2844 = vld [vmem:[#allocation2 + $0x4d] sm:$0xff]
        %v2845 = vld [vmem:[#allocation2 + $0x55] sm:$0xff]
        %v2846 = vld [vmem:[#allocation2 + $0x5d] sm:$0xff]
        %v2847 = vld [vmem:[#allocation2 + $0x65] sm:$0xff]
        %v2848 = vld [vmem:[#allocation2 + $0x6d] sm:$0xff]
        %v2849 = vld [vmem:[#allocation2 + $0x75] sm:$0xff]
        %v2850 = vld [vmem:[#allocation2 + $0x7d] sm:$0xff]
        %v2851 = vld [vmem:[#allocation2 + $0x85] sm:$0xff]
        %v2852 = vld [vmem:[#allocation2 + $0x8d] sm:$0xff]
        %v2853 = vld [vmem:[#allocation2 + $0x95] sm:$0xff]
        %v2854 = vld [vmem:[#allocation2 + $0x9d] sm:$0xff]
        %v2855 = vld [vmem:[#allocation2 + $0xa5] sm:$0xff]
        %v2856 = vld [vmem:[#allocation2 + $0xad] sm:$0xff]
        %v2857 = vld [vmem:[#allocation2 + $0xb5] sm:$0xff]
        %v2858 = vld [vmem:[#allocation2 + $0xbd] sm:$0xff]
        %v2859 = vld [vmem:[#allocation2 + $0xc5] sm:$0xff]
        %v2860 = vld [vmem:[#allocation2 + $0xcd] sm:$0xff]
        %v2861 = vld [vmem:[#allocation2 + $0xd5] sm:$0xff]
        %v2862 = vld [vmem:[#allocation2 + $0xdd] sm:$0xff]
        %v2863 = vld [vmem:[#allocation2 + $0xe5] sm:$0xff]
        %v2864 = vld [vmem:[#allocation2 + $0xed] sm:$0xff]
        %v2865 = vld [vmem:[#allocation2 + $0xf5] sm:$0xff]
        %v2866 = vld [vmem:[#allocation2 + $0xfd] sm:$0xff]
        %v2867 = vld [vmem:[#allocation2 + $0x105] sm:$0xff]
        %v2868 = vld [vmem:[#allocation2 + $0x10d] sm:$0xff]
        %v2869 = vld [vmem:[#allocation2 + $0x115] sm:$0xff]
        %v2870 = vld [vmem:[#allocation2 + $0x11d] sm:$0xff]
        %v2871 = vld [vmem:[#allocation2 + $0x125] sm:$0xff]
        %v2872 = vld [vmem:[#allocation2 + $0x12d] sm:$0xff]
        %v2873 = vld [vmem:[#allocation2 + $0x135] sm:$0xff]
        %v2874 = vld [vmem:[#allocation2 + $0x13d] sm:$0xff]
        %v2875 = vld [vmem:[#allocation2 + $0x145] sm:$0xff]
        %v2876 = vld [vmem:[#allocation2 + $0x14d] sm:$0xff]
        %v2877 = vld [vmem:[#allocation2 + $0x155] sm:$0xff]
        %v2878 = vld [vmem:[#allocation2 + $0x15d] sm:$0xff]
        %v2879 = vld [vmem:[#allocation2 + $0x165] sm:$0xf]
        %v2880 = vpack.c.bf16 %v2840, %v2839
        %v2881 = vpack.c.bf16 %v2842, %v2841
        %v2882 = vpack.c.bf16 %v2844, %v2843
        %v2883 = vpack.c.bf16 %v2846, %v2845
        %v2884 = vpack.c.bf16 %v2848, %v2847
        %v2885 = vpack.c.bf16 %v2850, %v2849
        %v2886 = vpack.c.bf16 %v2852, %v2851
        %v2887 = vpack.c.bf16 %v2854, %v2853
        %v2888 = vpack.c.bf16 %v2856, %v2855
        %v2889 = vpack.c.bf16 %v2858, %v2857
        %v2890 = vpack.c.bf16 %v2860, %v2859
        %v2891 = vpack.c.bf16 %v2862, %v2861
        %v2892 = vpack.c.bf16 %v2864, %v2863
        %v2893 = vpack.c.bf16 %v2866, %v2865
        %v2894 = vpack.c.bf16 %v2868, %v2867
        %v2895 = vpack.c.bf16 %v2870, %v2869
        %v2896 = vpack.c.bf16 %v2872, %v2871
        %v2897 = vpack.c.bf16 %v2874, %v2873
        %v2898 = vpack.c.bf16 %v2876, %v2875
        %v2899 = vpack.c.bf16 %v2878, %v2877
        %v2900 = vpack.c.bf16 %v2879, %v2879
        %v2922 = vunpack.c.l.b16 %v2880
        %v2923 = vunpack.c.h.b16 %v2880
        %v2924 = vunpack.c.l.b16 %v2881
        %v2925 = vunpack.c.h.b16 %v2881
        %v2926 = vunpack.c.l.b16 %v2882
        %v2927 = vunpack.c.h.b16 %v2882
        %v2928 = vunpack.c.l.b16 %v2883
        %v2929 = vunpack.c.h.b16 %v2883
        %v2930 = vunpack.c.l.b16 %v2884
        %v2931 = vunpack.c.h.b16 %v2884
        %v2932 = vunpack.c.l.b16 %v2885
        %v2933 = vunpack.c.h.b16 %v2885
        %v2934 = vunpack.c.l.b16 %v2886
        %v2935 = vunpack.c.h.b16 %v2886
        %v2936 = vunpack.c.l.b16 %v2887
        %v2937 = vunpack.c.h.b16 %v2887
        %v2938 = vunpack.c.l.b16 %v2888
        %v2939 = vunpack.c.h.b16 %v2888
        %v2940 = vunpack.c.l.b16 %v2889
        %v2941 = vunpack.c.h.b16 %v2889
        %v2942 = vunpack.c.l.b16 %v2890
        %v2943 = vunpack.c.h.b16 %v2890
        %v2944 = vunpack.c.l.b16 %v2891
        %v2945 = vunpack.c.h.b16 %v2891
        %v2946 = vunpack.c.l.b16 %v2892
        %v2947 = vunpack.c.h.b16 %v2892
        %v2948 = vunpack.c.l.b16 %v2893
        %v2949 = vunpack.c.h.b16 %v2893
        %v2950 = vunpack.c.l.b16 %v2894
        %v2951 = vunpack.c.h.b16 %v2894
        %v2952 = vunpack.c.l.b16 %v2895
        %v2953 = vunpack.c.h.b16 %v2895
        %v2954 = vunpack.c.l.b16 %v2896
        %v2955 = vunpack.c.h.b16 %v2896
        %v2956 = vunpack.c.l.b16 %v2897
        %v2957 = vunpack.c.h.b16 %v2897
        %v2958 = vunpack.c.l.b16 %v2898
        %v2959 = vunpack.c.h.b16 %v2898
        %v2960 = vunpack.c.l.b16 %v2899
        %v2961 = vunpack.c.h.b16 %v2899
        %v2962 = vunpack.c.l.b16 %v2900
        %v2963 = vpack.c.b16 %v2922, %v2922
        %v2964 = vpack.c.b16 %v2923, %v2923
        %v2965 = vpack.c.b16 %v2924, %v2924
        %v2966 = vpack.c.b16 %v2925, %v2925
        %v2967 = vpack.c.b16 %v2926, %v2926
        %v2968 = vpack.c.b16 %v2927, %v2927
        %v2969 = vpack.c.b16 %v2928, %v2928
        %v2970 = vpack.c.b16 %v2929, %v2929
        %v2971 = vpack.c.b16 %v2930, %v2930
        %v2972 = vpack.c.b16 %v2931, %v2931
        %v2973 = vpack.c.b16 %v2932, %v2932
        %v2974 = vpack.c.b16 %v2933, %v2933
        %v2975 = vpack.c.b16 %v2934, %v2934
        %v2976 = vpack.c.b16 %v2935, %v2935
        %v2977 = vpack.c.b16 %v2936, %v2936
        %v2978 = vpack.c.b16 %v2937, %v2937
        %v2979 = vpack.c.b16 %v2938, %v2938
        %v2980 = vpack.c.b16 %v2939, %v2939
        %v2981 = vpack.c.b16 %v2940, %v2940
        %v2982 = vpack.c.b16 %v2941, %v2941
        %v2983 = vpack.c.b16 %v2942, %v2942
        %v2984 = vpack.c.b16 %v2943, %v2943
        %v2985 = vpack.c.b16 %v2944, %v2944
        %v2986 = vpack.c.b16 %v2945, %v2945
        %v2987 = vpack.c.b16 %v2946, %v2946
        %v2988 = vpack.c.b16 %v2947, %v2947
        %v2989 = vpack.c.b16 %v2948, %v2948
        %v2990 = vpack.c.b16 %v2949, %v2949
        %v2991 = vpack.c.b16 %v2950, %v2950
        %v2992 = vpack.c.b16 %v2951, %v2951
        %v2993 = vpack.c.b16 %v2952, %v2952
        %v2994 = vpack.c.b16 %v2953, %v2953
        %v2995 = vpack.c.b16 %v2954, %v2954
        %v2996 = vpack.c.b16 %v2955, %v2955
        %v2997 = vpack.c.b16 %v2956, %v2956
        %v2998 = vpack.c.b16 %v2957, %v2957
        %v2999 = vpack.c.b16 %v2958, %v2958
        %v3000 = vpack.c.b16 %v2959, %v2959
        %v3001 = vpack.c.b16 %v2960, %v2960
        %v3002 = vpack.c.b16 %v2961, %v2961
        %v3003 = vpack.c.b16 %v2962, %v2962
        %3045 = vst [vmem:[#allocation4 + $0x1c] sm:$0xf] %v2963
        %3046 = vst [vmem:[#allocation4 + $0x40] sm:$0xf] %v2964
        %3047 = vst [vmem:[#allocation4 + $0x64] sm:$0xf] %v2965
        %3048 = vst [vmem:[#allocation4 + $0x88] sm:$0xf] %v2966
        %3049 = vst [vmem:[#allocation4 + $0xac] sm:$0xf] %v2967
        %3050 = vst [vmem:[#allocation4 + $0xd0] sm:$0xf] %v2968
        %3051 = vst [vmem:[#allocation4 + $0xf4] sm:$0xf] %v2969
        %3052 = vst [vmem:[#allocation4 + $0x118] sm:$0xf] %v2970
        %3053 = vst [vmem:[#allocation4 + $0x13c] sm:$0xf] %v2971
        %3054 = vst [vmem:[#allocation4 + $0x160] sm:$0xf] %v2972
        %3055 = vst [vmem:[#allocation4 + $0x184] sm:$0xf] %v2973
        %3056 = vst [vmem:[#allocation4 + $0x1a8] sm:$0xf] %v2974
        %3057 = vst [vmem:[#allocation4 + $0x1cc] sm:$0xf] %v2975
        %3058 = vst [vmem:[#allocation4 + $0x1f0] sm:$0xf] %v2976
        %3059 = vst [vmem:[#allocation4 + $0x214] sm:$0xf] %v2977
        %3060 = vst [vmem:[#allocation4 + $0x238] sm:$0xf] %v2978
        %3061 = vst [vmem:[#allocation4 + $0x25c] sm:$0xf] %v2979
        %3062 = vst [vmem:[#allocation4 + $0x280] sm:$0xf] %v2980
        %3063 = vst [vmem:[#allocation4 + $0x2a4] sm:$0xf] %v2981
        %3064 = vst [vmem:[#allocation4 + $0x2c8] sm:$0xf] %v2982
        %3065 = vst [vmem:[#allocation4 + $0x2ec] sm:$0xf] %v2983
        %3066 = vst [vmem:[#allocation4 + $0x310] sm:$0xf] %v2984
        %3067 = vst [vmem:[#allocation4 + $0x334] sm:$0xf] %v2985
        %3068 = vst [vmem:[#allocation4 + $0x358] sm:$0xf] %v2986
        %3069 = vst [vmem:[#allocation4 + $0x37c] sm:$0xf] %v2987
        %3070 = vst [vmem:[#allocation4 + $0x3a0] sm:$0xf] %v2988
        %3071 = vst [vmem:[#allocation4 + $0x3c4] sm:$0xf] %v2989
        %3072 = vst [vmem:[#allocation4 + $0x3e8] sm:$0xf] %v2990
        %3073 = vst [vmem:[#allocation4 + $0x40c] sm:$0xf] %v2991
        %3074 = vst [vmem:[#allocation4 + $0x430] sm:$0xf] %v2992
        %3075 = vst [vmem:[#allocation4 + $0x454] sm:$0xf] %v2993
        %3076 = vst [vmem:[#allocation4 + $0x478] sm:$0xf] %v2994
        %3077 = vst [vmem:[#allocation4 + $0x49c] sm:$0xf] %v2995
        %3078 = vst [vmem:[#allocation4 + $0x4c0] sm:$0xf] %v2996
        %3079 = vst [vmem:[#allocation4 + $0x4e4] sm:$0xf] %v2997
        %3080 = vst [vmem:[#allocation4 + $0x508] sm:$0xf] %v2998
        %3081 = vst [vmem:[#allocation4 + $0x52c] sm:$0xf] %v2999
        %3082 = vst [vmem:[#allocation4 + $0x550] sm:$0xf] %v3000
        %3083 = vst [vmem:[#allocation4 + $0x574] sm:$0xf] %v3001
        %3084 = vst [vmem:[#allocation4 + $0x598] sm:$0xf] %v3002
        %3085 = vst [vmem:[#allocation4 + $0x5bc] sm:$0x3] %v3003
        %v3086 = vld [vmem:[#allocation2 + $0x26] sm:$0xff]
        %v3087 = vld [vmem:[#allocation2 + $0x2e] sm:$0xff]
        %v3088 = vld [vmem:[#allocation2 + $0x36] sm:$0xff]
        %v3089 = vld [vmem:[#allocation2 + $0x3e] sm:$0xff]
        %v3090 = vld [vmem:[#allocation2 + $0x46] sm:$0xff]
        %v3091 = vld [vmem:[#allocation2 + $0x4e] sm:$0xff]
        %v3092 = vld [vmem:[#allocation2 + $0x56] sm:$0xff]
        %v3093 = vld [vmem:[#allocation2 + $0x5e] sm:$0xff]
        %v3094 = vld [vmem:[#allocation2 + $0x66] sm:$0xff]
        %v3095 = vld [vmem:[#allocation2 + $0x6e] sm:$0xff]
        %v3096 = vld [vmem:[#allocation2 + $0x76] sm:$0xff]
        %v3097 = vld [vmem:[#allocation2 + $0x7e] sm:$0xff]
        %v3098 = vld [vmem:[#allocation2 + $0x86] sm:$0xff]
        %v3099 = vld [vmem:[#allocation2 + $0x8e] sm:$0xff]
        %v3100 = vld [vmem:[#allocation2 + $0x96] sm:$0xff]
        %v3101 = vld [vmem:[#allocation2 + $0x9e] sm:$0xff]
        %v3102 = vld [vmem:[#allocation2 + $0xa6] sm:$0xff]
        %v3103 = vld [vmem:[#allocation2 + $0xae] sm:$0xff]
        %v3104 = vld [vmem:[#allocation2 + $0xb6] sm:$0xff]
        %v3105 = vld [vmem:[#allocation2 + $0xbe] sm:$0xff]
        %v3106 = vld [vmem:[#allocation2 + $0xc6] sm:$0xff]
        %v3107 = vld [vmem:[#allocation2 + $0xce] sm:$0xff]
        %v3108 = vld [vmem:[#allocation2 + $0xd6] sm:$0xff]
        %v3109 = vld [vmem:[#allocation2 + $0xde] sm:$0xff]
        %v3110 = vld [vmem:[#allocation2 + $0xe6] sm:$0xff]
        %v3111 = vld [vmem:[#allocation2 + $0xee] sm:$0xff]
        %v3112 = vld [vmem:[#allocation2 + $0xf6] sm:$0xff]
        %v3113 = vld [vmem:[#allocation2 + $0xfe] sm:$0xff]
        %v3114 = vld [vmem:[#allocation2 + $0x106] sm:$0xff]
        %v3115 = vld [vmem:[#allocation2 + $0x10e] sm:$0xff]
        %v3116 = vld [vmem:[#allocation2 + $0x116] sm:$0xff]
        %v3117 = vld [vmem:[#allocation2 + $0x11e] sm:$0xff]
        %v3118 = vld [vmem:[#allocation2 + $0x126] sm:$0xff]
        %v3119 = vld [vmem:[#allocation2 + $0x12e] sm:$0xff]
        %v3120 = vld [vmem:[#allocation2 + $0x136] sm:$0xff]
        %v3121 = vld [vmem:[#allocation2 + $0x13e] sm:$0xff]
        %v3122 = vld [vmem:[#allocation2 + $0x146] sm:$0xff]
        %v3123 = vld [vmem:[#allocation2 + $0x14e] sm:$0xff]
        %v3124 = vld [vmem:[#allocation2 + $0x156] sm:$0xff]
        %v3125 = vld [vmem:[#allocation2 + $0x15e] sm:$0xff]
        %v3126 = vld [vmem:[#allocation2 + $0x166] sm:$0xf]
        %v3127 = vpack.c.bf16 %v3087, %v3086
        %v3128 = vpack.c.bf16 %v3089, %v3088
        %v3129 = vpack.c.bf16 %v3091, %v3090
        %v3130 = vpack.c.bf16 %v3093, %v3092
        %v3131 = vpack.c.bf16 %v3095, %v3094
        %v3132 = vpack.c.bf16 %v3097, %v3096
        %v3133 = vpack.c.bf16 %v3099, %v3098
        %v3134 = vpack.c.bf16 %v3101, %v3100
        %v3135 = vpack.c.bf16 %v3103, %v3102
        %v3136 = vpack.c.bf16 %v3105, %v3104
        %v3137 = vpack.c.bf16 %v3107, %v3106
        %v3138 = vpack.c.bf16 %v3109, %v3108
        %v3139 = vpack.c.bf16 %v3111, %v3110
        %v3140 = vpack.c.bf16 %v3113, %v3112
        %v3141 = vpack.c.bf16 %v3115, %v3114
        %v3142 = vpack.c.bf16 %v3117, %v3116
        %v3143 = vpack.c.bf16 %v3119, %v3118
        %v3144 = vpack.c.bf16 %v3121, %v3120
        %v3145 = vpack.c.bf16 %v3123, %v3122
        %v3146 = vpack.c.bf16 %v3125, %v3124
        %v3147 = vpack.c.bf16 %v3126, %v3126
        %v3169 = vunpack.c.l.b16 %v3127
        %v3170 = vunpack.c.h.b16 %v3127
        %v3171 = vunpack.c.l.b16 %v3128
        %v3172 = vunpack.c.h.b16 %v3128
        %v3173 = vunpack.c.l.b16 %v3129
        %v3174 = vunpack.c.h.b16 %v3129
        %v3175 = vunpack.c.l.b16 %v3130
        %v3176 = vunpack.c.h.b16 %v3130
        %v3177 = vunpack.c.l.b16 %v3131
        %v3178 = vunpack.c.h.b16 %v3131
        %v3179 = vunpack.c.l.b16 %v3132
        %v3180 = vunpack.c.h.b16 %v3132
        %v3181 = vunpack.c.l.b16 %v3133
        %v3182 = vunpack.c.h.b16 %v3133
        %v3183 = vunpack.c.l.b16 %v3134
        %v3184 = vunpack.c.h.b16 %v3134
        %v3185 = vunpack.c.l.b16 %v3135
        %v3186 = vunpack.c.h.b16 %v3135
        %v3187 = vunpack.c.l.b16 %v3136
        %v3188 = vunpack.c.h.b16 %v3136
        %v3189 = vunpack.c.l.b16 %v3137
        %v3190 = vunpack.c.h.b16 %v3137
        %v3191 = vunpack.c.l.b16 %v3138
        %v3192 = vunpack.c.h.b16 %v3138
        %v3193 = vunpack.c.l.b16 %v3139
        %v3194 = vunpack.c.h.b16 %v3139
        %v3195 = vunpack.c.l.b16 %v3140
        %v3196 = vunpack.c.h.b16 %v3140
        %v3197 = vunpack.c.l.b16 %v3141
        %v3198 = vunpack.c.h.b16 %v3141
        %v3199 = vunpack.c.l.b16 %v3142
        %v3200 = vunpack.c.h.b16 %v3142
        %v3201 = vunpack.c.l.b16 %v3143
        %v3202 = vunpack.c.h.b16 %v3143
        %v3203 = vunpack.c.l.b16 %v3144
        %v3204 = vunpack.c.h.b16 %v3144
        %v3205 = vunpack.c.l.b16 %v3145
        %v3206 = vunpack.c.h.b16 %v3145
        %v3207 = vunpack.c.l.b16 %v3146
        %v3208 = vunpack.c.h.b16 %v3146
        %v3209 = vunpack.c.l.b16 %v3147
        %v3210 = vpack.c.b16 %v3169, %v3169
        %v3211 = vpack.c.b16 %v3170, %v3170
        %v3212 = vpack.c.b16 %v3171, %v3171
        %v3213 = vpack.c.b16 %v3172, %v3172
        %v3214 = vpack.c.b16 %v3173, %v3173
        %v3215 = vpack.c.b16 %v3174, %v3174
        %v3216 = vpack.c.b16 %v3175, %v3175
        %v3217 = vpack.c.b16 %v3176, %v3176
        %v3218 = vpack.c.b16 %v3177, %v3177
        %v3219 = vpack.c.b16 %v3178, %v3178
        %v3220 = vpack.c.b16 %v3179, %v3179
        %v3221 = vpack.c.b16 %v3180, %v3180
        %v3222 = vpack.c.b16 %v3181, %v3181
        %v3223 = vpack.c.b16 %v3182, %v3182
        %v3224 = vpack.c.b16 %v3183, %v3183
        %v3225 = vpack.c.b16 %v3184, %v3184
        %v3226 = vpack.c.b16 %v3185, %v3185
        %v3227 = vpack.c.b16 %v3186, %v3186
        %v3228 = vpack.c.b16 %v3187, %v3187
        %v3229 = vpack.c.b16 %v3188, %v3188
        %v3230 = vpack.c.b16 %v3189, %v3189
        %v3231 = vpack.c.b16 %v3190, %v3190
        %v3232 = vpack.c.b16 %v3191, %v3191
        %v3233 = vpack.c.b16 %v3192, %v3192
        %v3234 = vpack.c.b16 %v3193, %v3193
        %v3235 = vpack.c.b16 %v3194, %v3194
        %v3236 = vpack.c.b16 %v3195, %v3195
        %v3237 = vpack.c.b16 %v3196, %v3196
        %v3238 = vpack.c.b16 %v3197, %v3197
        %v3239 = vpack.c.b16 %v3198, %v3198
        %v3240 = vpack.c.b16 %v3199, %v3199
        %v3241 = vpack.c.b16 %v3200, %v3200
        %v3242 = vpack.c.b16 %v3201, %v3201
        %v3243 = vpack.c.b16 %v3202, %v3202
        %v3244 = vpack.c.b16 %v3203, %v3203
        %v3245 = vpack.c.b16 %v3204, %v3204
        %v3246 = vpack.c.b16 %v3205, %v3205
        %v3247 = vpack.c.b16 %v3206, %v3206
        %v3248 = vpack.c.b16 %v3207, %v3207
        %v3249 = vpack.c.b16 %v3208, %v3208
        %v3250 = vpack.c.b16 %v3209, %v3209
        %3292 = vst [vmem:[#allocation4 + $0x20] sm:$0xf] %v3210
        %3293 = vst [vmem:[#allocation4 + $0x44] sm:$0xf] %v3211
        %3294 = vst [vmem:[#allocation4 + $0x68] sm:$0xf] %v3212
        %3295 = vst [vmem:[#allocation4 + $0x8c] sm:$0xf] %v3213
        %3296 = vst [vmem:[#allocation4 + $0xb0] sm:$0xf] %v3214
        %3297 = vst [vmem:[#allocation4 + $0xd4] sm:$0xf] %v3215
        %3298 = vst [vmem:[#allocation4 + $0xf8] sm:$0xf] %v3216
        %3299 = vst [vmem:[#allocation4 + $0x11c] sm:$0xf] %v3217
        %3300 = vst [vmem:[#allocation4 + $0x140] sm:$0xf] %v3218
        %3301 = vst [vmem:[#allocation4 + $0x164] sm:$0xf] %v3219
        %3302 = vst [vmem:[#allocation4 + $0x188] sm:$0xf] %v3220
        %3303 = vst [vmem:[#allocation4 + $0x1ac] sm:$0xf] %v3221
        %3304 = vst [vmem:[#allocation4 + $0x1d0] sm:$0xf] %v3222
        %3305 = vst [vmem:[#allocation4 + $0x1f4] sm:$0xf] %v3223
        %3306 = vst [vmem:[#allocation4 + $0x218] sm:$0xf] %v3224
        %3307 = vst [vmem:[#allocation4 + $0x23c] sm:$0xf] %v3225
        %3308 = vst [vmem:[#allocation4 + $0x260] sm:$0xf] %v3226
        %3309 = vst [vmem:[#allocation4 + $0x284] sm:$0xf] %v3227
        %3310 = vst [vmem:[#allocation4 + $0x2a8] sm:$0xf] %v3228
        %3311 = vst [vmem:[#allocation4 + $0x2cc] sm:$0xf] %v3229
        %3312 = vst [vmem:[#allocation4 + $0x2f0] sm:$0xf] %v3230
        %3313 = vst [vmem:[#allocation4 + $0x314] sm:$0xf] %v3231
        %3314 = vst [vmem:[#allocation4 + $0x338] sm:$0xf] %v3232
        %3315 = vst [vmem:[#allocation4 + $0x35c] sm:$0xf] %v3233
        %3316 = vst [vmem:[#allocation4 + $0x380] sm:$0xf] %v3234
        %3317 = vst [vmem:[#allocation4 + $0x3a4] sm:$0xf] %v3235
        %3318 = vst [vmem:[#allocation4 + $0x3c8] sm:$0xf] %v3236
        %3319 = vst [vmem:[#allocation4 + $0x3ec] sm:$0xf] %v3237
        %3320 = vst [vmem:[#allocation4 + $0x410] sm:$0xf] %v3238
        %3321 = vst [vmem:[#allocation4 + $0x434] sm:$0xf] %v3239
        %3322 = vst [vmem:[#allocation4 + $0x458] sm:$0xf] %v3240
        %3323 = vst [vmem:[#allocation4 + $0x47c] sm:$0xf] %v3241
        %3324 = vst [vmem:[#allocation4 + $0x4a0] sm:$0xf] %v3242
        %3325 = vst [vmem:[#allocation4 + $0x4c4] sm:$0xf] %v3243
        %3326 = vst [vmem:[#allocation4 + $0x4e8] sm:$0xf] %v3244
        %3327 = vst [vmem:[#allocation4 + $0x50c] sm:$0xf] %v3245
        %3328 = vst [vmem:[#allocation4 + $0x530] sm:$0xf] %v3246
        %3329 = vst [vmem:[#allocation4 + $0x554] sm:$0xf] %v3247
        %3330 = vst [vmem:[#allocation4 + $0x578] sm:$0xf] %v3248
        %3331 = vst [vmem:[#allocation4 + $0x59c] sm:$0xf] %v3249
        %3332 = vst [vmem:[#allocation4 + $0x5c0] sm:$0x3] %v3250
        %v3333 = vld [vmem:[#allocation4] sm:$0xff]
        %v3334 = vld [vmem:[#allocation4 + $0x8] sm:$0xff]
        %v3335 = vld [vmem:[#allocation4 + $0x10] sm:$0xff]
        %v3336 = vld [vmem:[#allocation4 + $0x18] sm:$0xff]
        %v3337 = vld [vmem:[#allocation4 + $0x20] sm:$0xf]
        %v3338 = vld [vmem:[#allocation4 + $0x24] sm:$0xff]
        %v3339 = vld [vmem:[#allocation4 + $0x2c] sm:$0xff]
        %v3340 = vld [vmem:[#allocation4 + $0x34] sm:$0xff]
        %v3341 = vld [vmem:[#allocation4 + $0x3c] sm:$0xff]
        %v3342 = vld [vmem:[#allocation4 + $0x44] sm:$0xf]
        %v3343 = vld [vmem:[#allocation4 + $0x48] sm:$0xff]
        %v3344 = vld [vmem:[#allocation4 + $0x50] sm:$0xff]
        %v3345 = vld [vmem:[#allocation4 + $0x58] sm:$0xff]
        %v3346 = vld [vmem:[#allocation4 + $0x60] sm:$0xff]
        %v3347 = vld [vmem:[#allocation4 + $0x68] sm:$0xf]
        %v3348 = vld [vmem:[#allocation4 + $0x6c] sm:$0xff]
        %v3349 = vld [vmem:[#allocation4 + $0x74] sm:$0xff]
        %v3350 = vld [vmem:[#allocation4 + $0x7c] sm:$0xff]
        %v3351 = vld [vmem:[#allocation4 + $0x84] sm:$0xff]
        %v3352 = vld [vmem:[#allocation4 + $0x8c] sm:$0xf]
        %v3353 = vld [vmem:[#allocation4 + $0x90] sm:$0xff]
        %v3354 = vld [vmem:[#allocation4 + $0x98] sm:$0xff]
        %v3355 = vld [vmem:[#allocation4 + $0xa0] sm:$0xff]
        %v3356 = vld [vmem:[#allocation4 + $0xa8] sm:$0xff]
        %v3357 = vld [vmem:[#allocation4 + $0xb0] sm:$0xf]
        %v3358 = vld [vmem:[#allocation4 + $0xb4] sm:$0xff]
        %v3359 = vld [vmem:[#allocation4 + $0xbc] sm:$0xff]
        %v3360 = vld [vmem:[#allocation4 + $0xc4] sm:$0xff]
        %v3361 = vld [vmem:[#allocation4 + $0xcc] sm:$0xff]
        %v3362 = vld [vmem:[#allocation4 + $0xd4] sm:$0xf]
        %v3363 = vld [vmem:[#allocation4 + $0xd8] sm:$0xff]
        %v3364 = vld [vmem:[#allocation4 + $0xe0] sm:$0xff]
        %v3365 = vld [vmem:[#allocation4 + $0xe8] sm:$0xff]
        %v3366 = vld [vmem:[#allocation4 + $0xf0] sm:$0xff]
        %v3367 = vld [vmem:[#allocation4 + $0xf8] sm:$0xf]
        %v3368 = vld [vmem:[#allocation4 + $0xfc] sm:$0xff]
        %v3369 = vld [vmem:[#allocation4 + $0x104] sm:$0xff]
        %v3370 = vld [vmem:[#allocation4 + $0x10c] sm:$0xff]
        %v3371 = vld [vmem:[#allocation4 + $0x114] sm:$0xff]
        %v3372 = vld [vmem:[#allocation4 + $0x11c] sm:$0xf]
        %v3373 = vld [vmem:[#allocation4 + $0x120] sm:$0xff]
        %v3374 = vld [vmem:[#allocation4 + $0x128] sm:$0xff]
        %v3375 = vld [vmem:[#allocation4 + $0x130] sm:$0xff]
        %v3376 = vld [vmem:[#allocation4 + $0x138] sm:$0xff]
        %v3377 = vld [vmem:[#allocation4 + $0x140] sm:$0xf]
        %v3378 = vld [vmem:[#allocation4 + $0x144] sm:$0xff]
        %v3379 = vld [vmem:[#allocation4 + $0x14c] sm:$0xff]
        %v3380 = vld [vmem:[#allocation4 + $0x154] sm:$0xff]
        %v3381 = vld [vmem:[#allocation4 + $0x15c] sm:$0xff]
        %v3382 = vld [vmem:[#allocation4 + $0x164] sm:$0xf]
        %v3383 = vld [vmem:[#allocation4 + $0x168] sm:$0xff]
        %v3384 = vld [vmem:[#allocation4 + $0x170] sm:$0xff]
        %v3385 = vld [vmem:[#allocation4 + $0x178] sm:$0xff]
        %v3386 = vld [vmem:[#allocation4 + $0x180] sm:$0xff]
        %v3387 = vld [vmem:[#allocation4 + $0x188] sm:$0xf]
        %v3388 = vld [vmem:[#allocation4 + $0x18c] sm:$0xff]
        %v3389 = vld [vmem:[#allocation4 + $0x194] sm:$0xff]
        %v3390 = vld [vmem:[#allocation4 + $0x19c] sm:$0xff]
        %v3391 = vld [vmem:[#allocation4 + $0x1a4] sm:$0xff]
        %v3392 = vld [vmem:[#allocation4 + $0x1ac] sm:$0xf]
        %v3393 = vld [vmem:[#allocation4 + $0x1b0] sm:$0xff]
        %v3394 = vld [vmem:[#allocation4 + $0x1b8] sm:$0xff]
        %v3395 = vld [vmem:[#allocation4 + $0x1c0] sm:$0xff]
        %v3396 = vld [vmem:[#allocation4 + $0x1c8] sm:$0xff]
        %v3397 = vld [vmem:[#allocation4 + $0x1d0] sm:$0xf]
        %v3398 = vld [vmem:[#allocation4 + $0x1d4] sm:$0xff]
        %v3399 = vld [vmem:[#allocation4 + $0x1dc] sm:$0xff]
        %v3400 = vld [vmem:[#allocation4 + $0x1e4] sm:$0xff]
        %v3401 = vld [vmem:[#allocation4 + $0x1ec] sm:$0xff]
        %v3402 = vld [vmem:[#allocation4 + $0x1f4] sm:$0xf]
        %v3403 = vld [vmem:[#allocation4 + $0x1f8] sm:$0xff]
        %v3404 = vld [vmem:[#allocation4 + $0x200] sm:$0xff]
        %v3405 = vld [vmem:[#allocation4 + $0x208] sm:$0xff]
        %v3406 = vld [vmem:[#allocation4 + $0x210] sm:$0xff]
        %v3407 = vld [vmem:[#allocation4 + $0x218] sm:$0xf]
        %v3408 = vld [vmem:[#allocation4 + $0x21c] sm:$0xff]
        %v3409 = vld [vmem:[#allocation4 + $0x224] sm:$0xff]
        %v3410 = vld [vmem:[#allocation4 + $0x22c] sm:$0xff]
        %v3411 = vld [vmem:[#allocation4 + $0x234] sm:$0xff]
        %v3412 = vld [vmem:[#allocation4 + $0x23c] sm:$0xf]
        %v3413 = vld [vmem:[#allocation4 + $0x240] sm:$0xff]
        %v3414 = vld [vmem:[#allocation4 + $0x248] sm:$0xff]
        %v3415 = vld [vmem:[#allocation4 + $0x250] sm:$0xff]
        %v3416 = vld [vmem:[#allocation4 + $0x258] sm:$0xff]
        %v3417 = vld [vmem:[#allocation4 + $0x260] sm:$0xf]
        %v3418 = vld [vmem:[#allocation4 + $0x264] sm:$0xff]
        %v3419 = vld [vmem:[#allocation4 + $0x26c] sm:$0xff]
        %v3420 = vld [vmem:[#allocation4 + $0x274] sm:$0xff]
        %v3421 = vld [vmem:[#allocation4 + $0x27c] sm:$0xff]
        %v3422 = vld [vmem:[#allocation4 + $0x284] sm:$0xf]
        %v3423 = vld [vmem:[#allocation4 + $0x288] sm:$0xff]
        %v3424 = vld [vmem:[#allocation4 + $0x290] sm:$0xff]
        %v3425 = vld [vmem:[#allocation4 + $0x298] sm:$0xff]
        %v3426 = vld [vmem:[#allocation4 + $0x2a0] sm:$0xff]
        %v3427 = vld [vmem:[#allocation4 + $0x2a8] sm:$0xf]
        %v3428 = vld [vmem:[#allocation4 + $0x2ac] sm:$0xff]
        %v3429 = vld [vmem:[#allocation4 + $0x2b4] sm:$0xff]
        %v3430 = vld [vmem:[#allocation4 + $0x2bc] sm:$0xff]
        %v3431 = vld [vmem:[#allocation4 + $0x2c4] sm:$0xff]
        %v3432 = vld [vmem:[#allocation4 + $0x2cc] sm:$0xf]
        %v3433 = vld [vmem:[#allocation4 + $0x2d0] sm:$0xff]
        %v3434 = vld [vmem:[#allocation4 + $0x2d8] sm:$0xff]
        %v3435 = vld [vmem:[#allocation4 + $0x2e0] sm:$0xff]
        %v3436 = vld [vmem:[#allocation4 + $0x2e8] sm:$0xff]
        %v3437 = vld [vmem:[#allocation4 + $0x2f0] sm:$0xf]
        %v3438 = vld [vmem:[#allocation4 + $0x2f4] sm:$0xff]
        %v3439 = vld [vmem:[#allocation4 + $0x2fc] sm:$0xff]
        %v3440 = vld [vmem:[#allocation4 + $0x304] sm:$0xff]
        %v3441 = vld [vmem:[#allocation4 + $0x30c] sm:$0xff]
        %v3442 = vld [vmem:[#allocation4 + $0x314] sm:$0xf]
        %v3443 = vld [vmem:[#allocation4 + $0x318] sm:$0xff]
        %v3444 = vld [vmem:[#allocation4 + $0x320] sm:$0xff]
        %v3445 = vld [vmem:[#allocation4 + $0x328] sm:$0xff]
        %v3446 = vld [vmem:[#allocation4 + $0x330] sm:$0xff]
        %v3447 = vld [vmem:[#allocation4 + $0x338] sm:$0xf]
        %v3448 = vld [vmem:[#allocation4 + $0x33c] sm:$0xff]
        %v3449 = vld [vmem:[#allocation4 + $0x344] sm:$0xff]
        %v3450 = vld [vmem:[#allocation4 + $0x34c] sm:$0xff]
        %v3451 = vld [vmem:[#allocation4 + $0x354] sm:$0xff]
        %v3452 = vld [vmem:[#allocation4 + $0x35c] sm:$0xf]
        %v3453 = vld [vmem:[#allocation4 + $0x360] sm:$0xff]
        %v3454 = vld [vmem:[#allocation4 + $0x368] sm:$0xff]
        %v3455 = vld [vmem:[#allocation4 + $0x370] sm:$0xff]
        %v3456 = vld [vmem:[#allocation4 + $0x378] sm:$0xff]
        %v3457 = vld [vmem:[#allocation4 + $0x380] sm:$0xf]
        %v3458 = vld [vmem:[#allocation4 + $0x384] sm:$0xff]
        %v3459 = vld [vmem:[#allocation4 + $0x38c] sm:$0xff]
        %v3460 = vld [vmem:[#allocation4 + $0x394] sm:$0xff]
        %v3461 = vld [vmem:[#allocation4 + $0x39c] sm:$0xff]
        %v3462 = vld [vmem:[#allocation4 + $0x3a4] sm:$0xf]
        %v3463 = vld [vmem:[#allocation4 + $0x3a8] sm:$0xff]
        %v3464 = vld [vmem:[#allocation4 + $0x3b0] sm:$0xff]
        %v3465 = vld [vmem:[#allocation4 + $0x3b8] sm:$0xff]
        %v3466 = vld [vmem:[#allocation4 + $0x3c0] sm:$0xff]
        %v3467 = vld [vmem:[#allocation4 + $0x3c8] sm:$0xf]
        %v3468 = vld [vmem:[#allocation4 + $0x3cc] sm:$0xff]
        %v3469 = vld [vmem:[#allocation4 + $0x3d4] sm:$0xff]
        %v3470 = vld [vmem:[#allocation4 + $0x3dc] sm:$0xff]
        %v3471 = vld [vmem:[#allocation4 + $0x3e4] sm:$0xff]
        %v3472 = vld [vmem:[#allocation4 + $0x3ec] sm:$0xf]
        %v3473 = vld [vmem:[#allocation4 + $0x3f0] sm:$0xff]
        %v3474 = vld [vmem:[#allocation4 + $0x3f8] sm:$0xff]
        %v3475 = vld [vmem:[#allocation4 + $0x400] sm:$0xff]
        %v3476 = vld [vmem:[#allocation4 + $0x408] sm:$0xff]
        %v3477 = vld [vmem:[#allocation4 + $0x410] sm:$0xf]
        %v3478 = vld [vmem:[#allocation4 + $0x414] sm:$0xff]
        %v3479 = vld [vmem:[#allocation4 + $0x41c] sm:$0xff]
        %v3480 = vld [vmem:[#allocation4 + $0x424] sm:$0xff]
        %v3481 = vld [vmem:[#allocation4 + $0x42c] sm:$0xff]
        %v3482 = vld [vmem:[#allocation4 + $0x434] sm:$0xf]
        %v3483 = vld [vmem:[#allocation4 + $0x438] sm:$0xff]
        %v3484 = vld [vmem:[#allocation4 + $0x440] sm:$0xff]
        %v3485 = vld [vmem:[#allocation4 + $0x448] sm:$0xff]
        %v3486 = vld [vmem:[#allocation4 + $0x450] sm:$0xff]
        %v3487 = vld [vmem:[#allocation4 + $0x458] sm:$0xf]
        %v3488 = vld [vmem:[#allocation4 + $0x45c] sm:$0xff]
        %v3489 = vld [vmem:[#allocation4 + $0x464] sm:$0xff]
        %v3490 = vld [vmem:[#allocation4 + $0x46c] sm:$0xff]
        %v3491 = vld [vmem:[#allocation4 + $0x474] sm:$0xff]
        %v3492 = vld [vmem:[#allocation4 + $0x47c] sm:$0xf]
        %v3493 = vld [vmem:[#allocation4 + $0x480] sm:$0xff]
        %v3494 = vld [vmem:[#allocation4 + $0x488] sm:$0xff]
        %v3495 = vld [vmem:[#allocation4 + $0x490] sm:$0xff]
        %v3496 = vld [vmem:[#allocation4 + $0x498] sm:$0xff]
        %v3497 = vld [vmem:[#allocation4 + $0x4a0] sm:$0xf]
        %v3498 = vld [vmem:[#allocation4 + $0x4a4] sm:$0xff]
        %v3499 = vld [vmem:[#allocation4 + $0x4ac] sm:$0xff]
        %v3500 = vld [vmem:[#allocation4 + $0x4b4] sm:$0xff]
        %v3501 = vld [vmem:[#allocation4 + $0x4bc] sm:$0xff]
        %v3502 = vld [vmem:[#allocation4 + $0x4c4] sm:$0xf]
        %v3503 = vld [vmem:[#allocation4 + $0x4c8] sm:$0xff]
        %v3504 = vld [vmem:[#allocation4 + $0x4d0] sm:$0xff]
        %v3505 = vld [vmem:[#allocation4 + $0x4d8] sm:$0xff]
        %v3506 = vld [vmem:[#allocation4 + $0x4e0] sm:$0xff]
        %v3507 = vld [vmem:[#allocation4 + $0x4e8] sm:$0xf]
        %v3508 = vld [vmem:[#allocation4 + $0x4ec] sm:$0xff]
        %v3509 = vld [vmem:[#allocation4 + $0x4f4] sm:$0xff]
        %v3510 = vld [vmem:[#allocation4 + $0x4fc] sm:$0xff]
        %v3511 = vld [vmem:[#allocation4 + $0x504] sm:$0xff]
        %v3512 = vld [vmem:[#allocation4 + $0x50c] sm:$0xf]
        %v3513 = vld [vmem:[#allocation4 + $0x510] sm:$0xff]
        %v3514 = vld [vmem:[#allocation4 + $0x518] sm:$0xff]
        %v3515 = vld [vmem:[#allocation4 + $0x520] sm:$0xff]
        %v3516 = vld [vmem:[#allocation4 + $0x528] sm:$0xff]
        %v3517 = vld [vmem:[#allocation4 + $0x530] sm:$0xf]
        %v3518 = vld [vmem:[#allocation4 + $0x534] sm:$0xff]
        %v3519 = vld [vmem:[#allocation4 + $0x53c] sm:$0xff]
        %v3520 = vld [vmem:[#allocation4 + $0x544] sm:$0xff]
        %v3521 = vld [vmem:[#allocation4 + $0x54c] sm:$0xff]
        %v3522 = vld [vmem:[#allocation4 + $0x554] sm:$0xf]
        %v3523 = vld [vmem:[#allocation4 + $0x558] sm:$0xff]
        %v3524 = vld [vmem:[#allocation4 + $0x560] sm:$0xff]
        %v3525 = vld [vmem:[#allocation4 + $0x568] sm:$0xff]
        %v3526 = vld [vmem:[#allocation4 + $0x570] sm:$0xff]
        %v3527 = vld [vmem:[#allocation4 + $0x578] sm:$0xf]
        %v3528 = vld [vmem:[#allocation4 + $0x57c] sm:$0xff]
        %v3529 = vld [vmem:[#allocation4 + $0x584] sm:$0xff]
        %v3530 = vld [vmem:[#allocation4 + $0x58c] sm:$0xff]
        %v3531 = vld [vmem:[#allocation4 + $0x594] sm:$0xff]
        %v3532 = vld [vmem:[#allocation4 + $0x59c] sm:$0xf]
        %v3533 = vld [vmem:[#allocation4 + $0x5a0] sm:$0x33]
        %v3534 = vld [vmem:[#allocation4 + $0x5a8] sm:$0x33]
        %v3535 = vld [vmem:[#allocation4 + $0x5b0] sm:$0x33]
        %v3536 = vld [vmem:[#allocation4 + $0x5b8] sm:$0x33]
        %v3537 = vld [vmem:[#allocation4 + $0x5c0] sm:$0x3]
        %v3538 = vld [vmem:[%s4] sm:$0xf]
        %v3539 = vld [vmem:[%s4 + $0x4] sm:$0xf]
        %v3540 = vld [vmem:[%s4 + $0x8] sm:$0xf]
        %v3541 = vld [vmem:[%s4 + $0xc] sm:$0xf]
        %v3542 = vld [vmem:[%s4 + $0x10] sm:$0xf]
        %v3543 = vld [vmem:[%s4 + $0x14] sm:$0xf]
        %v3544 = vld [vmem:[%s4 + $0x18] sm:$0xf]
        %v3545 = vld [vmem:[%s4 + $0x1c] sm:$0xf]
        %v3546 = vld [vmem:[%s4 + $0x20] sm:$0xf]
        %v3547 = vld [vmem:[%s4 + $0x24] sm:$0xf]
        %v3548 = vld [vmem:[%s4 + $0x28] sm:$0xf]
        %v3549 = vld [vmem:[%s4 + $0x2c] sm:$0xf]
        %v3550 = vld [vmem:[%s4 + $0x30] sm:$0xf]
        %v3551 = vld [vmem:[%s4 + $0x34] sm:$0xf]
        %v3552 = vld [vmem:[%s4 + $0x38] sm:$0xf]
        %v3553 = vld [vmem:[%s4 + $0x3c] sm:$0xf]
        %v3554 = vld [vmem:[%s4 + $0x40] sm:$0xf]
        %v3555 = vld [vmem:[%s4 + $0x44] sm:$0xf]
        %v3556 = vld [vmem:[%s4 + $0x48] sm:$0xf]
        %v3557 = vld [vmem:[%s4 + $0x4c] sm:$0xf]
        %v3558 = vld [vmem:[%s4 + $0x50] sm:$0xf]
        %v3559 = vld [vmem:[%s4 + $0x54] sm:$0xf]
        %v3560 = vld [vmem:[%s4 + $0x58] sm:$0xf]
        %v3561 = vld [vmem:[%s4 + $0x5c] sm:$0xf]
        %v3562 = vld [vmem:[%s4 + $0x60] sm:$0xf]
        %v3563 = vld [vmem:[%s4 + $0x64] sm:$0xf]
        %v3564 = vld [vmem:[%s4 + $0x68] sm:$0xf]
        %v3565 = vld [vmem:[%s4 + $0x6c] sm:$0xf]
        %v3566 = vld [vmem:[%s4 + $0x70] sm:$0xf]
        %v3567 = vld [vmem:[%s4 + $0x74] sm:$0xf]
        %v3568 = vld [vmem:[%s4 + $0x78] sm:$0xf]
        %v3569 = vld [vmem:[%s4 + $0x7c] sm:$0xf]
        %v3570 = vld [vmem:[%s4 + $0x80] sm:$0xf]
        %v3571 = vld [vmem:[%s4 + $0x84] sm:$0xf]
        %v3572 = vld [vmem:[%s4 + $0x88] sm:$0xf]
        %v3573 = vld [vmem:[%s4 + $0x8c] sm:$0xf]
        %v3574 = vld [vmem:[%s4 + $0x90] sm:$0xf]
        %v3575 = vld [vmem:[%s4 + $0x94] sm:$0xf]
        %v3576 = vld [vmem:[%s4 + $0x98] sm:$0xf]
        %v3577 = vld [vmem:[%s4 + $0x9c] sm:$0xf]
        %v3578 = vld [vmem:[%s4 + $0xa0] sm:$0xf]
        %v3579 = vld [vmem:[%s4 + $0xa4] sm:$0xf]
        %v3580 = vld [vmem:[%s4 + $0xa8] sm:$0xf]
        %v3581 = vld [vmem:[%s4 + $0xac] sm:$0xf]
        %v3582 = vld [vmem:[%s4 + $0xb0] sm:$0xf]
        %v3583 = vld [vmem:[%s4 + $0xb4] sm:$0xf]
        %v3584 = vld [vmem:[%s4 + $0xb8] sm:$0xf]
        %v3585 = vld [vmem:[%s4 + $0xbc] sm:$0xf]
        %v3586 = vld [vmem:[%s4 + $0xc0] sm:$0xf]
        %v3587 = vld [vmem:[%s4 + $0xc4] sm:$0xf]
        %v3588 = vld [vmem:[%s4 + $0xc8] sm:$0xf]
        %v3589 = vld [vmem:[%s4 + $0xcc] sm:$0xf]
        %v3590 = vld [vmem:[%s4 + $0xd0] sm:$0xf]
        %v3591 = vld [vmem:[%s4 + $0xd4] sm:$0xf]
        %v3592 = vld [vmem:[%s4 + $0xd8] sm:$0xf]
        %v3593 = vld [vmem:[%s4 + $0xdc] sm:$0xf]
        %v3594 = vld [vmem:[%s4 + $0xe0] sm:$0xf]
        %v3595 = vld [vmem:[%s4 + $0xe4] sm:$0xf]
        %v3596 = vld [vmem:[%s4 + $0xe8] sm:$0xf]
        %v3597 = vld [vmem:[%s4 + $0xec] sm:$0xf]
        %v3598 = vld [vmem:[%s4 + $0xf0] sm:$0xf]
        %v3599 = vld [vmem:[%s4 + $0xf4] sm:$0xf]
        %v3600 = vld [vmem:[%s4 + $0xf8] sm:$0xf]
        %v3601 = vld [vmem:[%s4 + $0xfc] sm:$0xf]
        %v3602 = vld [vmem:[%s4 + $0x100] sm:$0xf]
        %v3603 = vld [vmem:[%s4 + $0x104] sm:$0xf]
        %v3604 = vld [vmem:[%s4 + $0x108] sm:$0xf]
        %v3605 = vld [vmem:[%s4 + $0x10c] sm:$0xf]
        %v3606 = vld [vmem:[%s4 + $0x110] sm:$0xf]
        %v3607 = vld [vmem:[%s4 + $0x114] sm:$0xf]
        %v3608 = vld [vmem:[%s4 + $0x118] sm:$0xf]
        %v3609 = vld [vmem:[%s4 + $0x11c] sm:$0xf]
        %v3610 = vld [vmem:[%s4 + $0x120] sm:$0xf]
        %v3611 = vld [vmem:[%s4 + $0x124] sm:$0xf]
        %v3612 = vld [vmem:[%s4 + $0x128] sm:$0xf]
        %v3613 = vld [vmem:[%s4 + $0x12c] sm:$0xf]
        %v3614 = vld [vmem:[%s4 + $0x130] sm:$0xf]
        %v3615 = vld [vmem:[%s4 + $0x134] sm:$0xf]
        %v3616 = vld [vmem:[%s4 + $0x138] sm:$0xf]
        %v3617 = vld [vmem:[%s4 + $0x13c] sm:$0xf]
        %v3618 = vld [vmem:[%s4 + $0x140] sm:$0xf]
        %v3619 = vld [vmem:[%s4 + $0x144] sm:$0xf]
        %v3620 = vld [vmem:[%s4 + $0x148] sm:$0xf]
        %v3621 = vld [vmem:[%s4 + $0x14c] sm:$0xf]
        %v3622 = vld [vmem:[%s4 + $0x150] sm:$0xf]
        %v3623 = vld [vmem:[%s4 + $0x154] sm:$0xf]
        %v3624 = vld [vmem:[%s4 + $0x158] sm:$0xf]
        %v3625 = vld [vmem:[%s4 + $0x15c] sm:$0xf]
        %v3626 = vld [vmem:[%s4 + $0x160] sm:$0xf]
        %v3627 = vld [vmem:[%s4 + $0x164] sm:$0xf]
        %v3628 = vld [vmem:[%s4 + $0x168] sm:$0xf]
        %v3629 = vld [vmem:[%s4 + $0x16c] sm:$0xf]
        %v3630 = vld [vmem:[%s4 + $0x170] sm:$0xf]
        %v3631 = vld [vmem:[%s4 + $0x174] sm:$0xf]
        %v3632 = vld [vmem:[%s4 + $0x178] sm:$0xf]
        %v3633 = vld [vmem:[%s4 + $0x17c] sm:$0xf]
        %v3634 = vld [vmem:[%s4 + $0x180] sm:$0xf]
        %v3635 = vld [vmem:[%s4 + $0x184] sm:$0xf]
        %v3636 = vld [vmem:[%s4 + $0x188] sm:$0xf]
        %v3637 = vld [vmem:[%s4 + $0x18c] sm:$0xf]
        %v3638 = vld [vmem:[%s4 + $0x190] sm:$0xf]
        %v3639 = vld [vmem:[%s4 + $0x194] sm:$0xf]
        %v3640 = vld [vmem:[%s4 + $0x198] sm:$0xf]
        %v3641 = vld [vmem:[%s4 + $0x19c] sm:$0xf]
        %v3642 = vld [vmem:[%s4 + $0x1a0] sm:$0xf]
        %v3643 = vld [vmem:[%s4 + $0x1a4] sm:$0xf]
        %v3644 = vld [vmem:[%s4 + $0x1a8] sm:$0xf]
        %v3645 = vld [vmem:[%s4 + $0x1ac] sm:$0xf]
        %v3646 = vld [vmem:[%s4 + $0x1b0] sm:$0xf]
        %v3647 = vld [vmem:[%s4 + $0x1b4] sm:$0xf]
        %v3648 = vld [vmem:[%s4 + $0x1b8] sm:$0xf]
        %v3649 = vld [vmem:[%s4 + $0x1bc] sm:$0xf]
        %v3650 = vld [vmem:[%s4 + $0x1c0] sm:$0xf]
        %v3651 = vld [vmem:[%s4 + $0x1c4] sm:$0xf]
        %v3652 = vld [vmem:[%s4 + $0x1c8] sm:$0xf]
        %v3653 = vld [vmem:[%s4 + $0x1cc] sm:$0xf]
        %v3654 = vld [vmem:[%s4 + $0x1d0] sm:$0xf]
        %v3655 = vld [vmem:[%s4 + $0x1d4] sm:$0xf]
        %v3656 = vld [vmem:[%s4 + $0x1d8] sm:$0xf]
        %v3657 = vld [vmem:[%s4 + $0x1dc] sm:$0xf]
        %v3658 = vld [vmem:[%s4 + $0x1e0] sm:$0xf]
        %v3659 = vld [vmem:[%s4 + $0x1e4] sm:$0xf]
        %v3660 = vld [vmem:[%s4 + $0x1e8] sm:$0xf]
        %v3661 = vld [vmem:[%s4 + $0x1ec] sm:$0xf]
        %v3662 = vld [vmem:[%s4 + $0x1f0] sm:$0xf]
        %v3663 = vld [vmem:[%s4 + $0x1f4] sm:$0xf]
        %v3664 = vld [vmem:[%s4 + $0x1f8] sm:$0xf]
        %v3665 = vld [vmem:[%s4 + $0x1fc] sm:$0xf]
        %v3666 = vld [vmem:[%s4 + $0x200] sm:$0xf]
        %v3667 = vld [vmem:[%s4 + $0x204] sm:$0xf]
        %v3668 = vld [vmem:[%s4 + $0x208] sm:$0xf]
        %v3669 = vld [vmem:[%s4 + $0x20c] sm:$0xf]
        %v3670 = vld [vmem:[%s4 + $0x210] sm:$0xf]
        %v3671 = vld [vmem:[%s4 + $0x214] sm:$0xf]
        %v3672 = vld [vmem:[%s4 + $0x218] sm:$0xf]
        %v3673 = vld [vmem:[%s4 + $0x21c] sm:$0xf]
        %v3674 = vld [vmem:[%s4 + $0x220] sm:$0xf]
        %v3675 = vld [vmem:[%s4 + $0x224] sm:$0xf]
        %v3676 = vld [vmem:[%s4 + $0x228] sm:$0xf]
        %v3677 = vld [vmem:[%s4 + $0x22c] sm:$0xf]
        %v3678 = vld [vmem:[%s4 + $0x230] sm:$0xf]
        %v3679 = vld [vmem:[%s4 + $0x234] sm:$0xf]
        %v3680 = vld [vmem:[%s4 + $0x238] sm:$0xf]
        %v3681 = vld [vmem:[%s4 + $0x23c] sm:$0xf]
        %v3682 = vld [vmem:[%s5] sm:$0x1]
        %v3684 = vlaneseq
        %v3685 = vshrl.u32 %v3684, 7
        %v3686 = vsub.s32 0, %v3685
        %v3687 = vrot.slane %v3682, %v3686
        %v3894 = vunpack.c.l.b16 %v3333
        %v3895 = vunpack.c.h.b16 %v3333
        %v3896 = vunpack.c.l.b16 %v3334
        %v3897 = vunpack.c.h.b16 %v3334
        %v3898 = vunpack.c.l.b16 %v3335
        %v3899 = vunpack.c.h.b16 %v3335
        %v3900 = vunpack.c.l.b16 %v3336
        %v3901 = vunpack.c.h.b16 %v3336
        %v3902 = vunpack.c.l.b16 %v3337
        %v3903 = vunpack.c.l.b16 %v3338
        %v3904 = vunpack.c.h.b16 %v3338
        %v3905 = vunpack.c.l.b16 %v3339
        %v3906 = vunpack.c.h.b16 %v3339
        %v3907 = vunpack.c.l.b16 %v3340
        %v3908 = vunpack.c.h.b16 %v3340
        %v3909 = vunpack.c.l.b16 %v3341
        %v3910 = vunpack.c.h.b16 %v3341
        %v3911 = vunpack.c.l.b16 %v3342
        %v3912 = vunpack.c.l.b16 %v3343
        %v3913 = vunpack.c.h.b16 %v3343
        %v3914 = vunpack.c.l.b16 %v3344
        %v3915 = vunpack.c.h.b16 %v3344
        %v3916 = vunpack.c.l.b16 %v3345
        %v3917 = vunpack.c.h.b16 %v3345
        %v3918 = vunpack.c.l.b16 %v3346
        %v3919 = vunpack.c.h.b16 %v3346
        %v3920 = vunpack.c.l.b16 %v3347
        %v3921 = vunpack.c.l.b16 %v3348
        %v3922 = vunpack.c.h.b16 %v3348
        %v3923 = vunpack.c.l.b16 %v3349
        %v3924 = vunpack.c.h.b16 %v3349
        %v3925 = vunpack.c.l.b16 %v3350
        %v3926 = vunpack.c.h.b16 %v3350
        %v3927 = vunpack.c.l.b16 %v3351
        %v3928 = vunpack.c.h.b16 %v3351
        %v3929 = vunpack.c.l.b16 %v3352
        %v3930 = vunpack.c.l.b16 %v3353
        %v3931 = vunpack.c.h.b16 %v3353
        %v3932 = vunpack.c.l.b16 %v3354
        %v3933 = vunpack.c.h.b16 %v3354
        %v3934 = vunpack.c.l.b16 %v3355
        %v3935 = vunpack.c.h.b16 %v3355
        %v3936 = vunpack.c.l.b16 %v3356
        %v3937 = vunpack.c.h.b16 %v3356
        %v3938 = vunpack.c.l.b16 %v3357
        %v3939 = vunpack.c.l.b16 %v3358
        %v3940 = vunpack.c.h.b16 %v3358
        %v3941 = vunpack.c.l.b16 %v3359
        %v3942 = vunpack.c.h.b16 %v3359
        %v3943 = vunpack.c.l.b16 %v3360
        %v3944 = vunpack.c.h.b16 %v3360
        %v3945 = vunpack.c.l.b16 %v3361
        %v3946 = vunpack.c.h.b16 %v3361
        %v3947 = vunpack.c.l.b16 %v3362
        %v3948 = vunpack.c.l.b16 %v3363
        %v3949 = vunpack.c.h.b16 %v3363
        %v3950 = vunpack.c.l.b16 %v3364
        %v3951 = vunpack.c.h.b16 %v3364
        %v3952 = vunpack.c.l.b16 %v3365
        %v3953 = vunpack.c.h.b16 %v3365
        %v3954 = vunpack.c.l.b16 %v3366
        %v3955 = vunpack.c.h.b16 %v3366
        %v3956 = vunpack.c.l.b16 %v3367
        %v3957 = vunpack.c.l.b16 %v3368
        %v3958 = vunpack.c.h.b16 %v3368
        %v3959 = vunpack.c.l.b16 %v3369
        %v3960 = vunpack.c.h.b16 %v3369
        %v3961 = vunpack.c.l.b16 %v3370
        %v3962 = vunpack.c.h.b16 %v3370
        %v3963 = vunpack.c.l.b16 %v3371
        %v3964 = vunpack.c.h.b16 %v3371
        %v3965 = vunpack.c.l.b16 %v3372
        %v3966 = vunpack.c.l.b16 %v3373
        %v3967 = vunpack.c.h.b16 %v3373
        %v3968 = vunpack.c.l.b16 %v3374
        %v3969 = vunpack.c.h.b16 %v3374
        %v3970 = vunpack.c.l.b16 %v3375
        %v3971 = vunpack.c.h.b16 %v3375
        %v3972 = vunpack.c.l.b16 %v3376
        %v3973 = vunpack.c.h.b16 %v3376
        %v3974 = vunpack.c.l.b16 %v3377
        %v3975 = vunpack.c.l.b16 %v3378
        %v3976 = vunpack.c.h.b16 %v3378
        %v3977 = vunpack.c.l.b16 %v3379
        %v3978 = vunpack.c.h.b16 %v3379
        %v3979 = vunpack.c.l.b16 %v3380
        %v3980 = vunpack.c.h.b16 %v3380
        %v3981 = vunpack.c.l.b16 %v3381
        %v3982 = vunpack.c.h.b16 %v3381
        %v3983 = vunpack.c.l.b16 %v3382
        %v3984 = vunpack.c.l.b16 %v3383
        %v3985 = vunpack.c.h.b16 %v3383
        %v3986 = vunpack.c.l.b16 %v3384
        %v3987 = vunpack.c.h.b16 %v3384
        %v3988 = vunpack.c.l.b16 %v3385
        %v3989 = vunpack.c.h.b16 %v3385
        %v3990 = vunpack.c.l.b16 %v3386
        %v3991 = vunpack.c.h.b16 %v3386
        %v3992 = vunpack.c.l.b16 %v3387
        %v3993 = vunpack.c.l.b16 %v3388
        %v3994 = vunpack.c.h.b16 %v3388
        %v3995 = vunpack.c.l.b16 %v3389
        %v3996 = vunpack.c.h.b16 %v3389
        %v3997 = vunpack.c.l.b16 %v3390
        %v3998 = vunpack.c.h.b16 %v3390
        %v3999 = vunpack.c.l.b16 %v3391
        %v4000 = vunpack.c.h.b16 %v3391
        %v4001 = vunpack.c.l.b16 %v3392
        %v4002 = vunpack.c.l.b16 %v3393
        %v4003 = vunpack.c.h.b16 %v3393
        %v4004 = vunpack.c.l.b16 %v3394
        %v4005 = vunpack.c.h.b16 %v3394
        %v4006 = vunpack.c.l.b16 %v3395
        %v4007 = vunpack.c.h.b16 %v3395
        %v4008 = vunpack.c.l.b16 %v3396
        %v4009 = vunpack.c.h.b16 %v3396
        %v4010 = vunpack.c.l.b16 %v3397
        %v4011 = vunpack.c.l.b16 %v3398
        %v4012 = vunpack.c.h.b16 %v3398
        %v4013 = vunpack.c.l.b16 %v3399
        %v4014 = vunpack.c.h.b16 %v3399
        %v4015 = vunpack.c.l.b16 %v3400
        %v4016 = vunpack.c.h.b16 %v3400
        %v4017 = vunpack.c.l.b16 %v3401
        %v4018 = vunpack.c.h.b16 %v3401
        %v4019 = vunpack.c.l.b16 %v3402
        %v4020 = vunpack.c.l.b16 %v3403
        %v4021 = vunpack.c.h.b16 %v3403
        %v4022 = vunpack.c.l.b16 %v3404
        %v4023 = vunpack.c.h.b16 %v3404
        %v4024 = vunpack.c.l.b16 %v3405
        %v4025 = vunpack.c.h.b16 %v3405
        %v4026 = vunpack.c.l.b16 %v3406
        %v4027 = vunpack.c.h.b16 %v3406
        %v4028 = vunpack.c.l.b16 %v3407
        %v4029 = vunpack.c.l.b16 %v3408
        %v4030 = vunpack.c.h.b16 %v3408
        %v4031 = vunpack.c.l.b16 %v3409
        %v4032 = vunpack.c.h.b16 %v3409
        %v4033 = vunpack.c.l.b16 %v3410
        %v4034 = vunpack.c.h.b16 %v3410
        %v4035 = vunpack.c.l.b16 %v3411
        %v4036 = vunpack.c.h.b16 %v3411
        %v4037 = vunpack.c.l.b16 %v3412
        %v4038 = vunpack.c.l.b16 %v3413
        %v4039 = vunpack.c.h.b16 %v3413
        %v4040 = vunpack.c.l.b16 %v3414
        %v4041 = vunpack.c.h.b16 %v3414
        %v4042 = vunpack.c.l.b16 %v3415
        %v4043 = vunpack.c.h.b16 %v3415
        %v4044 = vunpack.c.l.b16 %v3416
        %v4045 = vunpack.c.h.b16 %v3416
        %v4046 = vunpack.c.l.b16 %v3417
        %v4047 = vunpack.c.l.b16 %v3418
        %v4048 = vunpack.c.h.b16 %v3418
        %v4049 = vunpack.c.l.b16 %v3419
        %v4050 = vunpack.c.h.b16 %v3419
        %v4051 = vunpack.c.l.b16 %v3420
        %v4052 = vunpack.c.h.b16 %v3420
        %v4053 = vunpack.c.l.b16 %v3421
        %v4054 = vunpack.c.h.b16 %v3421
        %v4055 = vunpack.c.l.b16 %v3422
        %v4056 = vunpack.c.l.b16 %v3423
        %v4057 = vunpack.c.h.b16 %v3423
        %v4058 = vunpack.c.l.b16 %v3424
        %v4059 = vunpack.c.h.b16 %v3424
        %v4060 = vunpack.c.l.b16 %v3425
        %v4061 = vunpack.c.h.b16 %v3425
        %v4062 = vunpack.c.l.b16 %v3426
        %v4063 = vunpack.c.h.b16 %v3426
        %v4064 = vunpack.c.l.b16 %v3427
        %v4065 = vunpack.c.l.b16 %v3428
        %v4066 = vunpack.c.h.b16 %v3428
        %v4067 = vunpack.c.l.b16 %v3429
        %v4068 = vunpack.c.h.b16 %v3429
        %v4069 = vunpack.c.l.b16 %v3430
        %v4070 = vunpack.c.h.b16 %v3430
        %v4071 = vunpack.c.l.b16 %v3431
        %v4072 = vunpack.c.h.b16 %v3431
        %v4073 = vunpack.c.l.b16 %v3432
        %v4074 = vunpack.c.l.b16 %v3433
        %v4075 = vunpack.c.h.b16 %v3433
        %v4076 = vunpack.c.l.b16 %v3434
        %v4077 = vunpack.c.h.b16 %v3434
        %v4078 = vunpack.c.l.b16 %v3435
        %v4079 = vunpack.c.h.b16 %v3435
        %v4080 = vunpack.c.l.b16 %v3436
        %v4081 = vunpack.c.h.b16 %v3436
        %v4082 = vunpack.c.l.b16 %v3437
        %v4083 = vunpack.c.l.b16 %v3438
        %v4084 = vunpack.c.h.b16 %v3438
        %v4085 = vunpack.c.l.b16 %v3439
        %v4086 = vunpack.c.h.b16 %v3439
        %v4087 = vunpack.c.l.b16 %v3440
        %v4088 = vunpack.c.h.b16 %v3440
        %v4089 = vunpack.c.l.b16 %v3441
        %v4090 = vunpack.c.h.b16 %v3441
        %v4091 = vunpack.c.l.b16 %v3442
        %v4092 = vunpack.c.l.b16 %v3443
        %v4093 = vunpack.c.h.b16 %v3443
        %v4094 = vunpack.c.l.b16 %v3444
        %v4095 = vunpack.c.h.b16 %v3444
        %v4096 = vunpack.c.l.b16 %v3445
        %v4097 = vunpack.c.h.b16 %v3445
        %v4098 = vunpack.c.l.b16 %v3446
        %v4099 = vunpack.c.h.b16 %v3446
        %v4100 = vunpack.c.l.b16 %v3447
        %v4101 = vunpack.c.l.b16 %v3448
        %v4102 = vunpack.c.h.b16 %v3448
        %v4103 = vunpack.c.l.b16 %v3449
        %v4104 = vunpack.c.h.b16 %v3449
        %v4105 = vunpack.c.l.b16 %v3450
        %v4106 = vunpack.c.h.b16 %v3450
        %v4107 = vunpack.c.l.b16 %v3451
        %v4108 = vunpack.c.h.b16 %v3451
        %v4109 = vunpack.c.l.b16 %v3452
        %v4110 = vunpack.c.l.b16 %v3453
        %v4111 = vunpack.c.h.b16 %v3453
        %v4112 = vunpack.c.l.b16 %v3454
        %v4113 = vunpack.c.h.b16 %v3454
        %v4114 = vunpack.c.l.b16 %v3455
        %v4115 = vunpack.c.h.b16 %v3455
        %v4116 = vunpack.c.l.b16 %v3456
        %v4117 = vunpack.c.h.b16 %v3456
        %v4118 = vunpack.c.l.b16 %v3457
        %v4119 = vunpack.c.l.b16 %v3458
        %v4120 = vunpack.c.h.b16 %v3458
        %v4121 = vunpack.c.l.b16 %v3459
        %v4122 = vunpack.c.h.b16 %v3459
        %v4123 = vunpack.c.l.b16 %v3460
        %v4124 = vunpack.c.h.b16 %v3460
        %v4125 = vunpack.c.l.b16 %v3461
        %v4126 = vunpack.c.h.b16 %v3461
        %v4127 = vunpack.c.l.b16 %v3462
        %v4128 = vunpack.c.l.b16 %v3463
        %v4129 = vunpack.c.h.b16 %v3463
        %v4130 = vunpack.c.l.b16 %v3464
        %v4131 = vunpack.c.h.b16 %v3464
        %v4132 = vunpack.c.l.b16 %v3465
        %v4133 = vunpack.c.h.b16 %v3465
        %v4134 = vunpack.c.l.b16 %v3466
        %v4135 = vunpack.c.h.b16 %v3466
        %v4136 = vunpack.c.l.b16 %v3467
        %v4137 = vunpack.c.l.b16 %v3468
        %v4138 = vunpack.c.h.b16 %v3468
        %v4139 = vunpack.c.l.b16 %v3469
        %v4140 = vunpack.c.h.b16 %v3469
        %v4141 = vunpack.c.l.b16 %v3470
        %v4142 = vunpack.c.h.b16 %v3470
        %v4143 = vunpack.c.l.b16 %v3471
        %v4144 = vunpack.c.h.b16 %v3471
        %v4145 = vunpack.c.l.b16 %v3472
        %v4146 = vunpack.c.l.b16 %v3473
        %v4147 = vunpack.c.h.b16 %v3473
        %v4148 = vunpack.c.l.b16 %v3474
        %v4149 = vunpack.c.h.b16 %v3474
        %v4150 = vunpack.c.l.b16 %v3475
        %v4151 = vunpack.c.h.b16 %v3475
        %v4152 = vunpack.c.l.b16 %v3476
        %v4153 = vunpack.c.h.b16 %v3476
        %v4154 = vunpack.c.l.b16 %v3477
        %v4155 = vunpack.c.l.b16 %v3478
        %v4156 = vunpack.c.h.b16 %v3478
        %v4157 = vunpack.c.l.b16 %v3479
        %v4158 = vunpack.c.h.b16 %v3479
        %v4159 = vunpack.c.l.b16 %v3480
        %v4160 = vunpack.c.h.b16 %v3480
        %v4161 = vunpack.c.l.b16 %v3481
        %v4162 = vunpack.c.h.b16 %v3481
        %v4163 = vunpack.c.l.b16 %v3482
        %v4164 = vunpack.c.l.b16 %v3483
        %v4165 = vunpack.c.h.b16 %v3483
        %v4166 = vunpack.c.l.b16 %v3484
        %v4167 = vunpack.c.h.b16 %v3484
        %v4168 = vunpack.c.l.b16 %v3485
        %v4169 = vunpack.c.h.b16 %v3485
        %v4170 = vunpack.c.l.b16 %v3486
        %v4171 = vunpack.c.h.b16 %v3486
        %v4172 = vunpack.c.l.b16 %v3487
        %v4173 = vunpack.c.l.b16 %v3488
        %v4174 = vunpack.c.h.b16 %v3488
        %v4175 = vunpack.c.l.b16 %v3489
        %v4176 = vunpack.c.h.b16 %v3489
        %v4177 = vunpack.c.l.b16 %v3490
        %v4178 = vunpack.c.h.b16 %v3490
        %v4179 = vunpack.c.l.b16 %v3491
        %v4180 = vunpack.c.h.b16 %v3491
        %v4181 = vunpack.c.l.b16 %v3492
        %v4182 = vunpack.c.l.b16 %v3493
        %v4183 = vunpack.c.h.b16 %v3493
        %v4184 = vunpack.c.l.b16 %v3494
        %v4185 = vunpack.c.h.b16 %v3494
        %v4186 = vunpack.c.l.b16 %v3495
        %v4187 = vunpack.c.h.b16 %v3495
        %v4188 = vunpack.c.l.b16 %v3496
        %v4189 = vunpack.c.h.b16 %v3496
        %v4190 = vunpack.c.l.b16 %v3497
        %v4191 = vunpack.c.l.b16 %v3498
        %v4192 = vunpack.c.h.b16 %v3498
        %v4193 = vunpack.c.l.b16 %v3499
        %v4194 = vunpack.c.h.b16 %v3499
        %v4195 = vunpack.c.l.b16 %v3500
        %v4196 = vunpack.c.h.b16 %v3500
        %v4197 = vunpack.c.l.b16 %v3501
        %v4198 = vunpack.c.h.b16 %v3501
        %v4199 = vunpack.c.l.b16 %v3502
        %v4200 = vunpack.c.l.b16 %v3503
        %v4201 = vunpack.c.h.b16 %v3503
        %v4202 = vunpack.c.l.b16 %v3504
        %v4203 = vunpack.c.h.b16 %v3504
        %v4204 = vunpack.c.l.b16 %v3505
        %v4205 = vunpack.c.h.b16 %v3505
        %v4206 = vunpack.c.l.b16 %v3506
        %v4207 = vunpack.c.h.b16 %v3506
        %v4208 = vunpack.c.l.b16 %v3507
        %v4209 = vunpack.c.l.b16 %v3508
        %v4210 = vunpack.c.h.b16 %v3508
        %v4211 = vunpack.c.l.b16 %v3509
        %v4212 = vunpack.c.h.b16 %v3509
        %v4213 = vunpack.c.l.b16 %v3510
        %v4214 = vunpack.c.h.b16 %v3510
        %v4215 = vunpack.c.l.b16 %v3511
        %v4216 = vunpack.c.h.b16 %v3511
        %v4217 = vunpack.c.l.b16 %v3512
        %v4218 = vunpack.c.l.b16 %v3513
        %v4219 = vunpack.c.h.b16 %v3513
        %v4220 = vunpack.c.l.b16 %v3514
        %v4221 = vunpack.c.h.b16 %v3514
        %v4222 = vunpack.c.l.b16 %v3515
        %v4223 = vunpack.c.h.b16 %v3515
        %v4224 = vunpack.c.l.b16 %v3516
        %v4225 = vunpack.c.h.b16 %v3516
        %v4226 = vunpack.c.l.b16 %v3517
        %v4227 = vunpack.c.l.b16 %v3518
        %v4228 = vunpack.c.h.b16 %v3518
        %v4229 = vunpack.c.l.b16 %v3519
        %v4230 = vunpack.c.h.b16 %v3519
        %v4231 = vunpack.c.l.b16 %v3520
        %v4232 = vunpack.c.h.b16 %v3520
        %v4233 = vunpack.c.l.b16 %v3521
        %v4234 = vunpack.c.h.b16 %v3521
        %v4235 = vunpack.c.l.b16 %v3522
        %v4236 = vunpack.c.l.b16 %v3523
        %v4237 = vunpack.c.h.b16 %v3523
        %v4238 = vunpack.c.l.b16 %v3524
        %v4239 = vunpack.c.h.b16 %v3524
        %v4240 = vunpack.c.l.b16 %v3525
        %v4241 = vunpack.c.h.b16 %v3525
        %v4242 = vunpack.c.l.b16 %v3526
        %v4243 = vunpack.c.h.b16 %v3526
        %v4244 = vunpack.c.l.b16 %v3527
        %v4245 = vunpack.c.l.b16 %v3528
        %v4246 = vunpack.c.h.b16 %v3528
        %v4247 = vunpack.c.l.b16 %v3529
        %v4248 = vunpack.c.h.b16 %v3529
        %v4249 = vunpack.c.l.b16 %v3530
        %v4250 = vunpack.c.h.b16 %v3530
        %v4251 = vunpack.c.l.b16 %v3531
        %v4252 = vunpack.c.h.b16 %v3531
        %v4253 = vunpack.c.l.b16 %v3532
        %v4254 = vunpack.c.l.b16 %v3533
        %v4255 = vunpack.c.h.b16 %v3533
        %v4256 = vunpack.c.l.b16 %v3534
        %v4257 = vunpack.c.h.b16 %v3534
        %v4258 = vunpack.c.l.b16 %v3535
        %v4259 = vunpack.c.h.b16 %v3535
        %v4260 = vunpack.c.l.b16 %v3536
        %v4261 = vunpack.c.h.b16 %v3536
        %v4262 = vunpack.c.l.b16 %v3537
        %v4263 = vpack.c.b16 %v3903, %v3894
        %v4264 = vpack.c.b16 %v3904, %v3895
        %v4265 = vpack.c.b16 %v3905, %v3896
        %v4266 = vpack.c.b16 %v3906, %v3897
        %v4267 = vpack.c.b16 %v3907, %v3898
        %v4268 = vpack.c.b16 %v3908, %v3899
        %v4269 = vpack.c.b16 %v3909, %v3900
        %v4270 = vpack.c.b16 %v3910, %v3901
        %v4271 = vpack.c.b16 %v3911, %v3902
        %v4272 = vpack.c.b16 %v3921, %v3912
        %v4273 = vpack.c.b16 %v3922, %v3913
        %v4274 = vpack.c.b16 %v3923, %v3914
        %v4275 = vpack.c.b16 %v3924, %v3915
        %v4276 = vpack.c.b16 %v3925, %v3916
        %v4277 = vpack.c.b16 %v3926, %v3917
        %v4278 = vpack.c.b16 %v3927, %v3918
        %v4279 = vpack.c.b16 %v3928, %v3919
        %v4280 = vpack.c.b16 %v3929, %v3920
        %v4281 = vpack.c.b16 %v3939, %v3930
        %v4282 = vpack.c.b16 %v3940, %v3931
        %v4283 = vpack.c.b16 %v3941, %v3932
        %v4284 = vpack.c.b16 %v3942, %v3933
        %v4285 = vpack.c.b16 %v3943, %v3934
        %v4286 = vpack.c.b16 %v3944, %v3935
        %v4287 = vpack.c.b16 %v3945, %v3936
        %v4288 = vpack.c.b16 %v3946, %v3937
        %v4289 = vpack.c.b16 %v3947, %v3938
        %v4290 = vpack.c.b16 %v3957, %v3948
        %v4291 = vpack.c.b16 %v3958, %v3949
        %v4292 = vpack.c.b16 %v3959, %v3950
        %v4293 = vpack.c.b16 %v3960, %v3951
        %v4294 = vpack.c.b16 %v3961, %v3952
        %v4295 = vpack.c.b16 %v3962, %v3953
        %v4296 = vpack.c.b16 %v3963, %v3954
        %v4297 = vpack.c.b16 %v3964, %v3955
        %v4298 = vpack.c.b16 %v3965, %v3956
        %v4299 = vpack.c.b16 %v3975, %v3966
        %v4300 = vpack.c.b16 %v3976, %v3967
        %v4301 = vpack.c.b16 %v3977, %v3968
        %v4302 = vpack.c.b16 %v3978, %v3969
        %v4303 = vpack.c.b16 %v3979, %v3970
        %v4304 = vpack.c.b16 %v3980, %v3971
        %v4305 = vpack.c.b16 %v3981, %v3972
        %v4306 = vpack.c.b16 %v3982, %v3973
        %v4307 = vpack.c.b16 %v3983, %v3974
        %v4308 = vpack.c.b16 %v3993, %v3984
        %v4309 = vpack.c.b16 %v3994, %v3985
        %v4310 = vpack.c.b16 %v3995, %v3986
        %v4311 = vpack.c.b16 %v3996, %v3987
        %v4312 = vpack.c.b16 %v3997, %v3988
        %v4313 = vpack.c.b16 %v3998, %v3989
        %v4314 = vpack.c.b16 %v3999, %v3990
        %v4315 = vpack.c.b16 %v4000, %v3991
        %v4316 = vpack.c.b16 %v4001, %v3992
        %v4317 = vpack.c.b16 %v4011, %v4002
        %v4318 = vpack.c.b16 %v4012, %v4003
        %v4319 = vpack.c.b16 %v4013, %v4004
        %v4320 = vpack.c.b16 %v4014, %v4005
        %v4321 = vpack.c.b16 %v4015, %v4006
        %v4322 = vpack.c.b16 %v4016, %v4007
        %v4323 = vpack.c.b16 %v4017, %v4008
        %v4324 = vpack.c.b16 %v4018, %v4009
        %v4325 = vpack.c.b16 %v4019, %v4010
        %v4326 = vpack.c.b16 %v4029, %v4020
        %v4327 = vpack.c.b16 %v4030, %v4021
        %v4328 = vpack.c.b16 %v4031, %v4022
        %v4329 = vpack.c.b16 %v4032, %v4023
        %v4330 = vpack.c.b16 %v4033, %v4024
        %v4331 = vpack.c.b16 %v4034, %v4025
        %v4332 = vpack.c.b16 %v4035, %v4026
        %v4333 = vpack.c.b16 %v4036, %v4027
        %v4334 = vpack.c.b16 %v4037, %v4028
        %v4335 = vpack.c.b16 %v4047, %v4038
        %v4336 = vpack.c.b16 %v4048, %v4039
        %v4337 = vpack.c.b16 %v4049, %v4040
        %v4338 = vpack.c.b16 %v4050, %v4041
        %v4339 = vpack.c.b16 %v4051, %v4042
        %v4340 = vpack.c.b16 %v4052, %v4043
        %v4341 = vpack.c.b16 %v4053, %v4044
        %v4342 = vpack.c.b16 %v4054, %v4045
        %v4343 = vpack.c.b16 %v4055, %v4046
        %v4344 = vpack.c.b16 %v4065, %v4056
        %v4345 = vpack.c.b16 %v4066, %v4057
        %v4346 = vpack.c.b16 %v4067, %v4058
        %v4347 = vpack.c.b16 %v4068, %v4059
        %v4348 = vpack.c.b16 %v4069, %v4060
        %v4349 = vpack.c.b16 %v4070, %v4061
        %v4350 = vpack.c.b16 %v4071, %v4062
        %v4351 = vpack.c.b16 %v4072, %v4063
        %v4352 = vpack.c.b16 %v4073, %v4064
        %v4353 = vpack.c.b16 %v4083, %v4074
        %v4354 = vpack.c.b16 %v4084, %v4075
        %v4355 = vpack.c.b16 %v4085, %v4076
        %v4356 = vpack.c.b16 %v4086, %v4077
        %v4357 = vpack.c.b16 %v4087, %v4078
        %v4358 = vpack.c.b16 %v4088, %v4079
        %v4359 = vpack.c.b16 %v4089, %v4080
        %v4360 = vpack.c.b16 %v4090, %v4081
        %v4361 = vpack.c.b16 %v4091, %v4082
        %v4362 = vpack.c.b16 %v4101, %v4092
        %v4363 = vpack.c.b16 %v4102, %v4093
        %v4364 = vpack.c.b16 %v4103, %v4094
        %v4365 = vpack.c.b16 %v4104, %v4095
        %v4366 = vpack.c.b16 %v4105, %v4096
        %v4367 = vpack.c.b16 %v4106, %v4097
        %v4368 = vpack.c.b16 %v4107, %v4098
        %v4369 = vpack.c.b16 %v4108, %v4099
        %v4370 = vpack.c.b16 %v4109, %v4100
        %v4371 = vpack.c.b16 %v4119, %v4110
        %v4372 = vpack.c.b16 %v4120, %v4111
        %v4373 = vpack.c.b16 %v4121, %v4112
        %v4374 = vpack.c.b16 %v4122, %v4113
        %v4375 = vpack.c.b16 %v4123, %v4114
        %v4376 = vpack.c.b16 %v4124, %v4115
        %v4377 = vpack.c.b16 %v4125, %v4116
        %v4378 = vpack.c.b16 %v4126, %v4117
        %v4379 = vpack.c.b16 %v4127, %v4118
        %v4380 = vpack.c.b16 %v4137, %v4128
        %v4381 = vpack.c.b16 %v4138, %v4129
        %v4382 = vpack.c.b16 %v4139, %v4130
        %v4383 = vpack.c.b16 %v4140, %v4131
        %v4384 = vpack.c.b16 %v4141, %v4132
        %v4385 = vpack.c.b16 %v4142, %v4133
        %v4386 = vpack.c.b16 %v4143, %v4134
        %v4387 = vpack.c.b16 %v4144, %v4135
        %v4388 = vpack.c.b16 %v4145, %v4136
        %v4389 = vpack.c.b16 %v4155, %v4146
        %v4390 = vpack.c.b16 %v4156, %v4147
        %v4391 = vpack.c.b16 %v4157, %v4148
        %v4392 = vpack.c.b16 %v4158, %v4149
        %v4393 = vpack.c.b16 %v4159, %v4150
        %v4394 = vpack.c.b16 %v4160, %v4151
        %v4395 = vpack.c.b16 %v4161, %v4152
        %v4396 = vpack.c.b16 %v4162, %v4153
        %v4397 = vpack.c.b16 %v4163, %v4154
        %v4398 = vpack.c.b16 %v4173, %v4164
        %v4399 = vpack.c.b16 %v4174, %v4165
        %v4400 = vpack.c.b16 %v4175, %v4166
        %v4401 = vpack.c.b16 %v4176, %v4167
        %v4402 = vpack.c.b16 %v4177, %v4168
        %v4403 = vpack.c.b16 %v4178, %v4169
        %v4404 = vpack.c.b16 %v4179, %v4170
        %v4405 = vpack.c.b16 %v4180, %v4171
        %v4406 = vpack.c.b16 %v4181, %v4172
        %v4407 = vpack.c.b16 %v4191, %v4182
        %v4408 = vpack.c.b16 %v4192, %v4183
        %v4409 = vpack.c.b16 %v4193, %v4184
        %v4410 = vpack.c.b16 %v4194, %v4185
        %v4411 = vpack.c.b16 %v4195, %v4186
        %v4412 = vpack.c.b16 %v4196, %v4187
        %v4413 = vpack.c.b16 %v4197, %v4188
        %v4414 = vpack.c.b16 %v4198, %v4189
        %v4415 = vpack.c.b16 %v4199, %v4190
        %v4416 = vpack.c.b16 %v4209, %v4200
        %v4417 = vpack.c.b16 %v4210, %v4201
        %v4418 = vpack.c.b16 %v4211, %v4202
        %v4419 = vpack.c.b16 %v4212, %v4203
        %v4420 = vpack.c.b16 %v4213, %v4204
        %v4421 = vpack.c.b16 %v4214, %v4205
        %v4422 = vpack.c.b16 %v4215, %v4206
        %v4423 = vpack.c.b16 %v4216, %v4207
        %v4424 = vpack.c.b16 %v4217, %v4208
        %v4425 = vpack.c.b16 %v4227, %v4218
        %v4426 = vpack.c.b16 %v4228, %v4219
        %v4427 = vpack.c.b16 %v4229, %v4220
        %v4428 = vpack.c.b16 %v4230, %v4221
        %v4429 = vpack.c.b16 %v4231, %v4222
        %v4430 = vpack.c.b16 %v4232, %v4223
        %v4431 = vpack.c.b16 %v4233, %v4224
        %v4432 = vpack.c.b16 %v4234, %v4225
        %v4433 = vpack.c.b16 %v4235, %v4226
        %v4434 = vpack.c.b16 %v4245, %v4236
        %v4435 = vpack.c.b16 %v4246, %v4237
        %v4436 = vpack.c.b16 %v4247, %v4238
        %v4437 = vpack.c.b16 %v4248, %v4239
        %v4438 = vpack.c.b16 %v4249, %v4240
        %v4439 = vpack.c.b16 %v4250, %v4241
        %v4440 = vpack.c.b16 %v4251, %v4242
        %v4441 = vpack.c.b16 %v4252, %v4243
        %v4442 = vpack.c.b16 %v4253, %v4244
        %v4443 = vpack.c.b16 %v4254, %v4254
        %v4444 = vpack.c.b16 %v4255, %v4255
        %v4445 = vpack.c.b16 %v4256, %v4256
        %v4446 = vpack.c.b16 %v4257, %v4257
        %v4447 = vpack.c.b16 %v4258, %v4258
        %v4448 = vpack.c.b16 %v4259, %v4259
        %v4449 = vpack.c.b16 %v4260, %v4260
        %v4450 = vpack.c.b16 %v4261, %v4261
        %v4451 = vpack.c.b16 %v4262, %v4262
        %v4785 = vunpack.c.l.b16 %v3538
        %v4786 = vunpack.c.l.b16 %v3539
        %v4787 = vunpack.c.l.b16 %v3540
        %v4788 = vunpack.c.l.b16 %v3541
        %v4789 = vunpack.c.l.b16 %v3542
        %v4790 = vunpack.c.l.b16 %v3543
        %v4791 = vunpack.c.l.b16 %v3544
        %v4792 = vunpack.c.l.b16 %v3545
        %v4793 = vunpack.c.l.b16 %v3546
        %v4794 = vunpack.c.l.b16 %v3547
        %v4795 = vunpack.c.l.b16 %v3548
        %v4796 = vunpack.c.l.b16 %v3549
        %v4797 = vunpack.c.l.b16 %v3550
        %v4798 = vunpack.c.l.b16 %v3551
        %v4799 = vunpack.c.l.b16 %v3552
        %v4800 = vunpack.c.l.b16 %v3553
        %v4801 = vunpack.c.l.b16 %v3554
        %v4802 = vunpack.c.l.b16 %v3555
        %v4803 = vunpack.c.l.b16 %v3556
        %v4804 = vunpack.c.l.b16 %v3557
        %v4805 = vunpack.c.l.b16 %v3558
        %v4806 = vunpack.c.l.b16 %v3559
        %v4807 = vunpack.c.l.b16 %v3560
        %v4808 = vunpack.c.l.b16 %v3561
        %v4809 = vunpack.c.l.b16 %v3562
        %v4810 = vunpack.c.l.b16 %v3563
        %v4811 = vunpack.c.l.b16 %v3564
        %v4812 = vunpack.c.l.b16 %v3565
        %v4813 = vunpack.c.l.b16 %v3566
        %v4814 = vunpack.c.l.b16 %v3567
        %v4815 = vunpack.c.l.b16 %v3568
        %v4816 = vunpack.c.l.b16 %v3569
        %v4817 = vunpack.c.l.b16 %v3570
        %v4818 = vunpack.c.l.b16 %v3571
        %v4819 = vunpack.c.l.b16 %v3572
        %v4820 = vunpack.c.l.b16 %v3573
        %v4821 = vunpack.c.l.b16 %v3574
        %v4822 = vunpack.c.l.b16 %v3575
        %v4823 = vunpack.c.l.b16 %v3576
        %v4824 = vunpack.c.l.b16 %v3577
        %v4825 = vunpack.c.l.b16 %v3578
        %v4826 = vunpack.c.l.b16 %v3579
        %v4827 = vunpack.c.l.b16 %v3580
        %v4828 = vunpack.c.l.b16 %v3581
        %v4829 = vunpack.c.l.b16 %v3582
        %v4830 = vunpack.c.l.b16 %v3583
        %v4831 = vunpack.c.l.b16 %v3584
        %v4832 = vunpack.c.l.b16 %v3585
        %v4833 = vunpack.c.l.b16 %v3586
        %v4834 = vunpack.c.l.b16 %v3587
        %v4835 = vunpack.c.l.b16 %v3588
        %v4836 = vunpack.c.l.b16 %v3589
        %v4837 = vunpack.c.l.b16 %v3590
        %v4838 = vunpack.c.l.b16 %v3591
        %v4839 = vunpack.c.l.b16 %v3592
        %v4840 = vunpack.c.l.b16 %v3593
        %v4841 = vunpack.c.l.b16 %v3594
        %v4842 = vunpack.c.l.b16 %v3595
        %v4843 = vunpack.c.l.b16 %v3596
        %v4844 = vunpack.c.l.b16 %v3597
        %v4845 = vunpack.c.l.b16 %v3598
        %v4846 = vunpack.c.l.b16 %v3599
        %v4847 = vunpack.c.l.b16 %v3600
        %v4848 = vunpack.c.l.b16 %v3601
        %v4849 = vunpack.c.l.b16 %v3602
        %v4850 = vunpack.c.l.b16 %v3603
        %v4851 = vunpack.c.l.b16 %v3604
        %v4852 = vunpack.c.l.b16 %v3605
        %v4853 = vunpack.c.l.b16 %v3606
        %v4854 = vunpack.c.l.b16 %v3607
        %v4855 = vunpack.c.l.b16 %v3608
        %v4856 = vunpack.c.l.b16 %v3609
        %v4857 = vunpack.c.l.b16 %v3610
        %v4858 = vunpack.c.l.b16 %v3611
        %v4859 = vunpack.c.l.b16 %v3612
        %v4860 = vunpack.c.l.b16 %v3613
        %v4861 = vunpack.c.l.b16 %v3614
        %v4862 = vunpack.c.l.b16 %v3615
        %v4863 = vunpack.c.l.b16 %v3616
        %v4864 = vunpack.c.l.b16 %v3617
        %v4865 = vunpack.c.l.b16 %v3618
        %v4866 = vunpack.c.l.b16 %v3619
        %v4867 = vunpack.c.l.b16 %v3620
        %v4868 = vunpack.c.l.b16 %v3621
        %v4869 = vunpack.c.l.b16 %v3622
        %v4870 = vunpack.c.l.b16 %v3623
        %v4871 = vunpack.c.l.b16 %v3624
        %v4872 = vunpack.c.l.b16 %v3625
        %v4873 = vunpack.c.l.b16 %v3626
        %v4874 = vunpack.c.l.b16 %v3627
        %v4875 = vunpack.c.l.b16 %v3628
        %v4876 = vunpack.c.l.b16 %v3629
        %v4877 = vunpack.c.l.b16 %v3630
        %v4878 = vunpack.c.l.b16 %v3631
        %v4879 = vunpack.c.l.b16 %v3632
        %v4880 = vunpack.c.l.b16 %v3633
        %v4881 = vunpack.c.l.b16 %v3634
        %v4882 = vunpack.c.l.b16 %v3635
        %v4883 = vunpack.c.l.b16 %v3636
        %v4884 = vunpack.c.l.b16 %v3637
        %v4885 = vunpack.c.l.b16 %v3638
        %v4886 = vunpack.c.l.b16 %v3639
        %v4887 = vunpack.c.l.b16 %v3640
        %v4888 = vunpack.c.l.b16 %v3641
        %v4889 = vunpack.c.l.b16 %v3642
        %v4890 = vunpack.c.l.b16 %v3643
        %v4891 = vunpack.c.l.b16 %v3644
        %v4892 = vunpack.c.l.b16 %v3645
        %v4893 = vunpack.c.l.b16 %v3646
        %v4894 = vunpack.c.l.b16 %v3647
        %v4895 = vunpack.c.l.b16 %v3648
        %v4896 = vunpack.c.l.b16 %v3649
        %v4897 = vunpack.c.l.b16 %v3650
        %v4898 = vunpack.c.l.b16 %v3651
        %v4899 = vunpack.c.l.b16 %v3652
        %v4900 = vunpack.c.l.b16 %v3653
        %v4901 = vunpack.c.l.b16 %v3654
        %v4902 = vunpack.c.l.b16 %v3655
        %v4903 = vunpack.c.l.b16 %v3656
        %v4904 = vunpack.c.l.b16 %v3657
        %v4905 = vunpack.c.l.b16 %v3658
        %v4906 = vunpack.c.l.b16 %v3659
        %v4907 = vunpack.c.l.b16 %v3660
        %v4908 = vunpack.c.l.b16 %v3661
        %v4909 = vunpack.c.l.b16 %v3662
        %v4910 = vunpack.c.l.b16 %v3663
        %v4911 = vunpack.c.l.b16 %v3664
        %v4912 = vunpack.c.l.b16 %v3665
        %v4913 = vunpack.c.l.b16 %v3666
        %v4914 = vunpack.c.l.b16 %v3667
        %v4915 = vunpack.c.l.b16 %v3668
        %v4916 = vunpack.c.l.b16 %v3669
        %v4917 = vunpack.c.l.b16 %v3670
        %v4918 = vunpack.c.l.b16 %v3671
        %v4919 = vunpack.c.l.b16 %v3672
        %v4920 = vunpack.c.l.b16 %v3673
        %v4921 = vunpack.c.l.b16 %v3674
        %v4922 = vunpack.c.l.b16 %v3675
        %v4923 = vunpack.c.l.b16 %v3676
        %v4924 = vunpack.c.l.b16 %v3677
        %v4925 = vunpack.c.l.b16 %v3678
        %v4926 = vunpack.c.l.b16 %v3679
        %v4927 = vunpack.c.l.b16 %v3680
        %v4928 = vunpack.c.l.b16 %v3681
        %v4929 = vpack.c.b16 %v4786, %v4785
        %v4930 = vpack.c.b16 %v4788, %v4787
        %v4931 = vpack.c.b16 %v4790, %v4789
        %v4932 = vpack.c.b16 %v4792, %v4791
        %v4933 = vpack.c.b16 %v4794, %v4793
        %v4934 = vpack.c.b16 %v4796, %v4795
        %v4935 = vpack.c.b16 %v4798, %v4797
        %v4936 = vpack.c.b16 %v4800, %v4799
        %v4937 = vpack.c.b16 %v4802, %v4801
        %v4938 = vpack.c.b16 %v4804, %v4803
        %v4939 = vpack.c.b16 %v4806, %v4805
        %v4940 = vpack.c.b16 %v4808, %v4807
        %v4941 = vpack.c.b16 %v4810, %v4809
        %v4942 = vpack.c.b16 %v4812, %v4811
        %v4943 = vpack.c.b16 %v4814, %v4813
        %v4944 = vpack.c.b16 %v4816, %v4815
        %v4945 = vpack.c.b16 %v4818, %v4817
        %v4946 = vpack.c.b16 %v4820, %v4819
        %v4947 = vpack.c.b16 %v4822, %v4821
        %v4948 = vpack.c.b16 %v4824, %v4823
        %v4949 = vpack.c.b16 %v4826, %v4825
        %v4950 = vpack.c.b16 %v4828, %v4827
        %v4951 = vpack.c.b16 %v4830, %v4829
        %v4952 = vpack.c.b16 %v4832, %v4831
        %v4953 = vpack.c.b16 %v4834, %v4833
        %v4954 = vpack.c.b16 %v4836, %v4835
        %v4955 = vpack.c.b16 %v4838, %v4837
        %v4956 = vpack.c.b16 %v4840, %v4839
        %v4957 = vpack.c.b16 %v4842, %v4841
        %v4958 = vpack.c.b16 %v4844, %v4843
        %v4959 = vpack.c.b16 %v4846, %v4845
        %v4960 = vpack.c.b16 %v4848, %v4847
        %v4961 = vpack.c.b16 %v4850, %v4849
        %v4962 = vpack.c.b16 %v4852, %v4851
        %v4963 = vpack.c.b16 %v4854, %v4853
        %v4964 = vpack.c.b16 %v4856, %v4855
        %v4965 = vpack.c.b16 %v4858, %v4857
        %v4966 = vpack.c.b16 %v4860, %v4859
        %v4967 = vpack.c.b16 %v4862, %v4861
        %v4968 = vpack.c.b16 %v4864, %v4863
        %v4969 = vpack.c.b16 %v4866, %v4865
        %v4970 = vpack.c.b16 %v4868, %v4867
        %v4971 = vpack.c.b16 %v4870, %v4869
        %v4972 = vpack.c.b16 %v4872, %v4871
        %v4973 = vpack.c.b16 %v4874, %v4873
        %v4974 = vpack.c.b16 %v4876, %v4875
        %v4975 = vpack.c.b16 %v4878, %v4877
        %v4976 = vpack.c.b16 %v4880, %v4879
        %v4977 = vpack.c.b16 %v4882, %v4881
        %v4978 = vpack.c.b16 %v4884, %v4883
        %v4979 = vpack.c.b16 %v4886, %v4885
        %v4980 = vpack.c.b16 %v4888, %v4887
        %v4981 = vpack.c.b16 %v4890, %v4889
        %v4982 = vpack.c.b16 %v4892, %v4891
        %v4983 = vpack.c.b16 %v4894, %v4893
        %v4984 = vpack.c.b16 %v4896, %v4895
        %v4985 = vpack.c.b16 %v4898, %v4897
        %v4986 = vpack.c.b16 %v4900, %v4899
        %v4987 = vpack.c.b16 %v4902, %v4901
        %v4988 = vpack.c.b16 %v4904, %v4903
        %v4989 = vpack.c.b16 %v4906, %v4905
        %v4990 = vpack.c.b16 %v4908, %v4907
        %v4991 = vpack.c.b16 %v4910, %v4909
        %v4992 = vpack.c.b16 %v4912, %v4911
        %v4993 = vpack.c.b16 %v4914, %v4913
        %v4994 = vpack.c.b16 %v4916, %v4915
        %v4995 = vpack.c.b16 %v4918, %v4917
        %v4996 = vpack.c.b16 %v4920, %v4919
        %v4997 = vpack.c.b16 %v4922, %v4921
        %v4998 = vpack.c.b16 %v4924, %v4923
        %v4999 = vpack.c.b16 %v4926, %v4925
        %v5000 = vpack.c.b16 %v4928, %v4927
        %5073 = vmatprep.subr.bf16.mxu0 0
        %5074 = vmatpush1.bf16.msra.mxu0 %v4936
        %5075 = vmatprep.subr.bf16.mxu0 0
        %5076 = vmatpush1.bf16.msra.mxu0 %v4935
        %5077 = vmatprep.subr.bf16.mxu0 0
        %5078 = vmatpush1.bf16.msra.mxu0 %v4934
        %5079 = vmatprep.subr.bf16.mxu0 0
        %5080 = vmatpush1.bf16.msra.mxu0 %v4933
        %5081 = vmatprep.subr.bf16.mxu0 0
        %5082 = vmatpush1.bf16.msra.mxu0 %v4932
        %5083 = vmatprep.subr.bf16.mxu0 0
        %5084 = vmatpush1.bf16.msra.mxu0 %v4931
        %5085 = vmatprep.subr.bf16.mxu0 0
        %5086 = vmatpush1.bf16.msra.mxu0 %v4930
        %5087 = vmatprep.subr.bf16.mxu0 0
        %5088 = vmatpush1.bf16.msra.mxu0 %v4929
        %5089 = vmatprep.subr.bf16.mxu0 0
        %5090 = vmatpush2.bf16.msra.mxu0 %v4944
        %5091 = vmatprep.subr.bf16.mxu0 0
        %5092 = vmatpush2.bf16.msra.mxu0 %v4943
        %5093 = vmatprep.subr.bf16.mxu0 0
        %5094 = vmatpush2.bf16.msra.mxu0 %v4942
        %5095 = vmatprep.subr.bf16.mxu0 0
        %5096 = vmatpush2.bf16.msra.mxu0 %v4941
        %5097 = vmatprep.subr.bf16.mxu0 0
        %5098 = vmatpush2.bf16.msra.mxu0 %v4940
        %5099 = vmatprep.subr.bf16.mxu0 0
        %5100 = vmatpush2.bf16.msra.mxu0 %v4939
        %5101 = vmatprep.subr.bf16.mxu0 0
        %5102 = vmatpush2.bf16.msra.mxu0 %v4938
        %5103 = vmatprep.subr.bf16.mxu0 0
        %5104 = vmatpush2.bf16.msra.mxu0 %v4937
        %5105 = vmatprep.mubr.bf16.mxu0 %v4264
        %5106 = vmatmul.mubr.bf16.gmra.mxu0 %v4263
        %v5107 = vpop.f32.mrf.mxu0
        %v5108 = vadd.f32 %v3687, %v5107
        %v5109 = vpop.f32.mrf.mxu0
        %v5110 = vpop.f32.mrf.mxu0
        %v5111 = vadd.f32 %v3687, %v5110
        %v5112 = vpop.f32.mrf.mxu0
        %5113 = vmatprep.mubr.bf16.mxu0 %v4273
        %5114 = vmatmul.mubr.bf16.gmra.mxu0 %v4272
        %v5115 = vpop.f32.mrf.mxu0
        %v5116 = vadd.f32 %v3687, %v5115
        %v5117 = vpop.f32.mrf.mxu0
        %v5118 = vpop.f32.mrf.mxu0
        %v5119 = vadd.f32 %v3687, %v5118
        %v5120 = vpop.f32.mrf.mxu0
        %5121 = vmatprep.mubr.bf16.mxu0 %v4282
        %5122 = vmatmul.mubr.bf16.gmra.mxu0 %v4281
        %v5123 = vpop.f32.mrf.mxu0
        %v5124 = vadd.f32 %v3687, %v5123
        %v5125 = vpop.f32.mrf.mxu0
        %v5126 = vpop.f32.mrf.mxu0
        %v5127 = vadd.f32 %v3687, %v5126
        %v5128 = vpop.f32.mrf.mxu0
        %5129 = vmatprep.mubr.bf16.mxu0 %v4291
        %5130 = vmatmul.mubr.bf16.gmra.mxu0 %v4290
        %v5131 = vpop.f32.mrf.mxu0
        %v5132 = vadd.f32 %v3687, %v5131
        %v5133 = vpop.f32.mrf.mxu0
        %v5134 = vpop.f32.mrf.mxu0
        %v5135 = vadd.f32 %v3687, %v5134
        %v5136 = vpop.f32.mrf.mxu0
        %5137 = vmatprep.mubr.bf16.mxu0 %v4300
        %5138 = vmatmul.mubr.bf16.gmra.mxu0 %v4299
        %v5139 = vpop.f32.mrf.mxu0
        %v5140 = vadd.f32 %v3687, %v5139
        %v5141 = vpop.f32.mrf.mxu0
        %v5142 = vpop.f32.mrf.mxu0
        %v5143 = vadd.f32 %v3687, %v5142
        %v5144 = vpop.f32.mrf.mxu0
        %5145 = vmatprep.mubr.bf16.mxu0 %v4309
        %5146 = vmatmul.mubr.bf16.gmra.mxu0 %v4308
        %v5147 = vpop.f32.mrf.mxu0
        %v5148 = vadd.f32 %v3687, %v5147
        %v5149 = vpop.f32.mrf.mxu0
        %v5150 = vpop.f32.mrf.mxu0
        %v5151 = vadd.f32 %v3687, %v5150
        %v5152 = vpop.f32.mrf.mxu0
        %5153 = vmatprep.mubr.bf16.mxu0 %v4318
        %5154 = vmatmul.mubr.bf16.gmra.mxu0 %v4317
        %v5155 = vpop.f32.mrf.mxu0
        %v5156 = vadd.f32 %v3687, %v5155
        %v5157 = vpop.f32.mrf.mxu0
        %v5158 = vpop.f32.mrf.mxu0
        %v5159 = vadd.f32 %v3687, %v5158
        %v5160 = vpop.f32.mrf.mxu0
        %5161 = vmatprep.mubr.bf16.mxu0 %v4327
        %5162 = vmatmul.mubr.bf16.gmra.mxu0 %v4326
        %v5163 = vpop.f32.mrf.mxu0
        %v5164 = vadd.f32 %v3687, %v5163
        %v5165 = vpop.f32.mrf.mxu0
        %v5166 = vpop.f32.mrf.mxu0
        %v5167 = vadd.f32 %v3687, %v5166
        %v5168 = vpop.f32.mrf.mxu0
        %5169 = vmatprep.mubr.bf16.mxu0 %v4336
        %5170 = vmatmul.mubr.bf16.gmra.mxu0 %v4335
        %v5171 = vpop.f32.mrf.mxu0
        %v5172 = vadd.f32 %v3687, %v5171
        %v5173 = vpop.f32.mrf.mxu0
        %v5174 = vpop.f32.mrf.mxu0
        %v5175 = vadd.f32 %v3687, %v5174
        %v5176 = vpop.f32.mrf.mxu0
        %5177 = vmatprep.mubr.bf16.mxu0 %v4345
        %5178 = vmatmul.mubr.bf16.gmra.mxu0 %v4344
        %v5179 = vpop.f32.mrf.mxu0
        %v5180 = vadd.f32 %v3687, %v5179
        %v5181 = vpop.f32.mrf.mxu0
        %v5182 = vpop.f32.mrf.mxu0
        %v5183 = vadd.f32 %v3687, %v5182
        %v5184 = vpop.f32.mrf.mxu0
        %5185 = vmatprep.mubr.bf16.mxu0 %v4354
        %5186 = vmatmul.mubr.bf16.gmra.mxu0 %v4353
        %v5187 = vpop.f32.mrf.mxu0
        %v5188 = vadd.f32 %v3687, %v5187
        %v5189 = vpop.f32.mrf.mxu0
        %v5190 = vpop.f32.mrf.mxu0
        %v5191 = vadd.f32 %v3687, %v5190
        %v5192 = vpop.f32.mrf.mxu0
        %5193 = vmatprep.mubr.bf16.mxu0 %v4363
        %5194 = vmatmul.mubr.bf16.gmra.mxu0 %v4362
        %v5195 = vpop.f32.mrf.mxu0
        %v5196 = vadd.f32 %v3687, %v5195
        %v5197 = vpop.f32.mrf.mxu0
        %v5198 = vpop.f32.mrf.mxu0
        %v5199 = vadd.f32 %v3687, %v5198
        %v5200 = vpop.f32.mrf.mxu0
        %5201 = vmatprep.mubr.bf16.mxu0 %v4372
        %5202 = vmatmul.mubr.bf16.gmra.mxu0 %v4371
        %v5203 = vpop.f32.mrf.mxu0
        %v5204 = vadd.f32 %v3687, %v5203
        %v5205 = vpop.f32.mrf.mxu0
        %v5206 = vpop.f32.mrf.mxu0
        %v5207 = vadd.f32 %v3687, %v5206
        %v5208 = vpop.f32.mrf.mxu0
        %5209 = vmatprep.mubr.bf16.mxu0 %v4381
        %5210 = vmatmul.mubr.bf16.gmra.mxu0 %v4380
        %v5211 = vpop.f32.mrf.mxu0
        %v5212 = vadd.f32 %v3687, %v5211
        %v5213 = vpop.f32.mrf.mxu0
        %v5214 = vpop.f32.mrf.mxu0
        %v5215 = vadd.f32 %v3687, %v5214
        %v5216 = vpop.f32.mrf.mxu0
        %5217 = vmatprep.mubr.bf16.mxu0 %v4390
        %5218 = vmatmul.mubr.bf16.gmra.mxu0 %v4389
        %v5219 = vpop.f32.mrf.mxu0
        %v5220 = vadd.f32 %v3687, %v5219
        %v5221 = vpop.f32.mrf.mxu0
        %v5222 = vpop.f32.mrf.mxu0
        %v5223 = vadd.f32 %v3687, %v5222
        %v5224 = vpop.f32.mrf.mxu0
        %5225 = vmatprep.mubr.bf16.mxu0 %v4399
        %5226 = vmatmul.mubr.bf16.gmra.mxu0 %v4398
        %v5227 = vpop.f32.mrf.mxu0
        %v5228 = vadd.f32 %v3687, %v5227
        %v5229 = vpop.f32.mrf.mxu0
        %v5230 = vpop.f32.mrf.mxu0
        %v5231 = vadd.f32 %v3687, %v5230
        %v5232 = vpop.f32.mrf.mxu0
        %5233 = vmatprep.mubr.bf16.mxu0 %v4408
        %5234 = vmatmul.mubr.bf16.gmra.mxu0 %v4407
        %v5235 = vpop.f32.mrf.mxu0
        %v5236 = vadd.f32 %v3687, %v5235
        %v5237 = vpop.f32.mrf.mxu0
        %v5238 = vpop.f32.mrf.mxu0
        %v5239 = vadd.f32 %v3687, %v5238
        %v5240 = vpop.f32.mrf.mxu0
        %5241 = vmatprep.mubr.bf16.mxu0 %v4417
        %5242 = vmatmul.mubr.bf16.gmra.mxu0 %v4416
        %v5243 = vpop.f32.mrf.mxu0
        %v5244 = vadd.f32 %v3687, %v5243
        %v5245 = vpop.f32.mrf.mxu0
        %v5246 = vpop.f32.mrf.mxu0
        %v5247 = vadd.f32 %v3687, %v5246
        %v5248 = vpop.f32.mrf.mxu0
        %5249 = vmatprep.mubr.bf16.mxu0 %v4426
        %5250 = vmatmul.mubr.bf16.gmra.mxu0 %v4425
        %v5251 = vpop.f32.mrf.mxu0
        %v5252 = vadd.f32 %v3687, %v5251
        %v5253 = vpop.f32.mrf.mxu0
        %v5254 = vpop.f32.mrf.mxu0
        %v5255 = vadd.f32 %v3687, %v5254
        %v5256 = vpop.f32.mrf.mxu0
        %5257 = vmatprep.mubr.bf16.mxu0 %v4435
        %5258 = vmatmul.mubr.bf16.gmra.mxu0 %v4434
        %v5259 = vpop.f32.mrf.mxu0
        %v5260 = vadd.f32 %v3687, %v5259
        %v5261 = vpop.f32.mrf.mxu0
        %v5262 = vpop.f32.mrf.mxu0
        %v5263 = vadd.f32 %v3687, %v5262
        %v5264 = vpop.f32.mrf.mxu0
        %5265 = vmatprep.mubr.bf16.mxu0 %v4444
        %5266 = vmatmul.mubr.bf16.gmra.mxu0 %v4443
        %v5267 = vpop.f32.mrf.mxu0
        %v5268 = vadd.f32 %v3687, %v5267
        %v5269 = vpop.f32.mrf.mxu0
        %v5270 = vpop.f32.mrf.mxu0
        %v5271 = vpop.f32.mrf.mxu0
        %5272 = vdwg.mxu0
        %5273 = vmatprep.subr.bf16.mxu0 0
        %5274 = vmatpush1.bf16.msra.mxu0 %v4952
        %5275 = vmatprep.subr.bf16.mxu0 0
        %5276 = vmatpush1.bf16.msra.mxu0 %v4951
        %5277 = vmatprep.subr.bf16.mxu0 0
        %5278 = vmatpush1.bf16.msra.mxu0 %v4950
        %5279 = vmatprep.subr.bf16.mxu0 0
        %5280 = vmatpush1.bf16.msra.mxu0 %v4949
        %5281 = vmatprep.subr.bf16.mxu0 0
        %5282 = vmatpush1.bf16.msra.mxu0 %v4948
        %5283 = vmatprep.subr.bf16.mxu0 0
        %5284 = vmatpush1.bf16.msra.mxu0 %v4947
        %5285 = vmatprep.subr.bf16.mxu0 0
        %5286 = vmatpush1.bf16.msra.mxu0 %v4946
        %5287 = vmatprep.subr.bf16.mxu0 0
        %5288 = vmatpush1.bf16.msra.mxu0 %v4945
        %5289 = vmatprep.subr.bf16.mxu0 0
        %5290 = vmatpush2.bf16.msra.mxu0 %v4960
        %5291 = vmatprep.subr.bf16.mxu0 0
        %5292 = vmatpush2.bf16.msra.mxu0 %v4959
        %5293 = vmatprep.subr.bf16.mxu0 0
        %5294 = vmatpush2.bf16.msra.mxu0 %v4958
        %5295 = vmatprep.subr.bf16.mxu0 0
        %5296 = vmatpush2.bf16.msra.mxu0 %v4957
        %5297 = vmatprep.subr.bf16.mxu0 0
        %5298 = vmatpush2.bf16.msra.mxu0 %v4956
        %5299 = vmatprep.subr.bf16.mxu0 0
        %5300 = vmatpush2.bf16.msra.mxu0 %v4955
        %5301 = vmatprep.subr.bf16.mxu0 0
        %5302 = vmatpush2.bf16.msra.mxu0 %v4954
        %5303 = vmatprep.subr.bf16.mxu0 0
        %5304 = vmatpush2.bf16.msra.mxu0 %v4953
        %5305 = vmatprep.mubr.bf16.mxu0 %v4266
        %5306 = vmatmul.mubr.bf16.gmra.mxu0 %v4265
        %v5307 = vpop.f32.mrf.mxu0
        %v5308 = vadd.f32 %v5108, %v5307
        %v5309 = vpop.f32.mrf.mxu0
        %v5310 = vpop.f32.mrf.mxu0
        %v5311 = vadd.f32 %v5111, %v5310
        %v5312 = vpop.f32.mrf.mxu0
        %5313 = vmatprep.mubr.bf16.mxu0 %v4275
        %5314 = vmatmul.mubr.bf16.gmra.mxu0 %v4274
        %v5315 = vpop.f32.mrf.mxu0
        %v5316 = vadd.f32 %v5116, %v5315
        %v5317 = vpop.f32.mrf.mxu0
        %v5318 = vpop.f32.mrf.mxu0
        %v5319 = vadd.f32 %v5119, %v5318
        %v5320 = vpop.f32.mrf.mxu0
        %5321 = vmatprep.mubr.bf16.mxu0 %v4284
        %5322 = vmatmul.mubr.bf16.gmra.mxu0 %v4283
        %v5323 = vpop.f32.mrf.mxu0
        %v5324 = vadd.f32 %v5124, %v5323
        %v5325 = vpop.f32.mrf.mxu0
        %v5326 = vpop.f32.mrf.mxu0
        %v5327 = vadd.f32 %v5127, %v5326
        %v5328 = vpop.f32.mrf.mxu0
        %5329 = vmatprep.mubr.bf16.mxu0 %v4293
        %5330 = vmatmul.mubr.bf16.gmra.mxu0 %v4292
        %v5331 = vpop.f32.mrf.mxu0
        %v5332 = vadd.f32 %v5132, %v5331
        %v5333 = vpop.f32.mrf.mxu0
        %v5334 = vpop.f32.mrf.mxu0
        %v5335 = vadd.f32 %v5135, %v5334
        %v5336 = vpop.f32.mrf.mxu0
        %5337 = vmatprep.mubr.bf16.mxu0 %v4302
        %5338 = vmatmul.mubr.bf16.gmra.mxu0 %v4301
        %v5339 = vpop.f32.mrf.mxu0
        %v5340 = vadd.f32 %v5140, %v5339
        %v5341 = vpop.f32.mrf.mxu0
        %v5342 = vpop.f32.mrf.mxu0
        %v5343 = vadd.f32 %v5143, %v5342
        %v5344 = vpop.f32.mrf.mxu0
        %5345 = vmatprep.mubr.bf16.mxu0 %v4311
        %5346 = vmatmul.mubr.bf16.gmra.mxu0 %v4310
        %v5347 = vpop.f32.mrf.mxu0
        %v5348 = vadd.f32 %v5148, %v5347
        %v5349 = vpop.f32.mrf.mxu0
        %v5350 = vpop.f32.mrf.mxu0
        %v5351 = vadd.f32 %v5151, %v5350
        %v5352 = vpop.f32.mrf.mxu0
        %5353 = vmatprep.mubr.bf16.mxu0 %v4320
        %5354 = vmatmul.mubr.bf16.gmra.mxu0 %v4319
        %v5355 = vpop.f32.mrf.mxu0
        %v5356 = vadd.f32 %v5156, %v5355
        %v5357 = vpop.f32.mrf.mxu0
        %v5358 = vpop.f32.mrf.mxu0
        %v5359 = vadd.f32 %v5159, %v5358
        %v5360 = vpop.f32.mrf.mxu0
        %5361 = vmatprep.mubr.bf16.mxu0 %v4329
        %5362 = vmatmul.mubr.bf16.gmra.mxu0 %v4328
        %v5363 = vpop.f32.mrf.mxu0
        %v5364 = vadd.f32 %v5164, %v5363
        %v5365 = vpop.f32.mrf.mxu0
        %v5366 = vpop.f32.mrf.mxu0
        %v5367 = vadd.f32 %v5167, %v5366
        %v5368 = vpop.f32.mrf.mxu0
        %5369 = vmatprep.mubr.bf16.mxu0 %v4338
        %5370 = vmatmul.mubr.bf16.gmra.mxu0 %v4337
        %v5371 = vpop.f32.mrf.mxu0
        %v5372 = vadd.f32 %v5172, %v5371
        %v5373 = vpop.f32.mrf.mxu0
        %v5374 = vpop.f32.mrf.mxu0
        %v5375 = vadd.f32 %v5175, %v5374
        %v5376 = vpop.f32.mrf.mxu0
        %5377 = vmatprep.mubr.bf16.mxu0 %v4347
        %5378 = vmatmul.mubr.bf16.gmra.mxu0 %v4346
        %v5379 = vpop.f32.mrf.mxu0
        %v5380 = vadd.f32 %v5180, %v5379
        %v5381 = vpop.f32.mrf.mxu0
        %v5382 = vpop.f32.mrf.mxu0
        %v5383 = vadd.f32 %v5183, %v5382
        %v5384 = vpop.f32.mrf.mxu0
        %5385 = vmatprep.mubr.bf16.mxu0 %v4356
        %5386 = vmatmul.mubr.bf16.gmra.mxu0 %v4355
        %v5387 = vpop.f32.mrf.mxu0
        %v5388 = vadd.f32 %v5188, %v5387
        %v5389 = vpop.f32.mrf.mxu0
        %v5390 = vpop.f32.mrf.mxu0
        %v5391 = vadd.f32 %v5191, %v5390
        %v5392 = vpop.f32.mrf.mxu0
        %5393 = vmatprep.mubr.bf16.mxu0 %v4365
        %5394 = vmatmul.mubr.bf16.gmra.mxu0 %v4364
        %v5395 = vpop.f32.mrf.mxu0
        %v5396 = vadd.f32 %v5196, %v5395
        %v5397 = vpop.f32.mrf.mxu0
        %v5398 = vpop.f32.mrf.mxu0
        %v5399 = vadd.f32 %v5199, %v5398
        %v5400 = vpop.f32.mrf.mxu0
        %5401 = vmatprep.mubr.bf16.mxu0 %v4374
        %5402 = vmatmul.mubr.bf16.gmra.mxu0 %v4373
        %v5403 = vpop.f32.mrf.mxu0
        %v5404 = vadd.f32 %v5204, %v5403
        %v5405 = vpop.f32.mrf.mxu0
        %v5406 = vpop.f32.mrf.mxu0
        %v5407 = vadd.f32 %v5207, %v5406
        %v5408 = vpop.f32.mrf.mxu0
        %5409 = vmatprep.mubr.bf16.mxu0 %v4383
        %5410 = vmatmul.mubr.bf16.gmra.mxu0 %v4382
        %v5411 = vpop.f32.mrf.mxu0
        %v5412 = vadd.f32 %v5212, %v5411
        %v5413 = vpop.f32.mrf.mxu0
        %v5414 = vpop.f32.mrf.mxu0
        %v5415 = vadd.f32 %v5215, %v5414
        %v5416 = vpop.f32.mrf.mxu0
        %5417 = vmatprep.mubr.bf16.mxu0 %v4392
        %5418 = vmatmul.mubr.bf16.gmra.mxu0 %v4391
        %v5419 = vpop.f32.mrf.mxu0
        %v5420 = vadd.f32 %v5220, %v5419
        %v5421 = vpop.f32.mrf.mxu0
        %v5422 = vpop.f32.mrf.mxu0
        %v5423 = vadd.f32 %v5223, %v5422
        %v5424 = vpop.f32.mrf.mxu0
        %5425 = vmatprep.mubr.bf16.mxu0 %v4401
        %5426 = vmatmul.mubr.bf16.gmra.mxu0 %v4400
        %v5427 = vpop.f32.mrf.mxu0
        %v5428 = vadd.f32 %v5228, %v5427
        %v5429 = vpop.f32.mrf.mxu0
        %v5430 = vpop.f32.mrf.mxu0
        %v5431 = vadd.f32 %v5231, %v5430
        %v5432 = vpop.f32.mrf.mxu0
        %5433 = vmatprep.mubr.bf16.mxu0 %v4410
        %5434 = vmatmul.mubr.bf16.gmra.mxu0 %v4409
        %v5435 = vpop.f32.mrf.mxu0
        %v5436 = vadd.f32 %v5236, %v5435
        %v5437 = vpop.f32.mrf.mxu0
        %v5438 = vpop.f32.mrf.mxu0
        %v5439 = vadd.f32 %v5239, %v5438
        %v5440 = vpop.f32.mrf.mxu0
        %5441 = vmatprep.mubr.bf16.mxu0 %v4419
        %5442 = vmatmul.mubr.bf16.gmra.mxu0 %v4418
        %v5443 = vpop.f32.mrf.mxu0
        %v5444 = vadd.f32 %v5244, %v5443
        %v5445 = vpop.f32.mrf.mxu0
        %v5446 = vpop.f32.mrf.mxu0
        %v5447 = vadd.f32 %v5247, %v5446
        %v5448 = vpop.f32.mrf.mxu0
        %5449 = vmatprep.mubr.bf16.mxu0 %v4428
        %5450 = vmatmul.mubr.bf16.gmra.mxu0 %v4427
        %v5451 = vpop.f32.mrf.mxu0
        %v5452 = vadd.f32 %v5252, %v5451
        %v5453 = vpop.f32.mrf.mxu0
        %v5454 = vpop.f32.mrf.mxu0
        %v5455 = vadd.f32 %v5255, %v5454
        %v5456 = vpop.f32.mrf.mxu0
        %5457 = vmatprep.mubr.bf16.mxu0 %v4437
        %5458 = vmatmul.mubr.bf16.gmra.mxu0 %v4436
        %v5459 = vpop.f32.mrf.mxu0
        %v5460 = vadd.f32 %v5260, %v5459
        %v5461 = vpop.f32.mrf.mxu0
        %v5462 = vpop.f32.mrf.mxu0
        %v5463 = vadd.f32 %v5263, %v5462
        %v5464 = vpop.f32.mrf.mxu0
        %5465 = vmatprep.mubr.bf16.mxu0 %v4446
        %5466 = vmatmul.mubr.bf16.gmra.mxu0 %v4445
        %v5467 = vpop.f32.mrf.mxu0
        %v5468 = vadd.f32 %v5268, %v5467
        %v5469 = vpop.f32.mrf.mxu0
        %v5470 = vpop.f32.mrf.mxu0
        %v5471 = vpop.f32.mrf.mxu0
        %5472 = vdwg.mxu0
        %5473 = vmatprep.subr.bf16.mxu0 0
        %5474 = vmatpush1.bf16.msra.mxu0 %v4968
        %5475 = vmatprep.subr.bf16.mxu0 0
        %5476 = vmatpush1.bf16.msra.mxu0 %v4967
        %5477 = vmatprep.subr.bf16.mxu0 0
        %5478 = vmatpush1.bf16.msra.mxu0 %v4966
        %5479 = vmatprep.subr.bf16.mxu0 0
        %5480 = vmatpush1.bf16.msra.mxu0 %v4965
        %5481 = vmatprep.subr.bf16.mxu0 0
        %5482 = vmatpush1.bf16.msra.mxu0 %v4964
        %5483 = vmatprep.subr.bf16.mxu0 0
        %5484 = vmatpush1.bf16.msra.mxu0 %v4963
        %5485 = vmatprep.subr.bf16.mxu0 0
        %5486 = vmatpush1.bf16.msra.mxu0 %v4962
        %5487 = vmatprep.subr.bf16.mxu0 0
        %5488 = vmatpush1.bf16.msra.mxu0 %v4961
        %5489 = vmatprep.subr.bf16.mxu0 0
        %5490 = vmatpush2.bf16.msra.mxu0 %v4976
        %5491 = vmatprep.subr.bf16.mxu0 0
        %5492 = vmatpush2.bf16.msra.mxu0 %v4975
        %5493 = vmatprep.subr.bf16.mxu0 0
        %5494 = vmatpush2.bf16.msra.mxu0 %v4974
        %5495 = vmatprep.subr.bf16.mxu0 0
        %5496 = vmatpush2.bf16.msra.mxu0 %v4973
        %5497 = vmatprep.subr.bf16.mxu0 0
        %5498 = vmatpush2.bf16.msra.mxu0 %v4972
        %5499 = vmatprep.subr.bf16.mxu0 0
        %5500 = vmatpush2.bf16.msra.mxu0 %v4971
        %5501 = vmatprep.subr.bf16.mxu0 0
        %5502 = vmatpush2.bf16.msra.mxu0 %v4970
        %5503 = vmatprep.subr.bf16.mxu0 0
        %5504 = vmatpush2.bf16.msra.mxu0 %v4969
        %5505 = vmatprep.mubr.bf16.mxu0 %v4268
        %5506 = vmatmul.mubr.bf16.gmra.mxu0 %v4267
        %v5507 = vpop.f32.mrf.mxu0
        %v5508 = vadd.f32 %v5308, %v5507
        %v5509 = vpop.f32.mrf.mxu0
        %v5510 = vpop.f32.mrf.mxu0
        %v5511 = vadd.f32 %v5311, %v5510
        %v5512 = vpop.f32.mrf.mxu0
        %5513 = vmatprep.mubr.bf16.mxu0 %v4277
        %5514 = vmatmul.mubr.bf16.gmra.mxu0 %v4276
        %v5515 = vpop.f32.mrf.mxu0
        %v5516 = vadd.f32 %v5316, %v5515
        %v5517 = vpop.f32.mrf.mxu0
        %v5518 = vpop.f32.mrf.mxu0
        %v5519 = vadd.f32 %v5319, %v5518
        %v5520 = vpop.f32.mrf.mxu0
        %5521 = vmatprep.mubr.bf16.mxu0 %v4286
        %5522 = vmatmul.mubr.bf16.gmra.mxu0 %v4285
        %v5523 = vpop.f32.mrf.mxu0
        %v5524 = vadd.f32 %v5324, %v5523
        %v5525 = vpop.f32.mrf.mxu0
        %v5526 = vpop.f32.mrf.mxu0
        %v5527 = vadd.f32 %v5327, %v5526
        %v5528 = vpop.f32.mrf.mxu0
        %5529 = vmatprep.mubr.bf16.mxu0 %v4295
        %5530 = vmatmul.mubr.bf16.gmra.mxu0 %v4294
        %v5531 = vpop.f32.mrf.mxu0
        %v5532 = vadd.f32 %v5332, %v5531
        %v5533 = vpop.f32.mrf.mxu0
        %v5534 = vpop.f32.mrf.mxu0
        %v5535 = vadd.f32 %v5335, %v5534
        %v5536 = vpop.f32.mrf.mxu0
        %5537 = vmatprep.mubr.bf16.mxu0 %v4304
        %5538 = vmatmul.mubr.bf16.gmra.mxu0 %v4303
        %v5539 = vpop.f32.mrf.mxu0
        %v5540 = vadd.f32 %v5340, %v5539
        %v5541 = vpop.f32.mrf.mxu0
        %v5542 = vpop.f32.mrf.mxu0
        %v5543 = vadd.f32 %v5343, %v5542
        %v5544 = vpop.f32.mrf.mxu0
        %5545 = vmatprep.mubr.bf16.mxu0 %v4313
        %5546 = vmatmul.mubr.bf16.gmra.mxu0 %v4312
        %v5547 = vpop.f32.mrf.mxu0
        %v5548 = vadd.f32 %v5348, %v5547
        %v5549 = vpop.f32.mrf.mxu0
        %v5550 = vpop.f32.mrf.mxu0
        %v5551 = vadd.f32 %v5351, %v5550
        %v5552 = vpop.f32.mrf.mxu0
        %5553 = vmatprep.mubr.bf16.mxu0 %v4322
        %5554 = vmatmul.mubr.bf16.gmra.mxu0 %v4321
        %v5555 = vpop.f32.mrf.mxu0
        %v5556 = vadd.f32 %v5356, %v5555
        %v5557 = vpop.f32.mrf.mxu0
        %v5558 = vpop.f32.mrf.mxu0
        %v5559 = vadd.f32 %v5359, %v5558
        %v5560 = vpop.f32.mrf.mxu0
        %5561 = vmatprep.mubr.bf16.mxu0 %v4331
        %5562 = vmatmul.mubr.bf16.gmra.mxu0 %v4330
        %v5563 = vpop.f32.mrf.mxu0
        %v5564 = vadd.f32 %v5364, %v5563
        %v5565 = vpop.f32.mrf.mxu0
        %v5566 = vpop.f32.mrf.mxu0
        %v5567 = vadd.f32 %v5367, %v5566
        %v5568 = vpop.f32.mrf.mxu0
        %5569 = vmatprep.mubr.bf16.mxu0 %v4340
        %5570 = vmatmul.mubr.bf16.gmra.mxu0 %v4339
        %v5571 = vpop.f32.mrf.mxu0
        %v5572 = vadd.f32 %v5372, %v5571
        %v5573 = vpop.f32.mrf.mxu0
        %v5574 = vpop.f32.mrf.mxu0
        %v5575 = vadd.f32 %v5375, %v5574
        %v5576 = vpop.f32.mrf.mxu0
        %5577 = vmatprep.mubr.bf16.mxu0 %v4349
        %5578 = vmatmul.mubr.bf16.gmra.mxu0 %v4348
        %v5579 = vpop.f32.mrf.mxu0
        %v5580 = vadd.f32 %v5380, %v5579
        %v5581 = vpop.f32.mrf.mxu0
        %v5582 = vpop.f32.mrf.mxu0
        %v5583 = vadd.f32 %v5383, %v5582
        %v5584 = vpop.f32.mrf.mxu0
        %5585 = vmatprep.mubr.bf16.mxu0 %v4358
        %5586 = vmatmul.mubr.bf16.gmra.mxu0 %v4357
        %v5587 = vpop.f32.mrf.mxu0
        %v5588 = vadd.f32 %v5388, %v5587
        %v5589 = vpop.f32.mrf.mxu0
        %v5590 = vpop.f32.mrf.mxu0
        %v5591 = vadd.f32 %v5391, %v5590
        %v5592 = vpop.f32.mrf.mxu0
        %5593 = vmatprep.mubr.bf16.mxu0 %v4367
        %5594 = vmatmul.mubr.bf16.gmra.mxu0 %v4366
        %v5595 = vpop.f32.mrf.mxu0
        %v5596 = vadd.f32 %v5396, %v5595
        %v5597 = vpop.f32.mrf.mxu0
        %v5598 = vpop.f32.mrf.mxu0
        %v5599 = vadd.f32 %v5399, %v5598
        %v5600 = vpop.f32.mrf.mxu0
        %5601 = vmatprep.mubr.bf16.mxu0 %v4376
        %5602 = vmatmul.mubr.bf16.gmra.mxu0 %v4375
        %v5603 = vpop.f32.mrf.mxu0
        %v5604 = vadd.f32 %v5404, %v5603
        %v5605 = vpop.f32.mrf.mxu0
        %v5606 = vpop.f32.mrf.mxu0
        %v5607 = vadd.f32 %v5407, %v5606
        %v5608 = vpop.f32.mrf.mxu0
        %5609 = vmatprep.mubr.bf16.mxu0 %v4385
        %5610 = vmatmul.mubr.bf16.gmra.mxu0 %v4384
        %v5611 = vpop.f32.mrf.mxu0
        %v5612 = vadd.f32 %v5412, %v5611
        %v5613 = vpop.f32.mrf.mxu0
        %v5614 = vpop.f32.mrf.mxu0
        %v5615 = vadd.f32 %v5415, %v5614
        %v5616 = vpop.f32.mrf.mxu0
        %5617 = vmatprep.mubr.bf16.mxu0 %v4394
        %5618 = vmatmul.mubr.bf16.gmra.mxu0 %v4393
        %v5619 = vpop.f32.mrf.mxu0
        %v5620 = vadd.f32 %v5420, %v5619
        %v5621 = vpop.f32.mrf.mxu0
        %v5622 = vpop.f32.mrf.mxu0
        %v5623 = vadd.f32 %v5423, %v5622
        %v5624 = vpop.f32.mrf.mxu0
        %5625 = vmatprep.mubr.bf16.mxu0 %v4403
        %5626 = vmatmul.mubr.bf16.gmra.mxu0 %v4402
        %v5627 = vpop.f32.mrf.mxu0
        %v5628 = vadd.f32 %v5428, %v5627
        %v5629 = vpop.f32.mrf.mxu0
        %v5630 = vpop.f32.mrf.mxu0
        %v5631 = vadd.f32 %v5431, %v5630
        %v5632 = vpop.f32.mrf.mxu0
        %5633 = vmatprep.mubr.bf16.mxu0 %v4412
        %5634 = vmatmul.mubr.bf16.gmra.mxu0 %v4411
        %v5635 = vpop.f32.mrf.mxu0
        %v5636 = vadd.f32 %v5436, %v5635
        %v5637 = vpop.f32.mrf.mxu0
        %v5638 = vpop.f32.mrf.mxu0
        %v5639 = vadd.f32 %v5439, %v5638
        %v5640 = vpop.f32.mrf.mxu0
        %5641 = vmatprep.mubr.bf16.mxu0 %v4421
        %5642 = vmatmul.mubr.bf16.gmra.mxu0 %v4420
        %v5643 = vpop.f32.mrf.mxu0
        %v5644 = vadd.f32 %v5444, %v5643
        %v5645 = vpop.f32.mrf.mxu0
        %v5646 = vpop.f32.mrf.mxu0
        %v5647 = vadd.f32 %v5447, %v5646
        %v5648 = vpop.f32.mrf.mxu0
        %5649 = vmatprep.mubr.bf16.mxu0 %v4430
        %5650 = vmatmul.mubr.bf16.gmra.mxu0 %v4429
        %v5651 = vpop.f32.mrf.mxu0
        %v5652 = vadd.f32 %v5452, %v5651
        %v5653 = vpop.f32.mrf.mxu0
        %v5654 = vpop.f32.mrf.mxu0
        %v5655 = vadd.f32 %v5455, %v5654
        %v5656 = vpop.f32.mrf.mxu0
        %5657 = vmatprep.mubr.bf16.mxu0 %v4439
        %5658 = vmatmul.mubr.bf16.gmra.mxu0 %v4438
        %v5659 = vpop.f32.mrf.mxu0
        %v5660 = vadd.f32 %v5460, %v5659
        %v5661 = vpop.f32.mrf.mxu0
        %v5662 = vpop.f32.mrf.mxu0
        %v5663 = vadd.f32 %v5463, %v5662
        %v5664 = vpop.f32.mrf.mxu0
        %5665 = vmatprep.mubr.bf16.mxu0 %v4448
        %5666 = vmatmul.mubr.bf16.gmra.mxu0 %v4447
        %v5667 = vpop.f32.mrf.mxu0
        %v5668 = vadd.f32 %v5468, %v5667
        %v5669 = vpop.f32.mrf.mxu0
        %v5670 = vpop.f32.mrf.mxu0
        %v5671 = vpop.f32.mrf.mxu0
        %5672 = vdwg.mxu0
        %5673 = vmatprep.subr.bf16.mxu0 0
        %5674 = vmatpush1.bf16.msra.mxu0 %v4984
        %5675 = vmatprep.subr.bf16.mxu0 0
        %5676 = vmatpush1.bf16.msra.mxu0 %v4983
        %5677 = vmatprep.subr.bf16.mxu0 0
        %5678 = vmatpush1.bf16.msra.mxu0 %v4982
        %5679 = vmatprep.subr.bf16.mxu0 0
        %5680 = vmatpush1.bf16.msra.mxu0 %v4981
        %5681 = vmatprep.subr.bf16.mxu0 0
        %5682 = vmatpush1.bf16.msra.mxu0 %v4980
        %5683 = vmatprep.subr.bf16.mxu0 0
        %5684 = vmatpush1.bf16.msra.mxu0 %v4979
        %5685 = vmatprep.subr.bf16.mxu0 0
        %5686 = vmatpush1.bf16.msra.mxu0 %v4978
        %5687 = vmatprep.subr.bf16.mxu0 0
        %5688 = vmatpush1.bf16.msra.mxu0 %v4977
        %5689 = vmatprep.subr.bf16.mxu0 0
        %5690 = vmatpush2.bf16.msra.mxu0 %v4992
        %5691 = vmatprep.subr.bf16.mxu0 0
        %5692 = vmatpush2.bf16.msra.mxu0 %v4991
        %5693 = vmatprep.subr.bf16.mxu0 0
        %5694 = vmatpush2.bf16.msra.mxu0 %v4990
        %5695 = vmatprep.subr.bf16.mxu0 0
        %5696 = vmatpush2.bf16.msra.mxu0 %v4989
        %5697 = vmatprep.subr.bf16.mxu0 0
        %5698 = vmatpush2.bf16.msra.mxu0 %v4988
        %5699 = vmatprep.subr.bf16.mxu0 0
        %5700 = vmatpush2.bf16.msra.mxu0 %v4987
        %5701 = vmatprep.subr.bf16.mxu0 0
        %5702 = vmatpush2.bf16.msra.mxu0 %v4986
        %5703 = vmatprep.subr.bf16.mxu0 0
        %5704 = vmatpush2.bf16.msra.mxu0 %v4985
        %5705 = vmatprep.mubr.bf16.mxu0 %v4270
        %5706 = vmatmul.mubr.bf16.gmra.mxu0 %v4269
        %v5707 = vpop.f32.mrf.mxu0
        %v5708 = vadd.f32 %v5508, %v5707
        %v5709 = vpop.f32.mrf.mxu0
        %v5710 = vpop.f32.mrf.mxu0
        %v5711 = vadd.f32 %v5511, %v5710
        %v5712 = vpop.f32.mrf.mxu0
        %5713 = vmatprep.mubr.bf16.mxu0 %v4279
        %5714 = vmatmul.mubr.bf16.gmra.mxu0 %v4278
        %v5715 = vpop.f32.mrf.mxu0
        %v5716 = vadd.f32 %v5516, %v5715
        %v5717 = vpop.f32.mrf.mxu0
        %v5718 = vpop.f32.mrf.mxu0
        %v5719 = vadd.f32 %v5519, %v5718
        %v5720 = vpop.f32.mrf.mxu0
        %5721 = vmatprep.mubr.bf16.mxu0 %v4288
        %5722 = vmatmul.mubr.bf16.gmra.mxu0 %v4287
        %v5723 = vpop.f32.mrf.mxu0
        %v5724 = vadd.f32 %v5524, %v5723
        %v5725 = vpop.f32.mrf.mxu0
        %v5726 = vpop.f32.mrf.mxu0
        %v5727 = vadd.f32 %v5527, %v5726
        %v5728 = vpop.f32.mrf.mxu0
        %5729 = vmatprep.mubr.bf16.mxu0 %v4297
        %5730 = vmatmul.mubr.bf16.gmra.mxu0 %v4296
        %v5731 = vpop.f32.mrf.mxu0
        %v5732 = vadd.f32 %v5532, %v5731
        %v5733 = vpop.f32.mrf.mxu0
        %v5734 = vpop.f32.mrf.mxu0
        %v5735 = vadd.f32 %v5535, %v5734
        %v5736 = vpop.f32.mrf.mxu0
        %5737 = vmatprep.mubr.bf16.mxu0 %v4306
        %5738 = vmatmul.mubr.bf16.gmra.mxu0 %v4305
        %v5739 = vpop.f32.mrf.mxu0
        %v5740 = vadd.f32 %v5540, %v5739
        %v5741 = vpop.f32.mrf.mxu0
        %v5742 = vpop.f32.mrf.mxu0
        %v5743 = vadd.f32 %v5543, %v5742
        %v5744 = vpop.f32.mrf.mxu0
        %5745 = vmatprep.mubr.bf16.mxu0 %v4315
        %5746 = vmatmul.mubr.bf16.gmra.mxu0 %v4314
        %v5747 = vpop.f32.mrf.mxu0
        %v5748 = vadd.f32 %v5548, %v5747
        %v5749 = vpop.f32.mrf.mxu0
        %v5750 = vpop.f32.mrf.mxu0
        %v5751 = vadd.f32 %v5551, %v5750
        %v5752 = vpop.f32.mrf.mxu0
        %5753 = vmatprep.mubr.bf16.mxu0 %v4324
        %5754 = vmatmul.mubr.bf16.gmra.mxu0 %v4323
        %v5755 = vpop.f32.mrf.mxu0
        %v5756 = vadd.f32 %v5556, %v5755
        %v5757 = vpop.f32.mrf.mxu0
        %v5758 = vpop.f32.mrf.mxu0
        %v5759 = vadd.f32 %v5559, %v5758
        %v5760 = vpop.f32.mrf.mxu0
        %5761 = vmatprep.mubr.bf16.mxu0 %v4333
        %5762 = vmatmul.mubr.bf16.gmra.mxu0 %v4332
        %v5763 = vpop.f32.mrf.mxu0
        %v5764 = vadd.f32 %v5564, %v5763
        %v5765 = vpop.f32.mrf.mxu0
        %v5766 = vpop.f32.mrf.mxu0
        %v5767 = vadd.f32 %v5567, %v5766
        %v5768 = vpop.f32.mrf.mxu0
        %5769 = vmatprep.mubr.bf16.mxu0 %v4342
        %5770 = vmatmul.mubr.bf16.gmra.mxu0 %v4341
        %v5771 = vpop.f32.mrf.mxu0
        %v5772 = vadd.f32 %v5572, %v5771
        %v5773 = vpop.f32.mrf.mxu0
        %v5774 = vpop.f32.mrf.mxu0
        %v5775 = vadd.f32 %v5575, %v5774
        %v5776 = vpop.f32.mrf.mxu0
        %5777 = vmatprep.mubr.bf16.mxu0 %v4351
        %5778 = vmatmul.mubr.bf16.gmra.mxu0 %v4350
        %v5779 = vpop.f32.mrf.mxu0
        %v5780 = vadd.f32 %v5580, %v5779
        %v5781 = vpop.f32.mrf.mxu0
        %v5782 = vpop.f32.mrf.mxu0
        %v5783 = vadd.f32 %v5583, %v5782
        %v5784 = vpop.f32.mrf.mxu0
        %5785 = vmatprep.mubr.bf16.mxu0 %v4360
        %5786 = vmatmul.mubr.bf16.gmra.mxu0 %v4359
        %v5787 = vpop.f32.mrf.mxu0
        %v5788 = vadd.f32 %v5588, %v5787
        %v5789 = vpop.f32.mrf.mxu0
        %v5790 = vpop.f32.mrf.mxu0
        %v5791 = vadd.f32 %v5591, %v5790
        %v5792 = vpop.f32.mrf.mxu0
        %5793 = vmatprep.mubr.bf16.mxu0 %v4369
        %5794 = vmatmul.mubr.bf16.gmra.mxu0 %v4368
        %v5795 = vpop.f32.mrf.mxu0
        %v5796 = vadd.f32 %v5596, %v5795
        %v5797 = vpop.f32.mrf.mxu0
        %v5798 = vpop.f32.mrf.mxu0
        %v5799 = vadd.f32 %v5599, %v5798
        %v5800 = vpop.f32.mrf.mxu0
        %5801 = vmatprep.mubr.bf16.mxu0 %v4378
        %5802 = vmatmul.mubr.bf16.gmra.mxu0 %v4377
        %v5803 = vpop.f32.mrf.mxu0
        %v5804 = vadd.f32 %v5604, %v5803
        %v5805 = vpop.f32.mrf.mxu0
        %v5806 = vpop.f32.mrf.mxu0
        %v5807 = vadd.f32 %v5607, %v5806
        %v5808 = vpop.f32.mrf.mxu0
        %5809 = vmatprep.mubr.bf16.mxu0 %v4387
        %5810 = vmatmul.mubr.bf16.gmra.mxu0 %v4386
        %v5811 = vpop.f32.mrf.mxu0
        %v5812 = vadd.f32 %v5612, %v5811
        %v5813 = vpop.f32.mrf.mxu0
        %v5814 = vpop.f32.mrf.mxu0
        %v5815 = vadd.f32 %v5615, %v5814
        %v5816 = vpop.f32.mrf.mxu0
        %5817 = vmatprep.mubr.bf16.mxu0 %v4396
        %5818 = vmatmul.mubr.bf16.gmra.mxu0 %v4395
        %v5819 = vpop.f32.mrf.mxu0
        %v5820 = vadd.f32 %v5620, %v5819
        %v5821 = vpop.f32.mrf.mxu0
        %v5822 = vpop.f32.mrf.mxu0
        %v5823 = vadd.f32 %v5623, %v5822
        %v5824 = vpop.f32.mrf.mxu0
        %5825 = vmatprep.mubr.bf16.mxu0 %v4405
        %5826 = vmatmul.mubr.bf16.gmra.mxu0 %v4404
        %v5827 = vpop.f32.mrf.mxu0
        %v5828 = vadd.f32 %v5628, %v5827
        %v5829 = vpop.f32.mrf.mxu0
        %v5830 = vpop.f32.mrf.mxu0
        %v5831 = vadd.f32 %v5631, %v5830
        %v5832 = vpop.f32.mrf.mxu0
        %5833 = vmatprep.mubr.bf16.mxu0 %v4414
        %5834 = vmatmul.mubr.bf16.gmra.mxu0 %v4413
        %v5835 = vpop.f32.mrf.mxu0
        %v5836 = vadd.f32 %v5636, %v5835
        %v5837 = vpop.f32.mrf.mxu0
        %v5838 = vpop.f32.mrf.mxu0
        %v5839 = vadd.f32 %v5639, %v5838
        %v5840 = vpop.f32.mrf.mxu0
        %5841 = vmatprep.mubr.bf16.mxu0 %v4423
        %5842 = vmatmul.mubr.bf16.gmra.mxu0 %v4422
        %v5843 = vpop.f32.mrf.mxu0
        %v5844 = vadd.f32 %v5644, %v5843
        %v5845 = vpop.f32.mrf.mxu0
        %v5846 = vpop.f32.mrf.mxu0
        %v5847 = vadd.f32 %v5647, %v5846
        %v5848 = vpop.f32.mrf.mxu0
        %5849 = vmatprep.mubr.bf16.mxu0 %v4432
        %5850 = vmatmul.mubr.bf16.gmra.mxu0 %v4431
        %v5851 = vpop.f32.mrf.mxu0
        %v5852 = vadd.f32 %v5652, %v5851
        %v5853 = vpop.f32.mrf.mxu0
        %v5854 = vpop.f32.mrf.mxu0
        %v5855 = vadd.f32 %v5655, %v5854
        %v5856 = vpop.f32.mrf.mxu0
        %5857 = vmatprep.mubr.bf16.mxu0 %v4441
        %5858 = vmatmul.mubr.bf16.gmra.mxu0 %v4440
        %v5859 = vpop.f32.mrf.mxu0
        %v5860 = vadd.f32 %v5660, %v5859
        %v5861 = vpop.f32.mrf.mxu0
        %v5862 = vpop.f32.mrf.mxu0
        %v5863 = vadd.f32 %v5663, %v5862
        %v5864 = vpop.f32.mrf.mxu0
        %5865 = vmatprep.mubr.bf16.mxu0 %v4450
        %5866 = vmatmul.mubr.bf16.gmra.mxu0 %v4449
        %v5867 = vpop.f32.mrf.mxu0
        %v5868 = vadd.f32 %v5668, %v5867
        %v5869 = vpop.f32.mrf.mxu0
        %v5870 = vpop.f32.mrf.mxu0
        %v5871 = vpop.f32.mrf.mxu0
        %5872 = vdwg.mxu0
        %5873 = vmatprep.subr.bf16.mxu0 0
        %5874 = vmatpush1.bf16.msra.mxu0 %v5000
        %5875 = vmatprep.subr.bf16.mxu0 0
        %5876 = vmatpush1.bf16.msra.mxu0 %v4999
        %5877 = vmatprep.subr.bf16.mxu0 0
        %5878 = vmatpush1.bf16.msra.mxu0 %v4998
        %5879 = vmatprep.subr.bf16.mxu0 0
        %5880 = vmatpush1.bf16.msra.mxu0 %v4997
        %5881 = vmatprep.subr.bf16.mxu0 0
        %5882 = vmatpush1.bf16.msra.mxu0 %v4996
        %5883 = vmatprep.subr.bf16.mxu0 0
        %5884 = vmatpush1.bf16.msra.mxu0 %v4995
        %5885 = vmatprep.subr.bf16.mxu0 0
        %5886 = vmatpush1.bf16.msra.mxu0 %v4994
        %5887 = vmatprep.subr.bf16.mxu0 0
        %5888 = vmatpush1.bf16.msra.mxu0 %v4993
        %5889 = vmatprep.subr.bf16.mxu0 0
        %5890 = vmatpush2.bf16.msra.mxu0 0
        %5891 = vmatprep.subr.bf16.mxu0 0
        %5892 = vmatpush2.bf16.msra.mxu0 0
        %5893 = vmatprep.subr.bf16.mxu0 0
        %5894 = vmatpush2.bf16.msra.mxu0 0
        %5895 = vmatprep.subr.bf16.mxu0 0
        %5896 = vmatpush2.bf16.msra.mxu0 0
        %5897 = vmatprep.subr.bf16.mxu0 0
        %5898 = vmatpush2.bf16.msra.mxu0 0
        %5899 = vmatprep.subr.bf16.mxu0 0
        %5900 = vmatpush2.bf16.msra.mxu0 0
        %5901 = vmatprep.subr.bf16.mxu0 0
        %5902 = vmatpush2.bf16.msra.mxu0 0
        %5903 = vmatprep.subr.bf16.mxu0 0
        %5904 = vmatpush2.bf16.msra.mxu0 0
        %5905 = vmatprep.mubr.bf16.mxu0 0
        %5906 = vmatmul.mubr.bf16.gmra.mxu0 %v4271
        %v5907 = vpop.f32.mrf.mxu0
        %v5908 = vadd.f32 %v5708, %v5907
        %v5909 = vpop.f32.mrf.mxu0
        %v5910 = vpop.f32.mrf.mxu0
        %v5911 = vadd.f32 %v5711, %v5910
        %v5912 = vpop.f32.mrf.mxu0
        %5913 = vmatprep.mubr.bf16.mxu0 0
        %5914 = vmatmul.mubr.bf16.gmra.mxu0 %v4280
        %v5915 = vpop.f32.mrf.mxu0
        %v5916 = vadd.f32 %v5716, %v5915
        %v5917 = vpop.f32.mrf.mxu0
        %v5918 = vpop.f32.mrf.mxu0
        %v5919 = vadd.f32 %v5719, %v5918
        %v5920 = vpop.f32.mrf.mxu0
        %5921 = vmatprep.mubr.bf16.mxu0 0
        %5922 = vmatmul.mubr.bf16.gmra.mxu0 %v4289
        %v5923 = vpop.f32.mrf.mxu0
        %v5924 = vadd.f32 %v5724, %v5923
        %v5925 = vpop.f32.mrf.mxu0
        %v5926 = vpop.f32.mrf.mxu0
        %v5927 = vadd.f32 %v5727, %v5926
        %v5928 = vpop.f32.mrf.mxu0
        %5929 = vmatprep.mubr.bf16.mxu0 0
        %5930 = vmatmul.mubr.bf16.gmra.mxu0 %v4298
        %v5931 = vpop.f32.mrf.mxu0
        %v5932 = vadd.f32 %v5732, %v5931
        %v5933 = vpop.f32.mrf.mxu0
        %v5934 = vpop.f32.mrf.mxu0
        %v5935 = vadd.f32 %v5735, %v5934
        %v5936 = vpop.f32.mrf.mxu0
        %5937 = vmatprep.mubr.bf16.mxu0 0
        %5938 = vmatmul.mubr.bf16.gmra.mxu0 %v4307
        %v5939 = vpop.f32.mrf.mxu0
        %v5940 = vadd.f32 %v5740, %v5939
        %v5941 = vpop.f32.mrf.mxu0
        %v5942 = vpop.f32.mrf.mxu0
        %v5943 = vadd.f32 %v5743, %v5942
        %v5944 = vpop.f32.mrf.mxu0
        %5945 = vmatprep.mubr.bf16.mxu0 0
        %5946 = vmatmul.mubr.bf16.gmra.mxu0 %v4316
        %v5947 = vpop.f32.mrf.mxu0
        %v5948 = vadd.f32 %v5748, %v5947
        %v5949 = vpop.f32.mrf.mxu0
        %v5950 = vpop.f32.mrf.mxu0
        %v5951 = vadd.f32 %v5751, %v5950
        %v5952 = vpop.f32.mrf.mxu0
        %5953 = vmatprep.mubr.bf16.mxu0 0
        %5954 = vmatmul.mubr.bf16.gmra.mxu0 %v4325
        %v5955 = vpop.f32.mrf.mxu0
        %v5956 = vadd.f32 %v5756, %v5955
        %v5957 = vpop.f32.mrf.mxu0
        %v5958 = vpop.f32.mrf.mxu0
        %v5959 = vadd.f32 %v5759, %v5958
        %v5960 = vpop.f32.mrf.mxu0
        %5961 = vmatprep.mubr.bf16.mxu0 0
        %5962 = vmatmul.mubr.bf16.gmra.mxu0 %v4334
        %v5963 = vpop.f32.mrf.mxu0
        %v5964 = vadd.f32 %v5764, %v5963
        %v5965 = vpop.f32.mrf.mxu0
        %v5966 = vpop.f32.mrf.mxu0
        %v5967 = vadd.f32 %v5767, %v5966
        %v5968 = vpop.f32.mrf.mxu0
        %5969 = vmatprep.mubr.bf16.mxu0 0
        %5970 = vmatmul.mubr.bf16.gmra.mxu0 %v4343
        %v5971 = vpop.f32.mrf.mxu0
        %v5972 = vadd.f32 %v5772, %v5971
        %v5973 = vpop.f32.mrf.mxu0
        %v5974 = vpop.f32.mrf.mxu0
        %v5975 = vadd.f32 %v5775, %v5974
        %v5976 = vpop.f32.mrf.mxu0
        %5977 = vmatprep.mubr.bf16.mxu0 0
        %5978 = vmatmul.mubr.bf16.gmra.mxu0 %v4352
        %v5979 = vpop.f32.mrf.mxu0
        %v5980 = vadd.f32 %v5780, %v5979
        %v5981 = vpop.f32.mrf.mxu0
        %v5982 = vpop.f32.mrf.mxu0
        %v5983 = vadd.f32 %v5783, %v5982
        %v5984 = vpop.f32.mrf.mxu0
        %5985 = vmatprep.mubr.bf16.mxu0 0
        %5986 = vmatmul.mubr.bf16.gmra.mxu0 %v4361
        %v5987 = vpop.f32.mrf.mxu0
        %v5988 = vadd.f32 %v5788, %v5987
        %v5989 = vpop.f32.mrf.mxu0
        %v5990 = vpop.f32.mrf.mxu0
        %v5991 = vadd.f32 %v5791, %v5990
        %v5992 = vpop.f32.mrf.mxu0
        %5993 = vmatprep.mubr.bf16.mxu0 0
        %5994 = vmatmul.mubr.bf16.gmra.mxu0 %v4370
        %v5995 = vpop.f32.mrf.mxu0
        %v5996 = vadd.f32 %v5796, %v5995
        %v5997 = vpop.f32.mrf.mxu0
        %v5998 = vpop.f32.mrf.mxu0
        %v5999 = vadd.f32 %v5799, %v5998
        %v6000 = vpop.f32.mrf.mxu0
        %6001 = vmatprep.mubr.bf16.mxu0 0
        %6002 = vmatmul.mubr.bf16.gmra.mxu0 %v4379
        %v6003 = vpop.f32.mrf.mxu0
        %v6004 = vadd.f32 %v5804, %v6003
        %v6005 = vpop.f32.mrf.mxu0
        %v6006 = vpop.f32.mrf.mxu0
        %v6007 = vadd.f32 %v5807, %v6006
        %v6008 = vpop.f32.mrf.mxu0
        %6009 = vmatprep.mubr.bf16.mxu0 0
        %6010 = vmatmul.mubr.bf16.gmra.mxu0 %v4388
        %v6011 = vpop.f32.mrf.mxu0
        %v6012 = vadd.f32 %v5812, %v6011
        %v6013 = vpop.f32.mrf.mxu0
        %v6014 = vpop.f32.mrf.mxu0
        %v6015 = vadd.f32 %v5815, %v6014
        %v6016 = vpop.f32.mrf.mxu0
        %6017 = vmatprep.mubr.bf16.mxu0 0
        %6018 = vmatmul.mubr.bf16.gmra.mxu0 %v4397
        %v6019 = vpop.f32.mrf.mxu0
        %v6020 = vadd.f32 %v5820, %v6019
        %v6021 = vpop.f32.mrf.mxu0
        %v6022 = vpop.f32.mrf.mxu0
        %v6023 = vadd.f32 %v5823, %v6022
        %v6024 = vpop.f32.mrf.mxu0
        %6025 = vmatprep.mubr.bf16.mxu0 0
        %6026 = vmatmul.mubr.bf16.gmra.mxu0 %v4406
        %v6027 = vpop.f32.mrf.mxu0
        %v6028 = vadd.f32 %v5828, %v6027
        %v6029 = vpop.f32.mrf.mxu0
        %v6030 = vpop.f32.mrf.mxu0
        %v6031 = vadd.f32 %v5831, %v6030
        %v6032 = vpop.f32.mrf.mxu0
        %6033 = vmatprep.mubr.bf16.mxu0 0
        %6034 = vmatmul.mubr.bf16.gmra.mxu0 %v4415
        %v6035 = vpop.f32.mrf.mxu0
        %v6036 = vadd.f32 %v5836, %v6035
        %v6037 = vpop.f32.mrf.mxu0
        %v6038 = vpop.f32.mrf.mxu0
        %v6039 = vadd.f32 %v5839, %v6038
        %v6040 = vpop.f32.mrf.mxu0
        %6041 = vmatprep.mubr.bf16.mxu0 0
        %6042 = vmatmul.mubr.bf16.gmra.mxu0 %v4424
        %v6043 = vpop.f32.mrf.mxu0
        %v6044 = vadd.f32 %v5844, %v6043
        %v6045 = vpop.f32.mrf.mxu0
        %v6046 = vpop.f32.mrf.mxu0
        %v6047 = vadd.f32 %v5847, %v6046
        %v6048 = vpop.f32.mrf.mxu0
        %6049 = vmatprep.mubr.bf16.mxu0 0
        %6050 = vmatmul.mubr.bf16.gmra.mxu0 %v4433
        %v6051 = vpop.f32.mrf.mxu0
        %v6052 = vadd.f32 %v5852, %v6051
        %v6053 = vpop.f32.mrf.mxu0
        %v6054 = vpop.f32.mrf.mxu0
        %v6055 = vadd.f32 %v5855, %v6054
        %v6056 = vpop.f32.mrf.mxu0
        %6057 = vmatprep.mubr.bf16.mxu0 0
        %6058 = vmatmul.mubr.bf16.gmra.mxu0 %v4442
        %v6059 = vpop.f32.mrf.mxu0
        %v6060 = vadd.f32 %v5860, %v6059
        %v6061 = vpop.f32.mrf.mxu0
        %v6062 = vpop.f32.mrf.mxu0
        %v6063 = vadd.f32 %v5863, %v6062
        %v6064 = vpop.f32.mrf.mxu0
        %6065 = vmatprep.mubr.bf16.mxu0 0
        %6066 = vmatmul.mubr.bf16.gmra.mxu0 %v4451
        %v6067 = vpop.f32.mrf.mxu0
        %v6068 = vadd.f32 %v5868, %v6067
        %v6069 = vpop.f32.mrf.mxu0
        %v6070 = vpop.f32.mrf.mxu0
        %v6071 = vpop.f32.mrf.mxu0
        %6072 = vdwg.mxu0
        %v6073 = vmax.f32 %v5908, 0.0
        %v6074 = vmax.f32 %v5911, 0.0
        %v6075 = vmax.f32 %v5916, 0.0
        %v6076 = vmax.f32 %v5919, 0.0
        %v6077 = vmax.f32 %v5924, 0.0
        %v6078 = vmax.f32 %v5927, 0.0
        %v6079 = vmax.f32 %v5932, 0.0
        %v6080 = vmax.f32 %v5935, 0.0
        %v6081 = vmax.f32 %v5940, 0.0
        %v6082 = vmax.f32 %v5943, 0.0
        %v6083 = vmax.f32 %v5948, 0.0
        %v6084 = vmax.f32 %v5951, 0.0
        %v6085 = vmax.f32 %v5956, 0.0
        %v6086 = vmax.f32 %v5959, 0.0
        %v6087 = vmax.f32 %v5964, 0.0
        %v6088 = vmax.f32 %v5967, 0.0
        %v6089 = vmax.f32 %v5972, 0.0
        %v6090 = vmax.f32 %v5975, 0.0
        %v6091 = vmax.f32 %v5980, 0.0
        %v6092 = vmax.f32 %v5983, 0.0
        %v6093 = vmax.f32 %v5988, 0.0
        %v6094 = vmax.f32 %v5991, 0.0
        %v6095 = vmax.f32 %v5996, 0.0
        %v6096 = vmax.f32 %v5999, 0.0
        %v6097 = vmax.f32 %v6004, 0.0
        %v6098 = vmax.f32 %v6007, 0.0
        %v6099 = vmax.f32 %v6012, 0.0
        %v6100 = vmax.f32 %v6015, 0.0
        %v6101 = vmax.f32 %v6020, 0.0
        %v6102 = vmax.f32 %v6023, 0.0
        %v6103 = vmax.f32 %v6028, 0.0
        %v6104 = vmax.f32 %v6031, 0.0
        %v6105 = vmax.f32 %v6036, 0.0
        %v6106 = vmax.f32 %v6039, 0.0
        %v6107 = vmax.f32 %v6044, 0.0
        %v6108 = vmax.f32 %v6047, 0.0
        %v6109 = vmax.f32 %v6052, 0.0
        %v6110 = vmax.f32 %v6055, 0.0
        %v6111 = vmax.f32 %v6060, 0.0
        %v6112 = vmax.f32 %v6063, 0.0
        %v6113 = vmax.f32 %v6068, 0.0
        %v6114 = vmul.f32 %v6073, %v820
        %v6115 = vmul.f32 %v6074, %v825
        %v6116 = vmul.f32 %v6075, %v830
        %v6117 = vmul.f32 %v6076, %v835
        %v6118 = vmul.f32 %v6077, %v840
        %v6119 = vmul.f32 %v6078, %v845
        %v6120 = vmul.f32 %v6079, %v850
        %v6121 = vmul.f32 %v6080, %v855
        %v6122 = vmul.f32 %v6081, %v860
        %v6123 = vmul.f32 %v6082, %v865
        %v6124 = vmul.f32 %v6083, %v870
        %v6125 = vmul.f32 %v6084, %v875
        %v6126 = vmul.f32 %v6085, %v880
        %v6127 = vmul.f32 %v6086, %v885
        %v6128 = vmul.f32 %v6087, %v890
        %v6129 = vmul.f32 %v6088, %v895
        %v6130 = vmul.f32 %v6089, %v900
        %v6131 = vmul.f32 %v6090, %v905
        %v6132 = vmul.f32 %v6091, %v910
        %v6133 = vmul.f32 %v6092, %v915
        %v6134 = vmul.f32 %v6093, %v920
        %v6135 = vmul.f32 %v6094, %v925
        %v6136 = vmul.f32 %v6095, %v930
        %v6137 = vmul.f32 %v6096, %v935
        %v6138 = vmul.f32 %v6097, %v940
        %v6139 = vmul.f32 %v6098, %v945
        %v6140 = vmul.f32 %v6099, %v950
        %v6141 = vmul.f32 %v6100, %v955
        %v6142 = vmul.f32 %v6101, %v960
        %v6143 = vmul.f32 %v6102, %v965
        %v6144 = vmul.f32 %v6103, %v970
        %v6145 = vmul.f32 %v6104, %v975
        %v6146 = vmul.f32 %v6105, %v980
        %v6147 = vmul.f32 %v6106, %v985
        %v6148 = vmul.f32 %v6107, %v990
        %v6149 = vmul.f32 %v6108, %v995
        %v6150 = vmul.f32 %v6109, %v1000
        %v6151 = vmul.f32 %v6110, %v1005
        %v6152 = vmul.f32 %v6111, %v1010
        %v6153 = vmul.f32 %v6112, %v1015
        %v6154 = vmul.f32 %v6113, %v1020
        %6155 = vst [vmem:[#allocation3] sm:$0xff] 0.0
        %6156 = vst [vmem:[#allocation3 + $0x8] sm:$0xff] 0.0
        %6157 = vst [vmem:[#allocation3 + $0x10] sm:$0x7] 0.0
        %6158 = vst [vmem:[#allocation3 + $0x157] sm:$0xff] 0.0
        %6159 = vst [vmem:[#allocation3 + $0x15f] sm:$0xff] 0.0
        %6160 = vst [vmem:[#allocation3 + $0x167] sm:$0x7] 0.0
        %6161 = vst [vmem:[#allocation3 + $0x13] sm:$0xff] %v6114
        %6162 = vst [vmem:[#allocation3 + $0x1b] sm:$0xff] %v6115
        %6163 = vst [vmem:[#allocation3 + $0x23] sm:$0xff] %v6116
        %6164 = vst [vmem:[#allocation3 + $0x2b] sm:$0xff] %v6117
        %6165 = vst [vmem:[#allocation3 + $0x33] sm:$0xff] %v6118
        %6166 = vst [vmem:[#allocation3 + $0x3b] sm:$0xff] %v6119
        %6167 = vst [vmem:[#allocation3 + $0x43] sm:$0xff] %v6120
        %6168 = vst [vmem:[#allocation3 + $0x4b] sm:$0xff] %v6121
        %6169 = vst [vmem:[#allocation3 + $0x53] sm:$0xff] %v6122
        %6170 = vst [vmem:[#allocation3 + $0x5b] sm:$0xff] %v6123
        %6171 = vst [vmem:[#allocation3 + $0x63] sm:$0xff] %v6124
        %6172 = vst [vmem:[#allocation3 + $0x6b] sm:$0xff] %v6125
        %6173 = vst [vmem:[#allocation3 + $0x73] sm:$0xff] %v6126
        %6174 = vst [vmem:[#allocation3 + $0x7b] sm:$0xff] %v6127
        %6175 = vst [vmem:[#allocation3 + $0x83] sm:$0xff] %v6128
        %6176 = vst [vmem:[#allocation3 + $0x8b] sm:$0xff] %v6129
        %6177 = vst [vmem:[#allocation3 + $0x93] sm:$0xff] %v6130
        %6178 = vst [vmem:[#allocation3 + $0x9b] sm:$0xff] %v6131
        %6179 = vst [vmem:[#allocation3 + $0xa3] sm:$0xff] %v6132
        %6180 = vst [vmem:[#allocation3 + $0xab] sm:$0xff] %v6133
        %6181 = vst [vmem:[#allocation3 + $0xb3] sm:$0xff] %v6134
        %6182 = vst [vmem:[#allocation3 + $0xbb] sm:$0xff] %v6135
        %6183 = vst [vmem:[#allocation3 + $0xc3] sm:$0xff] %v6136
        %6184 = vst [vmem:[#allocation3 + $0xcb] sm:$0xff] %v6137
        %6185 = vst [vmem:[#allocation3 + $0xd3] sm:$0xff] %v6138
        %6186 = vst [vmem:[#allocation3 + $0xdb] sm:$0xff] %v6139
        %6187 = vst [vmem:[#allocation3 + $0xe3] sm:$0xff] %v6140
        %6188 = vst [vmem:[#allocation3 + $0xeb] sm:$0xff] %v6141
        %6189 = vst [vmem:[#allocation3 + $0xf3] sm:$0xff] %v6142
        %6190 = vst [vmem:[#allocation3 + $0xfb] sm:$0xff] %v6143
        %6191 = vst [vmem:[#allocation3 + $0x103] sm:$0xff] %v6144
        %6192 = vst [vmem:[#allocation3 + $0x10b] sm:$0xff] %v6145
        %6193 = vst [vmem:[#allocation3 + $0x113] sm:$0xff] %v6146
        %6194 = vst [vmem:[#allocation3 + $0x11b] sm:$0xff] %v6147
        %6195 = vst [vmem:[#allocation3 + $0x123] sm:$0xff] %v6148
        %6196 = vst [vmem:[#allocation3 + $0x12b] sm:$0xff] %v6149
        %6197 = vst [vmem:[#allocation3 + $0x133] sm:$0xff] %v6150
        %6198 = vst [vmem:[#allocation3 + $0x13b] sm:$0xff] %v6151
        %6199 = vst [vmem:[#allocation3 + $0x143] sm:$0xff] %v6152
        %6200 = vst [vmem:[#allocation3 + $0x14b] sm:$0xff] %v6153
        %6201 = vst [vmem:[#allocation3 + $0x153] sm:$0xf] %v6154
        %v6202 = vld [vmem:[#allocation3] sm:$0xff]
        %v6203 = vld [vmem:[#allocation3 + $0x8] sm:$0xff]
        %v6204 = vld [vmem:[#allocation3 + $0x10] sm:$0xff]
        %v6205 = vld [vmem:[#allocation3 + $0x18] sm:$0xff]
        %v6206 = vld [vmem:[#allocation3 + $0x20] sm:$0xff]
        %v6207 = vld [vmem:[#allocation3 + $0x28] sm:$0xff]
        %v6208 = vld [vmem:[#allocation3 + $0x30] sm:$0xff]
        %v6209 = vld [vmem:[#allocation3 + $0x38] sm:$0xff]
        %v6210 = vld [vmem:[#allocation3 + $0x40] sm:$0xff]
        %v6211 = vld [vmem:[#allocation3 + $0x48] sm:$0xff]
        %v6212 = vld [vmem:[#allocation3 + $0x50] sm:$0xff]
        %v6213 = vld [vmem:[#allocation3 + $0x58] sm:$0xff]
        %v6214 = vld [vmem:[#allocation3 + $0x60] sm:$0xff]
        %v6215 = vld [vmem:[#allocation3 + $0x68] sm:$0xff]
        %v6216 = vld [vmem:[#allocation3 + $0x70] sm:$0xff]
        %v6217 = vld [vmem:[#allocation3 + $0x78] sm:$0xff]
        %v6218 = vld [vmem:[#allocation3 + $0x80] sm:$0xff]
        %v6219 = vld [vmem:[#allocation3 + $0x88] sm:$0xff]
        %v6220 = vld [vmem:[#allocation3 + $0x90] sm:$0xff]
        %v6221 = vld [vmem:[#allocation3 + $0x98] sm:$0xff]
        %v6222 = vld [vmem:[#allocation3 + $0xa0] sm:$0xff]
        %v6223 = vld [vmem:[#allocation3 + $0xa8] sm:$0xff]
        %v6224 = vld [vmem:[#allocation3 + $0xb0] sm:$0xff]
        %v6225 = vld [vmem:[#allocation3 + $0xb8] sm:$0xff]
        %v6226 = vld [vmem:[#allocation3 + $0xc0] sm:$0xff]
        %v6227 = vld [vmem:[#allocation3 + $0xc8] sm:$0xff]
        %v6228 = vld [vmem:[#allocation3 + $0xd0] sm:$0xff]
        %v6229 = vld [vmem:[#allocation3 + $0xd8] sm:$0xff]
        %v6230 = vld [vmem:[#allocation3 + $0xe0] sm:$0xff]
        %v6231 = vld [vmem:[#allocation3 + $0xe8] sm:$0xff]
        %v6232 = vld [vmem:[#allocation3 + $0xf0] sm:$0xff]
        %v6233 = vld [vmem:[#allocation3 + $0xf8] sm:$0xff]
        %v6234 = vld [vmem:[#allocation3 + $0x100] sm:$0xff]
        %v6235 = vld [vmem:[#allocation3 + $0x108] sm:$0xff]
        %v6236 = vld [vmem:[#allocation3 + $0x110] sm:$0xff]
        %v6237 = vld [vmem:[#allocation3 + $0x118] sm:$0xff]
        %v6238 = vld [vmem:[#allocation3 + $0x120] sm:$0xff]
        %v6239 = vld [vmem:[#allocation3 + $0x128] sm:$0xff]
        %v6240 = vld [vmem:[#allocation3 + $0x130] sm:$0xff]
        %v6241 = vld [vmem:[#allocation3 + $0x138] sm:$0xff]
        %v6242 = vld [vmem:[#allocation3 + $0x140] sm:$0xf]
        %v6243 = vpack.c.bf16 %v6203, %v6202
        %v6244 = vpack.c.bf16 %v6205, %v6204
        %v6245 = vpack.c.bf16 %v6207, %v6206
        %v6246 = vpack.c.bf16 %v6209, %v6208
        %v6247 = vpack.c.bf16 %v6211, %v6210
        %v6248 = vpack.c.bf16 %v6213, %v6212
        %v6249 = vpack.c.bf16 %v6215, %v6214
        %v6250 = vpack.c.bf16 %v6217, %v6216
        %v6251 = vpack.c.bf16 %v6219, %v6218
        %v6252 = vpack.c.bf16 %v6221, %v6220
        %v6253 = vpack.c.bf16 %v6223, %v6222
        %v6254 = vpack.c.bf16 %v6225, %v6224
        %v6255 = vpack.c.bf16 %v6227, %v6226
        %v6256 = vpack.c.bf16 %v6229, %v6228
        %v6257 = vpack.c.bf16 %v6231, %v6230
        %v6258 = vpack.c.bf16 %v6233, %v6232
        %v6259 = vpack.c.bf16 %v6235, %v6234
        %v6260 = vpack.c.bf16 %v6237, %v6236
        %v6261 = vpack.c.bf16 %v6239, %v6238
        %v6262 = vpack.c.bf16 %v6241, %v6240
        %v6263 = vpack.c.bf16 %v6242, %v6242
        %v6285 = vunpack.c.l.b16 %v6243
        %v6286 = vunpack.c.h.b16 %v6243
        %v6287 = vunpack.c.l.b16 %v6244
        %v6288 = vunpack.c.h.b16 %v6244
        %v6289 = vunpack.c.l.b16 %v6245
        %v6290 = vunpack.c.h.b16 %v6245
        %v6291 = vunpack.c.l.b16 %v6246
        %v6292 = vunpack.c.h.b16 %v6246
        %v6293 = vunpack.c.l.b16 %v6247
        %v6294 = vunpack.c.h.b16 %v6247
        %v6295 = vunpack.c.l.b16 %v6248
        %v6296 = vunpack.c.h.b16 %v6248
        %v6297 = vunpack.c.l.b16 %v6249
        %v6298 = vunpack.c.h.b16 %v6249
        %v6299 = vunpack.c.l.b16 %v6250
        %v6300 = vunpack.c.h.b16 %v6250
        %v6301 = vunpack.c.l.b16 %v6251
        %v6302 = vunpack.c.h.b16 %v6251
        %v6303 = vunpack.c.l.b16 %v6252
        %v6304 = vunpack.c.h.b16 %v6252
        %v6305 = vunpack.c.l.b16 %v6253
        %v6306 = vunpack.c.h.b16 %v6253
        %v6307 = vunpack.c.l.b16 %v6254
        %v6308 = vunpack.c.h.b16 %v6254
        %v6309 = vunpack.c.l.b16 %v6255
        %v6310 = vunpack.c.h.b16 %v6255
        %v6311 = vunpack.c.l.b16 %v6256
        %v6312 = vunpack.c.h.b16 %v6256
        %v6313 = vunpack.c.l.b16 %v6257
        %v6314 = vunpack.c.h.b16 %v6257
        %v6315 = vunpack.c.l.b16 %v6258
        %v6316 = vunpack.c.h.b16 %v6258
        %v6317 = vunpack.c.l.b16 %v6259
        %v6318 = vunpack.c.h.b16 %v6259
        %v6319 = vunpack.c.l.b16 %v6260
        %v6320 = vunpack.c.h.b16 %v6260
        %v6321 = vunpack.c.l.b16 %v6261
        %v6322 = vunpack.c.h.b16 %v6261
        %v6323 = vunpack.c.l.b16 %v6262
        %v6324 = vunpack.c.h.b16 %v6262
        %v6325 = vunpack.c.l.b16 %v6263
        %v6326 = vpack.c.b16 %v6285, %v6285
        %v6327 = vpack.c.b16 %v6286, %v6286
        %v6328 = vpack.c.b16 %v6287, %v6287
        %v6329 = vpack.c.b16 %v6288, %v6288
        %v6330 = vpack.c.b16 %v6289, %v6289
        %v6331 = vpack.c.b16 %v6290, %v6290
        %v6332 = vpack.c.b16 %v6291, %v6291
        %v6333 = vpack.c.b16 %v6292, %v6292
        %v6334 = vpack.c.b16 %v6293, %v6293
        %v6335 = vpack.c.b16 %v6294, %v6294
        %v6336 = vpack.c.b16 %v6295, %v6295
        %v6337 = vpack.c.b16 %v6296, %v6296
        %v6338 = vpack.c.b16 %v6297, %v6297
        %v6339 = vpack.c.b16 %v6298, %v6298
        %v6340 = vpack.c.b16 %v6299, %v6299
        %v6341 = vpack.c.b16 %v6300, %v6300
        %v6342 = vpack.c.b16 %v6301, %v6301
        %v6343 = vpack.c.b16 %v6302, %v6302
        %v6344 = vpack.c.b16 %v6303, %v6303
        %v6345 = vpack.c.b16 %v6304, %v6304
        %v6346 = vpack.c.b16 %v6305, %v6305
        %v6347 = vpack.c.b16 %v6306, %v6306
        %v6348 = vpack.c.b16 %v6307, %v6307
        %v6349 = vpack.c.b16 %v6308, %v6308
        %v6350 = vpack.c.b16 %v6309, %v6309
        %v6351 = vpack.c.b16 %v6310, %v6310
        %v6352 = vpack.c.b16 %v6311, %v6311
        %v6353 = vpack.c.b16 %v6312, %v6312
        %v6354 = vpack.c.b16 %v6313, %v6313
        %v6355 = vpack.c.b16 %v6314, %v6314
        %v6356 = vpack.c.b16 %v6315, %v6315
        %v6357 = vpack.c.b16 %v6316, %v6316
        %v6358 = vpack.c.b16 %v6317, %v6317
        %v6359 = vpack.c.b16 %v6318, %v6318
        %v6360 = vpack.c.b16 %v6319, %v6319
        %v6361 = vpack.c.b16 %v6320, %v6320
        %v6362 = vpack.c.b16 %v6321, %v6321
        %v6363 = vpack.c.b16 %v6322, %v6322
        %v6364 = vpack.c.b16 %v6323, %v6323
        %v6365 = vpack.c.b16 %v6324, %v6324
        %v6366 = vpack.c.b16 %v6325, %v6325
        %6408 = vst [vmem:[#allocation4] sm:$0xf] %v6326
        %6409 = vst [vmem:[#allocation4 + $0x24] sm:$0xf] %v6327
        %6410 = vst [vmem:[#allocation4 + $0x48] sm:$0xf] %v6328
        %6411 = vst [vmem:[#allocation4 + $0x6c] sm:$0xf] %v6329
        %6412 = vst [vmem:[#allocation4 + $0x90] sm:$0xf] %v6330
        %6413 = vst [vmem:[#allocation4 + $0xb4] sm:$0xf] %v6331
        %6414 = vst [vmem:[#allocation4 + $0xd8] sm:$0xf] %v6332
        %6415 = vst [vmem:[#allocation4 + $0xfc] sm:$0xf] %v6333
        %6416 = vst [vmem:[#allocation4 + $0x120] sm:$0xf] %v6334
        %6417 = vst [vmem:[#allocation4 + $0x144] sm:$0xf] %v6335
        %6418 = vst [vmem:[#allocation4 + $0x168] sm:$0xf] %v6336
        %6419 = vst [vmem:[#allocation4 + $0x18c] sm:$0xf] %v6337
        %6420 = vst [vmem:[#allocation4 + $0x1b0] sm:$0xf] %v6338
        %6421 = vst [vmem:[#allocation4 + $0x1d4] sm:$0xf] %v6339
        %6422 = vst [vmem:[#allocation4 + $0x1f8] sm:$0xf] %v6340
        %6423 = vst [vmem:[#allocation4 + $0x21c] sm:$0xf] %v6341
        %6424 = vst [vmem:[#allocation4 + $0x240] sm:$0xf] %v6342
        %6425 = vst [vmem:[#allocation4 + $0x264] sm:$0xf] %v6343
        %6426 = vst [vmem:[#allocation4 + $0x288] sm:$0xf] %v6344
        %6427 = vst [vmem:[#allocation4 + $0x2ac] sm:$0xf] %v6345
        %6428 = vst [vmem:[#allocation4 + $0x2d0] sm:$0xf] %v6346
        %6429 = vst [vmem:[#allocation4 + $0x2f4] sm:$0xf] %v6347
        %6430 = vst [vmem:[#allocation4 + $0x318] sm:$0xf] %v6348
        %6431 = vst [vmem:[#allocation4 + $0x33c] sm:$0xf] %v6349
        %6432 = vst [vmem:[#allocation4 + $0x360] sm:$0xf] %v6350
        %6433 = vst [vmem:[#allocation4 + $0x384] sm:$0xf] %v6351
        %6434 = vst [vmem:[#allocation4 + $0x3a8] sm:$0xf] %v6352
        %6435 = vst [vmem:[#allocation4 + $0x3cc] sm:$0xf] %v6353
        %6436 = vst [vmem:[#allocation4 + $0x3f0] sm:$0xf] %v6354
        %6437 = vst [vmem:[#allocation4 + $0x414] sm:$0xf] %v6355
        %6438 = vst [vmem:[#allocation4 + $0x438] sm:$0xf] %v6356
        %6439 = vst [vmem:[#allocation4 + $0x45c] sm:$0xf] %v6357
        %6440 = vst [vmem:[#allocation4 + $0x480] sm:$0xf] %v6358
        %6441 = vst [vmem:[#allocation4 + $0x4a4] sm:$0xf] %v6359
        %6442 = vst [vmem:[#allocation4 + $0x4c8] sm:$0xf] %v6360
        %6443 = vst [vmem:[#allocation4 + $0x4ec] sm:$0xf] %v6361
        %6444 = vst [vmem:[#allocation4 + $0x510] sm:$0xf] %v6362
        %6445 = vst [vmem:[#allocation4 + $0x534] sm:$0xf] %v6363
        %6446 = vst [vmem:[#allocation4 + $0x558] sm:$0xf] %v6364
        %6447 = vst [vmem:[#allocation4 + $0x57c] sm:$0xf] %v6365
        %6448 = vst [vmem:[#allocation4 + $0x5a0] sm:$0x3] %v6366
        %v6449 = vld [vmem:[#allocation3 + $0x1] sm:$0xff]
        %v6450 = vld [vmem:[#allocation3 + $0x9] sm:$0xff]
        %v6451 = vld [vmem:[#allocation3 + $0x11] sm:$0xff]
        %v6452 = vld [vmem:[#allocation3 + $0x19] sm:$0xff]
        %v6453 = vld [vmem:[#allocation3 + $0x21] sm:$0xff]
        %v6454 = vld [vmem:[#allocation3 + $0x29] sm:$0xff]
        %v6455 = vld [vmem:[#allocation3 + $0x31] sm:$0xff]
        %v6456 = vld [vmem:[#allocation3 + $0x39] sm:$0xff]
        %v6457 = vld [vmem:[#allocation3 + $0x41] sm:$0xff]
        %v6458 = vld [vmem:[#allocation3 + $0x49] sm:$0xff]
        %v6459 = vld [vmem:[#allocation3 + $0x51] sm:$0xff]
        %v6460 = vld [vmem:[#allocation3 + $0x59] sm:$0xff]
        %v6461 = vld [vmem:[#allocation3 + $0x61] sm:$0xff]
        %v6462 = vld [vmem:[#allocation3 + $0x69] sm:$0xff]
        %v6463 = vld [vmem:[#allocation3 + $0x71] sm:$0xff]
        %v6464 = vld [vmem:[#allocation3 + $0x79] sm:$0xff]
        %v6465 = vld [vmem:[#allocation3 + $0x81] sm:$0xff]
        %v6466 = vld [vmem:[#allocation3 + $0x89] sm:$0xff]
        %v6467 = vld [vmem:[#allocation3 + $0x91] sm:$0xff]
        %v6468 = vld [vmem:[#allocation3 + $0x99] sm:$0xff]
        %v6469 = vld [vmem:[#allocation3 + $0xa1] sm:$0xff]
        %v6470 = vld [vmem:[#allocation3 + $0xa9] sm:$0xff]
        %v6471 = vld [vmem:[#allocation3 + $0xb1] sm:$0xff]
        %v6472 = vld [vmem:[#allocation3 + $0xb9] sm:$0xff]
        %v6473 = vld [vmem:[#allocation3 + $0xc1] sm:$0xff]
        %v6474 = vld [vmem:[#allocation3 + $0xc9] sm:$0xff]
        %v6475 = vld [vmem:[#allocation3 + $0xd1] sm:$0xff]
        %v6476 = vld [vmem:[#allocation3 + $0xd9] sm:$0xff]
        %v6477 = vld [vmem:[#allocation3 + $0xe1] sm:$0xff]
        %v6478 = vld [vmem:[#allocation3 + $0xe9] sm:$0xff]
        %v6479 = vld [vmem:[#allocation3 + $0xf1] sm:$0xff]
        %v6480 = vld [vmem:[#allocation3 + $0xf9] sm:$0xff]
        %v6481 = vld [vmem:[#allocation3 + $0x101] sm:$0xff]
        %v6482 = vld [vmem:[#allocation3 + $0x109] sm:$0xff]
        %v6483 = vld [vmem:[#allocation3 + $0x111] sm:$0xff]
        %v6484 = vld [vmem:[#allocation3 + $0x119] sm:$0xff]
        %v6485 = vld [vmem:[#allocation3 + $0x121] sm:$0xff]
        %v6486 = vld [vmem:[#allocation3 + $0x129] sm:$0xff]
        %v6487 = vld [vmem:[#allocation3 + $0x131] sm:$0xff]
        %v6488 = vld [vmem:[#allocation3 + $0x139] sm:$0xff]
        %v6489 = vld [vmem:[#allocation3 + $0x141] sm:$0xf]
        %v6490 = vpack.c.bf16 %v6450, %v6449
        %v6491 = vpack.c.bf16 %v6452, %v6451
        %v6492 = vpack.c.bf16 %v6454, %v6453
        %v6493 = vpack.c.bf16 %v6456, %v6455
        %v6494 = vpack.c.bf16 %v6458, %v6457
        %v6495 = vpack.c.bf16 %v6460, %v6459
        %v6496 = vpack.c.bf16 %v6462, %v6461
        %v6497 = vpack.c.bf16 %v6464, %v6463
        %v6498 = vpack.c.bf16 %v6466, %v6465
        %v6499 = vpack.c.bf16 %v6468, %v6467
        %v6500 = vpack.c.bf16 %v6470, %v6469
        %v6501 = vpack.c.bf16 %v6472, %v6471
        %v6502 = vpack.c.bf16 %v6474, %v6473
        %v6503 = vpack.c.bf16 %v6476, %v6475
        %v6504 = vpack.c.bf16 %v6478, %v6477
        %v6505 = vpack.c.bf16 %v6480, %v6479
        %v6506 = vpack.c.bf16 %v6482, %v6481
        %v6507 = vpack.c.bf16 %v6484, %v6483
        %v6508 = vpack.c.bf16 %v6486, %v6485
        %v6509 = vpack.c.bf16 %v6488, %v6487
        %v6510 = vpack.c.bf16 %v6489, %v6489
        %v6532 = vunpack.c.l.b16 %v6490
        %v6533 = vunpack.c.h.b16 %v6490
        %v6534 = vunpack.c.l.b16 %v6491
        %v6535 = vunpack.c.h.b16 %v6491
        %v6536 = vunpack.c.l.b16 %v6492
        %v6537 = vunpack.c.h.b16 %v6492
        %v6538 = vunpack.c.l.b16 %v6493
        %v6539 = vunpack.c.h.b16 %v6493
        %v6540 = vunpack.c.l.b16 %v6494
        %v6541 = vunpack.c.h.b16 %v6494
        %v6542 = vunpack.c.l.b16 %v6495
        %v6543 = vunpack.c.h.b16 %v6495
        %v6544 = vunpack.c.l.b16 %v6496
        %v6545 = vunpack.c.h.b16 %v6496
        %v6546 = vunpack.c.l.b16 %v6497
        %v6547 = vunpack.c.h.b16 %v6497
        %v6548 = vunpack.c.l.b16 %v6498
        %v6549 = vunpack.c.h.b16 %v6498
        %v6550 = vunpack.c.l.b16 %v6499
        %v6551 = vunpack.c.h.b16 %v6499
        %v6552 = vunpack.c.l.b16 %v6500
        %v6553 = vunpack.c.h.b16 %v6500
        %v6554 = vunpack.c.l.b16 %v6501
        %v6555 = vunpack.c.h.b16 %v6501
        %v6556 = vunpack.c.l.b16 %v6502
        %v6557 = vunpack.c.h.b16 %v6502
        %v6558 = vunpack.c.l.b16 %v6503
        %v6559 = vunpack.c.h.b16 %v6503
        %v6560 = vunpack.c.l.b16 %v6504
        %v6561 = vunpack.c.h.b16 %v6504
        %v6562 = vunpack.c.l.b16 %v6505
        %v6563 = vunpack.c.h.b16 %v6505
        %v6564 = vunpack.c.l.b16 %v6506
        %v6565 = vunpack.c.h.b16 %v6506
        %v6566 = vunpack.c.l.b16 %v6507
        %v6567 = vunpack.c.h.b16 %v6507
        %v6568 = vunpack.c.l.b16 %v6508
        %v6569 = vunpack.c.h.b16 %v6508
        %v6570 = vunpack.c.l.b16 %v6509
        %v6571 = vunpack.c.h.b16 %v6509
        %v6572 = vunpack.c.l.b16 %v6510
        %v6573 = vpack.c.b16 %v6532, %v6532
        %v6574 = vpack.c.b16 %v6533, %v6533
        %v6575 = vpack.c.b16 %v6534, %v6534
        %v6576 = vpack.c.b16 %v6535, %v6535
        %v6577 = vpack.c.b16 %v6536, %v6536
        %v6578 = vpack.c.b16 %v6537, %v6537
        %v6579 = vpack.c.b16 %v6538, %v6538
        %v6580 = vpack.c.b16 %v6539, %v6539
        %v6581 = vpack.c.b16 %v6540, %v6540
        %v6582 = vpack.c.b16 %v6541, %v6541
        %v6583 = vpack.c.b16 %v6542, %v6542
        %v6584 = vpack.c.b16 %v6543, %v6543
        %v6585 = vpack.c.b16 %v6544, %v6544
        %v6586 = vpack.c.b16 %v6545, %v6545
        %v6587 = vpack.c.b16 %v6546, %v6546
        %v6588 = vpack.c.b16 %v6547, %v6547
        %v6589 = vpack.c.b16 %v6548, %v6548
        %v6590 = vpack.c.b16 %v6549, %v6549
        %v6591 = vpack.c.b16 %v6550, %v6550
        %v6592 = vpack.c.b16 %v6551, %v6551
        %v6593 = vpack.c.b16 %v6552, %v6552
        %v6594 = vpack.c.b16 %v6553, %v6553
        %v6595 = vpack.c.b16 %v6554, %v6554
        %v6596 = vpack.c.b16 %v6555, %v6555
        %v6597 = vpack.c.b16 %v6556, %v6556
        %v6598 = vpack.c.b16 %v6557, %v6557
        %v6599 = vpack.c.b16 %v6558, %v6558
        %v6600 = vpack.c.b16 %v6559, %v6559
        %v6601 = vpack.c.b16 %v6560, %v6560
        %v6602 = vpack.c.b16 %v6561, %v6561
        %v6603 = vpack.c.b16 %v6562, %v6562
        %v6604 = vpack.c.b16 %v6563, %v6563
        %v6605 = vpack.c.b16 %v6564, %v6564
        %v6606 = vpack.c.b16 %v6565, %v6565
        %v6607 = vpack.c.b16 %v6566, %v6566
        %v6608 = vpack.c.b16 %v6567, %v6567
        %v6609 = vpack.c.b16 %v6568, %v6568
        %v6610 = vpack.c.b16 %v6569, %v6569
        %v6611 = vpack.c.b16 %v6570, %v6570
        %v6612 = vpack.c.b16 %v6571, %v6571
        %v6613 = vpack.c.b16 %v6572, %v6572
        %6655 = vst [vmem:[#allocation4 + $0x4] sm:$0xf] %v6573
        %6656 = vst [vmem:[#allocation4 + $0x28] sm:$0xf] %v6574
        %6657 = vst [vmem:[#allocation4 + $0x4c] sm:$0xf] %v6575
        %6658 = vst [vmem:[#allocation4 + $0x70] sm:$0xf] %v6576
        %6659 = vst [vmem:[#allocation4 + $0x94] sm:$0xf] %v6577
        %6660 = vst [vmem:[#allocation4 + $0xb8] sm:$0xf] %v6578
        %6661 = vst [vmem:[#allocation4 + $0xdc] sm:$0xf] %v6579
        %6662 = vst [vmem:[#allocation4 + $0x100] sm:$0xf] %v6580
        %6663 = vst [vmem:[#allocation4 + $0x124] sm:$0xf] %v6581
        %6664 = vst [vmem:[#allocation4 + $0x148] sm:$0xf] %v6582
        %6665 = vst [vmem:[#allocation4 + $0x16c] sm:$0xf] %v6583
        %6666 = vst [vmem:[#allocation4 + $0x190] sm:$0xf] %v6584
        %6667 = vst [vmem:[#allocation4 + $0x1b4] sm:$0xf] %v6585
        %6668 = vst [vmem:[#allocation4 + $0x1d8] sm:$0xf] %v6586
        %6669 = vst [vmem:[#allocation4 + $0x1fc] sm:$0xf] %v6587
        %6670 = vst [vmem:[#allocation4 + $0x220] sm:$0xf] %v6588
        %6671 = vst [vmem:[#allocation4 + $0x244] sm:$0xf] %v6589
        %6672 = vst [vmem:[#allocation4 + $0x268] sm:$0xf] %v6590
        %6673 = vst [vmem:[#allocation4 + $0x28c] sm:$0xf] %v6591
        %6674 = vst [vmem:[#allocation4 + $0x2b0] sm:$0xf] %v6592
        %6675 = vst [vmem:[#allocation4 + $0x2d4] sm:$0xf] %v6593
        %6676 = vst [vmem:[#allocation4 + $0x2f8] sm:$0xf] %v6594
        %6677 = vst [vmem:[#allocation4 + $0x31c] sm:$0xf] %v6595
        %6678 = vst [vmem:[#allocation4 + $0x340] sm:$0xf] %v6596
        %6679 = vst [vmem:[#allocation4 + $0x364] sm:$0xf] %v6597
        %6680 = vst [vmem:[#allocation4 + $0x388] sm:$0xf] %v6598
        %6681 = vst [vmem:[#allocation4 + $0x3ac] sm:$0xf] %v6599
        %6682 = vst [vmem:[#allocation4 + $0x3d0] sm:$0xf] %v6600
        %6683 = vst [vmem:[#allocation4 + $0x3f4] sm:$0xf] %v6601
        %6684 = vst [vmem:[#allocation4 + $0x418] sm:$0xf] %v6602
        %6685 = vst [vmem:[#allocation4 + $0x43c] sm:$0xf] %v6603
        %6686 = vst [vmem:[#allocation4 + $0x460] sm:$0xf] %v6604
        %6687 = vst [vmem:[#allocation4 + $0x484] sm:$0xf] %v6605
        %6688 = vst [vmem:[#allocation4 + $0x4a8] sm:$0xf] %v6606
        %6689 = vst [vmem:[#allocation4 + $0x4cc] sm:$0xf] %v6607
        %6690 = vst [vmem:[#allocation4 + $0x4f0] sm:$0xf] %v6608
        %6691 = vst [vmem:[#allocation4 + $0x514] sm:$0xf] %v6609
        %6692 = vst [vmem:[#allocation4 + $0x538] sm:$0xf] %v6610
        %6693 = vst [vmem:[#allocation4 + $0x55c] sm:$0xf] %v6611
        %6694 = vst [vmem:[#allocation4 + $0x580] sm:$0xf] %v6612
        %6695 = vst [vmem:[#allocation4 + $0x5a4] sm:$0x3] %v6613
        %v6696 = vld [vmem:[#allocation3 + $0x2] sm:$0xff]
        %v6697 = vld [vmem:[#allocation3 + $0xa] sm:$0xff]
        %v6698 = vld [vmem:[#allocation3 + $0x12] sm:$0xff]
        %v6699 = vld [vmem:[#allocation3 + $0x1a] sm:$0xff]
        %v6700 = vld [vmem:[#allocation3 + $0x22] sm:$0xff]
        %v6701 = vld [vmem:[#allocation3 + $0x2a] sm:$0xff]
        %v6702 = vld [vmem:[#allocation3 + $0x32] sm:$0xff]
        %v6703 = vld [vmem:[#allocation3 + $0x3a] sm:$0xff]
        %v6704 = vld [vmem:[#allocation3 + $0x42] sm:$0xff]
        %v6705 = vld [vmem:[#allocation3 + $0x4a] sm:$0xff]
        %v6706 = vld [vmem:[#allocation3 + $0x52] sm:$0xff]
        %v6707 = vld [vmem:[#allocation3 + $0x5a] sm:$0xff]
        %v6708 = vld [vmem:[#allocation3 + $0x62] sm:$0xff]
        %v6709 = vld [vmem:[#allocation3 + $0x6a] sm:$0xff]
        %v6710 = vld [vmem:[#allocation3 + $0x72] sm:$0xff]
        %v6711 = vld [vmem:[#allocation3 + $0x7a] sm:$0xff]
        %v6712 = vld [vmem:[#allocation3 + $0x82] sm:$0xff]
        %v6713 = vld [vmem:[#allocation3 + $0x8a] sm:$0xff]
        %v6714 = vld [vmem:[#allocation3 + $0x92] sm:$0xff]
        %v6715 = vld [vmem:[#allocation3 + $0x9a] sm:$0xff]
        %v6716 = vld [vmem:[#allocation3 + $0xa2] sm:$0xff]
        %v6717 = vld [vmem:[#allocation3 + $0xaa] sm:$0xff]
        %v6718 = vld [vmem:[#allocation3 + $0xb2] sm:$0xff]
        %v6719 = vld [vmem:[#allocation3 + $0xba] sm:$0xff]
        %v6720 = vld [vmem:[#allocation3 + $0xc2] sm:$0xff]
        %v6721 = vld [vmem:[#allocation3 + $0xca] sm:$0xff]
        %v6722 = vld [vmem:[#allocation3 + $0xd2] sm:$0xff]
        %v6723 = vld [vmem:[#allocation3 + $0xda] sm:$0xff]
        %v6724 = vld [vmem:[#allocation3 + $0xe2] sm:$0xff]
        %v6725 = vld [vmem:[#allocation3 + $0xea] sm:$0xff]
        %v6726 = vld [vmem:[#allocation3 + $0xf2] sm:$0xff]
        %v6727 = vld [vmem:[#allocation3 + $0xfa] sm:$0xff]
        %v6728 = vld [vmem:[#allocation3 + $0x102] sm:$0xff]
        %v6729 = vld [vmem:[#allocation3 + $0x10a] sm:$0xff]
        %v6730 = vld [vmem:[#allocation3 + $0x112] sm:$0xff]
        %v6731 = vld [vmem:[#allocation3 + $0x11a] sm:$0xff]
        %v6732 = vld [vmem:[#allocation3 + $0x122] sm:$0xff]
        %v6733 = vld [vmem:[#allocation3 + $0x12a] sm:$0xff]
        %v6734 = vld [vmem:[#allocation3 + $0x132] sm:$0xff]
        %v6735 = vld [vmem:[#allocation3 + $0x13a] sm:$0xff]
        %v6736 = vld [vmem:[#allocation3 + $0x142] sm:$0xf]
        %v6737 = vpack.c.bf16 %v6697, %v6696
        %v6738 = vpack.c.bf16 %v6699, %v6698
        %v6739 = vpack.c.bf16 %v6701, %v6700
        %v6740 = vpack.c.bf16 %v6703, %v6702
        %v6741 = vpack.c.bf16 %v6705, %v6704
        %v6742 = vpack.c.bf16 %v6707, %v6706
        %v6743 = vpack.c.bf16 %v6709, %v6708
        %v6744 = vpack.c.bf16 %v6711, %v6710
        %v6745 = vpack.c.bf16 %v6713, %v6712
        %v6746 = vpack.c.bf16 %v6715, %v6714
        %v6747 = vpack.c.bf16 %v6717, %v6716
        %v6748 = vpack.c.bf16 %v6719, %v6718
        %v6749 = vpack.c.bf16 %v6721, %v6720
        %v6750 = vpack.c.bf16 %v6723, %v6722
        %v6751 = vpack.c.bf16 %v6725, %v6724
        %v6752 = vpack.c.bf16 %v6727, %v6726
        %v6753 = vpack.c.bf16 %v6729, %v6728
        %v6754 = vpack.c.bf16 %v6731, %v6730
        %v6755 = vpack.c.bf16 %v6733, %v6732
        %v6756 = vpack.c.bf16 %v6735, %v6734
        %v6757 = vpack.c.bf16 %v6736, %v6736
        %v6779 = vunpack.c.l.b16 %v6737
        %v6780 = vunpack.c.h.b16 %v6737
        %v6781 = vunpack.c.l.b16 %v6738
        %v6782 = vunpack.c.h.b16 %v6738
        %v6783 = vunpack.c.l.b16 %v6739
        %v6784 = vunpack.c.h.b16 %v6739
        %v6785 = vunpack.c.l.b16 %v6740
        %v6786 = vunpack.c.h.b16 %v6740
        %v6787 = vunpack.c.l.b16 %v6741
        %v6788 = vunpack.c.h.b16 %v6741
        %v6789 = vunpack.c.l.b16 %v6742
        %v6790 = vunpack.c.h.b16 %v6742
        %v6791 = vunpack.c.l.b16 %v6743
        %v6792 = vunpack.c.h.b16 %v6743
        %v6793 = vunpack.c.l.b16 %v6744
        %v6794 = vunpack.c.h.b16 %v6744
        %v6795 = vunpack.c.l.b16 %v6745
        %v6796 = vunpack.c.h.b16 %v6745
        %v6797 = vunpack.c.l.b16 %v6746
        %v6798 = vunpack.c.h.b16 %v6746
        %v6799 = vunpack.c.l.b16 %v6747
        %v6800 = vunpack.c.h.b16 %v6747
        %v6801 = vunpack.c.l.b16 %v6748
        %v6802 = vunpack.c.h.b16 %v6748
        %v6803 = vunpack.c.l.b16 %v6749
        %v6804 = vunpack.c.h.b16 %v6749
        %v6805 = vunpack.c.l.b16 %v6750
        %v6806 = vunpack.c.h.b16 %v6750
        %v6807 = vunpack.c.l.b16 %v6751
        %v6808 = vunpack.c.h.b16 %v6751
        %v6809 = vunpack.c.l.b16 %v6752
        %v6810 = vunpack.c.h.b16 %v6752
        %v6811 = vunpack.c.l.b16 %v6753
        %v6812 = vunpack.c.h.b16 %v6753
        %v6813 = vunpack.c.l.b16 %v6754
        %v6814 = vunpack.c.h.b16 %v6754
        %v6815 = vunpack.c.l.b16 %v6755
        %v6816 = vunpack.c.h.b16 %v6755
        %v6817 = vunpack.c.l.b16 %v6756
        %v6818 = vunpack.c.h.b16 %v6756
        %v6819 = vunpack.c.l.b16 %v6757
        %v6820 = vpack.c.b16 %v6779, %v6779
        %v6821 = vpack.c.b16 %v6780, %v6780
        %v6822 = vpack.c.b16 %v6781, %v6781
        %v6823 = vpack.c.b16 %v6782, %v6782
        %v6824 = vpack.c.b16 %v6783, %v6783
        %v6825 = vpack.c.b16 %v6784, %v6784
        %v6826 = vpack.c.b16 %v6785, %v6785
        %v6827 = vpack.c.b16 %v6786, %v6786
        %v6828 = vpack.c.b16 %v6787, %v6787
        %v6829 = vpack.c.b16 %v6788, %v6788
        %v6830 = vpack.c.b16 %v6789, %v6789
        %v6831 = vpack.c.b16 %v6790, %v6790
        %v6832 = vpack.c.b16 %v6791, %v6791
        %v6833 = vpack.c.b16 %v6792, %v6792
        %v6834 = vpack.c.b16 %v6793, %v6793
        %v6835 = vpack.c.b16 %v6794, %v6794
        %v6836 = vpack.c.b16 %v6795, %v6795
        %v6837 = vpack.c.b16 %v6796, %v6796
        %v6838 = vpack.c.b16 %v6797, %v6797
        %v6839 = vpack.c.b16 %v6798, %v6798
        %v6840 = vpack.c.b16 %v6799, %v6799
        %v6841 = vpack.c.b16 %v6800, %v6800
        %v6842 = vpack.c.b16 %v6801, %v6801
        %v6843 = vpack.c.b16 %v6802, %v6802
        %v6844 = vpack.c.b16 %v6803, %v6803
        %v6845 = vpack.c.b16 %v6804, %v6804
        %v6846 = vpack.c.b16 %v6805, %v6805
        %v6847 = vpack.c.b16 %v6806, %v6806
        %v6848 = vpack.c.b16 %v6807, %v6807
        %v6849 = vpack.c.b16 %v6808, %v6808
        %v6850 = vpack.c.b16 %v6809, %v6809
        %v6851 = vpack.c.b16 %v6810, %v6810
        %v6852 = vpack.c.b16 %v6811, %v6811
        %v6853 = vpack.c.b16 %v6812, %v6812
        %v6854 = vpack.c.b16 %v6813, %v6813
        %v6855 = vpack.c.b16 %v6814, %v6814
        %v6856 = vpack.c.b16 %v6815, %v6815
        %v6857 = vpack.c.b16 %v6816, %v6816
        %v6858 = vpack.c.b16 %v6817, %v6817
        %v6859 = vpack.c.b16 %v6818, %v6818
        %v6860 = vpack.c.b16 %v6819, %v6819
        %6902 = vst [vmem:[#allocation4 + $0x8] sm:$0xf] %v6820
        %6903 = vst [vmem:[#allocation4 + $0x2c] sm:$0xf] %v6821
        %6904 = vst [vmem:[#allocation4 + $0x50] sm:$0xf] %v6822
        %6905 = vst [vmem:[#allocation4 + $0x74] sm:$0xf] %v6823
        %6906 = vst [vmem:[#allocation4 + $0x98] sm:$0xf] %v6824
        %6907 = vst [vmem:[#allocation4 + $0xbc] sm:$0xf] %v6825
        %6908 = vst [vmem:[#allocation4 + $0xe0] sm:$0xf] %v6826
        %6909 = vst [vmem:[#allocation4 + $0x104] sm:$0xf] %v6827
        %6910 = vst [vmem:[#allocation4 + $0x128] sm:$0xf] %v6828
        %6911 = vst [vmem:[#allocation4 + $0x14c] sm:$0xf] %v6829
        %6912 = vst [vmem:[#allocation4 + $0x170] sm:$0xf] %v6830
        %6913 = vst [vmem:[#allocation4 + $0x194] sm:$0xf] %v6831
        %6914 = vst [vmem:[#allocation4 + $0x1b8] sm:$0xf] %v6832
        %6915 = vst [vmem:[#allocation4 + $0x1dc] sm:$0xf] %v6833
        %6916 = vst [vmem:[#allocation4 + $0x200] sm:$0xf] %v6834
        %6917 = vst [vmem:[#allocation4 + $0x224] sm:$0xf] %v6835
        %6918 = vst [vmem:[#allocation4 + $0x248] sm:$0xf] %v6836
        %6919 = vst [vmem:[#allocation4 + $0x26c] sm:$0xf] %v6837
        %6920 = vst [vmem:[#allocation4 + $0x290] sm:$0xf] %v6838
        %6921 = vst [vmem:[#allocation4 + $0x2b4] sm:$0xf] %v6839
        %6922 = vst [vmem:[#allocation4 + $0x2d8] sm:$0xf] %v6840
        %6923 = vst [vmem:[#allocation4 + $0x2fc] sm:$0xf] %v6841
        %6924 = vst [vmem:[#allocation4 + $0x320] sm:$0xf] %v6842
        %6925 = vst [vmem:[#allocation4 + $0x344] sm:$0xf] %v6843
        %6926 = vst [vmem:[#allocation4 + $0x368] sm:$0xf] %v6844
        %6927 = vst [vmem:[#allocation4 + $0x38c] sm:$0xf] %v6845
        %6928 = vst [vmem:[#allocation4 + $0x3b0] sm:$0xf] %v6846
        %6929 = vst [vmem:[#allocation4 + $0x3d4] sm:$0xf] %v6847
        %6930 = vst [vmem:[#allocation4 + $0x3f8] sm:$0xf] %v6848
        %6931 = vst [vmem:[#allocation4 + $0x41c] sm:$0xf] %v6849
        %6932 = vst [vmem:[#allocation4 + $0x440] sm:$0xf] %v6850
        %6933 = vst [vmem:[#allocation4 + $0x464] sm:$0xf] %v6851
        %6934 = vst [vmem:[#allocation4 + $0x488] sm:$0xf] %v6852
        %6935 = vst [vmem:[#allocation4 + $0x4ac] sm:$0xf] %v6853
        %6936 = vst [vmem:[#allocation4 + $0x4d0] sm:$0xf] %v6854
        %6937 = vst [vmem:[#allocation4 + $0x4f4] sm:$0xf] %v6855
        %6938 = vst [vmem:[#allocation4 + $0x518] sm:$0xf] %v6856
        %6939 = vst [vmem:[#allocation4 + $0x53c] sm:$0xf] %v6857
        %6940 = vst [vmem:[#allocation4 + $0x560] sm:$0xf] %v6858
        %6941 = vst [vmem:[#allocation4 + $0x584] sm:$0xf] %v6859
        %6942 = vst [vmem:[#allocation4 + $0x5a8] sm:$0x3] %v6860
        %v6943 = vld [vmem:[#allocation3 + $0x12] sm:$0xff]
        %v6944 = vld [vmem:[#allocation3 + $0x1a] sm:$0xff]
        %v6945 = vld [vmem:[#allocation3 + $0x22] sm:$0xff]
        %v6946 = vld [vmem:[#allocation3 + $0x2a] sm:$0xff]
        %v6947 = vld [vmem:[#allocation3 + $0x32] sm:$0xff]
        %v6948 = vld [vmem:[#allocation3 + $0x3a] sm:$0xff]
        %v6949 = vld [vmem:[#allocation3 + $0x42] sm:$0xff]
        %v6950 = vld [vmem:[#allocation3 + $0x4a] sm:$0xff]
        %v6951 = vld [vmem:[#allocation3 + $0x52] sm:$0xff]
        %v6952 = vld [vmem:[#allocation3 + $0x5a] sm:$0xff]
        %v6953 = vld [vmem:[#allocation3 + $0x62] sm:$0xff]
        %v6954 = vld [vmem:[#allocation3 + $0x6a] sm:$0xff]
        %v6955 = vld [vmem:[#allocation3 + $0x72] sm:$0xff]
        %v6956 = vld [vmem:[#allocation3 + $0x7a] sm:$0xff]
        %v6957 = vld [vmem:[#allocation3 + $0x82] sm:$0xff]
        %v6958 = vld [vmem:[#allocation3 + $0x8a] sm:$0xff]
        %v6959 = vld [vmem:[#allocation3 + $0x92] sm:$0xff]
        %v6960 = vld [vmem:[#allocation3 + $0x9a] sm:$0xff]
        %v6961 = vld [vmem:[#allocation3 + $0xa2] sm:$0xff]
        %v6962 = vld [vmem:[#allocation3 + $0xaa] sm:$0xff]
        %v6963 = vld [vmem:[#allocation3 + $0xb2] sm:$0xff]
        %v6964 = vld [vmem:[#allocation3 + $0xba] sm:$0xff]
        %v6965 = vld [vmem:[#allocation3 + $0xc2] sm:$0xff]
        %v6966 = vld [vmem:[#allocation3 + $0xca] sm:$0xff]
        %v6967 = vld [vmem:[#allocation3 + $0xd2] sm:$0xff]
        %v6968 = vld [vmem:[#allocation3 + $0xda] sm:$0xff]
        %v6969 = vld [vmem:[#allocation3 + $0xe2] sm:$0xff]
        %v6970 = vld [vmem:[#allocation3 + $0xea] sm:$0xff]
        %v6971 = vld [vmem:[#allocation3 + $0xf2] sm:$0xff]
        %v6972 = vld [vmem:[#allocation3 + $0xfa] sm:$0xff]
        %v6973 = vld [vmem:[#allocation3 + $0x102] sm:$0xff]
        %v6974 = vld [vmem:[#allocation3 + $0x10a] sm:$0xff]
        %v6975 = vld [vmem:[#allocation3 + $0x112] sm:$0xff]
        %v6976 = vld [vmem:[#allocation3 + $0x11a] sm:$0xff]
        %v6977 = vld [vmem:[#allocation3 + $0x122] sm:$0xff]
        %v6978 = vld [vmem:[#allocation3 + $0x12a] sm:$0xff]
        %v6979 = vld [vmem:[#allocation3 + $0x132] sm:$0xff]
        %v6980 = vld [vmem:[#allocation3 + $0x13a] sm:$0xff]
        %v6981 = vld [vmem:[#allocation3 + $0x142] sm:$0xff]
        %v6982 = vld [vmem:[#allocation3 + $0x14a] sm:$0xff]
        %v6983 = vld [vmem:[#allocation3 + $0x152] sm:$0xf]
        %v6984 = vpack.c.bf16 %v6944, %v6943
        %v6985 = vpack.c.bf16 %v6946, %v6945
        %v6986 = vpack.c.bf16 %v6948, %v6947
        %v6987 = vpack.c.bf16 %v6950, %v6949
        %v6988 = vpack.c.bf16 %v6952, %v6951
        %v6989 = vpack.c.bf16 %v6954, %v6953
        %v6990 = vpack.c.bf16 %v6956, %v6955
        %v6991 = vpack.c.bf16 %v6958, %v6957
        %v6992 = vpack.c.bf16 %v6960, %v6959
        %v6993 = vpack.c.bf16 %v6962, %v6961
        %v6994 = vpack.c.bf16 %v6964, %v6963
        %v6995 = vpack.c.bf16 %v6966, %v6965
        %v6996 = vpack.c.bf16 %v6968, %v6967
        %v6997 = vpack.c.bf16 %v6970, %v6969
        %v6998 = vpack.c.bf16 %v6972, %v6971
        %v6999 = vpack.c.bf16 %v6974, %v6973
        %v7000 = vpack.c.bf16 %v6976, %v6975
        %v7001 = vpack.c.bf16 %v6978, %v6977
        %v7002 = vpack.c.bf16 %v6980, %v6979
        %v7003 = vpack.c.bf16 %v6982, %v6981
        %v7004 = vpack.c.bf16 %v6983, %v6983
        %v7026 = vunpack.c.l.b16 %v6984
        %v7027 = vunpack.c.h.b16 %v6984
        %v7028 = vunpack.c.l.b16 %v6985
        %v7029 = vunpack.c.h.b16 %v6985
        %v7030 = vunpack.c.l.b16 %v6986
        %v7031 = vunpack.c.h.b16 %v6986
        %v7032 = vunpack.c.l.b16 %v6987
        %v7033 = vunpack.c.h.b16 %v6987
        %v7034 = vunpack.c.l.b16 %v6988
        %v7035 = vunpack.c.h.b16 %v6988
        %v7036 = vunpack.c.l.b16 %v6989
        %v7037 = vunpack.c.h.b16 %v6989
        %v7038 = vunpack.c.l.b16 %v6990
        %v7039 = vunpack.c.h.b16 %v6990
        %v7040 = vunpack.c.l.b16 %v6991
        %v7041 = vunpack.c.h.b16 %v6991
        %v7042 = vunpack.c.l.b16 %v6992
        %v7043 = vunpack.c.h.b16 %v6992
        %v7044 = vunpack.c.l.b16 %v6993
        %v7045 = vunpack.c.h.b16 %v6993
        %v7046 = vunpack.c.l.b16 %v6994
        %v7047 = vunpack.c.h.b16 %v6994
        %v7048 = vunpack.c.l.b16 %v6995
        %v7049 = vunpack.c.h.b16 %v6995
        %v7050 = vunpack.c.l.b16 %v6996
        %v7051 = vunpack.c.h.b16 %v6996
        %v7052 = vunpack.c.l.b16 %v6997
        %v7053 = vunpack.c.h.b16 %v6997
        %v7054 = vunpack.c.l.b16 %v6998
        %v7055 = vunpack.c.h.b16 %v6998
        %v7056 = vunpack.c.l.b16 %v6999
        %v7057 = vunpack.c.h.b16 %v6999
        %v7058 = vunpack.c.l.b16 %v7000
        %v7059 = vunpack.c.h.b16 %v7000
        %v7060 = vunpack.c.l.b16 %v7001
        %v7061 = vunpack.c.h.b16 %v7001
        %v7062 = vunpack.c.l.b16 %v7002
        %v7063 = vunpack.c.h.b16 %v7002
        %v7064 = vunpack.c.l.b16 %v7003
        %v7065 = vunpack.c.h.b16 %v7003
        %v7066 = vunpack.c.l.b16 %v7004
        %v7067 = vpack.c.b16 %v7026, %v7026
        %v7068 = vpack.c.b16 %v7027, %v7027
        %v7069 = vpack.c.b16 %v7028, %v7028
        %v7070 = vpack.c.b16 %v7029, %v7029
        %v7071 = vpack.c.b16 %v7030, %v7030
        %v7072 = vpack.c.b16 %v7031, %v7031
        %v7073 = vpack.c.b16 %v7032, %v7032
        %v7074 = vpack.c.b16 %v7033, %v7033
        %v7075 = vpack.c.b16 %v7034, %v7034
        %v7076 = vpack.c.b16 %v7035, %v7035
        %v7077 = vpack.c.b16 %v7036, %v7036
        %v7078 = vpack.c.b16 %v7037, %v7037
        %v7079 = vpack.c.b16 %v7038, %v7038
        %v7080 = vpack.c.b16 %v7039, %v7039
        %v7081 = vpack.c.b16 %v7040, %v7040
        %v7082 = vpack.c.b16 %v7041, %v7041
        %v7083 = vpack.c.b16 %v7042, %v7042
        %v7084 = vpack.c.b16 %v7043, %v7043
        %v7085 = vpack.c.b16 %v7044, %v7044
        %v7086 = vpack.c.b16 %v7045, %v7045
        %v7087 = vpack.c.b16 %v7046, %v7046
        %v7088 = vpack.c.b16 %v7047, %v7047
        %v7089 = vpack.c.b16 %v7048, %v7048
        %v7090 = vpack.c.b16 %v7049, %v7049
        %v7091 = vpack.c.b16 %v7050, %v7050
        %v7092 = vpack.c.b16 %v7051, %v7051
        %v7093 = vpack.c.b16 %v7052, %v7052
        %v7094 = vpack.c.b16 %v7053, %v7053
        %v7095 = vpack.c.b16 %v7054, %v7054
        %v7096 = vpack.c.b16 %v7055, %v7055
        %v7097 = vpack.c.b16 %v7056, %v7056
        %v7098 = vpack.c.b16 %v7057, %v7057
        %v7099 = vpack.c.b16 %v7058, %v7058
        %v7100 = vpack.c.b16 %v7059, %v7059
        %v7101 = vpack.c.b16 %v7060, %v7060
        %v7102 = vpack.c.b16 %v7061, %v7061
        %v7103 = vpack.c.b16 %v7062, %v7062
        %v7104 = vpack.c.b16 %v7063, %v7063
        %v7105 = vpack.c.b16 %v7064, %v7064
        %v7106 = vpack.c.b16 %v7065, %v7065
        %v7107 = vpack.c.b16 %v7066, %v7066
        %7149 = vst [vmem:[#allocation4 + $0xc] sm:$0xf] %v7067
        %7150 = vst [vmem:[#allocation4 + $0x30] sm:$0xf] %v7068
        %7151 = vst [vmem:[#allocation4 + $0x54] sm:$0xf] %v7069
        %7152 = vst [vmem:[#allocation4 + $0x78] sm:$0xf] %v7070
        %7153 = vst [vmem:[#allocation4 + $0x9c] sm:$0xf] %v7071
        %7154 = vst [vmem:[#allocation4 + $0xc0] sm:$0xf] %v7072
        %7155 = vst [vmem:[#allocation4 + $0xe4] sm:$0xf] %v7073
        %7156 = vst [vmem:[#allocation4 + $0x108] sm:$0xf] %v7074
        %7157 = vst [vmem:[#allocation4 + $0x12c] sm:$0xf] %v7075
        %7158 = vst [vmem:[#allocation4 + $0x150] sm:$0xf] %v7076
        %7159 = vst [vmem:[#allocation4 + $0x174] sm:$0xf] %v7077
        %7160 = vst [vmem:[#allocation4 + $0x198] sm:$0xf] %v7078
        %7161 = vst [vmem:[#allocation4 + $0x1bc] sm:$0xf] %v7079
        %7162 = vst [vmem:[#allocation4 + $0x1e0] sm:$0xf] %v7080
        %7163 = vst [vmem:[#allocation4 + $0x204] sm:$0xf] %v7081
        %7164 = vst [vmem:[#allocation4 + $0x228] sm:$0xf] %v7082
        %7165 = vst [vmem:[#allocation4 + $0x24c] sm:$0xf] %v7083
        %7166 = vst [vmem:[#allocation4 + $0x270] sm:$0xf] %v7084
        %7167 = vst [vmem:[#allocation4 + $0x294] sm:$0xf] %v7085
        %7168 = vst [vmem:[#allocation4 + $0x2b8] sm:$0xf] %v7086
        %7169 = vst [vmem:[#allocation4 + $0x2dc] sm:$0xf] %v7087
        %7170 = vst [vmem:[#allocation4 + $0x300] sm:$0xf] %v7088
        %7171 = vst [vmem:[#allocation4 + $0x324] sm:$0xf] %v7089
        %7172 = vst [vmem:[#allocation4 + $0x348] sm:$0xf] %v7090
        %7173 = vst [vmem:[#allocation4 + $0x36c] sm:$0xf] %v7091
        %7174 = vst [vmem:[#allocation4 + $0x390] sm:$0xf] %v7092
        %7175 = vst [vmem:[#allocation4 + $0x3b4] sm:$0xf] %v7093
        %7176 = vst [vmem:[#allocation4 + $0x3d8] sm:$0xf] %v7094
        %7177 = vst [vmem:[#allocation4 + $0x3fc] sm:$0xf] %v7095
        %7178 = vst [vmem:[#allocation4 + $0x420] sm:$0xf] %v7096
        %7179 = vst [vmem:[#allocation4 + $0x444] sm:$0xf] %v7097
        %7180 = vst [vmem:[#allocation4 + $0x468] sm:$0xf] %v7098
        %7181 = vst [vmem:[#allocation4 + $0x48c] sm:$0xf] %v7099
        %7182 = vst [vmem:[#allocation4 + $0x4b0] sm:$0xf] %v7100
        %7183 = vst [vmem:[#allocation4 + $0x4d4] sm:$0xf] %v7101
        %7184 = vst [vmem:[#allocation4 + $0x4f8] sm:$0xf] %v7102
        %7185 = vst [vmem:[#allocation4 + $0x51c] sm:$0xf] %v7103
        %7186 = vst [vmem:[#allocation4 + $0x540] sm:$0xf] %v7104
        %7187 = vst [vmem:[#allocation4 + $0x564] sm:$0xf] %v7105
        %7188 = vst [vmem:[#allocation4 + $0x588] sm:$0xf] %v7106
        %7189 = vst [vmem:[#allocation4 + $0x5ac] sm:$0x3] %v7107
        %v7190 = vld [vmem:[#allocation3 + $0x13] sm:$0xff]
        %v7191 = vld [vmem:[#allocation3 + $0x1b] sm:$0xff]
        %v7192 = vld [vmem:[#allocation3 + $0x23] sm:$0xff]
        %v7193 = vld [vmem:[#allocation3 + $0x2b] sm:$0xff]
        %v7194 = vld [vmem:[#allocation3 + $0x33] sm:$0xff]
        %v7195 = vld [vmem:[#allocation3 + $0x3b] sm:$0xff]
        %v7196 = vld [vmem:[#allocation3 + $0x43] sm:$0xff]
        %v7197 = vld [vmem:[#allocation3 + $0x4b] sm:$0xff]
        %v7198 = vld [vmem:[#allocation3 + $0x53] sm:$0xff]
        %v7199 = vld [vmem:[#allocation3 + $0x5b] sm:$0xff]
        %v7200 = vld [vmem:[#allocation3 + $0x63] sm:$0xff]
        %v7201 = vld [vmem:[#allocation3 + $0x6b] sm:$0xff]
        %v7202 = vld [vmem:[#allocation3 + $0x73] sm:$0xff]
        %v7203 = vld [vmem:[#allocation3 + $0x7b] sm:$0xff]
        %v7204 = vld [vmem:[#allocation3 + $0x83] sm:$0xff]
        %v7205 = vld [vmem:[#allocation3 + $0x8b] sm:$0xff]
        %v7206 = vld [vmem:[#allocation3 + $0x93] sm:$0xff]
        %v7207 = vld [vmem:[#allocation3 + $0x9b] sm:$0xff]
        %v7208 = vld [vmem:[#allocation3 + $0xa3] sm:$0xff]
        %v7209 = vld [vmem:[#allocation3 + $0xab] sm:$0xff]
        %v7210 = vld [vmem:[#allocation3 + $0xb3] sm:$0xff]
        %v7211 = vld [vmem:[#allocation3 + $0xbb] sm:$0xff]
        %v7212 = vld [vmem:[#allocation3 + $0xc3] sm:$0xff]
        %v7213 = vld [vmem:[#allocation3 + $0xcb] sm:$0xff]
        %v7214 = vld [vmem:[#allocation3 + $0xd3] sm:$0xff]
        %v7215 = vld [vmem:[#allocation3 + $0xdb] sm:$0xff]
        %v7216 = vld [vmem:[#allocation3 + $0xe3] sm:$0xff]
        %v7217 = vld [vmem:[#allocation3 + $0xeb] sm:$0xff]
        %v7218 = vld [vmem:[#allocation3 + $0xf3] sm:$0xff]
        %v7219 = vld [vmem:[#allocation3 + $0xfb] sm:$0xff]
        %v7220 = vld [vmem:[#allocation3 + $0x103] sm:$0xff]
        %v7221 = vld [vmem:[#allocation3 + $0x10b] sm:$0xff]
        %v7222 = vld [vmem:[#allocation3 + $0x113] sm:$0xff]
        %v7223 = vld [vmem:[#allocation3 + $0x11b] sm:$0xff]
        %v7224 = vld [vmem:[#allocation3 + $0x123] sm:$0xff]
        %v7225 = vld [vmem:[#allocation3 + $0x12b] sm:$0xff]
        %v7226 = vld [vmem:[#allocation3 + $0x133] sm:$0xff]
        %v7227 = vld [vmem:[#allocation3 + $0x13b] sm:$0xff]
        %v7228 = vld [vmem:[#allocation3 + $0x143] sm:$0xff]
        %v7229 = vld [vmem:[#allocation3 + $0x14b] sm:$0xff]
        %v7230 = vld [vmem:[#allocation3 + $0x153] sm:$0xf]
        %v7231 = vpack.c.bf16 %v7191, %v7190
        %v7232 = vpack.c.bf16 %v7193, %v7192
        %v7233 = vpack.c.bf16 %v7195, %v7194
        %v7234 = vpack.c.bf16 %v7197, %v7196
        %v7235 = vpack.c.bf16 %v7199, %v7198
        %v7236 = vpack.c.bf16 %v7201, %v7200
        %v7237 = vpack.c.bf16 %v7203, %v7202
        %v7238 = vpack.c.bf16 %v7205, %v7204
        %v7239 = vpack.c.bf16 %v7207, %v7206
        %v7240 = vpack.c.bf16 %v7209, %v7208
        %v7241 = vpack.c.bf16 %v7211, %v7210
        %v7242 = vpack.c.bf16 %v7213, %v7212
        %v7243 = vpack.c.bf16 %v7215, %v7214
        %v7244 = vpack.c.bf16 %v7217, %v7216
        %v7245 = vpack.c.bf16 %v7219, %v7218
        %v7246 = vpack.c.bf16 %v7221, %v7220
        %v7247 = vpack.c.bf16 %v7223, %v7222
        %v7248 = vpack.c.bf16 %v7225, %v7224
        %v7249 = vpack.c.bf16 %v7227, %v7226
        %v7250 = vpack.c.bf16 %v7229, %v7228
        %v7251 = vpack.c.bf16 %v7230, %v7230
        %v7273 = vunpack.c.l.b16 %v7231
        %v7274 = vunpack.c.h.b16 %v7231
        %v7275 = vunpack.c.l.b16 %v7232
        %v7276 = vunpack.c.h.b16 %v7232
        %v7277 = vunpack.c.l.b16 %v7233
        %v7278 = vunpack.c.h.b16 %v7233
        %v7279 = vunpack.c.l.b16 %v7234
        %v7280 = vunpack.c.h.b16 %v7234
        %v7281 = vunpack.c.l.b16 %v7235
        %v7282 = vunpack.c.h.b16 %v7235
        %v7283 = vunpack.c.l.b16 %v7236
        %v7284 = vunpack.c.h.b16 %v7236
        %v7285 = vunpack.c.l.b16 %v7237
        %v7286 = vunpack.c.h.b16 %v7237
        %v7287 = vunpack.c.l.b16 %v7238
        %v7288 = vunpack.c.h.b16 %v7238
        %v7289 = vunpack.c.l.b16 %v7239
        %v7290 = vunpack.c.h.b16 %v7239
        %v7291 = vunpack.c.l.b16 %v7240
        %v7292 = vunpack.c.h.b16 %v7240
        %v7293 = vunpack.c.l.b16 %v7241
        %v7294 = vunpack.c.h.b16 %v7241
        %v7295 = vunpack.c.l.b16 %v7242
        %v7296 = vunpack.c.h.b16 %v7242
        %v7297 = vunpack.c.l.b16 %v7243
        %v7298 = vunpack.c.h.b16 %v7243
        %v7299 = vunpack.c.l.b16 %v7244
        %v7300 = vunpack.c.h.b16 %v7244
        %v7301 = vunpack.c.l.b16 %v7245
        %v7302 = vunpack.c.h.b16 %v7245
        %v7303 = vunpack.c.l.b16 %v7246
        %v7304 = vunpack.c.h.b16 %v7246
        %v7305 = vunpack.c.l.b16 %v7247
        %v7306 = vunpack.c.h.b16 %v7247
        %v7307 = vunpack.c.l.b16 %v7248
        %v7308 = vunpack.c.h.b16 %v7248
        %v7309 = vunpack.c.l.b16 %v7249
        %v7310 = vunpack.c.h.b16 %v7249
        %v7311 = vunpack.c.l.b16 %v7250
        %v7312 = vunpack.c.h.b16 %v7250
        %v7313 = vunpack.c.l.b16 %v7251
        %v7314 = vpack.c.b16 %v7273, %v7273
        %v7315 = vpack.c.b16 %v7274, %v7274
        %v7316 = vpack.c.b16 %v7275, %v7275
        %v7317 = vpack.c.b16 %v7276, %v7276
        %v7318 = vpack.c.b16 %v7277, %v7277
        %v7319 = vpack.c.b16 %v7278, %v7278
        %v7320 = vpack.c.b16 %v7279, %v7279
        %v7321 = vpack.c.b16 %v7280, %v7280
        %v7322 = vpack.c.b16 %v7281, %v7281
        %v7323 = vpack.c.b16 %v7282, %v7282
        %v7324 = vpack.c.b16 %v7283, %v7283
        %v7325 = vpack.c.b16 %v7284, %v7284
        %v7326 = vpack.c.b16 %v7285, %v7285
        %v7327 = vpack.c.b16 %v7286, %v7286
        %v7328 = vpack.c.b16 %v7287, %v7287
        %v7329 = vpack.c.b16 %v7288, %v7288
        %v7330 = vpack.c.b16 %v7289, %v7289
        %v7331 = vpack.c.b16 %v7290, %v7290
        %v7332 = vpack.c.b16 %v7291, %v7291
        %v7333 = vpack.c.b16 %v7292, %v7292
        %v7334 = vpack.c.b16 %v7293, %v7293
        %v7335 = vpack.c.b16 %v7294, %v7294
        %v7336 = vpack.c.b16 %v7295, %v7295
        %v7337 = vpack.c.b16 %v7296, %v7296
        %v7338 = vpack.c.b16 %v7297, %v7297
        %v7339 = vpack.c.b16 %v7298, %v7298
        %v7340 = vpack.c.b16 %v7299, %v7299
        %v7341 = vpack.c.b16 %v7300, %v7300
        %v7342 = vpack.c.b16 %v7301, %v7301
        %v7343 = vpack.c.b16 %v7302, %v7302
        %v7344 = vpack.c.b16 %v7303, %v7303
        %v7345 = vpack.c.b16 %v7304, %v7304
        %v7346 = vpack.c.b16 %v7305, %v7305
        %v7347 = vpack.c.b16 %v7306, %v7306
        %v7348 = vpack.c.b16 %v7307, %v7307
        %v7349 = vpack.c.b16 %v7308, %v7308
        %v7350 = vpack.c.b16 %v7309, %v7309
        %v7351 = vpack.c.b16 %v7310, %v7310
        %v7352 = vpack.c.b16 %v7311, %v7311
        %v7353 = vpack.c.b16 %v7312, %v7312
        %v7354 = vpack.c.b16 %v7313, %v7313
        %7396 = vst [vmem:[#allocation4 + $0x10] sm:$0xf] %v7314
        %7397 = vst [vmem:[#allocation4 + $0x34] sm:$0xf] %v7315
        %7398 = vst [vmem:[#allocation4 + $0x58] sm:$0xf] %v7316
        %7399 = vst [vmem:[#allocation4 + $0x7c] sm:$0xf] %v7317
        %7400 = vst [vmem:[#allocation4 + $0xa0] sm:$0xf] %v7318
        %7401 = vst [vmem:[#allocation4 + $0xc4] sm:$0xf] %v7319
        %7402 = vst [vmem:[#allocation4 + $0xe8] sm:$0xf] %v7320
        %7403 = vst [vmem:[#allocation4 + $0x10c] sm:$0xf] %v7321
        %7404 = vst [vmem:[#allocation4 + $0x130] sm:$0xf] %v7322
        %7405 = vst [vmem:[#allocation4 + $0x154] sm:$0xf] %v7323
        %7406 = vst [vmem:[#allocation4 + $0x178] sm:$0xf] %v7324
        %7407 = vst [vmem:[#allocation4 + $0x19c] sm:$0xf] %v7325
        %7408 = vst [vmem:[#allocation4 + $0x1c0] sm:$0xf] %v7326
        %7409 = vst [vmem:[#allocation4 + $0x1e4] sm:$0xf] %v7327
        %7410 = vst [vmem:[#allocation4 + $0x208] sm:$0xf] %v7328
        %7411 = vst [vmem:[#allocation4 + $0x22c] sm:$0xf] %v7329
        %7412 = vst [vmem:[#allocation4 + $0x250] sm:$0xf] %v7330
        %7413 = vst [vmem:[#allocation4 + $0x274] sm:$0xf] %v7331
        %7414 = vst [vmem:[#allocation4 + $0x298] sm:$0xf] %v7332
        %7415 = vst [vmem:[#allocation4 + $0x2bc] sm:$0xf] %v7333
        %7416 = vst [vmem:[#allocation4 + $0x2e0] sm:$0xf] %v7334
        %7417 = vst [vmem:[#allocation4 + $0x304] sm:$0xf] %v7335
        %7418 = vst [vmem:[#allocation4 + $0x328] sm:$0xf] %v7336
        %7419 = vst [vmem:[#allocation4 + $0x34c] sm:$0xf] %v7337
        %7420 = vst [vmem:[#allocation4 + $0x370] sm:$0xf] %v7338
        %7421 = vst [vmem:[#allocation4 + $0x394] sm:$0xf] %v7339
        %7422 = vst [vmem:[#allocation4 + $0x3b8] sm:$0xf] %v7340
        %7423 = vst [vmem:[#allocation4 + $0x3dc] sm:$0xf] %v7341
        %7424 = vst [vmem:[#allocation4 + $0x400] sm:$0xf] %v7342
        %7425 = vst [vmem:[#allocation4 + $0x424] sm:$0xf] %v7343
        %7426 = vst [vmem:[#allocation4 + $0x448] sm:$0xf] %v7344
        %7427 = vst [vmem:[#allocation4 + $0x46c] sm:$0xf] %v7345
        %7428 = vst [vmem:[#allocation4 + $0x490] sm:$0xf] %v7346
        %7429 = vst [vmem:[#allocation4 + $0x4b4] sm:$0xf] %v7347
        %7430 = vst [vmem:[#allocation4 + $0x4d8] sm:$0xf] %v7348
        %7431 = vst [vmem:[#allocation4 + $0x4fc] sm:$0xf] %v7349
        %7432 = vst [vmem:[#allocation4 + $0x520] sm:$0xf] %v7350
        %7433 = vst [vmem:[#allocation4 + $0x544] sm:$0xf] %v7351
        %7434 = vst [vmem:[#allocation4 + $0x568] sm:$0xf] %v7352
        %7435 = vst [vmem:[#allocation4 + $0x58c] sm:$0xf] %v7353
        %7436 = vst [vmem:[#allocation4 + $0x5b0] sm:$0x3] %v7354
        %v7437 = vld [vmem:[#allocation3 + $0x14] sm:$0xff]
        %v7438 = vld [vmem:[#allocation3 + $0x1c] sm:$0xff]
        %v7439 = vld [vmem:[#allocation3 + $0x24] sm:$0xff]
        %v7440 = vld [vmem:[#allocation3 + $0x2c] sm:$0xff]
        %v7441 = vld [vmem:[#allocation3 + $0x34] sm:$0xff]
        %v7442 = vld [vmem:[#allocation3 + $0x3c] sm:$0xff]
        %v7443 = vld [vmem:[#allocation3 + $0x44] sm:$0xff]
        %v7444 = vld [vmem:[#allocation3 + $0x4c] sm:$0xff]
        %v7445 = vld [vmem:[#allocation3 + $0x54] sm:$0xff]
        %v7446 = vld [vmem:[#allocation3 + $0x5c] sm:$0xff]
        %v7447 = vld [vmem:[#allocation3 + $0x64] sm:$0xff]
        %v7448 = vld [vmem:[#allocation3 + $0x6c] sm:$0xff]
        %v7449 = vld [vmem:[#allocation3 + $0x74] sm:$0xff]
        %v7450 = vld [vmem:[#allocation3 + $0x7c] sm:$0xff]
        %v7451 = vld [vmem:[#allocation3 + $0x84] sm:$0xff]
        %v7452 = vld [vmem:[#allocation3 + $0x8c] sm:$0xff]
        %v7453 = vld [vmem:[#allocation3 + $0x94] sm:$0xff]
        %v7454 = vld [vmem:[#allocation3 + $0x9c] sm:$0xff]
        %v7455 = vld [vmem:[#allocation3 + $0xa4] sm:$0xff]
        %v7456 = vld [vmem:[#allocation3 + $0xac] sm:$0xff]
        %v7457 = vld [vmem:[#allocation3 + $0xb4] sm:$0xff]
        %v7458 = vld [vmem:[#allocation3 + $0xbc] sm:$0xff]
        %v7459 = vld [vmem:[#allocation3 + $0xc4] sm:$0xff]
        %v7460 = vld [vmem:[#allocation3 + $0xcc] sm:$0xff]
        %v7461 = vld [vmem:[#allocation3 + $0xd4] sm:$0xff]
        %v7462 = vld [vmem:[#allocation3 + $0xdc] sm:$0xff]
        %v7463 = vld [vmem:[#allocation3 + $0xe4] sm:$0xff]
        %v7464 = vld [vmem:[#allocation3 + $0xec] sm:$0xff]
        %v7465 = vld [vmem:[#allocation3 + $0xf4] sm:$0xff]
        %v7466 = vld [vmem:[#allocation3 + $0xfc] sm:$0xff]
        %v7467 = vld [vmem:[#allocation3 + $0x104] sm:$0xff]
        %v7468 = vld [vmem:[#allocation3 + $0x10c] sm:$0xff]
        %v7469 = vld [vmem:[#allocation3 + $0x114] sm:$0xff]
        %v7470 = vld [vmem:[#allocation3 + $0x11c] sm:$0xff]
        %v7471 = vld [vmem:[#allocation3 + $0x124] sm:$0xff]
        %v7472 = vld [vmem:[#allocation3 + $0x12c] sm:$0xff]
        %v7473 = vld [vmem:[#allocation3 + $0x134] sm:$0xff]
        %v7474 = vld [vmem:[#allocation3 + $0x13c] sm:$0xff]
        %v7475 = vld [vmem:[#allocation3 + $0x144] sm:$0xff]
        %v7476 = vld [vmem:[#allocation3 + $0x14c] sm:$0xff]
        %v7477 = vld [vmem:[#allocation3 + $0x154] sm:$0xf]
        %v7478 = vpack.c.bf16 %v7438, %v7437
        %v7479 = vpack.c.bf16 %v7440, %v7439
        %v7480 = vpack.c.bf16 %v7442, %v7441
        %v7481 = vpack.c.bf16 %v7444, %v7443
        %v7482 = vpack.c.bf16 %v7446, %v7445
        %v7483 = vpack.c.bf16 %v7448, %v7447
        %v7484 = vpack.c.bf16 %v7450, %v7449
        %v7485 = vpack.c.bf16 %v7452, %v7451
        %v7486 = vpack.c.bf16 %v7454, %v7453
        %v7487 = vpack.c.bf16 %v7456, %v7455
        %v7488 = vpack.c.bf16 %v7458, %v7457
        %v7489 = vpack.c.bf16 %v7460, %v7459
        %v7490 = vpack.c.bf16 %v7462, %v7461
        %v7491 = vpack.c.bf16 %v7464, %v7463
        %v7492 = vpack.c.bf16 %v7466, %v7465
        %v7493 = vpack.c.bf16 %v7468, %v7467
        %v7494 = vpack.c.bf16 %v7470, %v7469
        %v7495 = vpack.c.bf16 %v7472, %v7471
        %v7496 = vpack.c.bf16 %v7474, %v7473
        %v7497 = vpack.c.bf16 %v7476, %v7475
        %v7498 = vpack.c.bf16 %v7477, %v7477
        %v7520 = vunpack.c.l.b16 %v7478
        %v7521 = vunpack.c.h.b16 %v7478
        %v7522 = vunpack.c.l.b16 %v7479
        %v7523 = vunpack.c.h.b16 %v7479
        %v7524 = vunpack.c.l.b16 %v7480
        %v7525 = vunpack.c.h.b16 %v7480
        %v7526 = vunpack.c.l.b16 %v7481
        %v7527 = vunpack.c.h.b16 %v7481
        %v7528 = vunpack.c.l.b16 %v7482
        %v7529 = vunpack.c.h.b16 %v7482
        %v7530 = vunpack.c.l.b16 %v7483
        %v7531 = vunpack.c.h.b16 %v7483
        %v7532 = vunpack.c.l.b16 %v7484
        %v7533 = vunpack.c.h.b16 %v7484
        %v7534 = vunpack.c.l.b16 %v7485
        %v7535 = vunpack.c.h.b16 %v7485
        %v7536 = vunpack.c.l.b16 %v7486
        %v7537 = vunpack.c.h.b16 %v7486
        %v7538 = vunpack.c.l.b16 %v7487
        %v7539 = vunpack.c.h.b16 %v7487
        %v7540 = vunpack.c.l.b16 %v7488
        %v7541 = vunpack.c.h.b16 %v7488
        %v7542 = vunpack.c.l.b16 %v7489
        %v7543 = vunpack.c.h.b16 %v7489
        %v7544 = vunpack.c.l.b16 %v7490
        %v7545 = vunpack.c.h.b16 %v7490
        %v7546 = vunpack.c.l.b16 %v7491
        %v7547 = vunpack.c.h.b16 %v7491
        %v7548 = vunpack.c.l.b16 %v7492
        %v7549 = vunpack.c.h.b16 %v7492
        %v7550 = vunpack.c.l.b16 %v7493
        %v7551 = vunpack.c.h.b16 %v7493
        %v7552 = vunpack.c.l.b16 %v7494
        %v7553 = vunpack.c.h.b16 %v7494
        %v7554 = vunpack.c.l.b16 %v7495
        %v7555 = vunpack.c.h.b16 %v7495
        %v7556 = vunpack.c.l.b16 %v7496
        %v7557 = vunpack.c.h.b16 %v7496
        %v7558 = vunpack.c.l.b16 %v7497
        %v7559 = vunpack.c.h.b16 %v7497
        %v7560 = vunpack.c.l.b16 %v7498
        %v7561 = vpack.c.b16 %v7520, %v7520
        %v7562 = vpack.c.b16 %v7521, %v7521
        %v7563 = vpack.c.b16 %v7522, %v7522
        %v7564 = vpack.c.b16 %v7523, %v7523
        %v7565 = vpack.c.b16 %v7524, %v7524
        %v7566 = vpack.c.b16 %v7525, %v7525
        %v7567 = vpack.c.b16 %v7526, %v7526
        %v7568 = vpack.c.b16 %v7527, %v7527
        %v7569 = vpack.c.b16 %v7528, %v7528
        %v7570 = vpack.c.b16 %v7529, %v7529
        %v7571 = vpack.c.b16 %v7530, %v7530
        %v7572 = vpack.c.b16 %v7531, %v7531
        %v7573 = vpack.c.b16 %v7532, %v7532
        %v7574 = vpack.c.b16 %v7533, %v7533
        %v7575 = vpack.c.b16 %v7534, %v7534
        %v7576 = vpack.c.b16 %v7535, %v7535
        %v7577 = vpack.c.b16 %v7536, %v7536
        %v7578 = vpack.c.b16 %v7537, %v7537
        %v7579 = vpack.c.b16 %v7538, %v7538
        %v7580 = vpack.c.b16 %v7539, %v7539
        %v7581 = vpack.c.b16 %v7540, %v7540
        %v7582 = vpack.c.b16 %v7541, %v7541
        %v7583 = vpack.c.b16 %v7542, %v7542
        %v7584 = vpack.c.b16 %v7543, %v7543
        %v7585 = vpack.c.b16 %v7544, %v7544
        %v7586 = vpack.c.b16 %v7545, %v7545
        %v7587 = vpack.c.b16 %v7546, %v7546
        %v7588 = vpack.c.b16 %v7547, %v7547
        %v7589 = vpack.c.b16 %v7548, %v7548
        %v7590 = vpack.c.b16 %v7549, %v7549
        %v7591 = vpack.c.b16 %v7550, %v7550
        %v7592 = vpack.c.b16 %v7551, %v7551
        %v7593 = vpack.c.b16 %v7552, %v7552
        %v7594 = vpack.c.b16 %v7553, %v7553
        %v7595 = vpack.c.b16 %v7554, %v7554
        %v7596 = vpack.c.b16 %v7555, %v7555
        %v7597 = vpack.c.b16 %v7556, %v7556
        %v7598 = vpack.c.b16 %v7557, %v7557
        %v7599 = vpack.c.b16 %v7558, %v7558
        %v7600 = vpack.c.b16 %v7559, %v7559
        %v7601 = vpack.c.b16 %v7560, %v7560
        %7643 = vst [vmem:[#allocation4 + $0x14] sm:$0xf] %v7561
        %7644 = vst [vmem:[#allocation4 + $0x38] sm:$0xf] %v7562
        %7645 = vst [vmem:[#allocation4 + $0x5c] sm:$0xf] %v7563
        %7646 = vst [vmem:[#allocation4 + $0x80] sm:$0xf] %v7564
        %7647 = vst [vmem:[#allocation4 + $0xa4] sm:$0xf] %v7565
        %7648 = vst [vmem:[#allocation4 + $0xc8] sm:$0xf] %v7566
        %7649 = vst [vmem:[#allocation4 + $0xec] sm:$0xf] %v7567
        %7650 = vst [vmem:[#allocation4 + $0x110] sm:$0xf] %v7568
        %7651 = vst [vmem:[#allocation4 + $0x134] sm:$0xf] %v7569
        %7652 = vst [vmem:[#allocation4 + $0x158] sm:$0xf] %v7570
        %7653 = vst [vmem:[#allocation4 + $0x17c] sm:$0xf] %v7571
        %7654 = vst [vmem:[#allocation4 + $0x1a0] sm:$0xf] %v7572
        %7655 = vst [vmem:[#allocation4 + $0x1c4] sm:$0xf] %v7573
        %7656 = vst [vmem:[#allocation4 + $0x1e8] sm:$0xf] %v7574
        %7657 = vst [vmem:[#allocation4 + $0x20c] sm:$0xf] %v7575
        %7658 = vst [vmem:[#allocation4 + $0x230] sm:$0xf] %v7576
        %7659 = vst [vmem:[#allocation4 + $0x254] sm:$0xf] %v7577
        %7660 = vst [vmem:[#allocation4 + $0x278] sm:$0xf] %v7578
        %7661 = vst [vmem:[#allocation4 + $0x29c] sm:$0xf] %v7579
        %7662 = vst [vmem:[#allocation4 + $0x2c0] sm:$0xf] %v7580
        %7663 = vst [vmem:[#allocation4 + $0x2e4] sm:$0xf] %v7581
        %7664 = vst [vmem:[#allocation4 + $0x308] sm:$0xf] %v7582
        %7665 = vst [vmem:[#allocation4 + $0x32c] sm:$0xf] %v7583
        %7666 = vst [vmem:[#allocation4 + $0x350] sm:$0xf] %v7584
        %7667 = vst [vmem:[#allocation4 + $0x374] sm:$0xf] %v7585
        %7668 = vst [vmem:[#allocation4 + $0x398] sm:$0xf] %v7586
        %7669 = vst [vmem:[#allocation4 + $0x3bc] sm:$0xf] %v7587
        %7670 = vst [vmem:[#allocation4 + $0x3e0] sm:$0xf] %v7588
        %7671 = vst [vmem:[#allocation4 + $0x404] sm:$0xf] %v7589
        %7672 = vst [vmem:[#allocation4 + $0x428] sm:$0xf] %v7590
        %7673 = vst [vmem:[#allocation4 + $0x44c] sm:$0xf] %v7591
        %7674 = vst [vmem:[#allocation4 + $0x470] sm:$0xf] %v7592
        %7675 = vst [vmem:[#allocation4 + $0x494] sm:$0xf] %v7593
        %7676 = vst [vmem:[#allocation4 + $0x4b8] sm:$0xf] %v7594
        %7677 = vst [vmem:[#allocation4 + $0x4dc] sm:$0xf] %v7595
        %7678 = vst [vmem:[#allocation4 + $0x500] sm:$0xf] %v7596
        %7679 = vst [vmem:[#allocation4 + $0x524] sm:$0xf] %v7597
        %7680 = vst [vmem:[#allocation4 + $0x548] sm:$0xf] %v7598
        %7681 = vst [vmem:[#allocation4 + $0x56c] sm:$0xf] %v7599
        %7682 = vst [vmem:[#allocation4 + $0x590] sm:$0xf] %v7600
        %7683 = vst [vmem:[#allocation4 + $0x5b4] sm:$0x3] %v7601
        %v7684 = vld [vmem:[#allocation3 + $0x24] sm:$0xff]
        %v7685 = vld [vmem:[#allocation3 + $0x2c] sm:$0xff]
        %v7686 = vld [vmem:[#allocation3 + $0x34] sm:$0xff]
        %v7687 = vld [vmem:[#allocation3 + $0x3c] sm:$0xff]
        %v7688 = vld [vmem:[#allocation3 + $0x44] sm:$0xff]
        %v7689 = vld [vmem:[#allocation3 + $0x4c] sm:$0xff]
        %v7690 = vld [vmem:[#allocation3 + $0x54] sm:$0xff]
        %v7691 = vld [vmem:[#allocation3 + $0x5c] sm:$0xff]
        %v7692 = vld [vmem:[#allocation3 + $0x64] sm:$0xff]
        %v7693 = vld [vmem:[#allocation3 + $0x6c] sm:$0xff]
        %v7694 = vld [vmem:[#allocation3 + $0x74] sm:$0xff]
        %v7695 = vld [vmem:[#allocation3 + $0x7c] sm:$0xff]
        %v7696 = vld [vmem:[#allocation3 + $0x84] sm:$0xff]
        %v7697 = vld [vmem:[#allocation3 + $0x8c] sm:$0xff]
        %v7698 = vld [vmem:[#allocation3 + $0x94] sm:$0xff]
        %v7699 = vld [vmem:[#allocation3 + $0x9c] sm:$0xff]
        %v7700 = vld [vmem:[#allocation3 + $0xa4] sm:$0xff]
        %v7701 = vld [vmem:[#allocation3 + $0xac] sm:$0xff]
        %v7702 = vld [vmem:[#allocation3 + $0xb4] sm:$0xff]
        %v7703 = vld [vmem:[#allocation3 + $0xbc] sm:$0xff]
        %v7704 = vld [vmem:[#allocation3 + $0xc4] sm:$0xff]
        %v7705 = vld [vmem:[#allocation3 + $0xcc] sm:$0xff]
        %v7706 = vld [vmem:[#allocation3 + $0xd4] sm:$0xff]
        %v7707 = vld [vmem:[#allocation3 + $0xdc] sm:$0xff]
        %v7708 = vld [vmem:[#allocation3 + $0xe4] sm:$0xff]
        %v7709 = vld [vmem:[#allocation3 + $0xec] sm:$0xff]
        %v7710 = vld [vmem:[#allocation3 + $0xf4] sm:$0xff]
        %v7711 = vld [vmem:[#allocation3 + $0xfc] sm:$0xff]
        %v7712 = vld [vmem:[#allocation3 + $0x104] sm:$0xff]
        %v7713 = vld [vmem:[#allocation3 + $0x10c] sm:$0xff]
        %v7714 = vld [vmem:[#allocation3 + $0x114] sm:$0xff]
        %v7715 = vld [vmem:[#allocation3 + $0x11c] sm:$0xff]
        %v7716 = vld [vmem:[#allocation3 + $0x124] sm:$0xff]
        %v7717 = vld [vmem:[#allocation3 + $0x12c] sm:$0xff]
        %v7718 = vld [vmem:[#allocation3 + $0x134] sm:$0xff]
        %v7719 = vld [vmem:[#allocation3 + $0x13c] sm:$0xff]
        %v7720 = vld [vmem:[#allocation3 + $0x144] sm:$0xff]
        %v7721 = vld [vmem:[#allocation3 + $0x14c] sm:$0xff]
        %v7722 = vld [vmem:[#allocation3 + $0x154] sm:$0xff]
        %v7723 = vld [vmem:[#allocation3 + $0x15c] sm:$0xff]
        %v7724 = vld [vmem:[#allocation3 + $0x164] sm:$0xf]
        %v7725 = vpack.c.bf16 %v7685, %v7684
        %v7726 = vpack.c.bf16 %v7687, %v7686
        %v7727 = vpack.c.bf16 %v7689, %v7688
        %v7728 = vpack.c.bf16 %v7691, %v7690
        %v7729 = vpack.c.bf16 %v7693, %v7692
        %v7730 = vpack.c.bf16 %v7695, %v7694
        %v7731 = vpack.c.bf16 %v7697, %v7696
        %v7732 = vpack.c.bf16 %v7699, %v7698
        %v7733 = vpack.c.bf16 %v7701, %v7700
        %v7734 = vpack.c.bf16 %v7703, %v7702
        %v7735 = vpack.c.bf16 %v7705, %v7704
        %v7736 = vpack.c.bf16 %v7707, %v7706
        %v7737 = vpack.c.bf16 %v7709, %v7708
        %v7738 = vpack.c.bf16 %v7711, %v7710
        %v7739 = vpack.c.bf16 %v7713, %v7712
        %v7740 = vpack.c.bf16 %v7715, %v7714
        %v7741 = vpack.c.bf16 %v7717, %v7716
        %v7742 = vpack.c.bf16 %v7719, %v7718
        %v7743 = vpack.c.bf16 %v7721, %v7720
        %v7744 = vpack.c.bf16 %v7723, %v7722
        %v7745 = vpack.c.bf16 %v7724, %v7724
        %v7767 = vunpack.c.l.b16 %v7725
        %v7768 = vunpack.c.h.b16 %v7725
        %v7769 = vunpack.c.l.b16 %v7726
        %v7770 = vunpack.c.h.b16 %v7726
        %v7771 = vunpack.c.l.b16 %v7727
        %v7772 = vunpack.c.h.b16 %v7727
        %v7773 = vunpack.c.l.b16 %v7728
        %v7774 = vunpack.c.h.b16 %v7728
        %v7775 = vunpack.c.l.b16 %v7729
        %v7776 = vunpack.c.h.b16 %v7729
        %v7777 = vunpack.c.l.b16 %v7730
        %v7778 = vunpack.c.h.b16 %v7730
        %v7779 = vunpack.c.l.b16 %v7731
        %v7780 = vunpack.c.h.b16 %v7731
        %v7781 = vunpack.c.l.b16 %v7732
        %v7782 = vunpack.c.h.b16 %v7732
        %v7783 = vunpack.c.l.b16 %v7733
        %v7784 = vunpack.c.h.b16 %v7733
        %v7785 = vunpack.c.l.b16 %v7734
        %v7786 = vunpack.c.h.b16 %v7734
        %v7787 = vunpack.c.l.b16 %v7735
        %v7788 = vunpack.c.h.b16 %v7735
        %v7789 = vunpack.c.l.b16 %v7736
        %v7790 = vunpack.c.h.b16 %v7736
        %v7791 = vunpack.c.l.b16 %v7737
        %v7792 = vunpack.c.h.b16 %v7737
        %v7793 = vunpack.c.l.b16 %v7738
        %v7794 = vunpack.c.h.b16 %v7738
        %v7795 = vunpack.c.l.b16 %v7739
        %v7796 = vunpack.c.h.b16 %v7739
        %v7797 = vunpack.c.l.b16 %v7740
        %v7798 = vunpack.c.h.b16 %v7740
        %v7799 = vunpack.c.l.b16 %v7741
        %v7800 = vunpack.c.h.b16 %v7741
        %v7801 = vunpack.c.l.b16 %v7742
        %v7802 = vunpack.c.h.b16 %v7742
        %v7803 = vunpack.c.l.b16 %v7743
        %v7804 = vunpack.c.h.b16 %v7743
        %v7805 = vunpack.c.l.b16 %v7744
        %v7806 = vunpack.c.h.b16 %v7744
        %v7807 = vunpack.c.l.b16 %v7745
        %v7808 = vpack.c.b16 %v7767, %v7767
        %v7809 = vpack.c.b16 %v7768, %v7768
        %v7810 = vpack.c.b16 %v7769, %v7769
        %v7811 = vpack.c.b16 %v7770, %v7770
        %v7812 = vpack.c.b16 %v7771, %v7771
        %v7813 = vpack.c.b16 %v7772, %v7772
        %v7814 = vpack.c.b16 %v7773, %v7773
        %v7815 = vpack.c.b16 %v7774, %v7774
        %v7816 = vpack.c.b16 %v7775, %v7775
        %v7817 = vpack.c.b16 %v7776, %v7776
        %v7818 = vpack.c.b16 %v7777, %v7777
        %v7819 = vpack.c.b16 %v7778, %v7778
        %v7820 = vpack.c.b16 %v7779, %v7779
        %v7821 = vpack.c.b16 %v7780, %v7780
        %v7822 = vpack.c.b16 %v7781, %v7781
        %v7823 = vpack.c.b16 %v7782, %v7782
        %v7824 = vpack.c.b16 %v7783, %v7783
        %v7825 = vpack.c.b16 %v7784, %v7784
        %v7826 = vpack.c.b16 %v7785, %v7785
        %v7827 = vpack.c.b16 %v7786, %v7786
        %v7828 = vpack.c.b16 %v7787, %v7787
        %v7829 = vpack.c.b16 %v7788, %v7788
        %v7830 = vpack.c.b16 %v7789, %v7789
        %v7831 = vpack.c.b16 %v7790, %v7790
        %v7832 = vpack.c.b16 %v7791, %v7791
        %v7833 = vpack.c.b16 %v7792, %v7792
        %v7834 = vpack.c.b16 %v7793, %v7793
        %v7835 = vpack.c.b16 %v7794, %v7794
        %v7836 = vpack.c.b16 %v7795, %v7795
        %v7837 = vpack.c.b16 %v7796, %v7796
        %v7838 = vpack.c.b16 %v7797, %v7797
        %v7839 = vpack.c.b16 %v7798, %v7798
        %v7840 = vpack.c.b16 %v7799, %v7799
        %v7841 = vpack.c.b16 %v7800, %v7800
        %v7842 = vpack.c.b16 %v7801, %v7801
        %v7843 = vpack.c.b16 %v7802, %v7802
        %v7844 = vpack.c.b16 %v7803, %v7803
        %v7845 = vpack.c.b16 %v7804, %v7804
        %v7846 = vpack.c.b16 %v7805, %v7805
        %v7847 = vpack.c.b16 %v7806, %v7806
        %v7848 = vpack.c.b16 %v7807, %v7807
        %7890 = vst [vmem:[#allocation4 + $0x18] sm:$0xf] %v7808
        %7891 = vst [vmem:[#allocation4 + $0x3c] sm:$0xf] %v7809
        %7892 = vst [vmem:[#allocation4 + $0x60] sm:$0xf] %v7810
        %7893 = vst [vmem:[#allocation4 + $0x84] sm:$0xf] %v7811
        %7894 = vst [vmem:[#allocation4 + $0xa8] sm:$0xf] %v7812
        %7895 = vst [vmem:[#allocation4 + $0xcc] sm:$0xf] %v7813
        %7896 = vst [vmem:[#allocation4 + $0xf0] sm:$0xf] %v7814
        %7897 = vst [vmem:[#allocation4 + $0x114] sm:$0xf] %v7815
        %7898 = vst [vmem:[#allocation4 + $0x138] sm:$0xf] %v7816
        %7899 = vst [vmem:[#allocation4 + $0x15c] sm:$0xf] %v7817
        %7900 = vst [vmem:[#allocation4 + $0x180] sm:$0xf] %v7818
        %7901 = vst [vmem:[#allocation4 + $0x1a4] sm:$0xf] %v7819
        %7902 = vst [vmem:[#allocation4 + $0x1c8] sm:$0xf] %v7820
        %7903 = vst [vmem:[#allocation4 + $0x1ec] sm:$0xf] %v7821
        %7904 = vst [vmem:[#allocation4 + $0x210] sm:$0xf] %v7822
        %7905 = vst [vmem:[#allocation4 + $0x234] sm:$0xf] %v7823
        %7906 = vst [vmem:[#allocation4 + $0x258] sm:$0xf] %v7824
        %7907 = vst [vmem:[#allocation4 + $0x27c] sm:$0xf] %v7825
        %7908 = vst [vmem:[#allocation4 + $0x2a0] sm:$0xf] %v7826
        %7909 = vst [vmem:[#allocation4 + $0x2c4] sm:$0xf] %v7827
        %7910 = vst [vmem:[#allocation4 + $0x2e8] sm:$0xf] %v7828
        %7911 = vst [vmem:[#allocation4 + $0x30c] sm:$0xf] %v7829
        %7912 = vst [vmem:[#allocation4 + $0x330] sm:$0xf] %v7830
        %7913 = vst [vmem:[#allocation4 + $0x354] sm:$0xf] %v7831
        %7914 = vst [vmem:[#allocation4 + $0x378] sm:$0xf] %v7832
        %7915 = vst [vmem:[#allocation4 + $0x39c] sm:$0xf] %v7833
        %7916 = vst [vmem:[#allocation4 + $0x3c0] sm:$0xf] %v7834
        %7917 = vst [vmem:[#allocation4 + $0x3e4] sm:$0xf] %v7835
        %7918 = vst [vmem:[#allocation4 + $0x408] sm:$0xf] %v7836
        %7919 = vst [vmem:[#allocation4 + $0x42c] sm:$0xf] %v7837
        %7920 = vst [vmem:[#allocation4 + $0x450] sm:$0xf] %v7838
        %7921 = vst [vmem:[#allocation4 + $0x474] sm:$0xf] %v7839
        %7922 = vst [vmem:[#allocation4 + $0x498] sm:$0xf] %v7840
        %7923 = vst [vmem:[#allocation4 + $0x4bc] sm:$0xf] %v7841
        %7924 = vst [vmem:[#allocation4 + $0x4e0] sm:$0xf] %v7842
        %7925 = vst [vmem:[#allocation4 + $0x504] sm:$0xf] %v7843
        %7926 = vst [vmem:[#allocation4 + $0x528] sm:$0xf] %v7844
        %7927 = vst [vmem:[#allocation4 + $0x54c] sm:$0xf] %v7845
        %7928 = vst [vmem:[#allocation4 + $0x570] sm:$0xf] %v7846
        %7929 = vst [vmem:[#allocation4 + $0x594] sm:$0xf] %v7847
        %7930 = vst [vmem:[#allocation4 + $0x5b8] sm:$0x3] %v7848
        %v7931 = vld [vmem:[#allocation3 + $0x25] sm:$0xff]
        %v7932 = vld [vmem:[#allocation3 + $0x2d] sm:$0xff]
        %v7933 = vld [vmem:[#allocation3 + $0x35] sm:$0xff]
        %v7934 = vld [vmem:[#allocation3 + $0x3d] sm:$0xff]
        %v7935 = vld [vmem:[#allocation3 + $0x45] sm:$0xff]
        %v7936 = vld [vmem:[#allocation3 + $0x4d] sm:$0xff]
        %v7937 = vld [vmem:[#allocation3 + $0x55] sm:$0xff]
        %v7938 = vld [vmem:[#allocation3 + $0x5d] sm:$0xff]
        %v7939 = vld [vmem:[#allocation3 + $0x65] sm:$0xff]
        %v7940 = vld [vmem:[#allocation3 + $0x6d] sm:$0xff]
        %v7941 = vld [vmem:[#allocation3 + $0x75] sm:$0xff]
        %v7942 = vld [vmem:[#allocation3 + $0x7d] sm:$0xff]
        %v7943 = vld [vmem:[#allocation3 + $0x85] sm:$0xff]
        %v7944 = vld [vmem:[#allocation3 + $0x8d] sm:$0xff]
        %v7945 = vld [vmem:[#allocation3 + $0x95] sm:$0xff]
        %v7946 = vld [vmem:[#allocation3 + $0x9d] sm:$0xff]
        %v7947 = vld [vmem:[#allocation3 + $0xa5] sm:$0xff]
        %v7948 = vld [vmem:[#allocation3 + $0xad] sm:$0xff]
        %v7949 = vld [vmem:[#allocation3 + $0xb5] sm:$0xff]
        %v7950 = vld [vmem:[#allocation3 + $0xbd] sm:$0xff]
        %v7951 = vld [vmem:[#allocation3 + $0xc5] sm:$0xff]
        %v7952 = vld [vmem:[#allocation3 + $0xcd] sm:$0xff]
        %v7953 = vld [vmem:[#allocation3 + $0xd5] sm:$0xff]
        %v7954 = vld [vmem:[#allocation3 + $0xdd] sm:$0xff]
        %v7955 = vld [vmem:[#allocation3 + $0xe5] sm:$0xff]
        %v7956 = vld [vmem:[#allocation3 + $0xed] sm:$0xff]
        %v7957 = vld [vmem:[#allocation3 + $0xf5] sm:$0xff]
        %v7958 = vld [vmem:[#allocation3 + $0xfd] sm:$0xff]
        %v7959 = vld [vmem:[#allocation3 + $0x105] sm:$0xff]
        %v7960 = vld [vmem:[#allocation3 + $0x10d] sm:$0xff]
        %v7961 = vld [vmem:[#allocation3 + $0x115] sm:$0xff]
        %v7962 = vld [vmem:[#allocation3 + $0x11d] sm:$0xff]
        %v7963 = vld [vmem:[#allocation3 + $0x125] sm:$0xff]
        %v7964 = vld [vmem:[#allocation3 + $0x12d] sm:$0xff]
        %v7965 = vld [vmem:[#allocation3 + $0x135] sm:$0xff]
        %v7966 = vld [vmem:[#allocation3 + $0x13d] sm:$0xff]
        %v7967 = vld [vmem:[#allocation3 + $0x145] sm:$0xff]
        %v7968 = vld [vmem:[#allocation3 + $0x14d] sm:$0xff]
        %v7969 = vld [vmem:[#allocation3 + $0x155] sm:$0xff]
        %v7970 = vld [vmem:[#allocation3 + $0x15d] sm:$0xff]
        %v7971 = vld [vmem:[#allocation3 + $0x165] sm:$0xf]
        %v7972 = vpack.c.bf16 %v7932, %v7931
        %v7973 = vpack.c.bf16 %v7934, %v7933
        %v7974 = vpack.c.bf16 %v7936, %v7935
        %v7975 = vpack.c.bf16 %v7938, %v7937
        %v7976 = vpack.c.bf16 %v7940, %v7939
        %v7977 = vpack.c.bf16 %v7942, %v7941
        %v7978 = vpack.c.bf16 %v7944, %v7943
        %v7979 = vpack.c.bf16 %v7946, %v7945
        %v7980 = vpack.c.bf16 %v7948, %v7947
        %v7981 = vpack.c.bf16 %v7950, %v7949
        %v7982 = vpack.c.bf16 %v7952, %v7951
        %v7983 = vpack.c.bf16 %v7954, %v7953
        %v7984 = vpack.c.bf16 %v7956, %v7955
        %v7985 = vpack.c.bf16 %v7958, %v7957
        %v7986 = vpack.c.bf16 %v7960, %v7959
        %v7987 = vpack.c.bf16 %v7962, %v7961
        %v7988 = vpack.c.bf16 %v7964, %v7963
        %v7989 = vpack.c.bf16 %v7966, %v7965
        %v7990 = vpack.c.bf16 %v7968, %v7967
        %v7991 = vpack.c.bf16 %v7970, %v7969
        %v7992 = vpack.c.bf16 %v7971, %v7971
        %v8014 = vunpack.c.l.b16 %v7972
        %v8015 = vunpack.c.h.b16 %v7972
        %v8016 = vunpack.c.l.b16 %v7973
        %v8017 = vunpack.c.h.b16 %v7973
        %v8018 = vunpack.c.l.b16 %v7974
        %v8019 = vunpack.c.h.b16 %v7974
        %v8020 = vunpack.c.l.b16 %v7975
        %v8021 = vunpack.c.h.b16 %v7975
        %v8022 = vunpack.c.l.b16 %v7976
        %v8023 = vunpack.c.h.b16 %v7976
        %v8024 = vunpack.c.l.b16 %v7977
        %v8025 = vunpack.c.h.b16 %v7977
        %v8026 = vunpack.c.l.b16 %v7978
        %v8027 = vunpack.c.h.b16 %v7978
        %v8028 = vunpack.c.l.b16 %v7979
        %v8029 = vunpack.c.h.b16 %v7979
        %v8030 = vunpack.c.l.b16 %v7980
        %v8031 = vunpack.c.h.b16 %v7980
        %v8032 = vunpack.c.l.b16 %v7981
        %v8033 = vunpack.c.h.b16 %v7981
        %v8034 = vunpack.c.l.b16 %v7982
        %v8035 = vunpack.c.h.b16 %v7982
        %v8036 = vunpack.c.l.b16 %v7983
        %v8037 = vunpack.c.h.b16 %v7983
        %v8038 = vunpack.c.l.b16 %v7984
        %v8039 = vunpack.c.h.b16 %v7984
        %v8040 = vunpack.c.l.b16 %v7985
        %v8041 = vunpack.c.h.b16 %v7985
        %v8042 = vunpack.c.l.b16 %v7986
        %v8043 = vunpack.c.h.b16 %v7986
        %v8044 = vunpack.c.l.b16 %v7987
        %v8045 = vunpack.c.h.b16 %v7987
        %v8046 = vunpack.c.l.b16 %v7988
        %v8047 = vunpack.c.h.b16 %v7988
        %v8048 = vunpack.c.l.b16 %v7989
        %v8049 = vunpack.c.h.b16 %v7989
        %v8050 = vunpack.c.l.b16 %v7990
        %v8051 = vunpack.c.h.b16 %v7990
        %v8052 = vunpack.c.l.b16 %v7991
        %v8053 = vunpack.c.h.b16 %v7991
        %v8054 = vunpack.c.l.b16 %v7992
        %v8055 = vpack.c.b16 %v8014, %v8014
        %v8056 = vpack.c.b16 %v8015, %v8015
        %v8057 = vpack.c.b16 %v8016, %v8016
        %v8058 = vpack.c.b16 %v8017, %v8017
        %v8059 = vpack.c.b16 %v8018, %v8018
        %v8060 = vpack.c.b16 %v8019, %v8019
        %v8061 = vpack.c.b16 %v8020, %v8020
        %v8062 = vpack.c.b16 %v8021, %v8021
        %v8063 = vpack.c.b16 %v8022, %v8022
        %v8064 = vpack.c.b16 %v8023, %v8023
        %v8065 = vpack.c.b16 %v8024, %v8024
        %v8066 = vpack.c.b16 %v8025, %v8025
        %v8067 = vpack.c.b16 %v8026, %v8026
        %v8068 = vpack.c.b16 %v8027, %v8027
        %v8069 = vpack.c.b16 %v8028, %v8028
        %v8070 = vpack.c.b16 %v8029, %v8029
        %v8071 = vpack.c.b16 %v8030, %v8030
        %v8072 = vpack.c.b16 %v8031, %v8031
        %v8073 = vpack.c.b16 %v8032, %v8032
        %v8074 = vpack.c.b16 %v8033, %v8033
        %v8075 = vpack.c.b16 %v8034, %v8034
        %v8076 = vpack.c.b16 %v8035, %v8035
        %v8077 = vpack.c.b16 %v8036, %v8036
        %v8078 = vpack.c.b16 %v8037, %v8037
        %v8079 = vpack.c.b16 %v8038, %v8038
        %v8080 = vpack.c.b16 %v8039, %v8039
        %v8081 = vpack.c.b16 %v8040, %v8040
        %v8082 = vpack.c.b16 %v8041, %v8041
        %v8083 = vpack.c.b16 %v8042, %v8042
        %v8084 = vpack.c.b16 %v8043, %v8043
        %v8085 = vpack.c.b16 %v8044, %v8044
        %v8086 = vpack.c.b16 %v8045, %v8045
        %v8087 = vpack.c.b16 %v8046, %v8046
        %v8088 = vpack.c.b16 %v8047, %v8047
        %v8089 = vpack.c.b16 %v8048, %v8048
        %v8090 = vpack.c.b16 %v8049, %v8049
        %v8091 = vpack.c.b16 %v8050, %v8050
        %v8092 = vpack.c.b16 %v8051, %v8051
        %v8093 = vpack.c.b16 %v8052, %v8052
        %v8094 = vpack.c.b16 %v8053, %v8053
        %v8095 = vpack.c.b16 %v8054, %v8054
        %8137 = vst [vmem:[#allocation4 + $0x1c] sm:$0xf] %v8055
        %8138 = vst [vmem:[#allocation4 + $0x40] sm:$0xf] %v8056
        %8139 = vst [vmem:[#allocation4 + $0x64] sm:$0xf] %v8057
        %8140 = vst [vmem:[#allocation4 + $0x88] sm:$0xf] %v8058
        %8141 = vst [vmem:[#allocation4 + $0xac] sm:$0xf] %v8059
        %8142 = vst [vmem:[#allocation4 + $0xd0] sm:$0xf] %v8060
        %8143 = vst [vmem:[#allocation4 + $0xf4] sm:$0xf] %v8061
        %8144 = vst [vmem:[#allocation4 + $0x118] sm:$0xf] %v8062
        %8145 = vst [vmem:[#allocation4 + $0x13c] sm:$0xf] %v8063
        %8146 = vst [vmem:[#allocation4 + $0x160] sm:$0xf] %v8064
        %8147 = vst [vmem:[#allocation4 + $0x184] sm:$0xf] %v8065
        %8148 = vst [vmem:[#allocation4 + $0x1a8] sm:$0xf] %v8066
        %8149 = vst [vmem:[#allocation4 + $0x1cc] sm:$0xf] %v8067
        %8150 = vst [vmem:[#allocation4 + $0x1f0] sm:$0xf] %v8068
        %8151 = vst [vmem:[#allocation4 + $0x214] sm:$0xf] %v8069
        %8152 = vst [vmem:[#allocation4 + $0x238] sm:$0xf] %v8070
        %8153 = vst [vmem:[#allocation4 + $0x25c] sm:$0xf] %v8071
        %8154 = vst [vmem:[#allocation4 + $0x280] sm:$0xf] %v8072
        %8155 = vst [vmem:[#allocation4 + $0x2a4] sm:$0xf] %v8073
        %8156 = vst [vmem:[#allocation4 + $0x2c8] sm:$0xf] %v8074
        %8157 = vst [vmem:[#allocation4 + $0x2ec] sm:$0xf] %v8075
        %8158 = vst [vmem:[#allocation4 + $0x310] sm:$0xf] %v8076
        %8159 = vst [vmem:[#allocation4 + $0x334] sm:$0xf] %v8077
        %8160 = vst [vmem:[#allocation4 + $0x358] sm:$0xf] %v8078
        %8161 = vst [vmem:[#allocation4 + $0x37c] sm:$0xf] %v8079
        %8162 = vst [vmem:[#allocation4 + $0x3a0] sm:$0xf] %v8080
        %8163 = vst [vmem:[#allocation4 + $0x3c4] sm:$0xf] %v8081
        %8164 = vst [vmem:[#allocation4 + $0x3e8] sm:$0xf] %v8082
        %8165 = vst [vmem:[#allocation4 + $0x40c] sm:$0xf] %v8083
        %8166 = vst [vmem:[#allocation4 + $0x430] sm:$0xf] %v8084
        %8167 = vst [vmem:[#allocation4 + $0x454] sm:$0xf] %v8085
        %8168 = vst [vmem:[#allocation4 + $0x478] sm:$0xf] %v8086
        %8169 = vst [vmem:[#allocation4 + $0x49c] sm:$0xf] %v8087
        %8170 = vst [vmem:[#allocation4 + $0x4c0] sm:$0xf] %v8088
        %8171 = vst [vmem:[#allocation4 + $0x4e4] sm:$0xf] %v8089
        %8172 = vst [vmem:[#allocation4 + $0x508] sm:$0xf] %v8090
        %8173 = vst [vmem:[#allocation4 + $0x52c] sm:$0xf] %v8091
        %8174 = vst [vmem:[#allocation4 + $0x550] sm:$0xf] %v8092
        %8175 = vst [vmem:[#allocation4 + $0x574] sm:$0xf] %v8093
        %8176 = vst [vmem:[#allocation4 + $0x598] sm:$0xf] %v8094
        %8177 = vst [vmem:[#allocation4 + $0x5bc] sm:$0x3] %v8095
        %v8178 = vld [vmem:[#allocation3 + $0x26] sm:$0xff]
        %v8179 = vld [vmem:[#allocation3 + $0x2e] sm:$0xff]
        %v8180 = vld [vmem:[#allocation3 + $0x36] sm:$0xff]
        %v8181 = vld [vmem:[#allocation3 + $0x3e] sm:$0xff]
        %v8182 = vld [vmem:[#allocation3 + $0x46] sm:$0xff]
        %v8183 = vld [vmem:[#allocation3 + $0x4e] sm:$0xff]
        %v8184 = vld [vmem:[#allocation3 + $0x56] sm:$0xff]
        %v8185 = vld [vmem:[#allocation3 + $0x5e] sm:$0xff]
        %v8186 = vld [vmem:[#allocation3 + $0x66] sm:$0xff]
        %v8187 = vld [vmem:[#allocation3 + $0x6e] sm:$0xff]
        %v8188 = vld [vmem:[#allocation3 + $0x76] sm:$0xff]
        %v8189 = vld [vmem:[#allocation3 + $0x7e] sm:$0xff]
        %v8190 = vld [vmem:[#allocation3 + $0x86] sm:$0xff]
        %v8191 = vld [vmem:[#allocation3 + $0x8e] sm:$0xff]
        %v8192 = vld [vmem:[#allocation3 + $0x96] sm:$0xff]
        %v8193 = vld [vmem:[#allocation3 + $0x9e] sm:$0xff]
        %v8194 = vld [vmem:[#allocation3 + $0xa6] sm:$0xff]
        %v8195 = vld [vmem:[#allocation3 + $0xae] sm:$0xff]
        %v8196 = vld [vmem:[#allocation3 + $0xb6] sm:$0xff]
        %v8197 = vld [vmem:[#allocation3 + $0xbe] sm:$0xff]
        %v8198 = vld [vmem:[#allocation3 + $0xc6] sm:$0xff]
        %v8199 = vld [vmem:[#allocation3 + $0xce] sm:$0xff]
        %v8200 = vld [vmem:[#allocation3 + $0xd6] sm:$0xff]
        %v8201 = vld [vmem:[#allocation3 + $0xde] sm:$0xff]
        %v8202 = vld [vmem:[#allocation3 + $0xe6] sm:$0xff]
        %v8203 = vld [vmem:[#allocation3 + $0xee] sm:$0xff]
        %v8204 = vld [vmem:[#allocation3 + $0xf6] sm:$0xff]
        %v8205 = vld [vmem:[#allocation3 + $0xfe] sm:$0xff]
        %v8206 = vld [vmem:[#allocation3 + $0x106] sm:$0xff]
        %v8207 = vld [vmem:[#allocation3 + $0x10e] sm:$0xff]
        %v8208 = vld [vmem:[#allocation3 + $0x116] sm:$0xff]
        %v8209 = vld [vmem:[#allocation3 + $0x11e] sm:$0xff]
        %v8210 = vld [vmem:[#allocation3 + $0x126] sm:$0xff]
        %v8211 = vld [vmem:[#allocation3 + $0x12e] sm:$0xff]
        %v8212 = vld [vmem:[#allocation3 + $0x136] sm:$0xff]
        %v8213 = vld [vmem:[#allocation3 + $0x13e] sm:$0xff]
        %v8214 = vld [vmem:[#allocation3 + $0x146] sm:$0xff]
        %v8215 = vld [vmem:[#allocation3 + $0x14e] sm:$0xff]
        %v8216 = vld [vmem:[#allocation3 + $0x156] sm:$0xff]
        %v8217 = vld [vmem:[#allocation3 + $0x15e] sm:$0xff]
        %v8218 = vld [vmem:[#allocation3 + $0x166] sm:$0xf]
        %v8219 = vpack.c.bf16 %v8179, %v8178
        %v8220 = vpack.c.bf16 %v8181, %v8180
        %v8221 = vpack.c.bf16 %v8183, %v8182
        %v8222 = vpack.c.bf16 %v8185, %v8184
        %v8223 = vpack.c.bf16 %v8187, %v8186
        %v8224 = vpack.c.bf16 %v8189, %v8188
        %v8225 = vpack.c.bf16 %v8191, %v8190
        %v8226 = vpack.c.bf16 %v8193, %v8192
        %v8227 = vpack.c.bf16 %v8195, %v8194
        %v8228 = vpack.c.bf16 %v8197, %v8196
        %v8229 = vpack.c.bf16 %v8199, %v8198
        %v8230 = vpack.c.bf16 %v8201, %v8200
        %v8231 = vpack.c.bf16 %v8203, %v8202
        %v8232 = vpack.c.bf16 %v8205, %v8204
        %v8233 = vpack.c.bf16 %v8207, %v8206
        %v8234 = vpack.c.bf16 %v8209, %v8208
        %v8235 = vpack.c.bf16 %v8211, %v8210
        %v8236 = vpack.c.bf16 %v8213, %v8212
        %v8237 = vpack.c.bf16 %v8215, %v8214
        %v8238 = vpack.c.bf16 %v8217, %v8216
        %v8239 = vpack.c.bf16 %v8218, %v8218
        %v8261 = vunpack.c.l.b16 %v8219
        %v8262 = vunpack.c.h.b16 %v8219
        %v8263 = vunpack.c.l.b16 %v8220
        %v8264 = vunpack.c.h.b16 %v8220
        %v8265 = vunpack.c.l.b16 %v8221
        %v8266 = vunpack.c.h.b16 %v8221
        %v8267 = vunpack.c.l.b16 %v8222
        %v8268 = vunpack.c.h.b16 %v8222
        %v8269 = vunpack.c.l.b16 %v8223
        %v8270 = vunpack.c.h.b16 %v8223
        %v8271 = vunpack.c.l.b16 %v8224
        %v8272 = vunpack.c.h.b16 %v8224
        %v8273 = vunpack.c.l.b16 %v8225
        %v8274 = vunpack.c.h.b16 %v8225
        %v8275 = vunpack.c.l.b16 %v8226
        %v8276 = vunpack.c.h.b16 %v8226
        %v8277 = vunpack.c.l.b16 %v8227
        %v8278 = vunpack.c.h.b16 %v8227
        %v8279 = vunpack.c.l.b16 %v8228
        %v8280 = vunpack.c.h.b16 %v8228
        %v8281 = vunpack.c.l.b16 %v8229
        %v8282 = vunpack.c.h.b16 %v8229
        %v8283 = vunpack.c.l.b16 %v8230
        %v8284 = vunpack.c.h.b16 %v8230
        %v8285 = vunpack.c.l.b16 %v8231
        %v8286 = vunpack.c.h.b16 %v8231
        %v8287 = vunpack.c.l.b16 %v8232
        %v8288 = vunpack.c.h.b16 %v8232
        %v8289 = vunpack.c.l.b16 %v8233
        %v8290 = vunpack.c.h.b16 %v8233
        %v8291 = vunpack.c.l.b16 %v8234
        %v8292 = vunpack.c.h.b16 %v8234
        %v8293 = vunpack.c.l.b16 %v8235
        %v8294 = vunpack.c.h.b16 %v8235
        %v8295 = vunpack.c.l.b16 %v8236
        %v8296 = vunpack.c.h.b16 %v8236
        %v8297 = vunpack.c.l.b16 %v8237
        %v8298 = vunpack.c.h.b16 %v8237
        %v8299 = vunpack.c.l.b16 %v8238
        %v8300 = vunpack.c.h.b16 %v8238
        %v8301 = vunpack.c.l.b16 %v8239
        %v8302 = vpack.c.b16 %v8261, %v8261
        %v8303 = vpack.c.b16 %v8262, %v8262
        %v8304 = vpack.c.b16 %v8263, %v8263
        %v8305 = vpack.c.b16 %v8264, %v8264
        %v8306 = vpack.c.b16 %v8265, %v8265
        %v8307 = vpack.c.b16 %v8266, %v8266
        %v8308 = vpack.c.b16 %v8267, %v8267
        %v8309 = vpack.c.b16 %v8268, %v8268
        %v8310 = vpack.c.b16 %v8269, %v8269
        %v8311 = vpack.c.b16 %v8270, %v8270
        %v8312 = vpack.c.b16 %v8271, %v8271
        %v8313 = vpack.c.b16 %v8272, %v8272
        %v8314 = vpack.c.b16 %v8273, %v8273
        %v8315 = vpack.c.b16 %v8274, %v8274
        %v8316 = vpack.c.b16 %v8275, %v8275
        %v8317 = vpack.c.b16 %v8276, %v8276
        %v8318 = vpack.c.b16 %v8277, %v8277
        %v8319 = vpack.c.b16 %v8278, %v8278
        %v8320 = vpack.c.b16 %v8279, %v8279
        %v8321 = vpack.c.b16 %v8280, %v8280
        %v8322 = vpack.c.b16 %v8281, %v8281
        %v8323 = vpack.c.b16 %v8282, %v8282
        %v8324 = vpack.c.b16 %v8283, %v8283
        %v8325 = vpack.c.b16 %v8284, %v8284
        %v8326 = vpack.c.b16 %v8285, %v8285
        %v8327 = vpack.c.b16 %v8286, %v8286
        %v8328 = vpack.c.b16 %v8287, %v8287
        %v8329 = vpack.c.b16 %v8288, %v8288
        %v8330 = vpack.c.b16 %v8289, %v8289
        %v8331 = vpack.c.b16 %v8290, %v8290
        %v8332 = vpack.c.b16 %v8291, %v8291
        %v8333 = vpack.c.b16 %v8292, %v8292
        %v8334 = vpack.c.b16 %v8293, %v8293
        %v8335 = vpack.c.b16 %v8294, %v8294
        %v8336 = vpack.c.b16 %v8295, %v8295
        %v8337 = vpack.c.b16 %v8296, %v8296
        %v8338 = vpack.c.b16 %v8297, %v8297
        %v8339 = vpack.c.b16 %v8298, %v8298
        %v8340 = vpack.c.b16 %v8299, %v8299
        %v8341 = vpack.c.b16 %v8300, %v8300
        %v8342 = vpack.c.b16 %v8301, %v8301
        %8384 = vst [vmem:[#allocation4 + $0x20] sm:$0xf] %v8302
        %8385 = vst [vmem:[#allocation4 + $0x44] sm:$0xf] %v8303
        %8386 = vst [vmem:[#allocation4 + $0x68] sm:$0xf] %v8304
        %8387 = vst [vmem:[#allocation4 + $0x8c] sm:$0xf] %v8305
        %8388 = vst [vmem:[#allocation4 + $0xb0] sm:$0xf] %v8306
        %8389 = vst [vmem:[#allocation4 + $0xd4] sm:$0xf] %v8307
        %8390 = vst [vmem:[#allocation4 + $0xf8] sm:$0xf] %v8308
        %8391 = vst [vmem:[#allocation4 + $0x11c] sm:$0xf] %v8309
        %8392 = vst [vmem:[#allocation4 + $0x140] sm:$0xf] %v8310
        %8393 = vst [vmem:[#allocation4 + $0x164] sm:$0xf] %v8311
        %8394 = vst [vmem:[#allocation4 + $0x188] sm:$0xf] %v8312
        %8395 = vst [vmem:[#allocation4 + $0x1ac] sm:$0xf] %v8313
        %8396 = vst [vmem:[#allocation4 + $0x1d0] sm:$0xf] %v8314
        %8397 = vst [vmem:[#allocation4 + $0x1f4] sm:$0xf] %v8315
        %8398 = vst [vmem:[#allocation4 + $0x218] sm:$0xf] %v8316
        %8399 = vst [vmem:[#allocation4 + $0x23c] sm:$0xf] %v8317
        %8400 = vst [vmem:[#allocation4 + $0x260] sm:$0xf] %v8318
        %8401 = vst [vmem:[#allocation4 + $0x284] sm:$0xf] %v8319
        %8402 = vst [vmem:[#allocation4 + $0x2a8] sm:$0xf] %v8320
        %8403 = vst [vmem:[#allocation4 + $0x2cc] sm:$0xf] %v8321
        %8404 = vst [vmem:[#allocation4 + $0x2f0] sm:$0xf] %v8322
        %8405 = vst [vmem:[#allocation4 + $0x314] sm:$0xf] %v8323
        %8406 = vst [vmem:[#allocation4 + $0x338] sm:$0xf] %v8324
        %8407 = vst [vmem:[#allocation4 + $0x35c] sm:$0xf] %v8325
        %8408 = vst [vmem:[#allocation4 + $0x380] sm:$0xf] %v8326
        %8409 = vst [vmem:[#allocation4 + $0x3a4] sm:$0xf] %v8327
        %8410 = vst [vmem:[#allocation4 + $0x3c8] sm:$0xf] %v8328
        %8411 = vst [vmem:[#allocation4 + $0x3ec] sm:$0xf] %v8329
        %8412 = vst [vmem:[#allocation4 + $0x410] sm:$0xf] %v8330
        %8413 = vst [vmem:[#allocation4 + $0x434] sm:$0xf] %v8331
        %8414 = vst [vmem:[#allocation4 + $0x458] sm:$0xf] %v8332
        %8415 = vst [vmem:[#allocation4 + $0x47c] sm:$0xf] %v8333
        %8416 = vst [vmem:[#allocation4 + $0x4a0] sm:$0xf] %v8334
        %8417 = vst [vmem:[#allocation4 + $0x4c4] sm:$0xf] %v8335
        %8418 = vst [vmem:[#allocation4 + $0x4e8] sm:$0xf] %v8336
        %8419 = vst [vmem:[#allocation4 + $0x50c] sm:$0xf] %v8337
        %8420 = vst [vmem:[#allocation4 + $0x530] sm:$0xf] %v8338
        %8421 = vst [vmem:[#allocation4 + $0x554] sm:$0xf] %v8339
        %8422 = vst [vmem:[#allocation4 + $0x578] sm:$0xf] %v8340
        %8423 = vst [vmem:[#allocation4 + $0x59c] sm:$0xf] %v8341
        %8424 = vst [vmem:[#allocation4 + $0x5c0] sm:$0x3] %v8342
        %v8425 = vld [vmem:[#allocation4] sm:$0xff]
        %v8426 = vld [vmem:[#allocation4 + $0x8] sm:$0xff]
        %v8427 = vld [vmem:[#allocation4 + $0x10] sm:$0xff]
        %v8428 = vld [vmem:[#allocation4 + $0x18] sm:$0xff]
        %v8429 = vld [vmem:[#allocation4 + $0x20] sm:$0xf]
        %v8430 = vld [vmem:[#allocation4 + $0x24] sm:$0xff]
        %v8431 = vld [vmem:[#allocation4 + $0x2c] sm:$0xff]
        %v8432 = vld [vmem:[#allocation4 + $0x34] sm:$0xff]
        %v8433 = vld [vmem:[#allocation4 + $0x3c] sm:$0xff]
        %v8434 = vld [vmem:[#allocation4 + $0x44] sm:$0xf]
        %v8435 = vld [vmem:[#allocation4 + $0x48] sm:$0xff]
        %v8436 = vld [vmem:[#allocation4 + $0x50] sm:$0xff]
        %v8437 = vld [vmem:[#allocation4 + $0x58] sm:$0xff]
        %v8438 = vld [vmem:[#allocation4 + $0x60] sm:$0xff]
        %v8439 = vld [vmem:[#allocation4 + $0x68] sm:$0xf]
        %v8440 = vld [vmem:[#allocation4 + $0x6c] sm:$0xff]
        %v8441 = vld [vmem:[#allocation4 + $0x74] sm:$0xff]
        %v8442 = vld [vmem:[#allocation4 + $0x7c] sm:$0xff]
        %v8443 = vld [vmem:[#allocation4 + $0x84] sm:$0xff]
        %v8444 = vld [vmem:[#allocation4 + $0x8c] sm:$0xf]
        %v8445 = vld [vmem:[#allocation4 + $0x90] sm:$0xff]
        %v8446 = vld [vmem:[#allocation4 + $0x98] sm:$0xff]
        %v8447 = vld [vmem:[#allocation4 + $0xa0] sm:$0xff]
        %v8448 = vld [vmem:[#allocation4 + $0xa8] sm:$0xff]
        %v8449 = vld [vmem:[#allocation4 + $0xb0] sm:$0xf]
        %v8450 = vld [vmem:[#allocation4 + $0xb4] sm:$0xff]
        %v8451 = vld [vmem:[#allocation4 + $0xbc] sm:$0xff]
        %v8452 = vld [vmem:[#allocation4 + $0xc4] sm:$0xff]
        %v8453 = vld [vmem:[#allocation4 + $0xcc] sm:$0xff]
        %v8454 = vld [vmem:[#allocation4 + $0xd4] sm:$0xf]
        %v8455 = vld [vmem:[#allocation4 + $0xd8] sm:$0xff]
        %v8456 = vld [vmem:[#allocation4 + $0xe0] sm:$0xff]
        %v8457 = vld [vmem:[#allocation4 + $0xe8] sm:$0xff]
        %v8458 = vld [vmem:[#allocation4 + $0xf0] sm:$0xff]
        %v8459 = vld [vmem:[#allocation4 + $0xf8] sm:$0xf]
        %v8460 = vld [vmem:[#allocation4 + $0xfc] sm:$0xff]
        %v8461 = vld [vmem:[#allocation4 + $0x104] sm:$0xff]
        %v8462 = vld [vmem:[#allocation4 + $0x10c] sm:$0xff]
        %v8463 = vld [vmem:[#allocation4 + $0x114] sm:$0xff]
        %v8464 = vld [vmem:[#allocation4 + $0x11c] sm:$0xf]
        %v8465 = vld [vmem:[#allocation4 + $0x120] sm:$0xff]
        %v8466 = vld [vmem:[#allocation4 + $0x128] sm:$0xff]
        %v8467 = vld [vmem:[#allocation4 + $0x130] sm:$0xff]
        %v8468 = vld [vmem:[#allocation4 + $0x138] sm:$0xff]
        %v8469 = vld [vmem:[#allocation4 + $0x140] sm:$0xf]
        %v8470 = vld [vmem:[#allocation4 + $0x144] sm:$0xff]
        %v8471 = vld [vmem:[#allocation4 + $0x14c] sm:$0xff]
        %v8472 = vld [vmem:[#allocation4 + $0x154] sm:$0xff]
        %v8473 = vld [vmem:[#allocation4 + $0x15c] sm:$0xff]
        %v8474 = vld [vmem:[#allocation4 + $0x164] sm:$0xf]
        %v8475 = vld [vmem:[#allocation4 + $0x168] sm:$0xff]
        %v8476 = vld [vmem:[#allocation4 + $0x170] sm:$0xff]
        %v8477 = vld [vmem:[#allocation4 + $0x178] sm:$0xff]
        %v8478 = vld [vmem:[#allocation4 + $0x180] sm:$0xff]
        %v8479 = vld [vmem:[#allocation4 + $0x188] sm:$0xf]
        %v8480 = vld [vmem:[#allocation4 + $0x18c] sm:$0xff]
        %v8481 = vld [vmem:[#allocation4 + $0x194] sm:$0xff]
        %v8482 = vld [vmem:[#allocation4 + $0x19c] sm:$0xff]
        %v8483 = vld [vmem:[#allocation4 + $0x1a4] sm:$0xff]
        %v8484 = vld [vmem:[#allocation4 + $0x1ac] sm:$0xf]
        %v8485 = vld [vmem:[#allocation4 + $0x1b0] sm:$0xff]
        %v8486 = vld [vmem:[#allocation4 + $0x1b8] sm:$0xff]
        %v8487 = vld [vmem:[#allocation4 + $0x1c0] sm:$0xff]
        %v8488 = vld [vmem:[#allocation4 + $0x1c8] sm:$0xff]
        %v8489 = vld [vmem:[#allocation4 + $0x1d0] sm:$0xf]
        %v8490 = vld [vmem:[#allocation4 + $0x1d4] sm:$0xff]
        %v8491 = vld [vmem:[#allocation4 + $0x1dc] sm:$0xff]
        %v8492 = vld [vmem:[#allocation4 + $0x1e4] sm:$0xff]
        %v8493 = vld [vmem:[#allocation4 + $0x1ec] sm:$0xff]
        %v8494 = vld [vmem:[#allocation4 + $0x1f4] sm:$0xf]
        %v8495 = vld [vmem:[#allocation4 + $0x1f8] sm:$0xff]
        %v8496 = vld [vmem:[#allocation4 + $0x200] sm:$0xff]
        %v8497 = vld [vmem:[#allocation4 + $0x208] sm:$0xff]
        %v8498 = vld [vmem:[#allocation4 + $0x210] sm:$0xff]
        %v8499 = vld [vmem:[#allocation4 + $0x218] sm:$0xf]
        %v8500 = vld [vmem:[#allocation4 + $0x21c] sm:$0xff]
        %v8501 = vld [vmem:[#allocation4 + $0x224] sm:$0xff]
        %v8502 = vld [vmem:[#allocation4 + $0x22c] sm:$0xff]
        %v8503 = vld [vmem:[#allocation4 + $0x234] sm:$0xff]
        %v8504 = vld [vmem:[#allocation4 + $0x23c] sm:$0xf]
        %v8505 = vld [vmem:[#allocation4 + $0x240] sm:$0xff]
        %v8506 = vld [vmem:[#allocation4 + $0x248] sm:$0xff]
        %v8507 = vld [vmem:[#allocation4 + $0x250] sm:$0xff]
        %v8508 = vld [vmem:[#allocation4 + $0x258] sm:$0xff]
        %v8509 = vld [vmem:[#allocation4 + $0x260] sm:$0xf]
        %v8510 = vld [vmem:[#allocation4 + $0x264] sm:$0xff]
        %v8511 = vld [vmem:[#allocation4 + $0x26c] sm:$0xff]
        %v8512 = vld [vmem:[#allocation4 + $0x274] sm:$0xff]
        %v8513 = vld [vmem:[#allocation4 + $0x27c] sm:$0xff]
        %v8514 = vld [vmem:[#allocation4 + $0x284] sm:$0xf]
        %v8515 = vld [vmem:[#allocation4 + $0x288] sm:$0xff]
        %v8516 = vld [vmem:[#allocation4 + $0x290] sm:$0xff]
        %v8517 = vld [vmem:[#allocation4 + $0x298] sm:$0xff]
        %v8518 = vld [vmem:[#allocation4 + $0x2a0] sm:$0xff]
        %v8519 = vld [vmem:[#allocation4 + $0x2a8] sm:$0xf]
        %v8520 = vld [vmem:[#allocation4 + $0x2ac] sm:$0xff]
        %v8521 = vld [vmem:[#allocation4 + $0x2b4] sm:$0xff]
        %v8522 = vld [vmem:[#allocation4 + $0x2bc] sm:$0xff]
        %v8523 = vld [vmem:[#allocation4 + $0x2c4] sm:$0xff]
        %v8524 = vld [vmem:[#allocation4 + $0x2cc] sm:$0xf]
        %v8525 = vld [vmem:[#allocation4 + $0x2d0] sm:$0xff]
        %v8526 = vld [vmem:[#allocation4 + $0x2d8] sm:$0xff]
        %v8527 = vld [vmem:[#allocation4 + $0x2e0] sm:$0xff]
        %v8528 = vld [vmem:[#allocation4 + $0x2e8] sm:$0xff]
        %v8529 = vld [vmem:[#allocation4 + $0x2f0] sm:$0xf]
        %v8530 = vld [vmem:[#allocation4 + $0x2f4] sm:$0xff]
        %v8531 = vld [vmem:[#allocation4 + $0x2fc] sm:$0xff]
        %v8532 = vld [vmem:[#allocation4 + $0x304] sm:$0xff]
        %v8533 = vld [vmem:[#allocation4 + $0x30c] sm:$0xff]
        %v8534 = vld [vmem:[#allocation4 + $0x314] sm:$0xf]
        %v8535 = vld [vmem:[#allocation4 + $0x318] sm:$0xff]
        %v8536 = vld [vmem:[#allocation4 + $0x320] sm:$0xff]
        %v8537 = vld [vmem:[#allocation4 + $0x328] sm:$0xff]
        %v8538 = vld [vmem:[#allocation4 + $0x330] sm:$0xff]
        %v8539 = vld [vmem:[#allocation4 + $0x338] sm:$0xf]
        %v8540 = vld [vmem:[#allocation4 + $0x33c] sm:$0xff]
        %v8541 = vld [vmem:[#allocation4 + $0x344] sm:$0xff]
        %v8542 = vld [vmem:[#allocation4 + $0x34c] sm:$0xff]
        %v8543 = vld [vmem:[#allocation4 + $0x354] sm:$0xff]
        %v8544 = vld [vmem:[#allocation4 + $0x35c] sm:$0xf]
        %v8545 = vld [vmem:[#allocation4 + $0x360] sm:$0xff]
        %v8546 = vld [vmem:[#allocation4 + $0x368] sm:$0xff]
        %v8547 = vld [vmem:[#allocation4 + $0x370] sm:$0xff]
        %v8548 = vld [vmem:[#allocation4 + $0x378] sm:$0xff]
        %v8549 = vld [vmem:[#allocation4 + $0x380] sm:$0xf]
        %v8550 = vld [vmem:[#allocation4 + $0x384] sm:$0xff]
        %v8551 = vld [vmem:[#allocation4 + $0x38c] sm:$0xff]
        %v8552 = vld [vmem:[#allocation4 + $0x394] sm:$0xff]
        %v8553 = vld [vmem:[#allocation4 + $0x39c] sm:$0xff]
        %v8554 = vld [vmem:[#allocation4 + $0x3a4] sm:$0xf]
        %v8555 = vld [vmem:[#allocation4 + $0x3a8] sm:$0xff]
        %v8556 = vld [vmem:[#allocation4 + $0x3b0] sm:$0xff]
        %v8557 = vld [vmem:[#allocation4 + $0x3b8] sm:$0xff]
        %v8558 = vld [vmem:[#allocation4 + $0x3c0] sm:$0xff]
        %v8559 = vld [vmem:[#allocation4 + $0x3c8] sm:$0xf]
        %v8560 = vld [vmem:[#allocation4 + $0x3cc] sm:$0xff]
        %v8561 = vld [vmem:[#allocation4 + $0x3d4] sm:$0xff]
        %v8562 = vld [vmem:[#allocation4 + $0x3dc] sm:$0xff]
        %v8563 = vld [vmem:[#allocation4 + $0x3e4] sm:$0xff]
        %v8564 = vld [vmem:[#allocation4 + $0x3ec] sm:$0xf]
        %v8565 = vld [vmem:[#allocation4 + $0x3f0] sm:$0xff]
        %v8566 = vld [vmem:[#allocation4 + $0x3f8] sm:$0xff]
        %v8567 = vld [vmem:[#allocation4 + $0x400] sm:$0xff]
        %v8568 = vld [vmem:[#allocation4 + $0x408] sm:$0xff]
        %v8569 = vld [vmem:[#allocation4 + $0x410] sm:$0xf]
        %v8570 = vld [vmem:[#allocation4 + $0x414] sm:$0xff]
        %v8571 = vld [vmem:[#allocation4 + $0x41c] sm:$0xff]
        %v8572 = vld [vmem:[#allocation4 + $0x424] sm:$0xff]
        %v8573 = vld [vmem:[#allocation4 + $0x42c] sm:$0xff]
        %v8574 = vld [vmem:[#allocation4 + $0x434] sm:$0xf]
        %v8575 = vld [vmem:[#allocation4 + $0x438] sm:$0xff]
        %v8576 = vld [vmem:[#allocation4 + $0x440] sm:$0xff]
        %v8577 = vld [vmem:[#allocation4 + $0x448] sm:$0xff]
        %v8578 = vld [vmem:[#allocation4 + $0x450] sm:$0xff]
        %v8579 = vld [vmem:[#allocation4 + $0x458] sm:$0xf]
        %v8580 = vld [vmem:[#allocation4 + $0x45c] sm:$0xff]
        %v8581 = vld [vmem:[#allocation4 + $0x464] sm:$0xff]
        %v8582 = vld [vmem:[#allocation4 + $0x46c] sm:$0xff]
        %v8583 = vld [vmem:[#allocation4 + $0x474] sm:$0xff]
        %v8584 = vld [vmem:[#allocation4 + $0x47c] sm:$0xf]
        %v8585 = vld [vmem:[#allocation4 + $0x480] sm:$0xff]
        %v8586 = vld [vmem:[#allocation4 + $0x488] sm:$0xff]
        %v8587 = vld [vmem:[#allocation4 + $0x490] sm:$0xff]
        %v8588 = vld [vmem:[#allocation4 + $0x498] sm:$0xff]
        %v8589 = vld [vmem:[#allocation4 + $0x4a0] sm:$0xf]
        %v8590 = vld [vmem:[#allocation4 + $0x4a4] sm:$0xff]
        %v8591 = vld [vmem:[#allocation4 + $0x4ac] sm:$0xff]
        %v8592 = vld [vmem:[#allocation4 + $0x4b4] sm:$0xff]
        %v8593 = vld [vmem:[#allocation4 + $0x4bc] sm:$0xff]
        %v8594 = vld [vmem:[#allocation4 + $0x4c4] sm:$0xf]
        %v8595 = vld [vmem:[#allocation4 + $0x4c8] sm:$0xff]
        %v8596 = vld [vmem:[#allocation4 + $0x4d0] sm:$0xff]
        %v8597 = vld [vmem:[#allocation4 + $0x4d8] sm:$0xff]
        %v8598 = vld [vmem:[#allocation4 + $0x4e0] sm:$0xff]
        %v8599 = vld [vmem:[#allocation4 + $0x4e8] sm:$0xf]
        %v8600 = vld [vmem:[#allocation4 + $0x4ec] sm:$0xff]
        %v8601 = vld [vmem:[#allocation4 + $0x4f4] sm:$0xff]
        %v8602 = vld [vmem:[#allocation4 + $0x4fc] sm:$0xff]
        %v8603 = vld [vmem:[#allocation4 + $0x504] sm:$0xff]
        %v8604 = vld [vmem:[#allocation4 + $0x50c] sm:$0xf]
        %v8605 = vld [vmem:[#allocation4 + $0x510] sm:$0xff]
        %v8606 = vld [vmem:[#allocation4 + $0x518] sm:$0xff]
        %v8607 = vld [vmem:[#allocation4 + $0x520] sm:$0xff]
        %v8608 = vld [vmem:[#allocation4 + $0x528] sm:$0xff]
        %v8609 = vld [vmem:[#allocation4 + $0x530] sm:$0xf]
        %v8610 = vld [vmem:[#allocation4 + $0x534] sm:$0xff]
        %v8611 = vld [vmem:[#allocation4 + $0x53c] sm:$0xff]
        %v8612 = vld [vmem:[#allocation4 + $0x544] sm:$0xff]
        %v8613 = vld [vmem:[#allocation4 + $0x54c] sm:$0xff]
        %v8614 = vld [vmem:[#allocation4 + $0x554] sm:$0xf]
        %v8615 = vld [vmem:[#allocation4 + $0x558] sm:$0xff]
        %v8616 = vld [vmem:[#allocation4 + $0x560] sm:$0xff]
        %v8617 = vld [vmem:[#allocation4 + $0x568] sm:$0xff]
        %v8618 = vld [vmem:[#allocation4 + $0x570] sm:$0xff]
        %v8619 = vld [vmem:[#allocation4 + $0x578] sm:$0xf]
        %v8620 = vld [vmem:[#allocation4 + $0x57c] sm:$0xff]
        %v8621 = vld [vmem:[#allocation4 + $0x584] sm:$0xff]
        %v8622 = vld [vmem:[#allocation4 + $0x58c] sm:$0xff]
        %v8623 = vld [vmem:[#allocation4 + $0x594] sm:$0xff]
        %v8624 = vld [vmem:[#allocation4 + $0x59c] sm:$0xf]
        %v8625 = vld [vmem:[#allocation4 + $0x5a0] sm:$0x33]
        %v8626 = vld [vmem:[#allocation4 + $0x5a8] sm:$0x33]
        %v8627 = vld [vmem:[#allocation4 + $0x5b0] sm:$0x33]
        %v8628 = vld [vmem:[#allocation4 + $0x5b8] sm:$0x33]
        %v8629 = vld [vmem:[#allocation4 + $0x5c0] sm:$0x3]
        %v8630 = vld [vmem:[%s6] sm:$0xf]
        %v8631 = vld [vmem:[%s6 + $0x4] sm:$0xf]
        %v8632 = vld [vmem:[%s6 + $0x8] sm:$0xf]
        %v8633 = vld [vmem:[%s6 + $0xc] sm:$0xf]
        %v8634 = vld [vmem:[%s6 + $0x10] sm:$0xf]
        %v8635 = vld [vmem:[%s6 + $0x14] sm:$0xf]
        %v8636 = vld [vmem:[%s6 + $0x18] sm:$0xf]
        %v8637 = vld [vmem:[%s6 + $0x1c] sm:$0xf]
        %v8638 = vld [vmem:[%s6 + $0x20] sm:$0xf]
        %v8639 = vld [vmem:[%s6 + $0x24] sm:$0xf]
        %v8640 = vld [vmem:[%s6 + $0x28] sm:$0xf]
        %v8641 = vld [vmem:[%s6 + $0x2c] sm:$0xf]
        %v8642 = vld [vmem:[%s6 + $0x30] sm:$0xf]
        %v8643 = vld [vmem:[%s6 + $0x34] sm:$0xf]
        %v8644 = vld [vmem:[%s6 + $0x38] sm:$0xf]
        %v8645 = vld [vmem:[%s6 + $0x3c] sm:$0xf]
        %v8646 = vld [vmem:[%s6 + $0x40] sm:$0xf]
        %v8647 = vld [vmem:[%s6 + $0x44] sm:$0xf]
        %v8648 = vld [vmem:[%s6 + $0x48] sm:$0xf]
        %v8649 = vld [vmem:[%s6 + $0x4c] sm:$0xf]
        %v8650 = vld [vmem:[%s6 + $0x50] sm:$0xf]
        %v8651 = vld [vmem:[%s6 + $0x54] sm:$0xf]
        %v8652 = vld [vmem:[%s6 + $0x58] sm:$0xf]
        %v8653 = vld [vmem:[%s6 + $0x5c] sm:$0xf]
        %v8654 = vld [vmem:[%s6 + $0x60] sm:$0xf]
        %v8655 = vld [vmem:[%s6 + $0x64] sm:$0xf]
        %v8656 = vld [vmem:[%s6 + $0x68] sm:$0xf]
        %v8657 = vld [vmem:[%s6 + $0x6c] sm:$0xf]
        %v8658 = vld [vmem:[%s6 + $0x70] sm:$0xf]
        %v8659 = vld [vmem:[%s6 + $0x74] sm:$0xf]
        %v8660 = vld [vmem:[%s6 + $0x78] sm:$0xf]
        %v8661 = vld [vmem:[%s6 + $0x7c] sm:$0xf]
        %v8662 = vld [vmem:[%s6 + $0x80] sm:$0xf]
        %v8663 = vld [vmem:[%s6 + $0x84] sm:$0xf]
        %v8664 = vld [vmem:[%s6 + $0x88] sm:$0xf]
        %v8665 = vld [vmem:[%s6 + $0x8c] sm:$0xf]
        %v8666 = vld [vmem:[%s6 + $0x90] sm:$0xf]
        %v8667 = vld [vmem:[%s6 + $0x94] sm:$0xf]
        %v8668 = vld [vmem:[%s6 + $0x98] sm:$0xf]
        %v8669 = vld [vmem:[%s6 + $0x9c] sm:$0xf]
        %v8670 = vld [vmem:[%s6 + $0xa0] sm:$0xf]
        %v8671 = vld [vmem:[%s6 + $0xa4] sm:$0xf]
        %v8672 = vld [vmem:[%s6 + $0xa8] sm:$0xf]
        %v8673 = vld [vmem:[%s6 + $0xac] sm:$0xf]
        %v8674 = vld [vmem:[%s6 + $0xb0] sm:$0xf]
        %v8675 = vld [vmem:[%s6 + $0xb4] sm:$0xf]
        %v8676 = vld [vmem:[%s6 + $0xb8] sm:$0xf]
        %v8677 = vld [vmem:[%s6 + $0xbc] sm:$0xf]
        %v8678 = vld [vmem:[%s6 + $0xc0] sm:$0xf]
        %v8679 = vld [vmem:[%s6 + $0xc4] sm:$0xf]
        %v8680 = vld [vmem:[%s6 + $0xc8] sm:$0xf]
        %v8681 = vld [vmem:[%s6 + $0xcc] sm:$0xf]
        %v8682 = vld [vmem:[%s6 + $0xd0] sm:$0xf]
        %v8683 = vld [vmem:[%s6 + $0xd4] sm:$0xf]
        %v8684 = vld [vmem:[%s6 + $0xd8] sm:$0xf]
        %v8685 = vld [vmem:[%s6 + $0xdc] sm:$0xf]
        %v8686 = vld [vmem:[%s6 + $0xe0] sm:$0xf]
        %v8687 = vld [vmem:[%s6 + $0xe4] sm:$0xf]
        %v8688 = vld [vmem:[%s6 + $0xe8] sm:$0xf]
        %v8689 = vld [vmem:[%s6 + $0xec] sm:$0xf]
        %v8690 = vld [vmem:[%s6 + $0xf0] sm:$0xf]
        %v8691 = vld [vmem:[%s6 + $0xf4] sm:$0xf]
        %v8692 = vld [vmem:[%s6 + $0xf8] sm:$0xf]
        %v8693 = vld [vmem:[%s6 + $0xfc] sm:$0xf]
        %v8694 = vld [vmem:[%s6 + $0x100] sm:$0xf]
        %v8695 = vld [vmem:[%s6 + $0x104] sm:$0xf]
        %v8696 = vld [vmem:[%s6 + $0x108] sm:$0xf]
        %v8697 = vld [vmem:[%s6 + $0x10c] sm:$0xf]
        %v8698 = vld [vmem:[%s6 + $0x110] sm:$0xf]
        %v8699 = vld [vmem:[%s6 + $0x114] sm:$0xf]
        %v8700 = vld [vmem:[%s6 + $0x118] sm:$0xf]
        %v8701 = vld [vmem:[%s6 + $0x11c] sm:$0xf]
        %v8702 = vld [vmem:[%s6 + $0x120] sm:$0xf]
        %v8703 = vld [vmem:[%s6 + $0x124] sm:$0xf]
        %v8704 = vld [vmem:[%s6 + $0x128] sm:$0xf]
        %v8705 = vld [vmem:[%s6 + $0x12c] sm:$0xf]
        %v8706 = vld [vmem:[%s6 + $0x130] sm:$0xf]
        %v8707 = vld [vmem:[%s6 + $0x134] sm:$0xf]
        %v8708 = vld [vmem:[%s6 + $0x138] sm:$0xf]
        %v8709 = vld [vmem:[%s6 + $0x13c] sm:$0xf]
        %v8710 = vld [vmem:[%s6 + $0x140] sm:$0xf]
        %v8711 = vld [vmem:[%s6 + $0x144] sm:$0xf]
        %v8712 = vld [vmem:[%s6 + $0x148] sm:$0xf]
        %v8713 = vld [vmem:[%s6 + $0x14c] sm:$0xf]
        %v8714 = vld [vmem:[%s6 + $0x150] sm:$0xf]
        %v8715 = vld [vmem:[%s6 + $0x154] sm:$0xf]
        %v8716 = vld [vmem:[%s6 + $0x158] sm:$0xf]
        %v8717 = vld [vmem:[%s6 + $0x15c] sm:$0xf]
        %v8718 = vld [vmem:[%s6 + $0x160] sm:$0xf]
        %v8719 = vld [vmem:[%s6 + $0x164] sm:$0xf]
        %v8720 = vld [vmem:[%s6 + $0x168] sm:$0xf]
        %v8721 = vld [vmem:[%s6 + $0x16c] sm:$0xf]
        %v8722 = vld [vmem:[%s6 + $0x170] sm:$0xf]
        %v8723 = vld [vmem:[%s6 + $0x174] sm:$0xf]
        %v8724 = vld [vmem:[%s6 + $0x178] sm:$0xf]
        %v8725 = vld [vmem:[%s6 + $0x17c] sm:$0xf]
        %v8726 = vld [vmem:[%s6 + $0x180] sm:$0xf]
        %v8727 = vld [vmem:[%s6 + $0x184] sm:$0xf]
        %v8728 = vld [vmem:[%s6 + $0x188] sm:$0xf]
        %v8729 = vld [vmem:[%s6 + $0x18c] sm:$0xf]
        %v8730 = vld [vmem:[%s6 + $0x190] sm:$0xf]
        %v8731 = vld [vmem:[%s6 + $0x194] sm:$0xf]
        %v8732 = vld [vmem:[%s6 + $0x198] sm:$0xf]
        %v8733 = vld [vmem:[%s6 + $0x19c] sm:$0xf]
        %v8734 = vld [vmem:[%s6 + $0x1a0] sm:$0xf]
        %v8735 = vld [vmem:[%s6 + $0x1a4] sm:$0xf]
        %v8736 = vld [vmem:[%s6 + $0x1a8] sm:$0xf]
        %v8737 = vld [vmem:[%s6 + $0x1ac] sm:$0xf]
        %v8738 = vld [vmem:[%s6 + $0x1b0] sm:$0xf]
        %v8739 = vld [vmem:[%s6 + $0x1b4] sm:$0xf]
        %v8740 = vld [vmem:[%s6 + $0x1b8] sm:$0xf]
        %v8741 = vld [vmem:[%s6 + $0x1bc] sm:$0xf]
        %v8742 = vld [vmem:[%s6 + $0x1c0] sm:$0xf]
        %v8743 = vld [vmem:[%s6 + $0x1c4] sm:$0xf]
        %v8744 = vld [vmem:[%s6 + $0x1c8] sm:$0xf]
        %v8745 = vld [vmem:[%s6 + $0x1cc] sm:$0xf]
        %v8746 = vld [vmem:[%s6 + $0x1d0] sm:$0xf]
        %v8747 = vld [vmem:[%s6 + $0x1d4] sm:$0xf]
        %v8748 = vld [vmem:[%s6 + $0x1d8] sm:$0xf]
        %v8749 = vld [vmem:[%s6 + $0x1dc] sm:$0xf]
        %v8750 = vld [vmem:[%s6 + $0x1e0] sm:$0xf]
        %v8751 = vld [vmem:[%s6 + $0x1e4] sm:$0xf]
        %v8752 = vld [vmem:[%s6 + $0x1e8] sm:$0xf]
        %v8753 = vld [vmem:[%s6 + $0x1ec] sm:$0xf]
        %v8754 = vld [vmem:[%s6 + $0x1f0] sm:$0xf]
        %v8755 = vld [vmem:[%s6 + $0x1f4] sm:$0xf]
        %v8756 = vld [vmem:[%s6 + $0x1f8] sm:$0xf]
        %v8757 = vld [vmem:[%s6 + $0x1fc] sm:$0xf]
        %v8758 = vld [vmem:[%s6 + $0x200] sm:$0xf]
        %v8759 = vld [vmem:[%s6 + $0x204] sm:$0xf]
        %v8760 = vld [vmem:[%s6 + $0x208] sm:$0xf]
        %v8761 = vld [vmem:[%s6 + $0x20c] sm:$0xf]
        %v8762 = vld [vmem:[%s6 + $0x210] sm:$0xf]
        %v8763 = vld [vmem:[%s6 + $0x214] sm:$0xf]
        %v8764 = vld [vmem:[%s6 + $0x218] sm:$0xf]
        %v8765 = vld [vmem:[%s6 + $0x21c] sm:$0xf]
        %v8766 = vld [vmem:[%s6 + $0x220] sm:$0xf]
        %v8767 = vld [vmem:[%s6 + $0x224] sm:$0xf]
        %v8768 = vld [vmem:[%s6 + $0x228] sm:$0xf]
        %v8769 = vld [vmem:[%s6 + $0x22c] sm:$0xf]
        %v8770 = vld [vmem:[%s6 + $0x230] sm:$0xf]
        %v8771 = vld [vmem:[%s6 + $0x234] sm:$0xf]
        %v8772 = vld [vmem:[%s6 + $0x238] sm:$0xf]
        %v8773 = vld [vmem:[%s6 + $0x23c] sm:$0xf]
        %v8774 = vld [vmem:[#allocation2 + $0x13] sm:$0xff]
        %v8775 = vld [vmem:[#allocation2 + $0x1b] sm:$0xff]
        %v8776 = vld [vmem:[#allocation2 + $0x23] sm:$0xff]
        %v8777 = vld [vmem:[#allocation2 + $0x2b] sm:$0xff]
        %v8778 = vld [vmem:[#allocation2 + $0x33] sm:$0xff]
        %v8779 = vld [vmem:[#allocation2 + $0x3b] sm:$0xff]
        %v8780 = vld [vmem:[#allocation2 + $0x43] sm:$0xff]
        %v8781 = vld [vmem:[#allocation2 + $0x4b] sm:$0xff]
        %v8782 = vld [vmem:[#allocation2 + $0x53] sm:$0xff]
        %v8783 = vld [vmem:[#allocation2 + $0x5b] sm:$0xff]
        %v8784 = vld [vmem:[#allocation2 + $0x63] sm:$0xff]
        %v8785 = vld [vmem:[#allocation2 + $0x6b] sm:$0xff]
        %v8786 = vld [vmem:[#allocation2 + $0x73] sm:$0xff]
        %v8787 = vld [vmem:[#allocation2 + $0x7b] sm:$0xff]
        %v8788 = vld [vmem:[#allocation2 + $0x83] sm:$0xff]
        %v8789 = vld [vmem:[#allocation2 + $0x8b] sm:$0xff]
        %v8790 = vld [vmem:[#allocation2 + $0x93] sm:$0xff]
        %v8791 = vld [vmem:[#allocation2 + $0x9b] sm:$0xff]
        %v8792 = vld [vmem:[#allocation2 + $0xa3] sm:$0xff]
        %v8793 = vld [vmem:[#allocation2 + $0xab] sm:$0xff]
        %v8794 = vld [vmem:[#allocation2 + $0xb3] sm:$0xff]
        %v8795 = vld [vmem:[#allocation2 + $0xbb] sm:$0xff]
        %v8796 = vld [vmem:[#allocation2 + $0xc3] sm:$0xff]
        %v8797 = vld [vmem:[#allocation2 + $0xcb] sm:$0xff]
        %v8798 = vld [vmem:[#allocation2 + $0xd3] sm:$0xff]
        %v8799 = vld [vmem:[#allocation2 + $0xdb] sm:$0xff]
        %v8800 = vld [vmem:[#allocation2 + $0xe3] sm:$0xff]
        %v8801 = vld [vmem:[#allocation2 + $0xeb] sm:$0xff]
        %v8802 = vld [vmem:[#allocation2 + $0xf3] sm:$0xff]
        %v8803 = vld [vmem:[#allocation2 + $0xfb] sm:$0xff]
        %v8804 = vld [vmem:[#allocation2 + $0x103] sm:$0xff]
        %v8805 = vld [vmem:[#allocation2 + $0x10b] sm:$0xff]
        %v8806 = vld [vmem:[#allocation2 + $0x113] sm:$0xff]
        %v8807 = vld [vmem:[#allocation2 + $0x11b] sm:$0xff]
        %v8808 = vld [vmem:[#allocation2 + $0x123] sm:$0xff]
        %v8809 = vld [vmem:[#allocation2 + $0x12b] sm:$0xff]
        %v8810 = vld [vmem:[#allocation2 + $0x133] sm:$0xff]
        %v8811 = vld [vmem:[#allocation2 + $0x13b] sm:$0xff]
        %v8812 = vld [vmem:[#allocation2 + $0x143] sm:$0xff]
        %v8813 = vld [vmem:[#allocation2 + $0x14b] sm:$0xff]
        %v8814 = vld [vmem:[#allocation2 + $0x153] sm:$0xf]
        %v8815 = vld [vmem:[%s7] sm:$0x1]
        %v8817 = vlaneseq
        %v8818 = vshrl.u32 %v8817, 7
        %v8819 = vsub.s32 0, %v8818
        %v8820 = vrot.slane %v8815, %v8819
        %v9027 = vunpack.c.l.b16 %v8425
        %v9028 = vunpack.c.h.b16 %v8425
        %v9029 = vunpack.c.l.b16 %v8426
        %v9030 = vunpack.c.h.b16 %v8426
        %v9031 = vunpack.c.l.b16 %v8427
        %v9032 = vunpack.c.h.b16 %v8427
        %v9033 = vunpack.c.l.b16 %v8428
        %v9034 = vunpack.c.h.b16 %v8428
        %v9035 = vunpack.c.l.b16 %v8429
        %v9036 = vunpack.c.l.b16 %v8430
        %v9037 = vunpack.c.h.b16 %v8430
        %v9038 = vunpack.c.l.b16 %v8431
        %v9039 = vunpack.c.h.b16 %v8431
        %v9040 = vunpack.c.l.b16 %v8432
        %v9041 = vunpack.c.h.b16 %v8432
        %v9042 = vunpack.c.l.b16 %v8433
        %v9043 = vunpack.c.h.b16 %v8433
        %v9044 = vunpack.c.l.b16 %v8434
        %v9045 = vunpack.c.l.b16 %v8435
        %v9046 = vunpack.c.h.b16 %v8435
        %v9047 = vunpack.c.l.b16 %v8436
        %v9048 = vunpack.c.h.b16 %v8436
        %v9049 = vunpack.c.l.b16 %v8437
        %v9050 = vunpack.c.h.b16 %v8437
        %v9051 = vunpack.c.l.b16 %v8438
        %v9052 = vunpack.c.h.b16 %v8438
        %v9053 = vunpack.c.l.b16 %v8439
        %v9054 = vunpack.c.l.b16 %v8440
        %v9055 = vunpack.c.h.b16 %v8440
        %v9056 = vunpack.c.l.b16 %v8441
        %v9057 = vunpack.c.h.b16 %v8441
        %v9058 = vunpack.c.l.b16 %v8442
        %v9059 = vunpack.c.h.b16 %v8442
        %v9060 = vunpack.c.l.b16 %v8443
        %v9061 = vunpack.c.h.b16 %v8443
        %v9062 = vunpack.c.l.b16 %v8444
        %v9063 = vunpack.c.l.b16 %v8445
        %v9064 = vunpack.c.h.b16 %v8445
        %v9065 = vunpack.c.l.b16 %v8446
        %v9066 = vunpack.c.h.b16 %v8446
        %v9067 = vunpack.c.l.b16 %v8447
        %v9068 = vunpack.c.h.b16 %v8447
        %v9069 = vunpack.c.l.b16 %v8448
        %v9070 = vunpack.c.h.b16 %v8448
        %v9071 = vunpack.c.l.b16 %v8449
        %v9072 = vunpack.c.l.b16 %v8450
        %v9073 = vunpack.c.h.b16 %v8450
        %v9074 = vunpack.c.l.b16 %v8451
        %v9075 = vunpack.c.h.b16 %v8451
        %v9076 = vunpack.c.l.b16 %v8452
        %v9077 = vunpack.c.h.b16 %v8452
        %v9078 = vunpack.c.l.b16 %v8453
        %v9079 = vunpack.c.h.b16 %v8453
        %v9080 = vunpack.c.l.b16 %v8454
        %v9081 = vunpack.c.l.b16 %v8455
        %v9082 = vunpack.c.h.b16 %v8455
        %v9083 = vunpack.c.l.b16 %v8456
        %v9084 = vunpack.c.h.b16 %v8456
        %v9085 = vunpack.c.l.b16 %v8457
        %v9086 = vunpack.c.h.b16 %v8457
        %v9087 = vunpack.c.l.b16 %v8458
        %v9088 = vunpack.c.h.b16 %v8458
        %v9089 = vunpack.c.l.b16 %v8459
        %v9090 = vunpack.c.l.b16 %v8460
        %v9091 = vunpack.c.h.b16 %v8460
        %v9092 = vunpack.c.l.b16 %v8461
        %v9093 = vunpack.c.h.b16 %v8461
        %v9094 = vunpack.c.l.b16 %v8462
        %v9095 = vunpack.c.h.b16 %v8462
        %v9096 = vunpack.c.l.b16 %v8463
        %v9097 = vunpack.c.h.b16 %v8463
        %v9098 = vunpack.c.l.b16 %v8464
        %v9099 = vunpack.c.l.b16 %v8465
        %v9100 = vunpack.c.h.b16 %v8465
        %v9101 = vunpack.c.l.b16 %v8466
        %v9102 = vunpack.c.h.b16 %v8466
        %v9103 = vunpack.c.l.b16 %v8467
        %v9104 = vunpack.c.h.b16 %v8467
        %v9105 = vunpack.c.l.b16 %v8468
        %v9106 = vunpack.c.h.b16 %v8468
        %v9107 = vunpack.c.l.b16 %v8469
        %v9108 = vunpack.c.l.b16 %v8470
        %v9109 = vunpack.c.h.b16 %v8470
        %v9110 = vunpack.c.l.b16 %v8471
        %v9111 = vunpack.c.h.b16 %v8471
        %v9112 = vunpack.c.l.b16 %v8472
        %v9113 = vunpack.c.h.b16 %v8472
        %v9114 = vunpack.c.l.b16 %v8473
        %v9115 = vunpack.c.h.b16 %v8473
        %v9116 = vunpack.c.l.b16 %v8474
        %v9117 = vunpack.c.l.b16 %v8475
        %v9118 = vunpack.c.h.b16 %v8475
        %v9119 = vunpack.c.l.b16 %v8476
        %v9120 = vunpack.c.h.b16 %v8476
        %v9121 = vunpack.c.l.b16 %v8477
        %v9122 = vunpack.c.h.b16 %v8477
        %v9123 = vunpack.c.l.b16 %v8478
        %v9124 = vunpack.c.h.b16 %v8478
        %v9125 = vunpack.c.l.b16 %v8479
        %v9126 = vunpack.c.l.b16 %v8480
        %v9127 = vunpack.c.h.b16 %v8480
        %v9128 = vunpack.c.l.b16 %v8481
        %v9129 = vunpack.c.h.b16 %v8481
        %v9130 = vunpack.c.l.b16 %v8482
        %v9131 = vunpack.c.h.b16 %v8482
        %v9132 = vunpack.c.l.b16 %v8483
        %v9133 = vunpack.c.h.b16 %v8483
        %v9134 = vunpack.c.l.b16 %v8484
        %v9135 = vunpack.c.l.b16 %v8485
        %v9136 = vunpack.c.h.b16 %v8485
        %v9137 = vunpack.c.l.b16 %v8486
        %v9138 = vunpack.c.h.b16 %v8486
        %v9139 = vunpack.c.l.b16 %v8487
        %v9140 = vunpack.c.h.b16 %v8487
        %v9141 = vunpack.c.l.b16 %v8488
        %v9142 = vunpack.c.h.b16 %v8488
        %v9143 = vunpack.c.l.b16 %v8489
        %v9144 = vunpack.c.l.b16 %v8490
        %v9145 = vunpack.c.h.b16 %v8490
        %v9146 = vunpack.c.l.b16 %v8491
        %v9147 = vunpack.c.h.b16 %v8491
        %v9148 = vunpack.c.l.b16 %v8492
        %v9149 = vunpack.c.h.b16 %v8492
        %v9150 = vunpack.c.l.b16 %v8493
        %v9151 = vunpack.c.h.b16 %v8493
        %v9152 = vunpack.c.l.b16 %v8494
        %v9153 = vunpack.c.l.b16 %v8495
        %v9154 = vunpack.c.h.b16 %v8495
        %v9155 = vunpack.c.l.b16 %v8496
        %v9156 = vunpack.c.h.b16 %v8496
        %v9157 = vunpack.c.l.b16 %v8497
        %v9158 = vunpack.c.h.b16 %v8497
        %v9159 = vunpack.c.l.b16 %v8498
        %v9160 = vunpack.c.h.b16 %v8498
        %v9161 = vunpack.c.l.b16 %v8499
        %v9162 = vunpack.c.l.b16 %v8500
        %v9163 = vunpack.c.h.b16 %v8500
        %v9164 = vunpack.c.l.b16 %v8501
        %v9165 = vunpack.c.h.b16 %v8501
        %v9166 = vunpack.c.l.b16 %v8502
        %v9167 = vunpack.c.h.b16 %v8502
        %v9168 = vunpack.c.l.b16 %v8503
        %v9169 = vunpack.c.h.b16 %v8503
        %v9170 = vunpack.c.l.b16 %v8504
        %v9171 = vunpack.c.l.b16 %v8505
        %v9172 = vunpack.c.h.b16 %v8505
        %v9173 = vunpack.c.l.b16 %v8506
        %v9174 = vunpack.c.h.b16 %v8506
        %v9175 = vunpack.c.l.b16 %v8507
        %v9176 = vunpack.c.h.b16 %v8507
        %v9177 = vunpack.c.l.b16 %v8508
        %v9178 = vunpack.c.h.b16 %v8508
        %v9179 = vunpack.c.l.b16 %v8509
        %v9180 = vunpack.c.l.b16 %v8510
        %v9181 = vunpack.c.h.b16 %v8510
        %v9182 = vunpack.c.l.b16 %v8511
        %v9183 = vunpack.c.h.b16 %v8511
        %v9184 = vunpack.c.l.b16 %v8512
        %v9185 = vunpack.c.h.b16 %v8512
        %v9186 = vunpack.c.l.b16 %v8513
        %v9187 = vunpack.c.h.b16 %v8513
        %v9188 = vunpack.c.l.b16 %v8514
        %v9189 = vunpack.c.l.b16 %v8515
        %v9190 = vunpack.c.h.b16 %v8515
        %v9191 = vunpack.c.l.b16 %v8516
        %v9192 = vunpack.c.h.b16 %v8516
        %v9193 = vunpack.c.l.b16 %v8517
        %v9194 = vunpack.c.h.b16 %v8517
        %v9195 = vunpack.c.l.b16 %v8518
        %v9196 = vunpack.c.h.b16 %v8518
        %v9197 = vunpack.c.l.b16 %v8519
        %v9198 = vunpack.c.l.b16 %v8520
        %v9199 = vunpack.c.h.b16 %v8520
        %v9200 = vunpack.c.l.b16 %v8521
        %v9201 = vunpack.c.h.b16 %v8521
        %v9202 = vunpack.c.l.b16 %v8522
        %v9203 = vunpack.c.h.b16 %v8522
        %v9204 = vunpack.c.l.b16 %v8523
        %v9205 = vunpack.c.h.b16 %v8523
        %v9206 = vunpack.c.l.b16 %v8524
        %v9207 = vunpack.c.l.b16 %v8525
        %v9208 = vunpack.c.h.b16 %v8525
        %v9209 = vunpack.c.l.b16 %v8526
        %v9210 = vunpack.c.h.b16 %v8526
        %v9211 = vunpack.c.l.b16 %v8527
        %v9212 = vunpack.c.h.b16 %v8527
        %v9213 = vunpack.c.l.b16 %v8528
        %v9214 = vunpack.c.h.b16 %v8528
        %v9215 = vunpack.c.l.b16 %v8529
        %v9216 = vunpack.c.l.b16 %v8530
        %v9217 = vunpack.c.h.b16 %v8530
        %v9218 = vunpack.c.l.b16 %v8531
        %v9219 = vunpack.c.h.b16 %v8531
        %v9220 = vunpack.c.l.b16 %v8532
        %v9221 = vunpack.c.h.b16 %v8532
        %v9222 = vunpack.c.l.b16 %v8533
        %v9223 = vunpack.c.h.b16 %v8533
        %v9224 = vunpack.c.l.b16 %v8534
        %v9225 = vunpack.c.l.b16 %v8535
        %v9226 = vunpack.c.h.b16 %v8535
        %v9227 = vunpack.c.l.b16 %v8536
        %v9228 = vunpack.c.h.b16 %v8536
        %v9229 = vunpack.c.l.b16 %v8537
        %v9230 = vunpack.c.h.b16 %v8537
        %v9231 = vunpack.c.l.b16 %v8538
        %v9232 = vunpack.c.h.b16 %v8538
        %v9233 = vunpack.c.l.b16 %v8539
        %v9234 = vunpack.c.l.b16 %v8540
        %v9235 = vunpack.c.h.b16 %v8540
        %v9236 = vunpack.c.l.b16 %v8541
        %v9237 = vunpack.c.h.b16 %v8541
        %v9238 = vunpack.c.l.b16 %v8542
        %v9239 = vunpack.c.h.b16 %v8542
        %v9240 = vunpack.c.l.b16 %v8543
        %v9241 = vunpack.c.h.b16 %v8543
        %v9242 = vunpack.c.l.b16 %v8544
        %v9243 = vunpack.c.l.b16 %v8545
        %v9244 = vunpack.c.h.b16 %v8545
        %v9245 = vunpack.c.l.b16 %v8546
        %v9246 = vunpack.c.h.b16 %v8546
        %v9247 = vunpack.c.l.b16 %v8547
        %v9248 = vunpack.c.h.b16 %v8547
        %v9249 = vunpack.c.l.b16 %v8548
        %v9250 = vunpack.c.h.b16 %v8548
        %v9251 = vunpack.c.l.b16 %v8549
        %v9252 = vunpack.c.l.b16 %v8550
        %v9253 = vunpack.c.h.b16 %v8550
        %v9254 = vunpack.c.l.b16 %v8551
        %v9255 = vunpack.c.h.b16 %v8551
        %v9256 = vunpack.c.l.b16 %v8552
        %v9257 = vunpack.c.h.b16 %v8552
        %v9258 = vunpack.c.l.b16 %v8553
        %v9259 = vunpack.c.h.b16 %v8553
        %v9260 = vunpack.c.l.b16 %v8554
        %v9261 = vunpack.c.l.b16 %v8555
        %v9262 = vunpack.c.h.b16 %v8555
        %v9263 = vunpack.c.l.b16 %v8556
        %v9264 = vunpack.c.h.b16 %v8556
        %v9265 = vunpack.c.l.b16 %v8557
        %v9266 = vunpack.c.h.b16 %v8557
        %v9267 = vunpack.c.l.b16 %v8558
        %v9268 = vunpack.c.h.b16 %v8558
        %v9269 = vunpack.c.l.b16 %v8559
        %v9270 = vunpack.c.l.b16 %v8560
        %v9271 = vunpack.c.h.b16 %v8560
        %v9272 = vunpack.c.l.b16 %v8561
        %v9273 = vunpack.c.h.b16 %v8561
        %v9274 = vunpack.c.l.b16 %v8562
        %v9275 = vunpack.c.h.b16 %v8562
        %v9276 = vunpack.c.l.b16 %v8563
        %v9277 = vunpack.c.h.b16 %v8563
        %v9278 = vunpack.c.l.b16 %v8564
        %v9279 = vunpack.c.l.b16 %v8565
        %v9280 = vunpack.c.h.b16 %v8565
        %v9281 = vunpack.c.l.b16 %v8566
        %v9282 = vunpack.c.h.b16 %v8566
        %v9283 = vunpack.c.l.b16 %v8567
        %v9284 = vunpack.c.h.b16 %v8567
        %v9285 = vunpack.c.l.b16 %v8568
        %v9286 = vunpack.c.h.b16 %v8568
        %v9287 = vunpack.c.l.b16 %v8569
        %v9288 = vunpack.c.l.b16 %v8570
        %v9289 = vunpack.c.h.b16 %v8570
        %v9290 = vunpack.c.l.b16 %v8571
        %v9291 = vunpack.c.h.b16 %v8571
        %v9292 = vunpack.c.l.b16 %v8572
        %v9293 = vunpack.c.h.b16 %v8572
        %v9294 = vunpack.c.l.b16 %v8573
        %v9295 = vunpack.c.h.b16 %v8573
        %v9296 = vunpack.c.l.b16 %v8574
        %v9297 = vunpack.c.l.b16 %v8575
        %v9298 = vunpack.c.h.b16 %v8575
        %v9299 = vunpack.c.l.b16 %v8576
        %v9300 = vunpack.c.h.b16 %v8576
        %v9301 = vunpack.c.l.b16 %v8577
        %v9302 = vunpack.c.h.b16 %v8577
        %v9303 = vunpack.c.l.b16 %v8578
        %v9304 = vunpack.c.h.b16 %v8578
        %v9305 = vunpack.c.l.b16 %v8579
        %v9306 = vunpack.c.l.b16 %v8580
        %v9307 = vunpack.c.h.b16 %v8580
        %v9308 = vunpack.c.l.b16 %v8581
        %v9309 = vunpack.c.h.b16 %v8581
        %v9310 = vunpack.c.l.b16 %v8582
        %v9311 = vunpack.c.h.b16 %v8582
        %v9312 = vunpack.c.l.b16 %v8583
        %v9313 = vunpack.c.h.b16 %v8583
        %v9314 = vunpack.c.l.b16 %v8584
        %v9315 = vunpack.c.l.b16 %v8585
        %v9316 = vunpack.c.h.b16 %v8585
        %v9317 = vunpack.c.l.b16 %v8586
        %v9318 = vunpack.c.h.b16 %v8586
        %v9319 = vunpack.c.l.b16 %v8587
        %v9320 = vunpack.c.h.b16 %v8587
        %v9321 = vunpack.c.l.b16 %v8588
        %v9322 = vunpack.c.h.b16 %v8588
        %v9323 = vunpack.c.l.b16 %v8589
        %v9324 = vunpack.c.l.b16 %v8590
        %v9325 = vunpack.c.h.b16 %v8590
        %v9326 = vunpack.c.l.b16 %v8591
        %v9327 = vunpack.c.h.b16 %v8591
        %v9328 = vunpack.c.l.b16 %v8592
        %v9329 = vunpack.c.h.b16 %v8592
        %v9330 = vunpack.c.l.b16 %v8593
        %v9331 = vunpack.c.h.b16 %v8593
        %v9332 = vunpack.c.l.b16 %v8594
        %v9333 = vunpack.c.l.b16 %v8595
        %v9334 = vunpack.c.h.b16 %v8595
        %v9335 = vunpack.c.l.b16 %v8596
        %v9336 = vunpack.c.h.b16 %v8596
        %v9337 = vunpack.c.l.b16 %v8597
        %v9338 = vunpack.c.h.b16 %v8597
        %v9339 = vunpack.c.l.b16 %v8598
        %v9340 = vunpack.c.h.b16 %v8598
        %v9341 = vunpack.c.l.b16 %v8599
        %v9342 = vunpack.c.l.b16 %v8600
        %v9343 = vunpack.c.h.b16 %v8600
        %v9344 = vunpack.c.l.b16 %v8601
        %v9345 = vunpack.c.h.b16 %v8601
        %v9346 = vunpack.c.l.b16 %v8602
        %v9347 = vunpack.c.h.b16 %v8602
        %v9348 = vunpack.c.l.b16 %v8603
        %v9349 = vunpack.c.h.b16 %v8603
        %v9350 = vunpack.c.l.b16 %v8604
        %v9351 = vunpack.c.l.b16 %v8605
        %v9352 = vunpack.c.h.b16 %v8605
        %v9353 = vunpack.c.l.b16 %v8606
        %v9354 = vunpack.c.h.b16 %v8606
        %v9355 = vunpack.c.l.b16 %v8607
        %v9356 = vunpack.c.h.b16 %v8607
        %v9357 = vunpack.c.l.b16 %v8608
        %v9358 = vunpack.c.h.b16 %v8608
        %v9359 = vunpack.c.l.b16 %v8609
        %v9360 = vunpack.c.l.b16 %v8610
        %v9361 = vunpack.c.h.b16 %v8610
        %v9362 = vunpack.c.l.b16 %v8611
        %v9363 = vunpack.c.h.b16 %v8611
        %v9364 = vunpack.c.l.b16 %v8612
        %v9365 = vunpack.c.h.b16 %v8612
        %v9366 = vunpack.c.l.b16 %v8613
        %v9367 = vunpack.c.h.b16 %v8613
        %v9368 = vunpack.c.l.b16 %v8614
        %v9369 = vunpack.c.l.b16 %v8615
        %v9370 = vunpack.c.h.b16 %v8615
        %v9371 = vunpack.c.l.b16 %v8616
        %v9372 = vunpack.c.h.b16 %v8616
        %v9373 = vunpack.c.l.b16 %v8617
        %v9374 = vunpack.c.h.b16 %v8617
        %v9375 = vunpack.c.l.b16 %v8618
        %v9376 = vunpack.c.h.b16 %v8618
        %v9377 = vunpack.c.l.b16 %v8619
        %v9378 = vunpack.c.l.b16 %v8620
        %v9379 = vunpack.c.h.b16 %v8620
        %v9380 = vunpack.c.l.b16 %v8621
        %v9381 = vunpack.c.h.b16 %v8621
        %v9382 = vunpack.c.l.b16 %v8622
        %v9383 = vunpack.c.h.b16 %v8622
        %v9384 = vunpack.c.l.b16 %v8623
        %v9385 = vunpack.c.h.b16 %v8623
        %v9386 = vunpack.c.l.b16 %v8624
        %v9387 = vunpack.c.l.b16 %v8625
        %v9388 = vunpack.c.h.b16 %v8625
        %v9389 = vunpack.c.l.b16 %v8626
        %v9390 = vunpack.c.h.b16 %v8626
        %v9391 = vunpack.c.l.b16 %v8627
        %v9392 = vunpack.c.h.b16 %v8627
        %v9393 = vunpack.c.l.b16 %v8628
        %v9394 = vunpack.c.h.b16 %v8628
        %v9395 = vunpack.c.l.b16 %v8629
        %v9396 = vpack.c.b16 %v9036, %v9027
        %v9397 = vpack.c.b16 %v9037, %v9028
        %v9398 = vpack.c.b16 %v9038, %v9029
        %v9399 = vpack.c.b16 %v9039, %v9030
        %v9400 = vpack.c.b16 %v9040, %v9031
        %v9401 = vpack.c.b16 %v9041, %v9032
        %v9402 = vpack.c.b16 %v9042, %v9033
        %v9403 = vpack.c.b16 %v9043, %v9034
        %v9404 = vpack.c.b16 %v9044, %v9035
        %v9405 = vpack.c.b16 %v9054, %v9045
        %v9406 = vpack.c.b16 %v9055, %v9046
        %v9407 = vpack.c.b16 %v9056, %v9047
        %v9408 = vpack.c.b16 %v9057, %v9048
        %v9409 = vpack.c.b16 %v9058, %v9049
        %v9410 = vpack.c.b16 %v9059, %v9050
        %v9411 = vpack.c.b16 %v9060, %v9051
        %v9412 = vpack.c.b16 %v9061, %v9052
        %v9413 = vpack.c.b16 %v9062, %v9053
        %v9414 = vpack.c.b16 %v9072, %v9063
        %v9415 = vpack.c.b16 %v9073, %v9064
        %v9416 = vpack.c.b16 %v9074, %v9065
        %v9417 = vpack.c.b16 %v9075, %v9066
        %v9418 = vpack.c.b16 %v9076, %v9067
        %v9419 = vpack.c.b16 %v9077, %v9068
        %v9420 = vpack.c.b16 %v9078, %v9069
        %v9421 = vpack.c.b16 %v9079, %v9070
        %v9422 = vpack.c.b16 %v9080, %v9071
        %v9423 = vpack.c.b16 %v9090, %v9081
        %v9424 = vpack.c.b16 %v9091, %v9082
        %v9425 = vpack.c.b16 %v9092, %v9083
        %v9426 = vpack.c.b16 %v9093, %v9084
        %v9427 = vpack.c.b16 %v9094, %v9085
        %v9428 = vpack.c.b16 %v9095, %v9086
        %v9429 = vpack.c.b16 %v9096, %v9087
        %v9430 = vpack.c.b16 %v9097, %v9088
        %v9431 = vpack.c.b16 %v9098, %v9089
        %v9432 = vpack.c.b16 %v9108, %v9099
        %v9433 = vpack.c.b16 %v9109, %v9100
        %v9434 = vpack.c.b16 %v9110, %v9101
        %v9435 = vpack.c.b16 %v9111, %v9102
        %v9436 = vpack.c.b16 %v9112, %v9103
        %v9437 = vpack.c.b16 %v9113, %v9104
        %v9438 = vpack.c.b16 %v9114, %v9105
        %v9439 = vpack.c.b16 %v9115, %v9106
        %v9440 = vpack.c.b16 %v9116, %v9107
        %v9441 = vpack.c.b16 %v9126, %v9117
        %v9442 = vpack.c.b16 %v9127, %v9118
        %v9443 = vpack.c.b16 %v9128, %v9119
        %v9444 = vpack.c.b16 %v9129, %v9120
        %v9445 = vpack.c.b16 %v9130, %v9121
        %v9446 = vpack.c.b16 %v9131, %v9122
        %v9447 = vpack.c.b16 %v9132, %v9123
        %v9448 = vpack.c.b16 %v9133, %v9124
        %v9449 = vpack.c.b16 %v9134, %v9125
        %v9450 = vpack.c.b16 %v9144, %v9135
        %v9451 = vpack.c.b16 %v9145, %v9136
        %v9452 = vpack.c.b16 %v9146, %v9137
        %v9453 = vpack.c.b16 %v9147, %v9138
        %v9454 = vpack.c.b16 %v9148, %v9139
        %v9455 = vpack.c.b16 %v9149, %v9140
        %v9456 = vpack.c.b16 %v9150, %v9141
        %v9457 = vpack.c.b16 %v9151, %v9142
        %v9458 = vpack.c.b16 %v9152, %v9143
        %v9459 = vpack.c.b16 %v9162, %v9153
        %v9460 = vpack.c.b16 %v9163, %v9154
        %v9461 = vpack.c.b16 %v9164, %v9155
        %v9462 = vpack.c.b16 %v9165, %v9156
        %v9463 = vpack.c.b16 %v9166, %v9157
        %v9464 = vpack.c.b16 %v9167, %v9158
        %v9465 = vpack.c.b16 %v9168, %v9159
        %v9466 = vpack.c.b16 %v9169, %v9160
        %v9467 = vpack.c.b16 %v9170, %v9161
        %v9468 = vpack.c.b16 %v9180, %v9171
        %v9469 = vpack.c.b16 %v9181, %v9172
        %v9470 = vpack.c.b16 %v9182, %v9173
        %v9471 = vpack.c.b16 %v9183, %v9174
        %v9472 = vpack.c.b16 %v9184, %v9175
        %v9473 = vpack.c.b16 %v9185, %v9176
        %v9474 = vpack.c.b16 %v9186, %v9177
        %v9475 = vpack.c.b16 %v9187, %v9178
        %v9476 = vpack.c.b16 %v9188, %v9179
        %v9477 = vpack.c.b16 %v9198, %v9189
        %v9478 = vpack.c.b16 %v9199, %v9190
        %v9479 = vpack.c.b16 %v9200, %v9191
        %v9480 = vpack.c.b16 %v9201, %v9192
        %v9481 = vpack.c.b16 %v9202, %v9193
        %v9482 = vpack.c.b16 %v9203, %v9194
        %v9483 = vpack.c.b16 %v9204, %v9195
        %v9484 = vpack.c.b16 %v9205, %v9196
        %v9485 = vpack.c.b16 %v9206, %v9197
        %v9486 = vpack.c.b16 %v9216, %v9207
        %v9487 = vpack.c.b16 %v9217, %v9208
        %v9488 = vpack.c.b16 %v9218, %v9209
        %v9489 = vpack.c.b16 %v9219, %v9210
        %v9490 = vpack.c.b16 %v9220, %v9211
        %v9491 = vpack.c.b16 %v9221, %v9212
        %v9492 = vpack.c.b16 %v9222, %v9213
        %v9493 = vpack.c.b16 %v9223, %v9214
        %v9494 = vpack.c.b16 %v9224, %v9215
        %v9495 = vpack.c.b16 %v9234, %v9225
        %v9496 = vpack.c.b16 %v9235, %v9226
        %v9497 = vpack.c.b16 %v9236, %v9227
        %v9498 = vpack.c.b16 %v9237, %v9228
        %v9499 = vpack.c.b16 %v9238, %v9229
        %v9500 = vpack.c.b16 %v9239, %v9230
        %v9501 = vpack.c.b16 %v9240, %v9231
        %v9502 = vpack.c.b16 %v9241, %v9232
        %v9503 = vpack.c.b16 %v9242, %v9233
        %v9504 = vpack.c.b16 %v9252, %v9243
        %v9505 = vpack.c.b16 %v9253, %v9244
        %v9506 = vpack.c.b16 %v9254, %v9245
        %v9507 = vpack.c.b16 %v9255, %v9246
        %v9508 = vpack.c.b16 %v9256, %v9247
        %v9509 = vpack.c.b16 %v9257, %v9248
        %v9510 = vpack.c.b16 %v9258, %v9249
        %v9511 = vpack.c.b16 %v9259, %v9250
        %v9512 = vpack.c.b16 %v9260, %v9251
        %v9513 = vpack.c.b16 %v9270, %v9261
        %v9514 = vpack.c.b16 %v9271, %v9262
        %v9515 = vpack.c.b16 %v9272, %v9263
        %v9516 = vpack.c.b16 %v9273, %v9264
        %v9517 = vpack.c.b16 %v9274, %v9265
        %v9518 = vpack.c.b16 %v9275, %v9266
        %v9519 = vpack.c.b16 %v9276, %v9267
        %v9520 = vpack.c.b16 %v9277, %v9268
        %v9521 = vpack.c.b16 %v9278, %v9269
        %v9522 = vpack.c.b16 %v9288, %v9279
        %v9523 = vpack.c.b16 %v9289, %v9280
        %v9524 = vpack.c.b16 %v9290, %v9281
        %v9525 = vpack.c.b16 %v9291, %v9282
        %v9526 = vpack.c.b16 %v9292, %v9283
        %v9527 = vpack.c.b16 %v9293, %v9284
        %v9528 = vpack.c.b16 %v9294, %v9285
        %v9529 = vpack.c.b16 %v9295, %v9286
        %v9530 = vpack.c.b16 %v9296, %v9287
        %v9531 = vpack.c.b16 %v9306, %v9297
        %v9532 = vpack.c.b16 %v9307, %v9298
        %v9533 = vpack.c.b16 %v9308, %v9299
        %v9534 = vpack.c.b16 %v9309, %v9300
        %v9535 = vpack.c.b16 %v9310, %v9301
        %v9536 = vpack.c.b16 %v9311, %v9302
        %v9537 = vpack.c.b16 %v9312, %v9303
        %v9538 = vpack.c.b16 %v9313, %v9304
        %v9539 = vpack.c.b16 %v9314, %v9305
        %v9540 = vpack.c.b16 %v9324, %v9315
        %v9541 = vpack.c.b16 %v9325, %v9316
        %v9542 = vpack.c.b16 %v9326, %v9317
        %v9543 = vpack.c.b16 %v9327, %v9318
        %v9544 = vpack.c.b16 %v9328, %v9319
        %v9545 = vpack.c.b16 %v9329, %v9320
        %v9546 = vpack.c.b16 %v9330, %v9321
        %v9547 = vpack.c.b16 %v9331, %v9322
        %v9548 = vpack.c.b16 %v9332, %v9323
        %v9549 = vpack.c.b16 %v9342, %v9333
        %v9550 = vpack.c.b16 %v9343, %v9334
        %v9551 = vpack.c.b16 %v9344, %v9335
        %v9552 = vpack.c.b16 %v9345, %v9336
        %v9553 = vpack.c.b16 %v9346, %v9337
        %v9554 = vpack.c.b16 %v9347, %v9338
        %v9555 = vpack.c.b16 %v9348, %v9339
        %v9556 = vpack.c.b16 %v9349, %v9340
        %v9557 = vpack.c.b16 %v9350, %v9341
        %v9558 = vpack.c.b16 %v9360, %v9351
        %v9559 = vpack.c.b16 %v9361, %v9352
        %v9560 = vpack.c.b16 %v9362, %v9353
        %v9561 = vpack.c.b16 %v9363, %v9354
        %v9562 = vpack.c.b16 %v9364, %v9355
        %v9563 = vpack.c.b16 %v9365, %v9356
        %v9564 = vpack.c.b16 %v9366, %v9357
        %v9565 = vpack.c.b16 %v9367, %v9358
        %v9566 = vpack.c.b16 %v9368, %v9359
        %v9567 = vpack.c.b16 %v9378, %v9369
        %v9568 = vpack.c.b16 %v9379, %v9370
        %v9569 = vpack.c.b16 %v9380, %v9371
        %v9570 = vpack.c.b16 %v9381, %v9372
        %v9571 = vpack.c.b16 %v9382, %v9373
        %v9572 = vpack.c.b16 %v9383, %v9374
        %v9573 = vpack.c.b16 %v9384, %v9375
        %v9574 = vpack.c.b16 %v9385, %v9376
        %v9575 = vpack.c.b16 %v9386, %v9377
        %v9576 = vpack.c.b16 %v9387, %v9387
        %v9577 = vpack.c.b16 %v9388, %v9388
        %v9578 = vpack.c.b16 %v9389, %v9389
        %v9579 = vpack.c.b16 %v9390, %v9390
        %v9580 = vpack.c.b16 %v9391, %v9391
        %v9581 = vpack.c.b16 %v9392, %v9392
        %v9582 = vpack.c.b16 %v9393, %v9393
        %v9583 = vpack.c.b16 %v9394, %v9394
        %v9584 = vpack.c.b16 %v9395, %v9395
        %v9918 = vunpack.c.l.b16 %v8630
        %v9919 = vunpack.c.l.b16 %v8631
        %v9920 = vunpack.c.l.b16 %v8632
        %v9921 = vunpack.c.l.b16 %v8633
        %v9922 = vunpack.c.l.b16 %v8634
        %v9923 = vunpack.c.l.b16 %v8635
        %v9924 = vunpack.c.l.b16 %v8636
        %v9925 = vunpack.c.l.b16 %v8637
        %v9926 = vunpack.c.l.b16 %v8638
        %v9927 = vunpack.c.l.b16 %v8639
        %v9928 = vunpack.c.l.b16 %v8640
        %v9929 = vunpack.c.l.b16 %v8641
        %v9930 = vunpack.c.l.b16 %v8642
        %v9931 = vunpack.c.l.b16 %v8643
        %v9932 = vunpack.c.l.b16 %v8644
        %v9933 = vunpack.c.l.b16 %v8645
        %v9934 = vunpack.c.l.b16 %v8646
        %v9935 = vunpack.c.l.b16 %v8647
        %v9936 = vunpack.c.l.b16 %v8648
        %v9937 = vunpack.c.l.b16 %v8649
        %v9938 = vunpack.c.l.b16 %v8650
        %v9939 = vunpack.c.l.b16 %v8651
        %v9940 = vunpack.c.l.b16 %v8652
        %v9941 = vunpack.c.l.b16 %v8653
        %v9942 = vunpack.c.l.b16 %v8654
        %v9943 = vunpack.c.l.b16 %v8655
        %v9944 = vunpack.c.l.b16 %v8656
        %v9945 = vunpack.c.l.b16 %v8657
        %v9946 = vunpack.c.l.b16 %v8658
        %v9947 = vunpack.c.l.b16 %v8659
        %v9948 = vunpack.c.l.b16 %v8660
        %v9949 = vunpack.c.l.b16 %v8661
        %v9950 = vunpack.c.l.b16 %v8662
        %v9951 = vunpack.c.l.b16 %v8663
        %v9952 = vunpack.c.l.b16 %v8664
        %v9953 = vunpack.c.l.b16 %v8665
        %v9954 = vunpack.c.l.b16 %v8666
        %v9955 = vunpack.c.l.b16 %v8667
        %v9956 = vunpack.c.l.b16 %v8668
        %v9957 = vunpack.c.l.b16 %v8669
        %v9958 = vunpack.c.l.b16 %v8670
        %v9959 = vunpack.c.l.b16 %v8671
        %v9960 = vunpack.c.l.b16 %v8672
        %v9961 = vunpack.c.l.b16 %v8673
        %v9962 = vunpack.c.l.b16 %v8674
        %v9963 = vunpack.c.l.b16 %v8675
        %v9964 = vunpack.c.l.b16 %v8676
        %v9965 = vunpack.c.l.b16 %v8677
        %v9966 = vunpack.c.l.b16 %v8678
        %v9967 = vunpack.c.l.b16 %v8679
        %v9968 = vunpack.c.l.b16 %v8680
        %v9969 = vunpack.c.l.b16 %v8681
        %v9970 = vunpack.c.l.b16 %v8682
        %v9971 = vunpack.c.l.b16 %v8683
        %v9972 = vunpack.c.l.b16 %v8684
        %v9973 = vunpack.c.l.b16 %v8685
        %v9974 = vunpack.c.l.b16 %v8686
        %v9975 = vunpack.c.l.b16 %v8687
        %v9976 = vunpack.c.l.b16 %v8688
        %v9977 = vunpack.c.l.b16 %v8689
        %v9978 = vunpack.c.l.b16 %v8690
        %v9979 = vunpack.c.l.b16 %v8691
        %v9980 = vunpack.c.l.b16 %v8692
        %v9981 = vunpack.c.l.b16 %v8693
        %v9982 = vunpack.c.l.b16 %v8694
        %v9983 = vunpack.c.l.b16 %v8695
        %v9984 = vunpack.c.l.b16 %v8696
        %v9985 = vunpack.c.l.b16 %v8697
        %v9986 = vunpack.c.l.b16 %v8698
        %v9987 = vunpack.c.l.b16 %v8699
        %v9988 = vunpack.c.l.b16 %v8700
        %v9989 = vunpack.c.l.b16 %v8701
        %v9990 = vunpack.c.l.b16 %v8702
        %v9991 = vunpack.c.l.b16 %v8703
        %v9992 = vunpack.c.l.b16 %v8704
        %v9993 = vunpack.c.l.b16 %v8705
        %v9994 = vunpack.c.l.b16 %v8706
        %v9995 = vunpack.c.l.b16 %v8707
        %v9996 = vunpack.c.l.b16 %v8708
        %v9997 = vunpack.c.l.b16 %v8709
        %v9998 = vunpack.c.l.b16 %v8710
        %v9999 = vunpack.c.l.b16 %v8711
        %v10000 = vunpack.c.l.b16 %v8712
        %v10001 = vunpack.c.l.b16 %v8713
        %v10002 = vunpack.c.l.b16 %v8714
        %v10003 = vunpack.c.l.b16 %v8715
        %v10004 = vunpack.c.l.b16 %v8716
        %v10005 = vunpack.c.l.b16 %v8717
        %v10006 = vunpack.c.l.b16 %v8718
        %v10007 = vunpack.c.l.b16 %v8719
        %v10008 = vunpack.c.l.b16 %v8720
        %v10009 = vunpack.c.l.b16 %v8721
        %v10010 = vunpack.c.l.b16 %v8722
        %v10011 = vunpack.c.l.b16 %v8723
        %v10012 = vunpack.c.l.b16 %v8724
        %v10013 = vunpack.c.l.b16 %v8725
        %v10014 = vunpack.c.l.b16 %v8726
        %v10015 = vunpack.c.l.b16 %v8727
        %v10016 = vunpack.c.l.b16 %v8728
        %v10017 = vunpack.c.l.b16 %v8729
        %v10018 = vunpack.c.l.b16 %v8730
        %v10019 = vunpack.c.l.b16 %v8731
        %v10020 = vunpack.c.l.b16 %v8732
        %v10021 = vunpack.c.l.b16 %v8733
        %v10022 = vunpack.c.l.b16 %v8734
        %v10023 = vunpack.c.l.b16 %v8735
        %v10024 = vunpack.c.l.b16 %v8736
        %v10025 = vunpack.c.l.b16 %v8737
        %v10026 = vunpack.c.l.b16 %v8738
        %v10027 = vunpack.c.l.b16 %v8739
        %v10028 = vunpack.c.l.b16 %v8740
        %v10029 = vunpack.c.l.b16 %v8741
        %v10030 = vunpack.c.l.b16 %v8742
        %v10031 = vunpack.c.l.b16 %v8743
        %v10032 = vunpack.c.l.b16 %v8744
        %v10033 = vunpack.c.l.b16 %v8745
        %v10034 = vunpack.c.l.b16 %v8746
        %v10035 = vunpack.c.l.b16 %v8747
        %v10036 = vunpack.c.l.b16 %v8748
        %v10037 = vunpack.c.l.b16 %v8749
        %v10038 = vunpack.c.l.b16 %v8750
        %v10039 = vunpack.c.l.b16 %v8751
        %v10040 = vunpack.c.l.b16 %v8752
        %v10041 = vunpack.c.l.b16 %v8753
        %v10042 = vunpack.c.l.b16 %v8754
        %v10043 = vunpack.c.l.b16 %v8755
        %v10044 = vunpack.c.l.b16 %v8756
        %v10045 = vunpack.c.l.b16 %v8757
        %v10046 = vunpack.c.l.b16 %v8758
        %v10047 = vunpack.c.l.b16 %v8759
        %v10048 = vunpack.c.l.b16 %v8760
        %v10049 = vunpack.c.l.b16 %v8761
        %v10050 = vunpack.c.l.b16 %v8762
        %v10051 = vunpack.c.l.b16 %v8763
        %v10052 = vunpack.c.l.b16 %v8764
        %v10053 = vunpack.c.l.b16 %v8765
        %v10054 = vunpack.c.l.b16 %v8766
        %v10055 = vunpack.c.l.b16 %v8767
        %v10056 = vunpack.c.l.b16 %v8768
        %v10057 = vunpack.c.l.b16 %v8769
        %v10058 = vunpack.c.l.b16 %v8770
        %v10059 = vunpack.c.l.b16 %v8771
        %v10060 = vunpack.c.l.b16 %v8772
        %v10061 = vunpack.c.l.b16 %v8773
        %v10062 = vpack.c.b16 %v9919, %v9918
        %v10063 = vpack.c.b16 %v9921, %v9920
        %v10064 = vpack.c.b16 %v9923, %v9922
        %v10065 = vpack.c.b16 %v9925, %v9924
        %v10066 = vpack.c.b16 %v9927, %v9926
        %v10067 = vpack.c.b16 %v9929, %v9928
        %v10068 = vpack.c.b16 %v9931, %v9930
        %v10069 = vpack.c.b16 %v9933, %v9932
        %v10070 = vpack.c.b16 %v9935, %v9934
        %v10071 = vpack.c.b16 %v9937, %v9936
        %v10072 = vpack.c.b16 %v9939, %v9938
        %v10073 = vpack.c.b16 %v9941, %v9940
        %v10074 = vpack.c.b16 %v9943, %v9942
        %v10075 = vpack.c.b16 %v9945, %v9944
        %v10076 = vpack.c.b16 %v9947, %v9946
        %v10077 = vpack.c.b16 %v9949, %v9948
        %v10078 = vpack.c.b16 %v9951, %v9950
        %v10079 = vpack.c.b16 %v9953, %v9952
        %v10080 = vpack.c.b16 %v9955, %v9954
        %v10081 = vpack.c.b16 %v9957, %v9956
        %v10082 = vpack.c.b16 %v9959, %v9958
        %v10083 = vpack.c.b16 %v9961, %v9960
        %v10084 = vpack.c.b16 %v9963, %v9962
        %v10085 = vpack.c.b16 %v9965, %v9964
        %v10086 = vpack.c.b16 %v9967, %v9966
        %v10087 = vpack.c.b16 %v9969, %v9968
        %v10088 = vpack.c.b16 %v9971, %v9970
        %v10089 = vpack.c.b16 %v9973, %v9972
        %v10090 = vpack.c.b16 %v9975, %v9974
        %v10091 = vpack.c.b16 %v9977, %v9976
        %v10092 = vpack.c.b16 %v9979, %v9978
        %v10093 = vpack.c.b16 %v9981, %v9980
        %v10094 = vpack.c.b16 %v9983, %v9982
        %v10095 = vpack.c.b16 %v9985, %v9984
        %v10096 = vpack.c.b16 %v9987, %v9986
        %v10097 = vpack.c.b16 %v9989, %v9988
        %v10098 = vpack.c.b16 %v9991, %v9990
        %v10099 = vpack.c.b16 %v9993, %v9992
        %v10100 = vpack.c.b16 %v9995, %v9994
        %v10101 = vpack.c.b16 %v9997, %v9996
        %v10102 = vpack.c.b16 %v9999, %v9998
        %v10103 = vpack.c.b16 %v10001, %v10000
        %v10104 = vpack.c.b16 %v10003, %v10002
        %v10105 = vpack.c.b16 %v10005, %v10004
        %v10106 = vpack.c.b16 %v10007, %v10006
        %v10107 = vpack.c.b16 %v10009, %v10008
        %v10108 = vpack.c.b16 %v10011, %v10010
        %v10109 = vpack.c.b16 %v10013, %v10012
        %v10110 = vpack.c.b16 %v10015, %v10014
        %v10111 = vpack.c.b16 %v10017, %v10016
        %v10112 = vpack.c.b16 %v10019, %v10018
        %v10113 = vpack.c.b16 %v10021, %v10020
        %v10114 = vpack.c.b16 %v10023, %v10022
        %v10115 = vpack.c.b16 %v10025, %v10024
        %v10116 = vpack.c.b16 %v10027, %v10026
        %v10117 = vpack.c.b16 %v10029, %v10028
        %v10118 = vpack.c.b16 %v10031, %v10030
        %v10119 = vpack.c.b16 %v10033, %v10032
        %v10120 = vpack.c.b16 %v10035, %v10034
        %v10121 = vpack.c.b16 %v10037, %v10036
        %v10122 = vpack.c.b16 %v10039, %v10038
        %v10123 = vpack.c.b16 %v10041, %v10040
        %v10124 = vpack.c.b16 %v10043, %v10042
        %v10125 = vpack.c.b16 %v10045, %v10044
        %v10126 = vpack.c.b16 %v10047, %v10046
        %v10127 = vpack.c.b16 %v10049, %v10048
        %v10128 = vpack.c.b16 %v10051, %v10050
        %v10129 = vpack.c.b16 %v10053, %v10052
        %v10130 = vpack.c.b16 %v10055, %v10054
        %v10131 = vpack.c.b16 %v10057, %v10056
        %v10132 = vpack.c.b16 %v10059, %v10058
        %v10133 = vpack.c.b16 %v10061, %v10060
        %10206 = vmatprep.subr.bf16.mxu0 0
        %10207 = vmatpush1.bf16.msra.mxu0 %v10069
        %10208 = vmatprep.subr.bf16.mxu0 0
        %10209 = vmatpush1.bf16.msra.mxu0 %v10068
        %10210 = vmatprep.subr.bf16.mxu0 0
        %10211 = vmatpush1.bf16.msra.mxu0 %v10067
        %10212 = vmatprep.subr.bf16.mxu0 0
        %10213 = vmatpush1.bf16.msra.mxu0 %v10066
        %10214 = vmatprep.subr.bf16.mxu0 0
        %10215 = vmatpush1.bf16.msra.mxu0 %v10065
        %10216 = vmatprep.subr.bf16.mxu0 0
        %10217 = vmatpush1.bf16.msra.mxu0 %v10064
        %10218 = vmatprep.subr.bf16.mxu0 0
        %10219 = vmatpush1.bf16.msra.mxu0 %v10063
        %10220 = vmatprep.subr.bf16.mxu0 0
        %10221 = vmatpush1.bf16.msra.mxu0 %v10062
        %10222 = vmatprep.subr.bf16.mxu0 0
        %10223 = vmatpush2.bf16.msra.mxu0 %v10077
        %10224 = vmatprep.subr.bf16.mxu0 0
        %10225 = vmatpush2.bf16.msra.mxu0 %v10076
        %10226 = vmatprep.subr.bf16.mxu0 0
        %10227 = vmatpush2.bf16.msra.mxu0 %v10075
        %10228 = vmatprep.subr.bf16.mxu0 0
        %10229 = vmatpush2.bf16.msra.mxu0 %v10074
        %10230 = vmatprep.subr.bf16.mxu0 0
        %10231 = vmatpush2.bf16.msra.mxu0 %v10073
        %10232 = vmatprep.subr.bf16.mxu0 0
        %10233 = vmatpush2.bf16.msra.mxu0 %v10072
        %10234 = vmatprep.subr.bf16.mxu0 0
        %10235 = vmatpush2.bf16.msra.mxu0 %v10071
        %10236 = vmatprep.subr.bf16.mxu0 0
        %10237 = vmatpush2.bf16.msra.mxu0 %v10070
        %10238 = vmatprep.mubr.bf16.mxu0 %v9397
        %10239 = vmatmul.mubr.bf16.gmra.mxu0 %v9396
        %v10240 = vpop.f32.mrf.mxu0
        %v10241 = vadd.f32 %v8820, %v10240
        %v10242 = vpop.f32.mrf.mxu0
        %v10243 = vpop.f32.mrf.mxu0
        %v10244 = vadd.f32 %v8820, %v10243
        %v10245 = vpop.f32.mrf.mxu0
        %10246 = vmatprep.mubr.bf16.mxu0 %v9406
        %10247 = vmatmul.mubr.bf16.gmra.mxu0 %v9405
        %v10248 = vpop.f32.mrf.mxu0
        %v10249 = vadd.f32 %v8820, %v10248
        %v10250 = vpop.f32.mrf.mxu0
        %v10251 = vpop.f32.mrf.mxu0
        %v10252 = vadd.f32 %v8820, %v10251
        %v10253 = vpop.f32.mrf.mxu0
        %10254 = vmatprep.mubr.bf16.mxu0 %v9415
        %10255 = vmatmul.mubr.bf16.gmra.mxu0 %v9414
        %v10256 = vpop.f32.mrf.mxu0
        %v10257 = vadd.f32 %v8820, %v10256
        %v10258 = vpop.f32.mrf.mxu0
        %v10259 = vpop.f32.mrf.mxu0
        %v10260 = vadd.f32 %v8820, %v10259
        %v10261 = vpop.f32.mrf.mxu0
        %10262 = vmatprep.mubr.bf16.mxu0 %v9424
        %10263 = vmatmul.mubr.bf16.gmra.mxu0 %v9423
        %v10264 = vpop.f32.mrf.mxu0
        %v10265 = vadd.f32 %v8820, %v10264
        %v10266 = vpop.f32.mrf.mxu0
        %v10267 = vpop.f32.mrf.mxu0
        %v10268 = vadd.f32 %v8820, %v10267
        %v10269 = vpop.f32.mrf.mxu0
        %10270 = vmatprep.mubr.bf16.mxu0 %v9433
        %10271 = vmatmul.mubr.bf16.gmra.mxu0 %v9432
        %v10272 = vpop.f32.mrf.mxu0
        %v10273 = vadd.f32 %v8820, %v10272
        %v10274 = vpop.f32.mrf.mxu0
        %v10275 = vpop.f32.mrf.mxu0
        %v10276 = vadd.f32 %v8820, %v10275
        %v10277 = vpop.f32.mrf.mxu0
        %10278 = vmatprep.mubr.bf16.mxu0 %v9442
        %10279 = vmatmul.mubr.bf16.gmra.mxu0 %v9441
        %v10280 = vpop.f32.mrf.mxu0
        %v10281 = vadd.f32 %v8820, %v10280
        %v10282 = vpop.f32.mrf.mxu0
        %v10283 = vpop.f32.mrf.mxu0
        %v10284 = vadd.f32 %v8820, %v10283
        %v10285 = vpop.f32.mrf.mxu0
        %10286 = vmatprep.mubr.bf16.mxu0 %v9451
        %10287 = vmatmul.mubr.bf16.gmra.mxu0 %v9450
        %v10288 = vpop.f32.mrf.mxu0
        %v10289 = vadd.f32 %v8820, %v10288
        %v10290 = vpop.f32.mrf.mxu0
        %v10291 = vpop.f32.mrf.mxu0
        %v10292 = vadd.f32 %v8820, %v10291
        %v10293 = vpop.f32.mrf.mxu0
        %10294 = vmatprep.mubr.bf16.mxu0 %v9460
        %10295 = vmatmul.mubr.bf16.gmra.mxu0 %v9459
        %v10296 = vpop.f32.mrf.mxu0
        %v10297 = vadd.f32 %v8820, %v10296
        %v10298 = vpop.f32.mrf.mxu0
        %v10299 = vpop.f32.mrf.mxu0
        %v10300 = vadd.f32 %v8820, %v10299
        %v10301 = vpop.f32.mrf.mxu0
        %10302 = vmatprep.mubr.bf16.mxu0 %v9469
        %10303 = vmatmul.mubr.bf16.gmra.mxu0 %v9468
        %v10304 = vpop.f32.mrf.mxu0
        %v10305 = vadd.f32 %v8820, %v10304
        %v10306 = vpop.f32.mrf.mxu0
        %v10307 = vpop.f32.mrf.mxu0
        %v10308 = vadd.f32 %v8820, %v10307
        %v10309 = vpop.f32.mrf.mxu0
        %10310 = vmatprep.mubr.bf16.mxu0 %v9478
        %10311 = vmatmul.mubr.bf16.gmra.mxu0 %v9477
        %v10312 = vpop.f32.mrf.mxu0
        %v10313 = vadd.f32 %v8820, %v10312
        %v10314 = vpop.f32.mrf.mxu0
        %v10315 = vpop.f32.mrf.mxu0
        %v10316 = vadd.f32 %v8820, %v10315
        %v10317 = vpop.f32.mrf.mxu0
        %10318 = vmatprep.mubr.bf16.mxu0 %v9487
        %10319 = vmatmul.mubr.bf16.gmra.mxu0 %v9486
        %v10320 = vpop.f32.mrf.mxu0
        %v10321 = vadd.f32 %v8820, %v10320
        %v10322 = vpop.f32.mrf.mxu0
        %v10323 = vpop.f32.mrf.mxu0
        %v10324 = vadd.f32 %v8820, %v10323
        %v10325 = vpop.f32.mrf.mxu0
        %10326 = vmatprep.mubr.bf16.mxu0 %v9496
        %10327 = vmatmul.mubr.bf16.gmra.mxu0 %v9495
        %v10328 = vpop.f32.mrf.mxu0
        %v10329 = vadd.f32 %v8820, %v10328
        %v10330 = vpop.f32.mrf.mxu0
        %v10331 = vpop.f32.mrf.mxu0
        %v10332 = vadd.f32 %v8820, %v10331
        %v10333 = vpop.f32.mrf.mxu0
        %10334 = vmatprep.mubr.bf16.mxu0 %v9505
        %10335 = vmatmul.mubr.bf16.gmra.mxu0 %v9504
        %v10336 = vpop.f32.mrf.mxu0
        %v10337 = vadd.f32 %v8820, %v10336
        %v10338 = vpop.f32.mrf.mxu0
        %v10339 = vpop.f32.mrf.mxu0
        %v10340 = vadd.f32 %v8820, %v10339
        %v10341 = vpop.f32.mrf.mxu0
        %10342 = vmatprep.mubr.bf16.mxu0 %v9514
        %10343 = vmatmul.mubr.bf16.gmra.mxu0 %v9513
        %v10344 = vpop.f32.mrf.mxu0
        %v10345 = vadd.f32 %v8820, %v10344
        %v10346 = vpop.f32.mrf.mxu0
        %v10347 = vpop.f32.mrf.mxu0
        %v10348 = vadd.f32 %v8820, %v10347
        %v10349 = vpop.f32.mrf.mxu0
        %10350 = vmatprep.mubr.bf16.mxu0 %v9523
        %10351 = vmatmul.mubr.bf16.gmra.mxu0 %v9522
        %v10352 = vpop.f32.mrf.mxu0
        %v10353 = vadd.f32 %v8820, %v10352
        %v10354 = vpop.f32.mrf.mxu0
        %v10355 = vpop.f32.mrf.mxu0
        %v10356 = vadd.f32 %v8820, %v10355
        %v10357 = vpop.f32.mrf.mxu0
        %10358 = vmatprep.mubr.bf16.mxu0 %v9532
        %10359 = vmatmul.mubr.bf16.gmra.mxu0 %v9531
        %v10360 = vpop.f32.mrf.mxu0
        %v10361 = vadd.f32 %v8820, %v10360
        %v10362 = vpop.f32.mrf.mxu0
        %v10363 = vpop.f32.mrf.mxu0
        %v10364 = vadd.f32 %v8820, %v10363
        %v10365 = vpop.f32.mrf.mxu0
        %10366 = vmatprep.mubr.bf16.mxu0 %v9541
        %10367 = vmatmul.mubr.bf16.gmra.mxu0 %v9540
        %v10368 = vpop.f32.mrf.mxu0
        %v10369 = vadd.f32 %v8820, %v10368
        %v10370 = vpop.f32.mrf.mxu0
        %v10371 = vpop.f32.mrf.mxu0
        %v10372 = vadd.f32 %v8820, %v10371
        %v10373 = vpop.f32.mrf.mxu0
        %10374 = vmatprep.mubr.bf16.mxu0 %v9550
        %10375 = vmatmul.mubr.bf16.gmra.mxu0 %v9549
        %v10376 = vpop.f32.mrf.mxu0
        %v10377 = vadd.f32 %v8820, %v10376
        %v10378 = vpop.f32.mrf.mxu0
        %v10379 = vpop.f32.mrf.mxu0
        %v10380 = vadd.f32 %v8820, %v10379
        %v10381 = vpop.f32.mrf.mxu0
        %10382 = vmatprep.mubr.bf16.mxu0 %v9559
        %10383 = vmatmul.mubr.bf16.gmra.mxu0 %v9558
        %v10384 = vpop.f32.mrf.mxu0
        %v10385 = vadd.f32 %v8820, %v10384
        %v10386 = vpop.f32.mrf.mxu0
        %v10387 = vpop.f32.mrf.mxu0
        %v10388 = vadd.f32 %v8820, %v10387
        %v10389 = vpop.f32.mrf.mxu0
        %10390 = vmatprep.mubr.bf16.mxu0 %v9568
        %10391 = vmatmul.mubr.bf16.gmra.mxu0 %v9567
        %v10392 = vpop.f32.mrf.mxu0
        %v10393 = vadd.f32 %v8820, %v10392
        %v10394 = vpop.f32.mrf.mxu0
        %v10395 = vpop.f32.mrf.mxu0
        %v10396 = vadd.f32 %v8820, %v10395
        %v10397 = vpop.f32.mrf.mxu0
        %10398 = vmatprep.mubr.bf16.mxu0 %v9577
        %10399 = vmatmul.mubr.bf16.gmra.mxu0 %v9576
        %v10400 = vpop.f32.mrf.mxu0
        %v10401 = vadd.f32 %v8820, %v10400
        %v10402 = vpop.f32.mrf.mxu0
        %v10403 = vpop.f32.mrf.mxu0
        %v10404 = vpop.f32.mrf.mxu0
        %10405 = vdwg.mxu0
        %10406 = vmatprep.subr.bf16.mxu0 0
        %10407 = vmatpush1.bf16.msra.mxu0 %v10085
        %10408 = vmatprep.subr.bf16.mxu0 0
        %10409 = vmatpush1.bf16.msra.mxu0 %v10084
        %10410 = vmatprep.subr.bf16.mxu0 0
        %10411 = vmatpush1.bf16.msra.mxu0 %v10083
        %10412 = vmatprep.subr.bf16.mxu0 0
        %10413 = vmatpush1.bf16.msra.mxu0 %v10082
        %10414 = vmatprep.subr.bf16.mxu0 0
        %10415 = vmatpush1.bf16.msra.mxu0 %v10081
        %10416 = vmatprep.subr.bf16.mxu0 0
        %10417 = vmatpush1.bf16.msra.mxu0 %v10080
        %10418 = vmatprep.subr.bf16.mxu0 0
        %10419 = vmatpush1.bf16.msra.mxu0 %v10079
        %10420 = vmatprep.subr.bf16.mxu0 0
        %10421 = vmatpush1.bf16.msra.mxu0 %v10078
        %10422 = vmatprep.subr.bf16.mxu0 0
        %10423 = vmatpush2.bf16.msra.mxu0 %v10093
        %10424 = vmatprep.subr.bf16.mxu0 0
        %10425 = vmatpush2.bf16.msra.mxu0 %v10092
        %10426 = vmatprep.subr.bf16.mxu0 0
        %10427 = vmatpush2.bf16.msra.mxu0 %v10091
        %10428 = vmatprep.subr.bf16.mxu0 0
        %10429 = vmatpush2.bf16.msra.mxu0 %v10090
        %10430 = vmatprep.subr.bf16.mxu0 0
        %10431 = vmatpush2.bf16.msra.mxu0 %v10089
        %10432 = vmatprep.subr.bf16.mxu0 0
        %10433 = vmatpush2.bf16.msra.mxu0 %v10088
        %10434 = vmatprep.subr.bf16.mxu0 0
        %10435 = vmatpush2.bf16.msra.mxu0 %v10087
        %10436 = vmatprep.subr.bf16.mxu0 0
        %10437 = vmatpush2.bf16.msra.mxu0 %v10086
        %10438 = vmatprep.mubr.bf16.mxu0 %v9399
        %10439 = vmatmul.mubr.bf16.gmra.mxu0 %v9398
        %v10440 = vpop.f32.mrf.mxu0
        %v10441 = vadd.f32 %v10241, %v10440
        %v10442 = vpop.f32.mrf.mxu0
        %v10443 = vpop.f32.mrf.mxu0
        %v10444 = vadd.f32 %v10244, %v10443
        %v10445 = vpop.f32.mrf.mxu0
        %10446 = vmatprep.mubr.bf16.mxu0 %v9408
        %10447 = vmatmul.mubr.bf16.gmra.mxu0 %v9407
        %v10448 = vpop.f32.mrf.mxu0
        %v10449 = vadd.f32 %v10249, %v10448
        %v10450 = vpop.f32.mrf.mxu0
        %v10451 = vpop.f32.mrf.mxu0
        %v10452 = vadd.f32 %v10252, %v10451
        %v10453 = vpop.f32.mrf.mxu0
        %10454 = vmatprep.mubr.bf16.mxu0 %v9417
        %10455 = vmatmul.mubr.bf16.gmra.mxu0 %v9416
        %v10456 = vpop.f32.mrf.mxu0
        %v10457 = vadd.f32 %v10257, %v10456
        %v10458 = vpop.f32.mrf.mxu0
        %v10459 = vpop.f32.mrf.mxu0
        %v10460 = vadd.f32 %v10260, %v10459
        %v10461 = vpop.f32.mrf.mxu0
        %10462 = vmatprep.mubr.bf16.mxu0 %v9426
        %10463 = vmatmul.mubr.bf16.gmra.mxu0 %v9425
        %v10464 = vpop.f32.mrf.mxu0
        %v10465 = vadd.f32 %v10265, %v10464
        %v10466 = vpop.f32.mrf.mxu0
        %v10467 = vpop.f32.mrf.mxu0
        %v10468 = vadd.f32 %v10268, %v10467
        %v10469 = vpop.f32.mrf.mxu0
        %10470 = vmatprep.mubr.bf16.mxu0 %v9435
        %10471 = vmatmul.mubr.bf16.gmra.mxu0 %v9434
        %v10472 = vpop.f32.mrf.mxu0
        %v10473 = vadd.f32 %v10273, %v10472
        %v10474 = vpop.f32.mrf.mxu0
        %v10475 = vpop.f32.mrf.mxu0
        %v10476 = vadd.f32 %v10276, %v10475
        %v10477 = vpop.f32.mrf.mxu0
        %10478 = vmatprep.mubr.bf16.mxu0 %v9444
        %10479 = vmatmul.mubr.bf16.gmra.mxu0 %v9443
        %v10480 = vpop.f32.mrf.mxu0
        %v10481 = vadd.f32 %v10281, %v10480
        %v10482 = vpop.f32.mrf.mxu0
        %v10483 = vpop.f32.mrf.mxu0
        %v10484 = vadd.f32 %v10284, %v10483
        %v10485 = vpop.f32.mrf.mxu0
        %10486 = vmatprep.mubr.bf16.mxu0 %v9453
        %10487 = vmatmul.mubr.bf16.gmra.mxu0 %v9452
        %v10488 = vpop.f32.mrf.mxu0
        %v10489 = vadd.f32 %v10289, %v10488
        %v10490 = vpop.f32.mrf.mxu0
        %v10491 = vpop.f32.mrf.mxu0
        %v10492 = vadd.f32 %v10292, %v10491
        %v10493 = vpop.f32.mrf.mxu0
        %10494 = vmatprep.mubr.bf16.mxu0 %v9462
        %10495 = vmatmul.mubr.bf16.gmra.mxu0 %v9461
        %v10496 = vpop.f32.mrf.mxu0
        %v10497 = vadd.f32 %v10297, %v10496
        %v10498 = vpop.f32.mrf.mxu0
        %v10499 = vpop.f32.mrf.mxu0
        %v10500 = vadd.f32 %v10300, %v10499
        %v10501 = vpop.f32.mrf.mxu0
        %10502 = vmatprep.mubr.bf16.mxu0 %v9471
        %10503 = vmatmul.mubr.bf16.gmra.mxu0 %v9470
        %v10504 = vpop.f32.mrf.mxu0
        %v10505 = vadd.f32 %v10305, %v10504
        %v10506 = vpop.f32.mrf.mxu0
        %v10507 = vpop.f32.mrf.mxu0
        %v10508 = vadd.f32 %v10308, %v10507
        %v10509 = vpop.f32.mrf.mxu0
        %10510 = vmatprep.mubr.bf16.mxu0 %v9480
        %10511 = vmatmul.mubr.bf16.gmra.mxu0 %v9479
        %v10512 = vpop.f32.mrf.mxu0
        %v10513 = vadd.f32 %v10313, %v10512
        %v10514 = vpop.f32.mrf.mxu0
        %v10515 = vpop.f32.mrf.mxu0
        %v10516 = vadd.f32 %v10316, %v10515
        %v10517 = vpop.f32.mrf.mxu0
        %10518 = vmatprep.mubr.bf16.mxu0 %v9489
        %10519 = vmatmul.mubr.bf16.gmra.mxu0 %v9488
        %v10520 = vpop.f32.mrf.mxu0
        %v10521 = vadd.f32 %v10321, %v10520
        %v10522 = vpop.f32.mrf.mxu0
        %v10523 = vpop.f32.mrf.mxu0
        %v10524 = vadd.f32 %v10324, %v10523
        %v10525 = vpop.f32.mrf.mxu0
        %10526 = vmatprep.mubr.bf16.mxu0 %v9498
        %10527 = vmatmul.mubr.bf16.gmra.mxu0 %v9497
        %v10528 = vpop.f32.mrf.mxu0
        %v10529 = vadd.f32 %v10329, %v10528
        %v10530 = vpop.f32.mrf.mxu0
        %v10531 = vpop.f32.mrf.mxu0
        %v10532 = vadd.f32 %v10332, %v10531
        %v10533 = vpop.f32.mrf.mxu0
        %10534 = vmatprep.mubr.bf16.mxu0 %v9507
        %10535 = vmatmul.mubr.bf16.gmra.mxu0 %v9506
        %v10536 = vpop.f32.mrf.mxu0
        %v10537 = vadd.f32 %v10337, %v10536
        %v10538 = vpop.f32.mrf.mxu0
        %v10539 = vpop.f32.mrf.mxu0
        %v10540 = vadd.f32 %v10340, %v10539
        %v10541 = vpop.f32.mrf.mxu0
        %10542 = vmatprep.mubr.bf16.mxu0 %v9516
        %10543 = vmatmul.mubr.bf16.gmra.mxu0 %v9515
        %v10544 = vpop.f32.mrf.mxu0
        %v10545 = vadd.f32 %v10345, %v10544
        %v10546 = vpop.f32.mrf.mxu0
        %v10547 = vpop.f32.mrf.mxu0
        %v10548 = vadd.f32 %v10348, %v10547
        %v10549 = vpop.f32.mrf.mxu0
        %10550 = vmatprep.mubr.bf16.mxu0 %v9525
        %10551 = vmatmul.mubr.bf16.gmra.mxu0 %v9524
        %v10552 = vpop.f32.mrf.mxu0
        %v10553 = vadd.f32 %v10353, %v10552
        %v10554 = vpop.f32.mrf.mxu0
        %v10555 = vpop.f32.mrf.mxu0
        %v10556 = vadd.f32 %v10356, %v10555
        %v10557 = vpop.f32.mrf.mxu0
        %10558 = vmatprep.mubr.bf16.mxu0 %v9534
        %10559 = vmatmul.mubr.bf16.gmra.mxu0 %v9533
        %v10560 = vpop.f32.mrf.mxu0
        %v10561 = vadd.f32 %v10361, %v10560
        %v10562 = vpop.f32.mrf.mxu0
        %v10563 = vpop.f32.mrf.mxu0
        %v10564 = vadd.f32 %v10364, %v10563
        %v10565 = vpop.f32.mrf.mxu0
        %10566 = vmatprep.mubr.bf16.mxu0 %v9543
        %10567 = vmatmul.mubr.bf16.gmra.mxu0 %v9542
        %v10568 = vpop.f32.mrf.mxu0
        %v10569 = vadd.f32 %v10369, %v10568
        %v10570 = vpop.f32.mrf.mxu0
        %v10571 = vpop.f32.mrf.mxu0
        %v10572 = vadd.f32 %v10372, %v10571
        %v10573 = vpop.f32.mrf.mxu0
        %10574 = vmatprep.mubr.bf16.mxu0 %v9552
        %10575 = vmatmul.mubr.bf16.gmra.mxu0 %v9551
        %v10576 = vpop.f32.mrf.mxu0
        %v10577 = vadd.f32 %v10377, %v10576
        %v10578 = vpop.f32.mrf.mxu0
        %v10579 = vpop.f32.mrf.mxu0
        %v10580 = vadd.f32 %v10380, %v10579
        %v10581 = vpop.f32.mrf.mxu0
        %10582 = vmatprep.mubr.bf16.mxu0 %v9561
        %10583 = vmatmul.mubr.bf16.gmra.mxu0 %v9560
        %v10584 = vpop.f32.mrf.mxu0
        %v10585 = vadd.f32 %v10385, %v10584
        %v10586 = vpop.f32.mrf.mxu0
        %v10587 = vpop.f32.mrf.mxu0
        %v10588 = vadd.f32 %v10388, %v10587
        %v10589 = vpop.f32.mrf.mxu0
        %10590 = vmatprep.mubr.bf16.mxu0 %v9570
        %10591 = vmatmul.mubr.bf16.gmra.mxu0 %v9569
        %v10592 = vpop.f32.mrf.mxu0
        %v10593 = vadd.f32 %v10393, %v10592
        %v10594 = vpop.f32.mrf.mxu0
        %v10595 = vpop.f32.mrf.mxu0
        %v10596 = vadd.f32 %v10396, %v10595
        %v10597 = vpop.f32.mrf.mxu0
        %10598 = vmatprep.mubr.bf16.mxu0 %v9579
        %10599 = vmatmul.mubr.bf16.gmra.mxu0 %v9578
        %v10600 = vpop.f32.mrf.mxu0
        %v10601 = vadd.f32 %v10401, %v10600
        %v10602 = vpop.f32.mrf.mxu0
        %v10603 = vpop.f32.mrf.mxu0
        %v10604 = vpop.f32.mrf.mxu0
        %10605 = vdwg.mxu0
        %10606 = vmatprep.subr.bf16.mxu0 0
        %10607 = vmatpush1.bf16.msra.mxu0 %v10101
        %10608 = vmatprep.subr.bf16.mxu0 0
        %10609 = vmatpush1.bf16.msra.mxu0 %v10100
        %10610 = vmatprep.subr.bf16.mxu0 0
        %10611 = vmatpush1.bf16.msra.mxu0 %v10099
        %10612 = vmatprep.subr.bf16.mxu0 0
        %10613 = vmatpush1.bf16.msra.mxu0 %v10098
        %10614 = vmatprep.subr.bf16.mxu0 0
        %10615 = vmatpush1.bf16.msra.mxu0 %v10097
        %10616 = vmatprep.subr.bf16.mxu0 0
        %10617 = vmatpush1.bf16.msra.mxu0 %v10096
        %10618 = vmatprep.subr.bf16.mxu0 0
        %10619 = vmatpush1.bf16.msra.mxu0 %v10095
        %10620 = vmatprep.subr.bf16.mxu0 0
        %10621 = vmatpush1.bf16.msra.mxu0 %v10094
        %10622 = vmatprep.subr.bf16.mxu0 0
        %10623 = vmatpush2.bf16.msra.mxu0 %v10109
        %10624 = vmatprep.subr.bf16.mxu0 0
        %10625 = vmatpush2.bf16.msra.mxu0 %v10108
        %10626 = vmatprep.subr.bf16.mxu0 0
        %10627 = vmatpush2.bf16.msra.mxu0 %v10107
        %10628 = vmatprep.subr.bf16.mxu0 0
        %10629 = vmatpush2.bf16.msra.mxu0 %v10106
        %10630 = vmatprep.subr.bf16.mxu0 0
        %10631 = vmatpush2.bf16.msra.mxu0 %v10105
        %10632 = vmatprep.subr.bf16.mxu0 0
        %10633 = vmatpush2.bf16.msra.mxu0 %v10104
        %10634 = vmatprep.subr.bf16.mxu0 0
        %10635 = vmatpush2.bf16.msra.mxu0 %v10103
        %10636 = vmatprep.subr.bf16.mxu0 0
        %10637 = vmatpush2.bf16.msra.mxu0 %v10102
        %10638 = vmatprep.mubr.bf16.mxu0 %v9401
        %10639 = vmatmul.mubr.bf16.gmra.mxu0 %v9400
        %v10640 = vpop.f32.mrf.mxu0
        %v10641 = vadd.f32 %v10441, %v10640
        %v10642 = vpop.f32.mrf.mxu0
        %v10643 = vpop.f32.mrf.mxu0
        %v10644 = vadd.f32 %v10444, %v10643
        %v10645 = vpop.f32.mrf.mxu0
        %10646 = vmatprep.mubr.bf16.mxu0 %v9410
        %10647 = vmatmul.mubr.bf16.gmra.mxu0 %v9409
        %v10648 = vpop.f32.mrf.mxu0
        %v10649 = vadd.f32 %v10449, %v10648
        %v10650 = vpop.f32.mrf.mxu0
        %v10651 = vpop.f32.mrf.mxu0
        %v10652 = vadd.f32 %v10452, %v10651
        %v10653 = vpop.f32.mrf.mxu0
        %10654 = vmatprep.mubr.bf16.mxu0 %v9419
        %10655 = vmatmul.mubr.bf16.gmra.mxu0 %v9418
        %v10656 = vpop.f32.mrf.mxu0
        %v10657 = vadd.f32 %v10457, %v10656
        %v10658 = vpop.f32.mrf.mxu0
        %v10659 = vpop.f32.mrf.mxu0
        %v10660 = vadd.f32 %v10460, %v10659
        %v10661 = vpop.f32.mrf.mxu0
        %10662 = vmatprep.mubr.bf16.mxu0 %v9428
        %10663 = vmatmul.mubr.bf16.gmra.mxu0 %v9427
        %v10664 = vpop.f32.mrf.mxu0
        %v10665 = vadd.f32 %v10465, %v10664
        %v10666 = vpop.f32.mrf.mxu0
        %v10667 = vpop.f32.mrf.mxu0
        %v10668 = vadd.f32 %v10468, %v10667
        %v10669 = vpop.f32.mrf.mxu0
        %10670 = vmatprep.mubr.bf16.mxu0 %v9437
        %10671 = vmatmul.mubr.bf16.gmra.mxu0 %v9436
        %v10672 = vpop.f32.mrf.mxu0
        %v10673 = vadd.f32 %v10473, %v10672
        %v10674 = vpop.f32.mrf.mxu0
        %v10675 = vpop.f32.mrf.mxu0
        %v10676 = vadd.f32 %v10476, %v10675
        %v10677 = vpop.f32.mrf.mxu0
        %10678 = vmatprep.mubr.bf16.mxu0 %v9446
        %10679 = vmatmul.mubr.bf16.gmra.mxu0 %v9445
        %v10680 = vpop.f32.mrf.mxu0
        %v10681 = vadd.f32 %v10481, %v10680
        %v10682 = vpop.f32.mrf.mxu0
        %v10683 = vpop.f32.mrf.mxu0
        %v10684 = vadd.f32 %v10484, %v10683
        %v10685 = vpop.f32.mrf.mxu0
        %10686 = vmatprep.mubr.bf16.mxu0 %v9455
        %10687 = vmatmul.mubr.bf16.gmra.mxu0 %v9454
        %v10688 = vpop.f32.mrf.mxu0
        %v10689 = vadd.f32 %v10489, %v10688
        %v10690 = vpop.f32.mrf.mxu0
        %v10691 = vpop.f32.mrf.mxu0
        %v10692 = vadd.f32 %v10492, %v10691
        %v10693 = vpop.f32.mrf.mxu0
        %10694 = vmatprep.mubr.bf16.mxu0 %v9464
        %10695 = vmatmul.mubr.bf16.gmra.mxu0 %v9463
        %v10696 = vpop.f32.mrf.mxu0
        %v10697 = vadd.f32 %v10497, %v10696
        %v10698 = vpop.f32.mrf.mxu0
        %v10699 = vpop.f32.mrf.mxu0
        %v10700 = vadd.f32 %v10500, %v10699
        %v10701 = vpop.f32.mrf.mxu0
        %10702 = vmatprep.mubr.bf16.mxu0 %v9473
        %10703 = vmatmul.mubr.bf16.gmra.mxu0 %v9472
        %v10704 = vpop.f32.mrf.mxu0
        %v10705 = vadd.f32 %v10505, %v10704
        %v10706 = vpop.f32.mrf.mxu0
        %v10707 = vpop.f32.mrf.mxu0
        %v10708 = vadd.f32 %v10508, %v10707
        %v10709 = vpop.f32.mrf.mxu0
        %10710 = vmatprep.mubr.bf16.mxu0 %v9482
        %10711 = vmatmul.mubr.bf16.gmra.mxu0 %v9481
        %v10712 = vpop.f32.mrf.mxu0
        %v10713 = vadd.f32 %v10513, %v10712
        %v10714 = vpop.f32.mrf.mxu0
        %v10715 = vpop.f32.mrf.mxu0
        %v10716 = vadd.f32 %v10516, %v10715
        %v10717 = vpop.f32.mrf.mxu0
        %10718 = vmatprep.mubr.bf16.mxu0 %v9491
        %10719 = vmatmul.mubr.bf16.gmra.mxu0 %v9490
        %v10720 = vpop.f32.mrf.mxu0
        %v10721 = vadd.f32 %v10521, %v10720
        %v10722 = vpop.f32.mrf.mxu0
        %v10723 = vpop.f32.mrf.mxu0
        %v10724 = vadd.f32 %v10524, %v10723
        %v10725 = vpop.f32.mrf.mxu0
        %10726 = vmatprep.mubr.bf16.mxu0 %v9500
        %10727 = vmatmul.mubr.bf16.gmra.mxu0 %v9499
        %v10728 = vpop.f32.mrf.mxu0
        %v10729 = vadd.f32 %v10529, %v10728
        %v10730 = vpop.f32.mrf.mxu0
        %v10731 = vpop.f32.mrf.mxu0
        %v10732 = vadd.f32 %v10532, %v10731
        %v10733 = vpop.f32.mrf.mxu0
        %10734 = vmatprep.mubr.bf16.mxu0 %v9509
        %10735 = vmatmul.mubr.bf16.gmra.mxu0 %v9508
        %v10736 = vpop.f32.mrf.mxu0
        %v10737 = vadd.f32 %v10537, %v10736
        %v10738 = vpop.f32.mrf.mxu0
        %v10739 = vpop.f32.mrf.mxu0
        %v10740 = vadd.f32 %v10540, %v10739
        %v10741 = vpop.f32.mrf.mxu0
        %10742 = vmatprep.mubr.bf16.mxu0 %v9518
        %10743 = vmatmul.mubr.bf16.gmra.mxu0 %v9517
        %v10744 = vpop.f32.mrf.mxu0
        %v10745 = vadd.f32 %v10545, %v10744
        %v10746 = vpop.f32.mrf.mxu0
        %v10747 = vpop.f32.mrf.mxu0
        %v10748 = vadd.f32 %v10548, %v10747
        %v10749 = vpop.f32.mrf.mxu0
        %10750 = vmatprep.mubr.bf16.mxu0 %v9527
        %10751 = vmatmul.mubr.bf16.gmra.mxu0 %v9526
        %v10752 = vpop.f32.mrf.mxu0
        %v10753 = vadd.f32 %v10553, %v10752
        %v10754 = vpop.f32.mrf.mxu0
        %v10755 = vpop.f32.mrf.mxu0
        %v10756 = vadd.f32 %v10556, %v10755
        %v10757 = vpop.f32.mrf.mxu0
        %10758 = vmatprep.mubr.bf16.mxu0 %v9536
        %10759 = vmatmul.mubr.bf16.gmra.mxu0 %v9535
        %v10760 = vpop.f32.mrf.mxu0
        %v10761 = vadd.f32 %v10561, %v10760
        %v10762 = vpop.f32.mrf.mxu0
        %v10763 = vpop.f32.mrf.mxu0
        %v10764 = vadd.f32 %v10564, %v10763
        %v10765 = vpop.f32.mrf.mxu0
        %10766 = vmatprep.mubr.bf16.mxu0 %v9545
        %10767 = vmatmul.mubr.bf16.gmra.mxu0 %v9544
        %v10768 = vpop.f32.mrf.mxu0
        %v10769 = vadd.f32 %v10569, %v10768
        %v10770 = vpop.f32.mrf.mxu0
        %v10771 = vpop.f32.mrf.mxu0
        %v10772 = vadd.f32 %v10572, %v10771
        %v10773 = vpop.f32.mrf.mxu0
        %10774 = vmatprep.mubr.bf16.mxu0 %v9554
        %10775 = vmatmul.mubr.bf16.gmra.mxu0 %v9553
        %v10776 = vpop.f32.mrf.mxu0
        %v10777 = vadd.f32 %v10577, %v10776
        %v10778 = vpop.f32.mrf.mxu0
        %v10779 = vpop.f32.mrf.mxu0
        %v10780 = vadd.f32 %v10580, %v10779
        %v10781 = vpop.f32.mrf.mxu0
        %10782 = vmatprep.mubr.bf16.mxu0 %v9563
        %10783 = vmatmul.mubr.bf16.gmra.mxu0 %v9562
        %v10784 = vpop.f32.mrf.mxu0
        %v10785 = vadd.f32 %v10585, %v10784
        %v10786 = vpop.f32.mrf.mxu0
        %v10787 = vpop.f32.mrf.mxu0
        %v10788 = vadd.f32 %v10588, %v10787
        %v10789 = vpop.f32.mrf.mxu0
        %10790 = vmatprep.mubr.bf16.mxu0 %v9572
        %10791 = vmatmul.mubr.bf16.gmra.mxu0 %v9571
        %v10792 = vpop.f32.mrf.mxu0
        %v10793 = vadd.f32 %v10593, %v10792
        %v10794 = vpop.f32.mrf.mxu0
        %v10795 = vpop.f32.mrf.mxu0
        %v10796 = vadd.f32 %v10596, %v10795
        %v10797 = vpop.f32.mrf.mxu0
        %10798 = vmatprep.mubr.bf16.mxu0 %v9581
        %10799 = vmatmul.mubr.bf16.gmra.mxu0 %v9580
        %v10800 = vpop.f32.mrf.mxu0
        %v10801 = vadd.f32 %v10601, %v10800
        %v10802 = vpop.f32.mrf.mxu0
        %v10803 = vpop.f32.mrf.mxu0
        %v10804 = vpop.f32.mrf.mxu0
        %10805 = vdwg.mxu0
        %10806 = vmatprep.subr.bf16.mxu0 0
        %10807 = vmatpush1.bf16.msra.mxu0 %v10117
        %10808 = vmatprep.subr.bf16.mxu0 0
        %10809 = vmatpush1.bf16.msra.mxu0 %v10116
        %10810 = vmatprep.subr.bf16.mxu0 0
        %10811 = vmatpush1.bf16.msra.mxu0 %v10115
        %10812 = vmatprep.subr.bf16.mxu0 0
        %10813 = vmatpush1.bf16.msra.mxu0 %v10114
        %10814 = vmatprep.subr.bf16.mxu0 0
        %10815 = vmatpush1.bf16.msra.mxu0 %v10113
        %10816 = vmatprep.subr.bf16.mxu0 0
        %10817 = vmatpush1.bf16.msra.mxu0 %v10112
        %10818 = vmatprep.subr.bf16.mxu0 0
        %10819 = vmatpush1.bf16.msra.mxu0 %v10111
        %10820 = vmatprep.subr.bf16.mxu0 0
        %10821 = vmatpush1.bf16.msra.mxu0 %v10110
        %10822 = vmatprep.subr.bf16.mxu0 0
        %10823 = vmatpush2.bf16.msra.mxu0 %v10125
        %10824 = vmatprep.subr.bf16.mxu0 0
        %10825 = vmatpush2.bf16.msra.mxu0 %v10124
        %10826 = vmatprep.subr.bf16.mxu0 0
        %10827 = vmatpush2.bf16.msra.mxu0 %v10123
        %10828 = vmatprep.subr.bf16.mxu0 0
        %10829 = vmatpush2.bf16.msra.mxu0 %v10122
        %10830 = vmatprep.subr.bf16.mxu0 0
        %10831 = vmatpush2.bf16.msra.mxu0 %v10121
        %10832 = vmatprep.subr.bf16.mxu0 0
        %10833 = vmatpush2.bf16.msra.mxu0 %v10120
        %10834 = vmatprep.subr.bf16.mxu0 0
        %10835 = vmatpush2.bf16.msra.mxu0 %v10119
        %10836 = vmatprep.subr.bf16.mxu0 0
        %10837 = vmatpush2.bf16.msra.mxu0 %v10118
        %10838 = vmatprep.mubr.bf16.mxu0 %v9403
        %10839 = vmatmul.mubr.bf16.gmra.mxu0 %v9402
        %v10840 = vpop.f32.mrf.mxu0
        %v10841 = vadd.f32 %v10641, %v10840
        %v10842 = vpop.f32.mrf.mxu0
        %v10843 = vpop.f32.mrf.mxu0
        %v10844 = vadd.f32 %v10644, %v10843
        %v10845 = vpop.f32.mrf.mxu0
        %10846 = vmatprep.mubr.bf16.mxu0 %v9412
        %10847 = vmatmul.mubr.bf16.gmra.mxu0 %v9411
        %v10848 = vpop.f32.mrf.mxu0
        %v10849 = vadd.f32 %v10649, %v10848
        %v10850 = vpop.f32.mrf.mxu0
        %v10851 = vpop.f32.mrf.mxu0
        %v10852 = vadd.f32 %v10652, %v10851
        %v10853 = vpop.f32.mrf.mxu0
        %10854 = vmatprep.mubr.bf16.mxu0 %v9421
        %10855 = vmatmul.mubr.bf16.gmra.mxu0 %v9420
        %v10856 = vpop.f32.mrf.mxu0
        %v10857 = vadd.f32 %v10657, %v10856
        %v10858 = vpop.f32.mrf.mxu0
        %v10859 = vpop.f32.mrf.mxu0
        %v10860 = vadd.f32 %v10660, %v10859
        %v10861 = vpop.f32.mrf.mxu0
        %10862 = vmatprep.mubr.bf16.mxu0 %v9430
        %10863 = vmatmul.mubr.bf16.gmra.mxu0 %v9429
        %v10864 = vpop.f32.mrf.mxu0
        %v10865 = vadd.f32 %v10665, %v10864
        %v10866 = vpop.f32.mrf.mxu0
        %v10867 = vpop.f32.mrf.mxu0
        %v10868 = vadd.f32 %v10668, %v10867
        %v10869 = vpop.f32.mrf.mxu0
        %10870 = vmatprep.mubr.bf16.mxu0 %v9439
        %10871 = vmatmul.mubr.bf16.gmra.mxu0 %v9438
        %v10872 = vpop.f32.mrf.mxu0
        %v10873 = vadd.f32 %v10673, %v10872
        %v10874 = vpop.f32.mrf.mxu0
        %v10875 = vpop.f32.mrf.mxu0
        %v10876 = vadd.f32 %v10676, %v10875
        %v10877 = vpop.f32.mrf.mxu0
        %10878 = vmatprep.mubr.bf16.mxu0 %v9448
        %10879 = vmatmul.mubr.bf16.gmra.mxu0 %v9447
        %v10880 = vpop.f32.mrf.mxu0
        %v10881 = vadd.f32 %v10681, %v10880
        %v10882 = vpop.f32.mrf.mxu0
        %v10883 = vpop.f32.mrf.mxu0
        %v10884 = vadd.f32 %v10684, %v10883
        %v10885 = vpop.f32.mrf.mxu0
        %10886 = vmatprep.mubr.bf16.mxu0 %v9457
        %10887 = vmatmul.mubr.bf16.gmra.mxu0 %v9456
        %v10888 = vpop.f32.mrf.mxu0
        %v10889 = vadd.f32 %v10689, %v10888
        %v10890 = vpop.f32.mrf.mxu0
        %v10891 = vpop.f32.mrf.mxu0
        %v10892 = vadd.f32 %v10692, %v10891
        %v10893 = vpop.f32.mrf.mxu0
        %10894 = vmatprep.mubr.bf16.mxu0 %v9466
        %10895 = vmatmul.mubr.bf16.gmra.mxu0 %v9465
        %v10896 = vpop.f32.mrf.mxu0
        %v10897 = vadd.f32 %v10697, %v10896
        %v10898 = vpop.f32.mrf.mxu0
        %v10899 = vpop.f32.mrf.mxu0
        %v10900 = vadd.f32 %v10700, %v10899
        %v10901 = vpop.f32.mrf.mxu0
        %10902 = vmatprep.mubr.bf16.mxu0 %v9475
        %10903 = vmatmul.mubr.bf16.gmra.mxu0 %v9474
        %v10904 = vpop.f32.mrf.mxu0
        %v10905 = vadd.f32 %v10705, %v10904
        %v10906 = vpop.f32.mrf.mxu0
        %v10907 = vpop.f32.mrf.mxu0
        %v10908 = vadd.f32 %v10708, %v10907
        %v10909 = vpop.f32.mrf.mxu0
        %10910 = vmatprep.mubr.bf16.mxu0 %v9484
        %10911 = vmatmul.mubr.bf16.gmra.mxu0 %v9483
        %v10912 = vpop.f32.mrf.mxu0
        %v10913 = vadd.f32 %v10713, %v10912
        %v10914 = vpop.f32.mrf.mxu0
        %v10915 = vpop.f32.mrf.mxu0
        %v10916 = vadd.f32 %v10716, %v10915
        %v10917 = vpop.f32.mrf.mxu0
        %10918 = vmatprep.mubr.bf16.mxu0 %v9493
        %10919 = vmatmul.mubr.bf16.gmra.mxu0 %v9492
        %v10920 = vpop.f32.mrf.mxu0
        %v10921 = vadd.f32 %v10721, %v10920
        %v10922 = vpop.f32.mrf.mxu0
        %v10923 = vpop.f32.mrf.mxu0
        %v10924 = vadd.f32 %v10724, %v10923
        %v10925 = vpop.f32.mrf.mxu0
        %10926 = vmatprep.mubr.bf16.mxu0 %v9502
        %10927 = vmatmul.mubr.bf16.gmra.mxu0 %v9501
        %v10928 = vpop.f32.mrf.mxu0
        %v10929 = vadd.f32 %v10729, %v10928
        %v10930 = vpop.f32.mrf.mxu0
        %v10931 = vpop.f32.mrf.mxu0
        %v10932 = vadd.f32 %v10732, %v10931
        %v10933 = vpop.f32.mrf.mxu0
        %10934 = vmatprep.mubr.bf16.mxu0 %v9511
        %10935 = vmatmul.mubr.bf16.gmra.mxu0 %v9510
        %v10936 = vpop.f32.mrf.mxu0
        %v10937 = vadd.f32 %v10737, %v10936
        %v10938 = vpop.f32.mrf.mxu0
        %v10939 = vpop.f32.mrf.mxu0
        %v10940 = vadd.f32 %v10740, %v10939
        %v10941 = vpop.f32.mrf.mxu0
        %10942 = vmatprep.mubr.bf16.mxu0 %v9520
        %10943 = vmatmul.mubr.bf16.gmra.mxu0 %v9519
        %v10944 = vpop.f32.mrf.mxu0
        %v10945 = vadd.f32 %v10745, %v10944
        %v10946 = vpop.f32.mrf.mxu0
        %v10947 = vpop.f32.mrf.mxu0
        %v10948 = vadd.f32 %v10748, %v10947
        %v10949 = vpop.f32.mrf.mxu0
        %10950 = vmatprep.mubr.bf16.mxu0 %v9529
        %10951 = vmatmul.mubr.bf16.gmra.mxu0 %v9528
        %v10952 = vpop.f32.mrf.mxu0
        %v10953 = vadd.f32 %v10753, %v10952
        %v10954 = vpop.f32.mrf.mxu0
        %v10955 = vpop.f32.mrf.mxu0
        %v10956 = vadd.f32 %v10756, %v10955
        %v10957 = vpop.f32.mrf.mxu0
        %10958 = vmatprep.mubr.bf16.mxu0 %v9538
        %10959 = vmatmul.mubr.bf16.gmra.mxu0 %v9537
        %v10960 = vpop.f32.mrf.mxu0
        %v10961 = vadd.f32 %v10761, %v10960
        %v10962 = vpop.f32.mrf.mxu0
        %v10963 = vpop.f32.mrf.mxu0
        %v10964 = vadd.f32 %v10764, %v10963
        %v10965 = vpop.f32.mrf.mxu0
        %10966 = vmatprep.mubr.bf16.mxu0 %v9547
        %10967 = vmatmul.mubr.bf16.gmra.mxu0 %v9546
        %v10968 = vpop.f32.mrf.mxu0
        %v10969 = vadd.f32 %v10769, %v10968
        %v10970 = vpop.f32.mrf.mxu0
        %v10971 = vpop.f32.mrf.mxu0
        %v10972 = vadd.f32 %v10772, %v10971
        %v10973 = vpop.f32.mrf.mxu0
        %10974 = vmatprep.mubr.bf16.mxu0 %v9556
        %10975 = vmatmul.mubr.bf16.gmra.mxu0 %v9555
        %v10976 = vpop.f32.mrf.mxu0
        %v10977 = vadd.f32 %v10777, %v10976
        %v10978 = vpop.f32.mrf.mxu0
        %v10979 = vpop.f32.mrf.mxu0
        %v10980 = vadd.f32 %v10780, %v10979
        %v10981 = vpop.f32.mrf.mxu0
        %10982 = vmatprep.mubr.bf16.mxu0 %v9565
        %10983 = vmatmul.mubr.bf16.gmra.mxu0 %v9564
        %v10984 = vpop.f32.mrf.mxu0
        %v10985 = vadd.f32 %v10785, %v10984
        %v10986 = vpop.f32.mrf.mxu0
        %v10987 = vpop.f32.mrf.mxu0
        %v10988 = vadd.f32 %v10788, %v10987
        %v10989 = vpop.f32.mrf.mxu0
        %10990 = vmatprep.mubr.bf16.mxu0 %v9574
        %10991 = vmatmul.mubr.bf16.gmra.mxu0 %v9573
        %v10992 = vpop.f32.mrf.mxu0
        %v10993 = vadd.f32 %v10793, %v10992
        %v10994 = vpop.f32.mrf.mxu0
        %v10995 = vpop.f32.mrf.mxu0
        %v10996 = vadd.f32 %v10796, %v10995
        %v10997 = vpop.f32.mrf.mxu0
        %10998 = vmatprep.mubr.bf16.mxu0 %v9583
        %10999 = vmatmul.mubr.bf16.gmra.mxu0 %v9582
        %v11000 = vpop.f32.mrf.mxu0
        %v11001 = vadd.f32 %v10801, %v11000
        %v11002 = vpop.f32.mrf.mxu0
        %v11003 = vpop.f32.mrf.mxu0
        %v11004 = vpop.f32.mrf.mxu0
        %11005 = vdwg.mxu0
        %11006 = vmatprep.subr.bf16.mxu0 0
        %11007 = vmatpush1.bf16.msra.mxu0 %v10133
        %11008 = vmatprep.subr.bf16.mxu0 0
        %11009 = vmatpush1.bf16.msra.mxu0 %v10132
        %11010 = vmatprep.subr.bf16.mxu0 0
        %11011 = vmatpush1.bf16.msra.mxu0 %v10131
        %11012 = vmatprep.subr.bf16.mxu0 0
        %11013 = vmatpush1.bf16.msra.mxu0 %v10130
        %11014 = vmatprep.subr.bf16.mxu0 0
        %11015 = vmatpush1.bf16.msra.mxu0 %v10129
        %11016 = vmatprep.subr.bf16.mxu0 0
        %11017 = vmatpush1.bf16.msra.mxu0 %v10128
        %11018 = vmatprep.subr.bf16.mxu0 0
        %11019 = vmatpush1.bf16.msra.mxu0 %v10127
        %11020 = vmatprep.subr.bf16.mxu0 0
        %11021 = vmatpush1.bf16.msra.mxu0 %v10126
        %11022 = vmatprep.subr.bf16.mxu0 0
        %11023 = vmatpush2.bf16.msra.mxu0 0
        %11024 = vmatprep.subr.bf16.mxu0 0
        %11025 = vmatpush2.bf16.msra.mxu0 0
        %11026 = vmatprep.subr.bf16.mxu0 0
        %11027 = vmatpush2.bf16.msra.mxu0 0
        %11028 = vmatprep.subr.bf16.mxu0 0
        %11029 = vmatpush2.bf16.msra.mxu0 0
        %11030 = vmatprep.subr.bf16.mxu0 0
        %11031 = vmatpush2.bf16.msra.mxu0 0
        %11032 = vmatprep.subr.bf16.mxu0 0
        %11033 = vmatpush2.bf16.msra.mxu0 0
        %11034 = vmatprep.subr.bf16.mxu0 0
        %11035 = vmatpush2.bf16.msra.mxu0 0
        %11036 = vmatprep.subr.bf16.mxu0 0
        %11037 = vmatpush2.bf16.msra.mxu0 0
        %11038 = vmatprep.mubr.bf16.mxu0 0
        %11039 = vmatmul.mubr.bf16.gmra.mxu0 %v9404
        %v11040 = vpop.f32.mrf.mxu0
        %v11041 = vadd.f32 %v10841, %v11040
        %v11042 = vpop.f32.mrf.mxu0
        %v11043 = vpop.f32.mrf.mxu0
        %v11044 = vadd.f32 %v10844, %v11043
        %v11045 = vpop.f32.mrf.mxu0
        %11046 = vmatprep.mubr.bf16.mxu0 0
        %11047 = vmatmul.mubr.bf16.gmra.mxu0 %v9413
        %v11048 = vpop.f32.mrf.mxu0
        %v11049 = vadd.f32 %v10849, %v11048
        %v11050 = vpop.f32.mrf.mxu0
        %v11051 = vpop.f32.mrf.mxu0
        %v11052 = vadd.f32 %v10852, %v11051
        %v11053 = vpop.f32.mrf.mxu0
        %11054 = vmatprep.mubr.bf16.mxu0 0
        %11055 = vmatmul.mubr.bf16.gmra.mxu0 %v9422
        %v11056 = vpop.f32.mrf.mxu0
        %v11057 = vadd.f32 %v10857, %v11056
        %v11058 = vpop.f32.mrf.mxu0
        %v11059 = vpop.f32.mrf.mxu0
        %v11060 = vadd.f32 %v10860, %v11059
        %v11061 = vpop.f32.mrf.mxu0
        %11062 = vmatprep.mubr.bf16.mxu0 0
        %11063 = vmatmul.mubr.bf16.gmra.mxu0 %v9431
        %v11064 = vpop.f32.mrf.mxu0
        %v11065 = vadd.f32 %v10865, %v11064
        %v11066 = vpop.f32.mrf.mxu0
        %v11067 = vpop.f32.mrf.mxu0
        %v11068 = vadd.f32 %v10868, %v11067
        %v11069 = vpop.f32.mrf.mxu0
        %11070 = vmatprep.mubr.bf16.mxu0 0
        %11071 = vmatmul.mubr.bf16.gmra.mxu0 %v9440
        %v11072 = vpop.f32.mrf.mxu0
        %v11073 = vadd.f32 %v10873, %v11072
        %v11074 = vpop.f32.mrf.mxu0
        %v11075 = vpop.f32.mrf.mxu0
        %v11076 = vadd.f32 %v10876, %v11075
        %v11077 = vpop.f32.mrf.mxu0
        %11078 = vmatprep.mubr.bf16.mxu0 0
        %11079 = vmatmul.mubr.bf16.gmra.mxu0 %v9449
        %v11080 = vpop.f32.mrf.mxu0
        %v11081 = vadd.f32 %v10881, %v11080
        %v11082 = vpop.f32.mrf.mxu0
        %v11083 = vpop.f32.mrf.mxu0
        %v11084 = vadd.f32 %v10884, %v11083
        %v11085 = vpop.f32.mrf.mxu0
        %11086 = vmatprep.mubr.bf16.mxu0 0
        %11087 = vmatmul.mubr.bf16.gmra.mxu0 %v9458
        %v11088 = vpop.f32.mrf.mxu0
        %v11089 = vadd.f32 %v10889, %v11088
        %v11090 = vpop.f32.mrf.mxu0
        %v11091 = vpop.f32.mrf.mxu0
        %v11092 = vadd.f32 %v10892, %v11091
        %v11093 = vpop.f32.mrf.mxu0
        %11094 = vmatprep.mubr.bf16.mxu0 0
        %11095 = vmatmul.mubr.bf16.gmra.mxu0 %v9467
        %v11096 = vpop.f32.mrf.mxu0
        %v11097 = vadd.f32 %v10897, %v11096
        %v11098 = vpop.f32.mrf.mxu0
        %v11099 = vpop.f32.mrf.mxu0
        %v11100 = vadd.f32 %v10900, %v11099
        %v11101 = vpop.f32.mrf.mxu0
        %11102 = vmatprep.mubr.bf16.mxu0 0
        %11103 = vmatmul.mubr.bf16.gmra.mxu0 %v9476
        %v11104 = vpop.f32.mrf.mxu0
        %v11105 = vadd.f32 %v10905, %v11104
        %v11106 = vpop.f32.mrf.mxu0
        %v11107 = vpop.f32.mrf.mxu0
        %v11108 = vadd.f32 %v10908, %v11107
        %v11109 = vpop.f32.mrf.mxu0
        %11110 = vmatprep.mubr.bf16.mxu0 0
        %11111 = vmatmul.mubr.bf16.gmra.mxu0 %v9485
        %v11112 = vpop.f32.mrf.mxu0
        %v11113 = vadd.f32 %v10913, %v11112
        %v11114 = vpop.f32.mrf.mxu0
        %v11115 = vpop.f32.mrf.mxu0
        %v11116 = vadd.f32 %v10916, %v11115
        %v11117 = vpop.f32.mrf.mxu0
        %11118 = vmatprep.mubr.bf16.mxu0 0
        %11119 = vmatmul.mubr.bf16.gmra.mxu0 %v9494
        %v11120 = vpop.f32.mrf.mxu0
        %v11121 = vadd.f32 %v10921, %v11120
        %v11122 = vpop.f32.mrf.mxu0
        %v11123 = vpop.f32.mrf.mxu0
        %v11124 = vadd.f32 %v10924, %v11123
        %v11125 = vpop.f32.mrf.mxu0
        %11126 = vmatprep.mubr.bf16.mxu0 0
        %11127 = vmatmul.mubr.bf16.gmra.mxu0 %v9503
        %v11128 = vpop.f32.mrf.mxu0
        %v11129 = vadd.f32 %v10929, %v11128
        %v11130 = vpop.f32.mrf.mxu0
        %v11131 = vpop.f32.mrf.mxu0
        %v11132 = vadd.f32 %v10932, %v11131
        %v11133 = vpop.f32.mrf.mxu0
        %11134 = vmatprep.mubr.bf16.mxu0 0
        %11135 = vmatmul.mubr.bf16.gmra.mxu0 %v9512
        %v11136 = vpop.f32.mrf.mxu0
        %v11137 = vadd.f32 %v10937, %v11136
        %v11138 = vpop.f32.mrf.mxu0
        %v11139 = vpop.f32.mrf.mxu0
        %v11140 = vadd.f32 %v10940, %v11139
        %v11141 = vpop.f32.mrf.mxu0
        %11142 = vmatprep.mubr.bf16.mxu0 0
        %11143 = vmatmul.mubr.bf16.gmra.mxu0 %v9521
        %v11144 = vpop.f32.mrf.mxu0
        %v11145 = vadd.f32 %v10945, %v11144
        %v11146 = vpop.f32.mrf.mxu0
        %v11147 = vpop.f32.mrf.mxu0
        %v11148 = vadd.f32 %v10948, %v11147
        %v11149 = vpop.f32.mrf.mxu0
        %11150 = vmatprep.mubr.bf16.mxu0 0
        %11151 = vmatmul.mubr.bf16.gmra.mxu0 %v9530
        %v11152 = vpop.f32.mrf.mxu0
        %v11153 = vadd.f32 %v10953, %v11152
        %v11154 = vpop.f32.mrf.mxu0
        %v11155 = vpop.f32.mrf.mxu0
        %v11156 = vadd.f32 %v10956, %v11155
        %v11157 = vpop.f32.mrf.mxu0
        %11158 = vmatprep.mubr.bf16.mxu0 0
        %11159 = vmatmul.mubr.bf16.gmra.mxu0 %v9539
        %v11160 = vpop.f32.mrf.mxu0
        %v11161 = vadd.f32 %v10961, %v11160
        %v11162 = vpop.f32.mrf.mxu0
        %v11163 = vpop.f32.mrf.mxu0
        %v11164 = vadd.f32 %v10964, %v11163
        %v11165 = vpop.f32.mrf.mxu0
        %11166 = vmatprep.mubr.bf16.mxu0 0
        %11167 = vmatmul.mubr.bf16.gmra.mxu0 %v9548
        %v11168 = vpop.f32.mrf.mxu0
        %v11169 = vadd.f32 %v10969, %v11168
        %v11170 = vpop.f32.mrf.mxu0
        %v11171 = vpop.f32.mrf.mxu0
        %v11172 = vadd.f32 %v10972, %v11171
        %v11173 = vpop.f32.mrf.mxu0
        %11174 = vmatprep.mubr.bf16.mxu0 0
        %11175 = vmatmul.mubr.bf16.gmra.mxu0 %v9557
        %v11176 = vpop.f32.mrf.mxu0
        %v11177 = vadd.f32 %v10977, %v11176
        %v11178 = vpop.f32.mrf.mxu0
        %v11179 = vpop.f32.mrf.mxu0
        %v11180 = vadd.f32 %v10980, %v11179
        %v11181 = vpop.f32.mrf.mxu0
        %11182 = vmatprep.mubr.bf16.mxu0 0
        %11183 = vmatmul.mubr.bf16.gmra.mxu0 %v9566
        %v11184 = vpop.f32.mrf.mxu0
        %v11185 = vadd.f32 %v10985, %v11184
        %v11186 = vpop.f32.mrf.mxu0
        %v11187 = vpop.f32.mrf.mxu0
        %v11188 = vadd.f32 %v10988, %v11187
        %v11189 = vpop.f32.mrf.mxu0
        %11190 = vmatprep.mubr.bf16.mxu0 0
        %11191 = vmatmul.mubr.bf16.gmra.mxu0 %v9575
        %v11192 = vpop.f32.mrf.mxu0
        %v11193 = vadd.f32 %v10993, %v11192
        %v11194 = vpop.f32.mrf.mxu0
        %v11195 = vpop.f32.mrf.mxu0
        %v11196 = vadd.f32 %v10996, %v11195
        %v11197 = vpop.f32.mrf.mxu0
        %11198 = vmatprep.mubr.bf16.mxu0 0
        %11199 = vmatmul.mubr.bf16.gmra.mxu0 %v9584
        %v11200 = vpop.f32.mrf.mxu0
        %v11201 = vadd.f32 %v11001, %v11200
        %v11202 = vpop.f32.mrf.mxu0
        %v11203 = vpop.f32.mrf.mxu0
        %v11204 = vpop.f32.mrf.mxu0
        %11205 = vdwg.mxu0
        %v11206 = vadd.f32 %v11041, %v8774
        %v11207 = vadd.f32 %v11044, %v8775
        %v11208 = vadd.f32 %v11049, %v8776
        %v11209 = vadd.f32 %v11052, %v8777
        %v11210 = vadd.f32 %v11057, %v8778
        %v11211 = vadd.f32 %v11060, %v8779
        %v11212 = vadd.f32 %v11065, %v8780
        %v11213 = vadd.f32 %v11068, %v8781
        %v11214 = vadd.f32 %v11073, %v8782
        %v11215 = vadd.f32 %v11076, %v8783
        %v11216 = vadd.f32 %v11081, %v8784
        %v11217 = vadd.f32 %v11084, %v8785
        %v11218 = vadd.f32 %v11089, %v8786
        %v11219 = vadd.f32 %v11092, %v8787
        %v11220 = vadd.f32 %v11097, %v8788
        %v11221 = vadd.f32 %v11100, %v8789
        %v11222 = vadd.f32 %v11105, %v8790
        %v11223 = vadd.f32 %v11108, %v8791
        %v11224 = vadd.f32 %v11113, %v8792
        %v11225 = vadd.f32 %v11116, %v8793
        %v11226 = vadd.f32 %v11121, %v8794
        %v11227 = vadd.f32 %v11124, %v8795
        %v11228 = vadd.f32 %v11129, %v8796
        %v11229 = vadd.f32 %v11132, %v8797
        %v11230 = vadd.f32 %v11137, %v8798
        %v11231 = vadd.f32 %v11140, %v8799
        %v11232 = vadd.f32 %v11145, %v8800
        %v11233 = vadd.f32 %v11148, %v8801
        %v11234 = vadd.f32 %v11153, %v8802
        %v11235 = vadd.f32 %v11156, %v8803
        %v11236 = vadd.f32 %v11161, %v8804
        %v11237 = vadd.f32 %v11164, %v8805
        %v11238 = vadd.f32 %v11169, %v8806
        %v11239 = vadd.f32 %v11172, %v8807
        %v11240 = vadd.f32 %v11177, %v8808
        %v11241 = vadd.f32 %v11180, %v8809
        %v11242 = vadd.f32 %v11185, %v8810
        %v11243 = vadd.f32 %v11188, %v8811
        %v11244 = vadd.f32 %v11193, %v8812
        %v11245 = vadd.f32 %v11196, %v8813
        %v11246 = vadd.f32 %v11201, %v8814
        %v11247 = vmax.f32 %v11206, 0.0
        %v11248 = vmax.f32 %v11207, 0.0
        %v11249 = vmax.f32 %v11208, 0.0
        %v11250 = vmax.f32 %v11209, 0.0
        %v11251 = vmax.f32 %v11210, 0.0
        %v11252 = vmax.f32 %v11211, 0.0
        %v11253 = vmax.f32 %v11212, 0.0
        %v11254 = vmax.f32 %v11213, 0.0
        %v11255 = vmax.f32 %v11214, 0.0
        %v11256 = vmax.f32 %v11215, 0.0
        %v11257 = vmax.f32 %v11216, 0.0
        %v11258 = vmax.f32 %v11217, 0.0
        %v11259 = vmax.f32 %v11218, 0.0
        %v11260 = vmax.f32 %v11219, 0.0
        %v11261 = vmax.f32 %v11220, 0.0
        %v11262 = vmax.f32 %v11221, 0.0
        %v11263 = vmax.f32 %v11222, 0.0
        %v11264 = vmax.f32 %v11223, 0.0
        %v11265 = vmax.f32 %v11224, 0.0
        %v11266 = vmax.f32 %v11225, 0.0
        %v11267 = vmax.f32 %v11226, 0.0
        %v11268 = vmax.f32 %v11227, 0.0
        %v11269 = vmax.f32 %v11228, 0.0
        %v11270 = vmax.f32 %v11229, 0.0
        %v11271 = vmax.f32 %v11230, 0.0
        %v11272 = vmax.f32 %v11231, 0.0
        %v11273 = vmax.f32 %v11232, 0.0
        %v11274 = vmax.f32 %v11233, 0.0
        %v11275 = vmax.f32 %v11234, 0.0
        %v11276 = vmax.f32 %v11235, 0.0
        %v11277 = vmax.f32 %v11236, 0.0
        %v11278 = vmax.f32 %v11237, 0.0
        %v11279 = vmax.f32 %v11238, 0.0
        %v11280 = vmax.f32 %v11239, 0.0
        %v11281 = vmax.f32 %v11240, 0.0
        %v11282 = vmax.f32 %v11241, 0.0
        %v11283 = vmax.f32 %v11242, 0.0
        %v11284 = vmax.f32 %v11243, 0.0
        %v11285 = vmax.f32 %v11244, 0.0
        %v11286 = vmax.f32 %v11245, 0.0
        %v11287 = vmax.f32 %v11246, 0.0
        %v11288 = vmul.f32 %v11247, %v820
        %v11289 = vmul.f32 %v11248, %v825
        %v11290 = vmul.f32 %v11249, %v830
        %v11291 = vmul.f32 %v11250, %v835
        %v11292 = vmul.f32 %v11251, %v840
        %v11293 = vmul.f32 %v11252, %v845
        %v11294 = vmul.f32 %v11253, %v850
        %v11295 = vmul.f32 %v11254, %v855
        %v11296 = vmul.f32 %v11255, %v860
        %v11297 = vmul.f32 %v11256, %v865
        %v11298 = vmul.f32 %v11257, %v870
        %v11299 = vmul.f32 %v11258, %v875
        %v11300 = vmul.f32 %v11259, %v880
        %v11301 = vmul.f32 %v11260, %v885
        %v11302 = vmul.f32 %v11261, %v890
        %v11303 = vmul.f32 %v11262, %v895
        %v11304 = vmul.f32 %v11263, %v900
        %v11305 = vmul.f32 %v11264, %v905
        %v11306 = vmul.f32 %v11265, %v910
        %v11307 = vmul.f32 %v11266, %v915
        %v11308 = vmul.f32 %v11267, %v920
        %v11309 = vmul.f32 %v11268, %v925
        %v11310 = vmul.f32 %v11269, %v930
        %v11311 = vmul.f32 %v11270, %v935
        %v11312 = vmul.f32 %v11271, %v940
        %v11313 = vmul.f32 %v11272, %v945
        %v11314 = vmul.f32 %v11273, %v950
        %v11315 = vmul.f32 %v11274, %v955
        %v11316 = vmul.f32 %v11275, %v960
        %v11317 = vmul.f32 %v11276, %v965
        %v11318 = vmul.f32 %v11277, %v970
        %v11319 = vmul.f32 %v11278, %v975
        %v11320 = vmul.f32 %v11279, %v980
        %v11321 = vmul.f32 %v11280, %v985
        %v11322 = vmul.f32 %v11281, %v990
        %v11323 = vmul.f32 %v11282, %v995
        %v11324 = vmul.f32 %v11283, %v1000
        %v11325 = vmul.f32 %v11284, %v1005
        %v11326 = vmul.f32 %v11285, %v1010
        %v11327 = vmul.f32 %v11286, %v1015
        %v11328 = vmul.f32 %v11287, %v1020
        %v11329 = vadd.f32 %v11288, %v11289
        %v11330 = vadd.f32 %v11329, %v11290
        %v11331 = vadd.f32 %v11330, %v11291
        %v11332 = vadd.f32 %v11331, %v11292
        %v11333 = vadd.f32 %v11332, %v11293
        %v11334 = vadd.f32 %v11333, %v11294
        %v11335 = vadd.f32 %v11334, %v11295
        %v11336 = vadd.f32 %v11335, %v11296
        %v11337 = vadd.f32 %v11336, %v11297
        %v11338 = vadd.f32 %v11337, %v11298
        %v11339 = vadd.f32 %v11338, %v11299
        %v11340 = vadd.f32 %v11339, %v11300
        %v11341 = vadd.f32 %v11340, %v11301
        %v11342 = vadd.f32 %v11341, %v11302
        %v11343 = vadd.f32 %v11342, %v11303
        %v11344 = vadd.f32 %v11343, %v11304
        %v11345 = vadd.f32 %v11344, %v11305
        %v11346 = vadd.f32 %v11345, %v11306
        %v11347 = vadd.f32 %v11346, %v11307
        %v11348 = vadd.f32 %v11347, %v11308
        %v11349 = vadd.f32 %v11348, %v11309
        %v11350 = vadd.f32 %v11349, %v11310
        %v11351 = vadd.f32 %v11350, %v11311
        %v11352 = vadd.f32 %v11351, %v11312
        %v11353 = vadd.f32 %v11352, %v11313
        %v11354 = vadd.f32 %v11353, %v11314
        %v11355 = vadd.f32 %v11354, %v11315
        %v11356 = vadd.f32 %v11355, %v11316
        %v11357 = vadd.f32 %v11356, %v11317
        %v11358 = vadd.f32 %v11357, %v11318
        %v11359 = vadd.f32 %v11358, %v11319
        %v11360 = vadd.f32 %v11359, %v11320
        %v11361 = vadd.f32 %v11360, %v11321
        %v11362 = vadd.f32 %v11361, %v11322
        %v11363 = vadd.f32 %v11362, %v11323
        %v11364 = vadd.f32 %v11363, %v11324
        %v11365 = vadd.f32 %v11364, %v11325
        %v11366 = vadd.f32 %v11365, %v11326
        %v11367 = vadd.f32 %v11366, %v11327
        %vm11368 = vcmask 1043456
        %v11369 = vsel %vm11368, %v11328, 0.0
        %v11370 = vadd.f32 %v11367, %v11369
        %v11371 = vrot.slane %v11370, 4
        %v11372 = vadd.f32 %v11370, %v11371
        %v11373 = vrot.slane %v11372, 2
        %v11374 = vadd.f32 %v11372, %v11373
        %v11375 = vrot.slane %v11374, 1
        %v11376 = vadd.f32 %v11374, %v11375
        %v11377 = vmul.f32 %v11376, 0.00390625
        %11378 = vst [vmem:[%s297] sm:$0x1] %v11377
        %s11379 = sand.u32 %s203, 1
        %s11380 = scalar_lea.sflag [#allocation6], %s11379
        %s11381 = sand.u32 %s203, 1
        %s11382 = scalar_lea.vmem [#allocation5], %s11381
        // Predicated region
        $region53: #{encoder_forward.1} parent=51 // pred_check
          %p11383 = pneg %p213
        $region54: #{encoder_forward.1} parent=51 // pred_check_branch
          %11385 = sbr.rel (%p11383) target = $region56
        $region55: #{encoder_forward.1} parent=51 // pred_region
          %s11387 = ssub.s32 16, 16
          %11388 = vsyncadd %s11380, %s11387
          %s11389 = smul.addr %s22, 16
          %s11390 = scalar_lea.hbm %s8, %s11389
          %s11392 = sshll.u32 %s11382, 4
          %s11393 = int_to_ptr.vmem [resolvable:$true] %s11392
          %11395 = dma.vmem_to_hbm [thread:$0]  %s11393, 16, %s11390, %s11380
        $region56: #{encoder_forward.1} parent=51 // pred_fallthru
          _
      $region52: #{encoder_forward.1} parent=5 // pred_fallthru
        _
      %p11396 = scmp.le.s32.totalorder 2, %s17
      // Predicated region
      $region57: #{encoder_forward.1} parent=5 // pred_check
        %p11397 = pneg %p11396
      $region58: #{encoder_forward.1} parent=5 // pred_check_branch
        %11399 = sbr.rel (%p11397) target = $region60
      $region59: #{encoder_forward.1} parent=5 // pred_region
        %s11400 = ssub.s32 %s17, 2
        // Predicated region
        $region61: #{encoder_forward.1} parent=59 // pred_check
          %p11401 = pneg %p219
        $region62: #{encoder_forward.1} parent=59 // pred_check_branch
          %11403 = sbr.rel (%p11401) target = $region64
        $region63: #{encoder_forward.1} parent=59 // pred_region
          %s11404 = sand.u32 %s204, 1
          %s11405 = scalar_lea.sflag [#allocation6], %s11404
          %s11406 = sand.u32 %s204, 1
          %s11407 = scalar_lea.vmem [#allocation5], %s11406
          %11408 = dma.done %s11405, 16
        $region64: #{encoder_forward.1} parent=59 // pred_fallthru
          _
      $region60: #{encoder_forward.1} parent=5 // pred_fallthru
        _
    $region6: #{encoder_forward.1} parent=1 // loop_footer
      %s21 = sadd.s32 1, %s17
    $region7: #{encoder_forward.1} parent=1 // loop_footer_branch
      %16 = sbr.rel target = $region3
    $region8: #{encoder_forward.1} parent=1 // loop_exit
      _
    %11409 = vsyncpa [#allocation6], 1
    %s11410 = scalar_lea.sflag [#allocation6], 1
    %11411 = vsyncpa %s11410, 1

</llo_original>
